<compile_context>
chip_gen: v5e
topology: v5e:2x2
jax: 0.10.0
libtpu: 0.0.40
codegen_flags: <defaults>
</compile_context>

<pallas_src>
import functools

import jax
import jax.numpy as jnp
from jax import lax
from jax.experimental import pallas as pl
from jax.experimental.pallas import tpu as pltpu


def _round_up(x, m):
    return (x + m - 1) // m * m


def _lka_kernel(x_ref, m0_ref, ms_ref, w0_ref, b0_ref, ws_ref, bs_ref,
                w1_ref, b1_ref, o_ref, pad0_ref, pads_ref, *, H, W):
    # x_ref : (1, C, H*W)  one image, channels on sublanes, flat spatial on lanes
    # m0_ref: (5, H*W)     per-kw column masks (0/1) for the 5x5 conv
    # ms_ref: (7, H*W)     per-kw column masks (0/1) for the dilated 7x7 conv
    # w0_ref: (C, 25)      depthwise 5x5 weights, b0_ref: (C, 1)
    # ws_ref: (C, 49)      depthwise dilated 7x7 weights, bs_ref: (C, 1)
    # w1_ref: (C, C)       1x1 conv weight (out, in), b1_ref: (C, 1)
    # o_ref : (1, C, H*W)
    # pad0_ref / pads_ref: zero-margined flat scratch buffers (margin = max |lane shift|)
    C = x_ref.shape[1]
    HW = H * W

    K0, P0 = 5, 2                 # conv0: 5x5, pad 2
    KS, PS, DIL = 7, 9, 3         # conv_spatial: 7x7, pad 9, dilation 3
    C0 = K0 // 2                  # = 2 (tap center)
    CS = KS // 2                  # = 3
    M0 = P0 * W + P0              # max |lane shift| stage 1
    MS = PS * W + PS              # max |lane shift| stage 2

    x = x_ref[0]                  # (C, HW), lane-dense

    # ---------------- stage 1: depthwise 5x5 (VPU shifted FMA) ------------------
    pad0_ref[...] = jnp.zeros_like(pad0_ref)
    pad0_ref[:, M0:M0 + HW] = x                          # one wide store

    w0 = w0_ref[...]                                     # (C, 25)
    m0 = [m0_ref[kw:kw + 1, :] for kw in range(K0)]      # K0 x (1, HW)

    acc0 = jnp.zeros((C, HW), jnp.float32)
    for kh in range(K0):
        for kw in range(K0):
            d = (kh - C0) * W + (kw - C0)
            shifted = pad0_ref[:, M0 + d:M0 + d + HW]    # static lane-offset slice
            if kw != C0:                                 # horizontal zero-pad mask
                shifted = shifted * m0[kw]
            t = kh * K0 + kw
            acc0 = acc0 + shifted * w0[:, t:t + 1]       # per-channel tap weight
    acc0 = acc0 + b0_ref[...]                            # all HW lanes are valid

    # ---------------- stage 2: depthwise 7x7, dilation 3 ------------------------
    pads_ref[...] = jnp.zeros_like(pads_ref)
    pads_ref[:, MS:MS + HW] = acc0                       # one wide store

    ws = ws_ref[...]                                     # (C, 49)
    ms = [ms_ref[kw:kw + 1, :] for kw in range(KS)]

    acc1 = jnp.zeros((C, HW), jnp.float32)
    for kh in range(KS):
        for kw in range(KS):
            d = DIL * (kh - CS) * W + DIL * (kw - CS)
            shifted = pads_ref[:, MS + d:MS + d + HW]
            if kw != CS:
                shifted = shifted * ms[kw]
            t = kh * KS + kw
            acc1 = acc1 + shifted * ws[:, t:t + 1]
    acc1 = acc1 + bs_ref[...]

    # ---------------- stage 3: 1x1 conv (single MXU matmul) + gating ------------
    attn = jnp.dot(w1_ref[...], acc1,
                   preferred_element_type=jnp.float32) + b1_ref[...]
    o_ref[0] = (x * attn).astype(o_ref.dtype)


def attention_module_forward(x_nchw, params):
    """Forward pass of AttentionModule. Input/output are NCHW like PyTorch."""
    w0, b0, ws, bs, w1, b1 = params
    N, C, H, W = x_nchw.shape
    HW = H * W

    M0 = 2 * W + 2
    MS = 9 * W + 9
    pad0_len = _round_up(HW + 2 * M0, 128)
    pads_len = _round_up(HW + 2 * MS, 128)

    x_flat = x_nchw.reshape(N, C, HW)          # free: identical HBM layout to NCHW
    w0_f = w0.reshape(C, 25)
    ws_f = ws.reshape(C, 49)
    b0_c = b0[:, None]
    bs_c = bs[:, None]
    b1_c = b1[:, None]

    # Per-kw 0/1 column masks (exact zero-padding for the horizontal taps),
    # built on the host side so the kernel never needs integer modulo.
    col = jnp.arange(HW, dtype=jnp.int32) % W
    m0 = jnp.stack([((col + (kw - 2) >= 0) & (col + (kw - 2) < W))
                    for kw in range(5)]).astype(jnp.float32)           # (5, HW)
    ms = jnp.stack([((col + 3 * (kw - 3) >= 0) & (col + 3 * (kw - 3) < W))
                    for kw in range(7)]).astype(jnp.float32)           # (7, HW)

    kernel = functools.partial(_lka_kernel, H=H, W=W)

    out_flat = pl.pallas_call(
        kernel,
        out_shape=jax.ShapeDtypeStruct((N, C, HW), jnp.float32),
        grid_spec=pltpu.PrefetchScalarGridSpec(
            num_scalar_prefetch=0,
            grid=(N,),
            in_specs=[
                pl.BlockSpec((1, C, HW), lambda n: (n, 0, 0)),   # x
                pl.BlockSpec((5, HW), lambda n: (0, 0)),         # masks 5x5
                pl.BlockSpec((7, HW), lambda n: (0, 0)),         # masks 7x7
                pl.BlockSpec((C, 25), lambda n: (0, 0)),         # w0
                pl.BlockSpec((C, 1), lambda n: (0, 0)),          # b0
                pl.BlockSpec((C, 49), lambda n: (0, 0)),         # ws
                pl.BlockSpec((C, 1), lambda n: (0, 0)),          # bs
                pl.BlockSpec((C, C), lambda n: (0, 0)),          # w1
                pl.BlockSpec((C, 1), lambda n: (0, 0)),          # b1
            ],
            out_specs=pl.BlockSpec((1, C, HW), lambda n: (n, 0, 0)),
            scratch_shapes=[
                pltpu.VMEM((C, pad0_len), jnp.float32),
                pltpu.VMEM((C, pads_len), jnp.float32),
            ],
        ),
        compiler_params=pltpu.CompilerParams(
            dimension_semantics=("parallel",),
        ),
    )(x_flat, m0, ms, w0_f, b0_c, ws_f, bs_c, w1, b1_c)

    return out_flat.reshape(N, C, H, W)        # free reshape back to NCHW


def reference(x, params):
    """Pure-JAX reference mirroring the PyTorch forward."""
    w0, b0, ws, bs, w1, b1 = params
    C = x.shape[1]
    y = lax.conv_general_dilated(
        x, w0.reshape(C, 1, 5, 5), (1, 1), ((2, 2), (2, 2)),
        dimension_numbers=("NCHW", "OIHW", "NCHW"),
        feature_group_count=C) + b0[None, :, None, None]
    y = lax.conv_general_dilated(
        y, ws.reshape(C, 1, 7, 7), (1, 1), ((9, 9), (9, 9)),
        rhs_dilation=(3, 3),
        dimension_numbers=("NCHW", "OIHW", "NCHW"),
        feature_group_count=C) + bs[None, :, None, None]
    y = lax.conv_general_dilated(
        y, w1[:, :, None, None], (1, 1), ((0, 0), (0, 0)),
        dimension_numbers=("NCHW", "OIHW", "NCHW")) + b1[None, :, None, None]
    return x * y


def make_params(key, dim):
    ks = jax.random.split(key, 6)
    w0 = 0.1 * jax.random.normal(ks[0], (dim, 5, 5), jnp.float32)
    b0 = 0.1 * jax.random.normal(ks[1], (dim,), jnp.float32)
    ws = 0.1 * jax.random.normal(ks[2], (dim, 7, 7), jnp.float32)
    bs = 0.1 * jax.random.normal(ks[3], (dim,), jnp.float32)
    w1 = 0.1 * jax.random.normal(ks[4], (dim, dim), jnp.float32)
    b1 = 0.1 * jax.random.normal(ks[5], (dim,), jnp.float32)
    return (w0, b0, ws, bs, w1, b1)


if __name__ == "__main__":
    key = jax.random.PRNGKey(0)
    k_x, k_p = jax.random.split(key)

    N, dim, H, W = 2, 32, 16, 16
    x = jax.random.normal(k_x, (N, dim, H, W), jnp.float32)
    params = make_params(k_p, dim)

    run = jax.jit(functools.partial(attention_module_forward, params=params))
    out = jax.block_until_ready(run(x))

    ref = jax.block_until_ready(reference(x, params))
    assert out.shape == (N, dim, H, W), out.shape
    err = float(jnp.max(jnp.abs(out - ref)))
    assert jnp.allclose(out, ref, atol=2e-3, rtol=2e-3), err

    print("KERNEL_OK")
</pallas_src>

<mosaic_0001>
module attributes {stable_mosaic.version = 11 : i64} {
  func.func @_lka_kernel(%arg0: i32, %arg1: memref<1x32x256xf32, #tpu.memory_space<vmem>>, %arg2: memref<5x256xf32, #tpu.memory_space<vmem>>, %arg3: memref<7x256xf32, #tpu.memory_space<vmem>>, %arg4: memref<32x25xf32, #tpu.memory_space<vmem>>, %arg5: memref<32x1xf32, #tpu.memory_space<vmem>>, %arg6: memref<32x49xf32, #tpu.memory_space<vmem>>, %arg7: memref<32x1xf32, #tpu.memory_space<vmem>>, %arg8: memref<32x32xf32, #tpu.memory_space<vmem>>, %arg9: memref<32x1xf32, #tpu.memory_space<vmem>>, %arg10: memref<1x32x256xf32, #tpu.memory_space<vmem>>, %arg11: memref<32x384xf32, #tpu.memory_space<vmem>>, %arg12: memref<32x640xf32, #tpu.memory_space<vmem>>) attributes {dimension_semantics = [#tpu.dimension_semantics<parallel>], iteration_bounds = array<i64: 2>, scalar_prefetch = 0 : i64, scratch_operands = 2 : i64, tpu.core_type = #tpu.core_type<tc>, window_params = [{transform_indices = @transform_0, window_bounds = array<i64: 1, 32, 256>}, {pipeline_mode = #tpu.pipeline_mode<synchronous>, transform_indices = @transform_1, window_bounds = array<i64: 5, 256>}, {pipeline_mode = #tpu.pipeline_mode<synchronous>, transform_indices = @transform_2, window_bounds = array<i64: 7, 256>}, {pipeline_mode = #tpu.pipeline_mode<synchronous>, transform_indices = @transform_3, window_bounds = array<i64: 32, 25>}, {pipeline_mode = #tpu.pipeline_mode<synchronous>, transform_indices = @transform_4, window_bounds = array<i64: 32, 1>}, {pipeline_mode = #tpu.pipeline_mode<synchronous>, transform_indices = @transform_5, window_bounds = array<i64: 32, 49>}, {pipeline_mode = #tpu.pipeline_mode<synchronous>, transform_indices = @transform_6, window_bounds = array<i64: 32, 1>}, {pipeline_mode = #tpu.pipeline_mode<synchronous>, transform_indices = @transform_7, window_bounds = array<i64: 32, 32>}, {pipeline_mode = #tpu.pipeline_mode<synchronous>, transform_indices = @transform_8, window_bounds = array<i64: 32, 1>}, {transform_indices = @transform_9, window_bounds = array<i64: 1, 32, 256>}]} {
    %c0 = arith.constant 0 : index
    %c0_0 = arith.constant 0 : index
    %c0_1 = arith.constant 0 : index
    %0 = vector.load %arg1[%c0, %c0_0, %c0_1] : memref<1x32x256xf32, #tpu.memory_space<vmem>>, vector<1x32x256xf32>
    %1 = vector.shape_cast %0 : vector<1x32x256xf32> to vector<32x256xf32>
    %cst = arith.constant 0.000000e+00 : f32
    %2 = vector.broadcast %cst : f32 to vector<32x384xf32>
    %c0_2 = arith.constant 0 : index
    %c0_3 = arith.constant 0 : index
    %3 = vector.load %arg11[%c0_2, %c0_3] : memref<32x384xf32, #tpu.memory_space<vmem>>, vector<32x384xf32>
    tpu.vector_store %arg11[%c0_2, %c0_3], %2 {strides = array<i32>} : memref<32x384xf32, #tpu.memory_space<vmem>>, vector<32x384xf32>,
    %c0_4 = arith.constant 0 : index
    %c34 = arith.constant 34 : index
    %4 = vector.load %arg11[%c0_4, %c34] : memref<32x384xf32, #tpu.memory_space<vmem>>, vector<32x256xf32>
    tpu.vector_store %arg11[%c0_4, %c34], %1 {strides = array<i32>} : memref<32x384xf32, #tpu.memory_space<vmem>>, vector<32x256xf32>,
    %c0_5 = arith.constant 0 : index
    %c0_6 = arith.constant 0 : index
    %5 = vector.load %arg4[%c0_5, %c0_6] : memref<32x25xf32, #tpu.memory_space<vmem>>, vector<32x25xf32>
    %c0_7 = arith.constant 0 : index
    %c0_8 = arith.constant 0 : index
    %6 = vector.load %arg2[%c0_7, %c0_8] : memref<5x256xf32, #tpu.memory_space<vmem>>, vector<1x256xf32>
    %c1 = arith.constant 1 : index
    %c0_9 = arith.constant 0 : index
    %7 = vector.load %arg2[%c1, %c0_9] : memref<5x256xf32, #tpu.memory_space<vmem>>, vector<1x256xf32>
    %c3 = arith.constant 3 : index
    %c0_10 = arith.constant 0 : index
    %8 = vector.load %arg2[%c3, %c0_10] : memref<5x256xf32, #tpu.memory_space<vmem>>, vector<1x256xf32>
    %c4 = arith.constant 4 : index
    %c0_11 = arith.constant 0 : index
    %9 = vector.load %arg2[%c4, %c0_11] : memref<5x256xf32, #tpu.memory_space<vmem>>, vector<1x256xf32>
    %cst_12 = arith.constant 0.000000e+00 : f32
    %10 = vector.broadcast %cst_12 : f32 to vector<32x256xf32>
    %c0_13 = arith.constant 0 : index
    %c0_14 = arith.constant 0 : index
    %11 = vector.load %arg11[%c0_13, %c0_14] : memref<32x384xf32, #tpu.memory_space<vmem>>, vector<32x256xf32>
    %12 = vector.broadcast %6 : vector<1x256xf32> to vector<32x256xf32>
    %13 = arith.mulf %11, %12 : vector<32x256xf32>
    %14 = vector.extract_strided_slice %5 {offsets = [0, 0], sizes = [32, 1], strides = [1, 1]} : vector<32x25xf32> to vector<32x1xf32>
    %15 = vector.broadcast %14 : vector<32x1xf32> to vector<32x256xf32>
    %16 = arith.mulf %13, %15 : vector<32x256xf32>
    %17 = arith.addf %10, %16 : vector<32x256xf32>
    %c0_15 = arith.constant 0 : index
    %c1_16 = arith.constant 1 : index
    %18 = vector.load %arg11[%c0_15, %c1_16] : memref<32x384xf32, #tpu.memory_space<vmem>>, vector<32x256xf32>
    %19 = vector.broadcast %7 : vector<1x256xf32> to vector<32x256xf32>
    %20 = arith.mulf %18, %19 : vector<32x256xf32>
    %21 = vector.extract_strided_slice %5 {offsets = [0, 1], sizes = [32, 1], strides = [1, 1]} : vector<32x25xf32> to vector<32x1xf32>
    %22 = vector.broadcast %21 : vector<32x1xf32> to vector<32x256xf32>
    %23 = arith.mulf %20, %22 : vector<32x256xf32>
    %24 = arith.addf %17, %23 : vector<32x256xf32>
    %c0_17 = arith.constant 0 : index
    %c2 = arith.constant 2 : index
    %25 = vector.load %arg11[%c0_17, %c2] : memref<32x384xf32, #tpu.memory_space<vmem>>, vector<32x256xf32>
    %26 = vector.extract_strided_slice %5 {offsets = [0, 2], sizes = [32, 1], strides = [1, 1]} : vector<32x25xf32> to vector<32x1xf32>
    %27 = vector.broadcast %26 : vector<32x1xf32> to vector<32x256xf32>
    %28 = arith.mulf %25, %27 : vector<32x256xf32>
    %29 = arith.addf %24, %28 : vector<32x256xf32>
    %c0_18 = arith.constant 0 : index
    %c3_19 = arith.constant 3 : index
    %30 = vector.load %arg11[%c0_18, %c3_19] : memref<32x384xf32, #tpu.memory_space<vmem>>, vector<32x256xf32>
    %31 = vector.broadcast %8 : vector<1x256xf32> to vector<32x256xf32>
    %32 = arith.mulf %30, %31 : vector<32x256xf32>
    %33 = vector.extract_strided_slice %5 {offsets = [0, 3], sizes = [32, 1], strides = [1, 1]} : vector<32x25xf32> to vector<32x1xf32>
    %34 = vector.broadcast %33 : vector<32x1xf32> to vector<32x256xf32>
    %35 = arith.mulf %32, %34 : vector<32x256xf32>
    %36 = arith.addf %29, %35 : vector<32x256xf32>
    %c0_20 = arith.constant 0 : index
    %c4_21 = arith.constant 4 : index
    %37 = vector.load %arg11[%c0_20, %c4_21] : memref<32x384xf32, #tpu.memory_space<vmem>>, vector<32x256xf32>
    %38 = vector.broadcast %9 : vector<1x256xf32> to vector<32x256xf32>
    %39 = arith.mulf %37, %38 : vector<32x256xf32>
    %40 = vector.extract_strided_slice %5 {offsets = [0, 4], sizes = [32, 1], strides = [1, 1]} : vector<32x25xf32> to vector<32x1xf32>
    %41 = vector.broadcast %40 : vector<32x1xf32> to vector<32x256xf32>
    %42 = arith.mulf %39, %41 : vector<32x256xf32>
    %43 = arith.addf %36, %42 : vector<32x256xf32>
    %c0_22 = arith.constant 0 : index
    %c16 = arith.constant 16 : index
    %44 = vector.load %arg11[%c0_22, %c16] : memref<32x384xf32, #tpu.memory_space<vmem>>, vector<32x256xf32>
    %45 = vector.broadcast %6 : vector<1x256xf32> to vector<32x256xf32>
    %46 = arith.mulf %44, %45 : vector<32x256xf32>
    %47 = vector.extract_strided_slice %5 {offsets = [0, 5], sizes = [32, 1], strides = [1, 1]} : vector<32x25xf32> to vector<32x1xf32>
    %48 = vector.broadcast %47 : vector<32x1xf32> to vector<32x256xf32>
    %49 = arith.mulf %46, %48 : vector<32x256xf32>
    %50 = arith.addf %43, %49 : vector<32x256xf32>
    %c0_23 = arith.constant 0 : index
    %c17 = arith.constant 17 : index
    %51 = vector.load %arg11[%c0_23, %c17] : memref<32x384xf32, #tpu.memory_space<vmem>>, vector<32x256xf32>
    %52 = vector.broadcast %7 : vector<1x256xf32> to vector<32x256xf32>
    %53 = arith.mulf %51, %52 : vector<32x256xf32>
    %54 = vector.extract_strided_slice %5 {offsets = [0, 6], sizes = [32, 1], strides = [1, 1]} : vector<32x25xf32> to vector<32x1xf32>
    %55 = vector.broadcast %54 : vector<32x1xf32> to vector<32x256xf32>
    %56 = arith.mulf %53, %55 : vector<32x256xf32>
    %57 = arith.addf %50, %56 : vector<32x256xf32>
    %c0_24 = arith.constant 0 : index
    %c18 = arith.constant 18 : index
    %58 = vector.load %arg11[%c0_24, %c18] : memref<32x384xf32, #tpu.memory_space<vmem>>, vector<32x256xf32>
    %59 = vector.extract_strided_slice %5 {offsets = [0, 7], sizes = [32, 1], strides = [1, 1]} : vector<32x25xf32> to vector<32x1xf32>
    %60 = vector.broadcast %59 : vector<32x1xf32> to vector<32x256xf32>
    %61 = arith.mulf %58, %60 : vector<32x256xf32>
    %62 = arith.addf %57, %61 : vector<32x256xf32>
    %c0_25 = arith.constant 0 : index
    %c19 = arith.constant 19 : index
    %63 = vector.load %arg11[%c0_25, %c19] : memref<32x384xf32, #tpu.memory_space<vmem>>, vector<32x256xf32>
    %64 = vector.broadcast %8 : vector<1x256xf32> to vector<32x256xf32>
    %65 = arith.mulf %63, %64 : vector<32x256xf32>
    %66 = vector.extract_strided_slice %5 {offsets = [0, 8], sizes = [32, 1], strides = [1, 1]} : vector<32x25xf32> to vector<32x1xf32>
    %67 = vector.broadcast %66 : vector<32x1xf32> to vector<32x256xf32>
    %68 = arith.mulf %65, %67 : vector<32x256xf32>
    %69 = arith.addf %62, %68 : vector<32x256xf32>
    %c0_26 = arith.constant 0 : index
    %c20 = arith.constant 20 : index
    %70 = vector.load %arg11[%c0_26, %c20] : memref<32x384xf32, #tpu.memory_space<vmem>>, vector<32x256xf32>
    %71 = vector.broadcast %9 : vector<1x256xf32> to vector<32x256xf32>
    %72 = arith.mulf %70, %71 : vector<32x256xf32>
    %73 = vector.extract_strided_slice %5 {offsets = [0, 9], sizes = [32, 1], strides = [1, 1]} : vector<32x25xf32> to vector<32x1xf32>
    %74 = vector.broadcast %73 : vector<32x1xf32> to vector<32x256xf32>
    %75 = arith.mulf %72, %74 : vector<32x256xf32>
    %76 = arith.addf %69, %75 : vector<32x256xf32>
    %c0_27 = arith.constant 0 : index
    %c32 = arith.constant 32 : index
    %77 = vector.load %arg11[%c0_27, %c32] : memref<32x384xf32, #tpu.memory_space<vmem>>, vector<32x256xf32>
    %78 = vector.broadcast %6 : vector<1x256xf32> to vector<32x256xf32>
    %79 = arith.mulf %77, %78 : vector<32x256xf32>
    %80 = vector.extract_strided_slice %5 {offsets = [0, 10], sizes = [32, 1], strides = [1, 1]} : vector<32x25xf32> to vector<32x1xf32>
    %81 = vector.broadcast %80 : vector<32x1xf32> to vector<32x256xf32>
    %82 = arith.mulf %79, %81 : vector<32x256xf32>
    %83 = arith.addf %76, %82 : vector<32x256xf32>
    %c0_28 = arith.constant 0 : index
    %c33 = arith.constant 33 : index
    %84 = vector.load %arg11[%c0_28, %c33] : memref<32x384xf32, #tpu.memory_space<vmem>>, vector<32x256xf32>
    %85 = vector.broadcast %7 : vector<1x256xf32> to vector<32x256xf32>
    %86 = arith.mulf %84, %85 : vector<32x256xf32>
    %87 = vector.extract_strided_slice %5 {offsets = [0, 11], sizes = [32, 1], strides = [1, 1]} : vector<32x25xf32> to vector<32x1xf32>
    %88 = vector.broadcast %87 : vector<32x1xf32> to vector<32x256xf32>
    %89 = arith.mulf %86, %88 : vector<32x256xf32>
    %90 = arith.addf %83, %89 : vector<32x256xf32>
    %c0_29 = arith.constant 0 : index
    %c34_30 = arith.constant 34 : index
    %91 = vector.load %arg11[%c0_29, %c34_30] : memref<32x384xf32, #tpu.memory_space<vmem>>, vector<32x256xf32>
    %92 = vector.extract_strided_slice %5 {offsets = [0, 12], sizes = [32, 1], strides = [1, 1]} : vector<32x25xf32> to vector<32x1xf32>
    %93 = vector.broadcast %92 : vector<32x1xf32> to vector<32x256xf32>
    %94 = arith.mulf %91, %93 : vector<32x256xf32>
    %95 = arith.addf %90, %94 : vector<32x256xf32>
    %c0_31 = arith.constant 0 : index
    %c35 = arith.constant 35 : index
    %96 = vector.load %arg11[%c0_31, %c35] : memref<32x384xf32, #tpu.memory_space<vmem>>, vector<32x256xf32>
    %97 = vector.broadcast %8 : vector<1x256xf32> to vector<32x256xf32>
    %98 = arith.mulf %96, %97 : vector<32x256xf32>
    %99 = vector.extract_strided_slice %5 {offsets = [0, 13], sizes = [32, 1], strides = [1, 1]} : vector<32x25xf32> to vector<32x1xf32>
    %100 = vector.broadcast %99 : vector<32x1xf32> to vector<32x256xf32>
    %101 = arith.mulf %98, %100 : vector<32x256xf32>
    %102 = arith.addf %95, %101 : vector<32x256xf32>
    %c0_32 = arith.constant 0 : index
    %c36 = arith.constant 36 : index
    %103 = vector.load %arg11[%c0_32, %c36] : memref<32x384xf32, #tpu.memory_space<vmem>>, vector<32x256xf32>
    %104 = vector.broadcast %9 : vector<1x256xf32> to vector<32x256xf32>
    %105 = arith.mulf %103, %104 : vector<32x256xf32>
    %106 = vector.extract_strided_slice %5 {offsets = [0, 14], sizes = [32, 1], strides = [1, 1]} : vector<32x25xf32> to vector<32x1xf32>
    %107 = vector.broadcast %106 : vector<32x1xf32> to vector<32x256xf32>
    %108 = arith.mulf %105, %107 : vector<32x256xf32>
    %109 = arith.addf %102, %108 : vector<32x256xf32>
    %c0_33 = arith.constant 0 : index
    %c48 = arith.constant 48 : index
    %110 = vector.load %arg11[%c0_33, %c48] : memref<32x384xf32, #tpu.memory_space<vmem>>, vector<32x256xf32>
    %111 = vector.broadcast %6 : vector<1x256xf32> to vector<32x256xf32>
    %112 = arith.mulf %110, %111 : vector<32x256xf32>
    %113 = vector.extract_strided_slice %5 {offsets = [0, 15], sizes = [32, 1], strides = [1, 1]} : vector<32x25xf32> to vector<32x1xf32>
    %114 = vector.broadcast %113 : vector<32x1xf32> to vector<32x256xf32>
    %115 = arith.mulf %112, %114 : vector<32x256xf32>
    %116 = arith.addf %109, %115 : vector<32x256xf32>
    %c0_34 = arith.constant 0 : index
    %c49 = arith.constant 49 : index
    %117 = vector.load %arg11[%c0_34, %c49] : memref<32x384xf32, #tpu.memory_space<vmem>>, vector<32x256xf32>
    %118 = vector.broadcast %7 : vector<1x256xf32> to vector<32x256xf32>
    %119 = arith.mulf %117, %118 : vector<32x256xf32>
    %120 = vector.extract_strided_slice %5 {offsets = [0, 16], sizes = [32, 1], strides = [1, 1]} : vector<32x25xf32> to vector<32x1xf32>
    %121 = vector.broadcast %120 : vector<32x1xf32> to vector<32x256xf32>
    %122 = arith.mulf %119, %121 : vector<32x256xf32>
    %123 = arith.addf %116, %122 : vector<32x256xf32>
    %c0_35 = arith.constant 0 : index
    %c50 = arith.constant 50 : index
    %124 = vector.load %arg11[%c0_35, %c50] : memref<32x384xf32, #tpu.memory_space<vmem>>, vector<32x256xf32>
    %125 = vector.extract_strided_slice %5 {offsets = [0, 17], sizes = [32, 1], strides = [1, 1]} : vector<32x25xf32> to vector<32x1xf32>
    %126 = vector.broadcast %125 : vector<32x1xf32> to vector<32x256xf32>
    %127 = arith.mulf %124, %126 : vector<32x256xf32>
    %128 = arith.addf %123, %127 : vector<32x256xf32>
    %c0_36 = arith.constant 0 : index
    %c51 = arith.constant 51 : index
    %129 = vector.load %arg11[%c0_36, %c51] : memref<32x384xf32, #tpu.memory_space<vmem>>, vector<32x256xf32>
    %130 = vector.broadcast %8 : vector<1x256xf32> to vector<32x256xf32>
    %131 = arith.mulf %129, %130 : vector<32x256xf32>
    %132 = vector.extract_strided_slice %5 {offsets = [0, 18], sizes = [32, 1], strides = [1, 1]} : vector<32x25xf32> to vector<32x1xf32>
    %133 = vector.broadcast %132 : vector<32x1xf32> to vector<32x256xf32>
    %134 = arith.mulf %131, %133 : vector<32x256xf32>
    %135 = arith.addf %128, %134 : vector<32x256xf32>
    %c0_37 = arith.constant 0 : index
    %c52 = arith.constant 52 : index
    %136 = vector.load %arg11[%c0_37, %c52] : memref<32x384xf32, #tpu.memory_space<vmem>>, vector<32x256xf32>
    %137 = vector.broadcast %9 : vector<1x256xf32> to vector<32x256xf32>
    %138 = arith.mulf %136, %137 : vector<32x256xf32>
    %139 = vector.extract_strided_slice %5 {offsets = [0, 19], sizes = [32, 1], strides = [1, 1]} : vector<32x25xf32> to vector<32x1xf32>
    %140 = vector.broadcast %139 : vector<32x1xf32> to vector<32x256xf32>
    %141 = arith.mulf %138, %140 : vector<32x256xf32>
    %142 = arith.addf %135, %141 : vector<32x256xf32>
    %c0_38 = arith.constant 0 : index
    %c64 = arith.constant 64 : index
    %143 = vector.load %arg11[%c0_38, %c64] : memref<32x384xf32, #tpu.memory_space<vmem>>, vector<32x256xf32>
    %144 = vector.broadcast %6 : vector<1x256xf32> to vector<32x256xf32>
    %145 = arith.mulf %143, %144 : vector<32x256xf32>
    %146 = vector.extract_strided_slice %5 {offsets = [0, 20], sizes = [32, 1], strides = [1, 1]} : vector<32x25xf32> to vector<32x1xf32>
    %147 = vector.broadcast %146 : vector<32x1xf32> to vector<32x256xf32>
    %148 = arith.mulf %145, %147 : vector<32x256xf32>
    %149 = arith.addf %142, %148 : vector<32x256xf32>
    %c0_39 = arith.constant 0 : index
    %c65 = arith.constant 65 : index
    %150 = vector.load %arg11[%c0_39, %c65] : memref<32x384xf32, #tpu.memory_space<vmem>>, vector<32x256xf32>
    %151 = vector.broadcast %7 : vector<1x256xf32> to vector<32x256xf32>
    %152 = arith.mulf %150, %151 : vector<32x256xf32>
    %153 = vector.extract_strided_slice %5 {offsets = [0, 21], sizes = [32, 1], strides = [1, 1]} : vector<32x25xf32> to vector<32x1xf32>
    %154 = vector.broadcast %153 : vector<32x1xf32> to vector<32x256xf32>
    %155 = arith.mulf %152, %154 : vector<32x256xf32>
    %156 = arith.addf %149, %155 : vector<32x256xf32>
    %c0_40 = arith.constant 0 : index
    %c66 = arith.constant 66 : index
    %157 = vector.load %arg11[%c0_40, %c66] : memref<32x384xf32, #tpu.memory_space<vmem>>, vector<32x256xf32>
    %158 = vector.extract_strided_slice %5 {offsets = [0, 22], sizes = [32, 1], strides = [1, 1]} : vector<32x25xf32> to vector<32x1xf32>
    %159 = vector.broadcast %158 : vector<32x1xf32> to vector<32x256xf32>
    %160 = arith.mulf %157, %159 : vector<32x256xf32>
    %161 = arith.addf %156, %160 : vector<32x256xf32>
    %c0_41 = arith.constant 0 : index
    %c67 = arith.constant 67 : index
    %162 = vector.load %arg11[%c0_41, %c67] : memref<32x384xf32, #tpu.memory_space<vmem>>, vector<32x256xf32>
    %163 = vector.broadcast %8 : vector<1x256xf32> to vector<32x256xf32>
    %164 = arith.mulf %162, %163 : vector<32x256xf32>
    %165 = vector.extract_strided_slice %5 {offsets = [0, 23], sizes = [32, 1], strides = [1, 1]} : vector<32x25xf32> to vector<32x1xf32>
    %166 = vector.broadcast %165 : vector<32x1xf32> to vector<32x256xf32>
    %167 = arith.mulf %164, %166 : vector<32x256xf32>
    %168 = arith.addf %161, %167 : vector<32x256xf32>
    %c0_42 = arith.constant 0 : index
    %c68 = arith.constant 68 : index
    %169 = vector.load %arg11[%c0_42, %c68] : memref<32x384xf32, #tpu.memory_space<vmem>>, vector<32x256xf32>
    %170 = vector.broadcast %9 : vector<1x256xf32> to vector<32x256xf32>
    %171 = arith.mulf %169, %170 : vector<32x256xf32>
    %172 = vector.extract_strided_slice %5 {offsets = [0, 24], sizes = [32, 1], strides = [1, 1]} : vector<32x25xf32> to vector<32x1xf32>
    %173 = vector.broadcast %172 : vector<32x1xf32> to vector<32x256xf32>
    %174 = arith.mulf %171, %173 : vector<32x256xf32>
    %175 = arith.addf %168, %174 : vector<32x256xf32>
    %c0_43 = arith.constant 0 : index
    %c0_44 = arith.constant 0 : index
    %176 = vector.load %arg5[%c0_43, %c0_44] : memref<32x1xf32, #tpu.memory_space<vmem>>, vector<32x1xf32>
    %177 = vector.broadcast %176 : vector<32x1xf32> to vector<32x256xf32>
    %178 = arith.addf %175, %177 : vector<32x256xf32>
    %cst_45 = arith.constant 0.000000e+00 : f32
    %179 = vector.broadcast %cst_45 : f32 to vector<32x640xf32>
    %c0_46 = arith.constant 0 : index
    %c0_47 = arith.constant 0 : index
    %180 = vector.load %arg12[%c0_46, %c0_47] : memref<32x640xf32, #tpu.memory_space<vmem>>, vector<32x640xf32>
    tpu.vector_store %arg12[%c0_46, %c0_47], %179 {strides = array<i32>} : memref<32x640xf32, #tpu.memory_space<vmem>>, vector<32x640xf32>,
    %c0_48 = arith.constant 0 : index
    %c153 = arith.constant 153 : index
    %181 = vector.load %arg12[%c0_48, %c153] : memref<32x640xf32, #tpu.memory_space<vmem>>, vector<32x256xf32>
    tpu.vector_store %arg12[%c0_48, %c153], %178 {strides = array<i32>} : memref<32x640xf32, #tpu.memory_space<vmem>>, vector<32x256xf32>,
    %c0_49 = arith.constant 0 : index
    %c0_50 = arith.constant 0 : index
    %182 = vector.load %arg6[%c0_49, %c0_50] : memref<32x49xf32, #tpu.memory_space<vmem>>, vector<32x49xf32>
    %c0_51 = arith.constant 0 : index
    %c0_52 = arith.constant 0 : index
    %183 = vector.load %arg3[%c0_51, %c0_52] : memref<7x256xf32, #tpu.memory_space<vmem>>, vector<1x256xf32>
    %c1_53 = arith.constant 1 : index
    %c0_54 = arith.constant 0 : index
    %184 = vector.load %arg3[%c1_53, %c0_54] : memref<7x256xf32, #tpu.memory_space<vmem>>, vector<1x256xf32>
    %c2_55 = arith.constant 2 : index
    %c0_56 = arith.constant 0 : index
    %185 = vector.load %arg3[%c2_55, %c0_56] : memref<7x256xf32, #tpu.memory_space<vmem>>, vector<1x256xf32>
    %c4_57 = arith.constant 4 : index
    %c0_58 = arith.constant 0 : index
    %186 = vector.load %arg3[%c4_57, %c0_58] : memref<7x256xf32, #tpu.memory_space<vmem>>, vector<1x256xf32>
    %c5 = arith.constant 5 : index
    %c0_59 = arith.constant 0 : index
    %187 = vector.load %arg3[%c5, %c0_59] : memref<7x256xf32, #tpu.memory_space<vmem>>, vector<1x256xf32>
    %c6 = arith.constant 6 : index
    %c0_60 = arith.constant 0 : index
    %188 = vector.load %arg3[%c6, %c0_60] : memref<7x256xf32, #tpu.memory_space<vmem>>, vector<1x256xf32>
    %cst_61 = arith.constant 0.000000e+00 : f32
    %189 = vector.broadcast %cst_61 : f32 to vector<32x256xf32>
    %c0_62 = arith.constant 0 : index
    %c0_63 = arith.constant 0 : index
    %190 = vector.load %arg12[%c0_62, %c0_63] : memref<32x640xf32, #tpu.memory_space<vmem>>, vector<32x256xf32>
    %191 = vector.broadcast %183 : vector<1x256xf32> to vector<32x256xf32>
    %192 = arith.mulf %190, %191 : vector<32x256xf32>
    %193 = vector.extract_strided_slice %182 {offsets = [0, 0], sizes = [32, 1], strides = [1, 1]} : vector<32x49xf32> to vector<32x1xf32>
    %194 = vector.broadcast %193 : vector<32x1xf32> to vector<32x256xf32>
    %195 = arith.mulf %192, %194 : vector<32x256xf32>
    %196 = arith.addf %189, %195 : vector<32x256xf32>
    %c0_64 = arith.constant 0 : index
    %c3_65 = arith.constant 3 : index
    %197 = vector.load %arg12[%c0_64, %c3_65] : memref<32x640xf32, #tpu.memory_space<vmem>>, vector<32x256xf32>
    %198 = vector.broadcast %184 : vector<1x256xf32> to vector<32x256xf32>
    %199 = arith.mulf %197, %198 : vector<32x256xf32>
    %200 = vector.extract_strided_slice %182 {offsets = [0, 1], sizes = [32, 1], strides = [1, 1]} : vector<32x49xf32> to vector<32x1xf32>
    %201 = vector.broadcast %200 : vector<32x1xf32> to vector<32x256xf32>
    %202 = arith.mulf %199, %201 : vector<32x256xf32>
    %203 = arith.addf %196, %202 : vector<32x256xf32>
    %c0_66 = arith.constant 0 : index
    %c6_67 = arith.constant 6 : index
    %204 = vector.load %arg12[%c0_66, %c6_67] : memref<32x640xf32, #tpu.memory_space<vmem>>, vector<32x256xf32>
    %205 = vector.broadcast %185 : vector<1x256xf32> to vector<32x256xf32>
    %206 = arith.mulf %204, %205 : vector<32x256xf32>
    %207 = vector.extract_strided_slice %182 {offsets = [0, 2], sizes = [32, 1], strides = [1, 1]} : vector<32x49xf32> to vector<32x1xf32>
    %208 = vector.broadcast %207 : vector<32x1xf32> to vector<32x256xf32>
    %209 = arith.mulf %206, %208 : vector<32x256xf32>
    %210 = arith.addf %203, %209 : vector<32x256xf32>
    %c0_68 = arith.constant 0 : index
    %c9 = arith.constant 9 : index
    %211 = vector.load %arg12[%c0_68, %c9] : memref<32x640xf32, #tpu.memory_space<vmem>>, vector<32x256xf32>
    %212 = vector.extract_strided_slice %182 {offsets = [0, 3], sizes = [32, 1], strides = [1, 1]} : vector<32x49xf32> to vector<32x1xf32>
    %213 = vector.broadcast %212 : vector<32x1xf32> to vector<32x256xf32>
    %214 = arith.mulf %211, %213 : vector<32x256xf32>
    %215 = arith.addf %210, %214 : vector<32x256xf32>
    %c0_69 = arith.constant 0 : index
    %c12 = arith.constant 12 : index
    %216 = vector.load %arg12[%c0_69, %c12] : memref<32x640xf32, #tpu.memory_space<vmem>>, vector<32x256xf32>
    %217 = vector.broadcast %186 : vector<1x256xf32> to vector<32x256xf32>
    %218 = arith.mulf %216, %217 : vector<32x256xf32>
    %219 = vector.extract_strided_slice %182 {offsets = [0, 4], sizes = [32, 1], strides = [1, 1]} : vector<32x49xf32> to vector<32x1xf32>
    %220 = vector.broadcast %219 : vector<32x1xf32> to vector<32x256xf32>
    %221 = arith.mulf %218, %220 : vector<32x256xf32>
    %222 = arith.addf %215, %221 : vector<32x256xf32>
    %c0_70 = arith.constant 0 : index
    %c15 = arith.constant 15 : index
    %223 = vector.load %arg12[%c0_70, %c15] : memref<32x640xf32, #tpu.memory_space<vmem>>, vector<32x256xf32>
    %224 = vector.broadcast %187 : vector<1x256xf32> to vector<32x256xf32>
    %225 = arith.mulf %223, %224 : vector<32x256xf32>
    %226 = vector.extract_strided_slice %182 {offsets = [0, 5], sizes = [32, 1], strides = [1, 1]} : vector<32x49xf32> to vector<32x1xf32>
    %227 = vector.broadcast %226 : vector<32x1xf32> to vector<32x256xf32>
    %228 = arith.mulf %225, %227 : vector<32x256xf32>
    %229 = arith.addf %222, %228 : vector<32x256xf32>
    %c0_71 = arith.constant 0 : index
    %c18_72 = arith.constant 18 : index
    %230 = vector.load %arg12[%c0_71, %c18_72] : memref<32x640xf32, #tpu.memory_space<vmem>>, vector<32x256xf32>
    %231 = vector.broadcast %188 : vector<1x256xf32> to vector<32x256xf32>
    %232 = arith.mulf %230, %231 : vector<32x256xf32>
    %233 = vector.extract_strided_slice %182 {offsets = [0, 6], sizes = [32, 1], strides = [1, 1]} : vector<32x49xf32> to vector<32x1xf32>
    %234 = vector.broadcast %233 : vector<32x1xf32> to vector<32x256xf32>
    %235 = arith.mulf %232, %234 : vector<32x256xf32>
    %236 = arith.addf %229, %235 : vector<32x256xf32>
    %c0_73 = arith.constant 0 : index
    %c48_74 = arith.constant 48 : index
    %237 = vector.load %arg12[%c0_73, %c48_74] : memref<32x640xf32, #tpu.memory_space<vmem>>, vector<32x256xf32>
    %238 = vector.broadcast %183 : vector<1x256xf32> to vector<32x256xf32>
    %239 = arith.mulf %237, %238 : vector<32x256xf32>
    %240 = vector.extract_strided_slice %182 {offsets = [0, 7], sizes = [32, 1], strides = [1, 1]} : vector<32x49xf32> to vector<32x1xf32>
    %241 = vector.broadcast %240 : vector<32x1xf32> to vector<32x256xf32>
    %242 = arith.mulf %239, %241 : vector<32x256xf32>
    %243 = arith.addf %236, %242 : vector<32x256xf32>
    %c0_75 = arith.constant 0 : index
    %c51_76 = arith.constant 51 : index
    %244 = vector.load %arg12[%c0_75, %c51_76] : memref<32x640xf32, #tpu.memory_space<vmem>>, vector<32x256xf32>
    %245 = vector.broadcast %184 : vector<1x256xf32> to vector<32x256xf32>
    %246 = arith.mulf %244, %245 : vector<32x256xf32>
    %247 = vector.extract_strided_slice %182 {offsets = [0, 8], sizes = [32, 1], strides = [1, 1]} : vector<32x49xf32> to vector<32x1xf32>
    %248 = vector.broadcast %247 : vector<32x1xf32> to vector<32x256xf32>
    %249 = arith.mulf %246, %248 : vector<32x256xf32>
    %250 = arith.addf %243, %249 : vector<32x256xf32>
    %c0_77 = arith.constant 0 : index
    %c54 = arith.constant 54 : index
    %251 = vector.load %arg12[%c0_77, %c54] : memref<32x640xf32, #tpu.memory_space<vmem>>, vector<32x256xf32>
    %252 = vector.broadcast %185 : vector<1x256xf32> to vector<32x256xf32>
    %253 = arith.mulf %251, %252 : vector<32x256xf32>
    %254 = vector.extract_strided_slice %182 {offsets = [0, 9], sizes = [32, 1], strides = [1, 1]} : vector<32x49xf32> to vector<32x1xf32>
    %255 = vector.broadcast %254 : vector<32x1xf32> to vector<32x256xf32>
    %256 = arith.mulf %253, %255 : vector<32x256xf32>
    %257 = arith.addf %250, %256 : vector<32x256xf32>
    %c0_78 = arith.constant 0 : index
    %c57 = arith.constant 57 : index
    %258 = vector.load %arg12[%c0_78, %c57] : memref<32x640xf32, #tpu.memory_space<vmem>>, vector<32x256xf32>
    %259 = vector.extract_strided_slice %182 {offsets = [0, 10], sizes = [32, 1], strides = [1, 1]} : vector<32x49xf32> to vector<32x1xf32>
    %260 = vector.broadcast %259 : vector<32x1xf32> to vector<32x256xf32>
    %261 = arith.mulf %258, %260 : vector<32x256xf32>
    %262 = arith.addf %257, %261 : vector<32x256xf32>
    %c0_79 = arith.constant 0 : index
    %c60 = arith.constant 60 : index
    %263 = vector.load %arg12[%c0_79, %c60] : memref<32x640xf32, #tpu.memory_space<vmem>>, vector<32x256xf32>
    %264 = vector.broadcast %186 : vector<1x256xf32> to vector<32x256xf32>
    %265 = arith.mulf %263, %264 : vector<32x256xf32>
    %266 = vector.extract_strided_slice %182 {offsets = [0, 11], sizes = [32, 1], strides = [1, 1]} : vector<32x49xf32> to vector<32x1xf32>
    %267 = vector.broadcast %266 : vector<32x1xf32> to vector<32x256xf32>
    %268 = arith.mulf %265, %267 : vector<32x256xf32>
    %269 = arith.addf %262, %268 : vector<32x256xf32>
    %c0_80 = arith.constant 0 : index
    %c63 = arith.constant 63 : index
    %270 = vector.load %arg12[%c0_80, %c63] : memref<32x640xf32, #tpu.memory_space<vmem>>, vector<32x256xf32>
    %271 = vector.broadcast %187 : vector<1x256xf32> to vector<32x256xf32>
    %272 = arith.mulf %270, %271 : vector<32x256xf32>
    %273 = vector.extract_strided_slice %182 {offsets = [0, 12], sizes = [32, 1], strides = [1, 1]} : vector<32x49xf32> to vector<32x1xf32>
    %274 = vector.broadcast %273 : vector<32x1xf32> to vector<32x256xf32>
    %275 = arith.mulf %272, %274 : vector<32x256xf32>
    %276 = arith.addf %269, %275 : vector<32x256xf32>
    %c0_81 = arith.constant 0 : index
    %c66_82 = arith.constant 66 : index
    %277 = vector.load %arg12[%c0_81, %c66_82] : memref<32x640xf32, #tpu.memory_space<vmem>>, vector<32x256xf32>
    %278 = vector.broadcast %188 : vector<1x256xf32> to vector<32x256xf32>
    %279 = arith.mulf %277, %278 : vector<32x256xf32>
    %280 = vector.extract_strided_slice %182 {offsets = [0, 13], sizes = [32, 1], strides = [1, 1]} : vector<32x49xf32> to vector<32x1xf32>
    %281 = vector.broadcast %280 : vector<32x1xf32> to vector<32x256xf32>
    %282 = arith.mulf %279, %281 : vector<32x256xf32>
    %283 = arith.addf %276, %282 : vector<32x256xf32>
    %c0_83 = arith.constant 0 : index
    %c96 = arith.constant 96 : index
    %284 = vector.load %arg12[%c0_83, %c96] : memref<32x640xf32, #tpu.memory_space<vmem>>, vector<32x256xf32>
    %285 = vector.broadcast %183 : vector<1x256xf32> to vector<32x256xf32>
    %286 = arith.mulf %284, %285 : vector<32x256xf32>
    %287 = vector.extract_strided_slice %182 {offsets = [0, 14], sizes = [32, 1], strides = [1, 1]} : vector<32x49xf32> to vector<32x1xf32>
    %288 = vector.broadcast %287 : vector<32x1xf32> to vector<32x256xf32>
    %289 = arith.mulf %286, %288 : vector<32x256xf32>
    %290 = arith.addf %283, %289 : vector<32x256xf32>
    %c0_84 = arith.constant 0 : index
    %c99 = arith.constant 99 : index
    %291 = vector.load %arg12[%c0_84, %c99] : memref<32x640xf32, #tpu.memory_space<vmem>>, vector<32x256xf32>
    %292 = vector.broadcast %184 : vector<1x256xf32> to vector<32x256xf32>
    %293 = arith.mulf %291, %292 : vector<32x256xf32>
    %294 = vector.extract_strided_slice %182 {offsets = [0, 15], sizes = [32, 1], strides = [1, 1]} : vector<32x49xf32> to vector<32x1xf32>
    %295 = vector.broadcast %294 : vector<32x1xf32> to vector<32x256xf32>
    %296 = arith.mulf %293, %295 : vector<32x256xf32>
    %297 = arith.addf %290, %296 : vector<32x256xf32>
    %c0_85 = arith.constant 0 : index
    %c102 = arith.constant 102 : index
    %298 = vector.load %arg12[%c0_85, %c102] : memref<32x640xf32, #tpu.memory_space<vmem>>, vector<32x256xf32>
    %299 = vector.broadcast %185 : vector<1x256xf32> to vector<32x256xf32>
    %300 = arith.mulf %298, %299 : vector<32x256xf32>
    %301 = vector.extract_strided_slice %182 {offsets = [0, 16], sizes = [32, 1], strides = [1, 1]} : vector<32x49xf32> to vector<32x1xf32>
    %302 = vector.broadcast %301 : vector<32x1xf32> to vector<32x256xf32>
    %303 = arith.mulf %300, %302 : vector<32x256xf32>
    %304 = arith.addf %297, %303 : vector<32x256xf32>
    %c0_86 = arith.constant 0 : index
    %c105 = arith.constant 105 : index
    %305 = vector.load %arg12[%c0_86, %c105] : memref<32x640xf32, #tpu.memory_space<vmem>>, vector<32x256xf32>
    %306 = vector.extract_strided_slice %182 {offsets = [0, 17], sizes = [32, 1], strides = [1, 1]} : vector<32x49xf32> to vector<32x1xf32>
    %307 = vector.broadcast %306 : vector<32x1xf32> to vector<32x256xf32>
    %308 = arith.mulf %305, %307 : vector<32x256xf32>
    %309 = arith.addf %304, %308 : vector<32x256xf32>
    %c0_87 = arith.constant 0 : index
    %c108 = arith.constant 108 : index
    %310 = vector.load %arg12[%c0_87, %c108] : memref<32x640xf32, #tpu.memory_space<vmem>>, vector<32x256xf32>
    %311 = vector.broadcast %186 : vector<1x256xf32> to vector<32x256xf32>
    %312 = arith.mulf %310, %311 : vector<32x256xf32>
    %313 = vector.extract_strided_slice %182 {offsets = [0, 18], sizes = [32, 1], strides = [1, 1]} : vector<32x49xf32> to vector<32x1xf32>
    %314 = vector.broadcast %313 : vector<32x1xf32> to vector<32x256xf32>
    %315 = arith.mulf %312, %314 : vector<32x256xf32>
    %316 = arith.addf %309, %315 : vector<32x256xf32>
    %c0_88 = arith.constant 0 : index
    %c111 = arith.constant 111 : index
    %317 = vector.load %arg12[%c0_88, %c111] : memref<32x640xf32, #tpu.memory_space<vmem>>, vector<32x256xf32>
    %318 = vector.broadcast %187 : vector<1x256xf32> to vector<32x256xf32>
    %319 = arith.mulf %317, %318 : vector<32x256xf32>
    %320 = vector.extract_strided_slice %182 {offsets = [0, 19], sizes = [32, 1], strides = [1, 1]} : vector<32x49xf32> to vector<32x1xf32>
    %321 = vector.broadcast %320 : vector<32x1xf32> to vector<32x256xf32>
    %322 = arith.mulf %319, %321 : vector<32x256xf32>
    %323 = arith.addf %316, %322 : vector<32x256xf32>
    %c0_89 = arith.constant 0 : index
    %c114 = arith.constant 114 : index
    %324 = vector.load %arg12[%c0_89, %c114] : memref<32x640xf32, #tpu.memory_space<vmem>>, vector<32x256xf32>
    %325 = vector.broadcast %188 : vector<1x256xf32> to vector<32x256xf32>
    %326 = arith.mulf %324, %325 : vector<32x256xf32>
    %327 = vector.extract_strided_slice %182 {offsets = [0, 20], sizes = [32, 1], strides = [1, 1]} : vector<32x49xf32> to vector<32x1xf32>
    %328 = vector.broadcast %327 : vector<32x1xf32> to vector<32x256xf32>
    %329 = arith.mulf %326, %328 : vector<32x256xf32>
    %330 = arith.addf %323, %329 : vector<32x256xf32>
    %c0_90 = arith.constant 0 : index
    %c144 = arith.constant 144 : index
    %331 = vector.load %arg12[%c0_90, %c144] : memref<32x640xf32, #tpu.memory_space<vmem>>, vector<32x256xf32>
    %332 = vector.broadcast %183 : vector<1x256xf32> to vector<32x256xf32>
    %333 = arith.mulf %331, %332 : vector<32x256xf32>
    %334 = vector.extract_strided_slice %182 {offsets = [0, 21], sizes = [32, 1], strides = [1, 1]} : vector<32x49xf32> to vector<32x1xf32>
    %335 = vector.broadcast %334 : vector<32x1xf32> to vector<32x256xf32>
    %336 = arith.mulf %333, %335 : vector<32x256xf32>
    %337 = arith.addf %330, %336 : vector<32x256xf32>
    %c0_91 = arith.constant 0 : index
    %c147 = arith.constant 147 : index
    %338 = vector.load %arg12[%c0_91, %c147] : memref<32x640xf32, #tpu.memory_space<vmem>>, vector<32x256xf32>
    %339 = vector.broadcast %184 : vector<1x256xf32> to vector<32x256xf32>
    %340 = arith.mulf %338, %339 : vector<32x256xf32>
    %341 = vector.extract_strided_slice %182 {offsets = [0, 22], sizes = [32, 1], strides = [1, 1]} : vector<32x49xf32> to vector<32x1xf32>
    %342 = vector.broadcast %341 : vector<32x1xf32> to vector<32x256xf32>
    %343 = arith.mulf %340, %342 : vector<32x256xf32>
    %344 = arith.addf %337, %343 : vector<32x256xf32>
    %c0_92 = arith.constant 0 : index
    %c150 = arith.constant 150 : index
    %345 = vector.load %arg12[%c0_92, %c150] : memref<32x640xf32, #tpu.memory_space<vmem>>, vector<32x256xf32>
    %346 = vector.broadcast %185 : vector<1x256xf32> to vector<32x256xf32>
    %347 = arith.mulf %345, %346 : vector<32x256xf32>
    %348 = vector.extract_strided_slice %182 {offsets = [0, 23], sizes = [32, 1], strides = [1, 1]} : vector<32x49xf32> to vector<32x1xf32>
    %349 = vector.broadcast %348 : vector<32x1xf32> to vector<32x256xf32>
    %350 = arith.mulf %347, %349 : vector<32x256xf32>
    %351 = arith.addf %344, %350 : vector<32x256xf32>
    %c0_93 = arith.constant 0 : index
    %c153_94 = arith.constant 153 : index
    %352 = vector.load %arg12[%c0_93, %c153_94] : memref<32x640xf32, #tpu.memory_space<vmem>>, vector<32x256xf32>
    %353 = vector.extract_strided_slice %182 {offsets = [0, 24], sizes = [32, 1], strides = [1, 1]} : vector<32x49xf32> to vector<32x1xf32>
    %354 = vector.broadcast %353 : vector<32x1xf32> to vector<32x256xf32>
    %355 = arith.mulf %352, %354 : vector<32x256xf32>
    %356 = arith.addf %351, %355 : vector<32x256xf32>
    %c0_95 = arith.constant 0 : index
    %c156 = arith.constant 156 : index
    %357 = vector.load %arg12[%c0_95, %c156] : memref<32x640xf32, #tpu.memory_space<vmem>>, vector<32x256xf32>
    %358 = vector.broadcast %186 : vector<1x256xf32> to vector<32x256xf32>
    %359 = arith.mulf %357, %358 : vector<32x256xf32>
    %360 = vector.extract_strided_slice %182 {offsets = [0, 25], sizes = [32, 1], strides = [1, 1]} : vector<32x49xf32> to vector<32x1xf32>
    %361 = vector.broadcast %360 : vector<32x1xf32> to vector<32x256xf32>
    %362 = arith.mulf %359, %361 : vector<32x256xf32>
    %363 = arith.addf %356, %362 : vector<32x256xf32>
    %c0_96 = arith.constant 0 : index
    %c159 = arith.constant 159 : index
    %364 = vector.load %arg12[%c0_96, %c159] : memref<32x640xf32, #tpu.memory_space<vmem>>, vector<32x256xf32>
    %365 = vector.broadcast %187 : vector<1x256xf32> to vector<32x256xf32>
    %366 = arith.mulf %364, %365 : vector<32x256xf32>
    %367 = vector.extract_strided_slice %182 {offsets = [0, 26], sizes = [32, 1], strides = [1, 1]} : vector<32x49xf32> to vector<32x1xf32>
    %368 = vector.broadcast %367 : vector<32x1xf32> to vector<32x256xf32>
    %369 = arith.mulf %366, %368 : vector<32x256xf32>
    %370 = arith.addf %363, %369 : vector<32x256xf32>
    %c0_97 = arith.constant 0 : index
    %c162 = arith.constant 162 : index
    %371 = vector.load %arg12[%c0_97, %c162] : memref<32x640xf32, #tpu.memory_space<vmem>>, vector<32x256xf32>
    %372 = vector.broadcast %188 : vector<1x256xf32> to vector<32x256xf32>
    %373 = arith.mulf %371, %372 : vector<32x256xf32>
    %374 = vector.extract_strided_slice %182 {offsets = [0, 27], sizes = [32, 1], strides = [1, 1]} : vector<32x49xf32> to vector<32x1xf32>
    %375 = vector.broadcast %374 : vector<32x1xf32> to vector<32x256xf32>
    %376 = arith.mulf %373, %375 : vector<32x256xf32>
    %377 = arith.addf %370, %376 : vector<32x256xf32>
    %c0_98 = arith.constant 0 : index
    %c192 = arith.constant 192 : index
    %378 = vector.load %arg12[%c0_98, %c192] : memref<32x640xf32, #tpu.memory_space<vmem>>, vector<32x256xf32>
    %379 = vector.broadcast %183 : vector<1x256xf32> to vector<32x256xf32>
    %380 = arith.mulf %378, %379 : vector<32x256xf32>
    %381 = vector.extract_strided_slice %182 {offsets = [0, 28], sizes = [32, 1], strides = [1, 1]} : vector<32x49xf32> to vector<32x1xf32>
    %382 = vector.broadcast %381 : vector<32x1xf32> to vector<32x256xf32>
    %383 = arith.mulf %380, %382 : vector<32x256xf32>
    %384 = arith.addf %377, %383 : vector<32x256xf32>
    %c0_99 = arith.constant 0 : index
    %c195 = arith.constant 195 : index
    %385 = vector.load %arg12[%c0_99, %c195] : memref<32x640xf32, #tpu.memory_space<vmem>>, vector<32x256xf32>
    %386 = vector.broadcast %184 : vector<1x256xf32> to vector<32x256xf32>
    %387 = arith.mulf %385, %386 : vector<32x256xf32>
    %388 = vector.extract_strided_slice %182 {offsets = [0, 29], sizes = [32, 1], strides = [1, 1]} : vector<32x49xf32> to vector<32x1xf32>
    %389 = vector.broadcast %388 : vector<32x1xf32> to vector<32x256xf32>
    %390 = arith.mulf %387, %389 : vector<32x256xf32>
    %391 = arith.addf %384, %390 : vector<32x256xf32>
    %c0_100 = arith.constant 0 : index
    %c198 = arith.constant 198 : index
    %392 = vector.load %arg12[%c0_100, %c198] : memref<32x640xf32, #tpu.memory_space<vmem>>, vector<32x256xf32>
    %393 = vector.broadcast %185 : vector<1x256xf32> to vector<32x256xf32>
    %394 = arith.mulf %392, %393 : vector<32x256xf32>
    %395 = vector.extract_strided_slice %182 {offsets = [0, 30], sizes = [32, 1], strides = [1, 1]} : vector<32x49xf32> to vector<32x1xf32>
    %396 = vector.broadcast %395 : vector<32x1xf32> to vector<32x256xf32>
    %397 = arith.mulf %394, %396 : vector<32x256xf32>
    %398 = arith.addf %391, %397 : vector<32x256xf32>
    %c0_101 = arith.constant 0 : index
    %c201 = arith.constant 201 : index
    %399 = vector.load %arg12[%c0_101, %c201] : memref<32x640xf32, #tpu.memory_space<vmem>>, vector<32x256xf32>
    %400 = vector.extract_strided_slice %182 {offsets = [0, 31], sizes = [32, 1], strides = [1, 1]} : vector<32x49xf32> to vector<32x1xf32>
    %401 = vector.broadcast %400 : vector<32x1xf32> to vector<32x256xf32>
    %402 = arith.mulf %399, %401 : vector<32x256xf32>
    %403 = arith.addf %398, %402 : vector<32x256xf32>
    %c0_102 = arith.constant 0 : index
    %c204 = arith.constant 204 : index
    %404 = vector.load %arg12[%c0_102, %c204] : memref<32x640xf32, #tpu.memory_space<vmem>>, vector<32x256xf32>
    %405 = vector.broadcast %186 : vector<1x256xf32> to vector<32x256xf32>
    %406 = arith.mulf %404, %405 : vector<32x256xf32>
    %407 = vector.extract_strided_slice %182 {offsets = [0, 32], sizes = [32, 1], strides = [1, 1]} : vector<32x49xf32> to vector<32x1xf32>
    %408 = vector.broadcast %407 : vector<32x1xf32> to vector<32x256xf32>
    %409 = arith.mulf %406, %408 : vector<32x256xf32>
    %410 = arith.addf %403, %409 : vector<32x256xf32>
    %c0_103 = arith.constant 0 : index
    %c207 = arith.constant 207 : index
    %411 = vector.load %arg12[%c0_103, %c207] : memref<32x640xf32, #tpu.memory_space<vmem>>, vector<32x256xf32>
    %412 = vector.broadcast %187 : vector<1x256xf32> to vector<32x256xf32>
    %413 = arith.mulf %411, %412 : vector<32x256xf32>
    %414 = vector.extract_strided_slice %182 {offsets = [0, 33], sizes = [32, 1], strides = [1, 1]} : vector<32x49xf32> to vector<32x1xf32>
    %415 = vector.broadcast %414 : vector<32x1xf32> to vector<32x256xf32>
    %416 = arith.mulf %413, %415 : vector<32x256xf32>
    %417 = arith.addf %410, %416 : vector<32x256xf32>
    %c0_104 = arith.constant 0 : index
    %c210 = arith.constant 210 : index
    %418 = vector.load %arg12[%c0_104, %c210] : memref<32x640xf32, #tpu.memory_space<vmem>>, vector<32x256xf32>
    %419 = vector.broadcast %188 : vector<1x256xf32> to vector<32x256xf32>
    %420 = arith.mulf %418, %419 : vector<32x256xf32>
    %421 = vector.extract_strided_slice %182 {offsets = [0, 34], sizes = [32, 1], strides = [1, 1]} : vector<32x49xf32> to vector<32x1xf32>
    %422 = vector.broadcast %421 : vector<32x1xf32> to vector<32x256xf32>
    %423 = arith.mulf %420, %422 : vector<32x256xf32>
    %424 = arith.addf %417, %423 : vector<32x256xf32>
    %c0_105 = arith.constant 0 : index
    %c240 = arith.constant 240 : index
    %425 = vector.load %arg12[%c0_105, %c240] : memref<32x640xf32, #tpu.memory_space<vmem>>, vector<32x256xf32>
    %426 = vector.broadcast %183 : vector<1x256xf32> to vector<32x256xf32>
    %427 = arith.mulf %425, %426 : vector<32x256xf32>
    %428 = vector.extract_strided_slice %182 {offsets = [0, 35], sizes = [32, 1], strides = [1, 1]} : vector<32x49xf32> to vector<32x1xf32>
    %429 = vector.broadcast %428 : vector<32x1xf32> to vector<32x256xf32>
    %430 = arith.mulf %427, %429 : vector<32x256xf32>
    %431 = arith.addf %424, %430 : vector<32x256xf32>
    %c0_106 = arith.constant 0 : index
    %c243 = arith.constant 243 : index
    %432 = vector.load %arg12[%c0_106, %c243] : memref<32x640xf32, #tpu.memory_space<vmem>>, vector<32x256xf32>
    %433 = vector.broadcast %184 : vector<1x256xf32> to vector<32x256xf32>
    %434 = arith.mulf %432, %433 : vector<32x256xf32>
    %435 = vector.extract_strided_slice %182 {offsets = [0, 36], sizes = [32, 1], strides = [1, 1]} : vector<32x49xf32> to vector<32x1xf32>
    %436 = vector.broadcast %435 : vector<32x1xf32> to vector<32x256xf32>
    %437 = arith.mulf %434, %436 : vector<32x256xf32>
    %438 = arith.addf %431, %437 : vector<32x256xf32>
    %c0_107 = arith.constant 0 : index
    %c246 = arith.constant 246 : index
    %439 = vector.load %arg12[%c0_107, %c246] : memref<32x640xf32, #tpu.memory_space<vmem>>, vector<32x256xf32>
    %440 = vector.broadcast %185 : vector<1x256xf32> to vector<32x256xf32>
    %441 = arith.mulf %439, %440 : vector<32x256xf32>
    %442 = vector.extract_strided_slice %182 {offsets = [0, 37], sizes = [32, 1], strides = [1, 1]} : vector<32x49xf32> to vector<32x1xf32>
    %443 = vector.broadcast %442 : vector<32x1xf32> to vector<32x256xf32>
    %444 = arith.mulf %441, %443 : vector<32x256xf32>
    %445 = arith.addf %438, %444 : vector<32x256xf32>
    %c0_108 = arith.constant 0 : index
    %c249 = arith.constant 249 : index
    %446 = vector.load %arg12[%c0_108, %c249] : memref<32x640xf32, #tpu.memory_space<vmem>>, vector<32x256xf32>
    %447 = vector.extract_strided_slice %182 {offsets = [0, 38], sizes = [32, 1], strides = [1, 1]} : vector<32x49xf32> to vector<32x1xf32>
    %448 = vector.broadcast %447 : vector<32x1xf32> to vector<32x256xf32>
    %449 = arith.mulf %446, %448 : vector<32x256xf32>
    %450 = arith.addf %445, %449 : vector<32x256xf32>
    %c0_109 = arith.constant 0 : index
    %c252 = arith.constant 252 : index
    %451 = vector.load %arg12[%c0_109, %c252] : memref<32x640xf32, #tpu.memory_space<vmem>>, vector<32x256xf32>
    %452 = vector.broadcast %186 : vector<1x256xf32> to vector<32x256xf32>
    %453 = arith.mulf %451, %452 : vector<32x256xf32>
    %454 = vector.extract_strided_slice %182 {offsets = [0, 39], sizes = [32, 1], strides = [1, 1]} : vector<32x49xf32> to vector<32x1xf32>
    %455 = vector.broadcast %454 : vector<32x1xf32> to vector<32x256xf32>
    %456 = arith.mulf %453, %455 : vector<32x256xf32>
    %457 = arith.addf %450, %456 : vector<32x256xf32>
    %c0_110 = arith.constant 0 : index
    %c255 = arith.constant 255 : index
    %458 = vector.load %arg12[%c0_110, %c255] : memref<32x640xf32, #tpu.memory_space<vmem>>, vector<32x256xf32>
    %459 = vector.broadcast %187 : vector<1x256xf32> to vector<32x256xf32>
    %460 = arith.mulf %458, %459 : vector<32x256xf32>
    %461 = vector.extract_strided_slice %182 {offsets = [0, 40], sizes = [32, 1], strides = [1, 1]} : vector<32x49xf32> to vector<32x1xf32>
    %462 = vector.broadcast %461 : vector<32x1xf32> to vector<32x256xf32>
    %463 = arith.mulf %460, %462 : vector<32x256xf32>
    %464 = arith.addf %457, %463 : vector<32x256xf32>
    %c0_111 = arith.constant 0 : index
    %c258 = arith.constant 258 : index
    %465 = vector.load %arg12[%c0_111, %c258] : memref<32x640xf32, #tpu.memory_space<vmem>>, vector<32x256xf32>
    %466 = vector.broadcast %188 : vector<1x256xf32> to vector<32x256xf32>
    %467 = arith.mulf %465, %466 : vector<32x256xf32>
    %468 = vector.extract_strided_slice %182 {offsets = [0, 41], sizes = [32, 1], strides = [1, 1]} : vector<32x49xf32> to vector<32x1xf32>
    %469 = vector.broadcast %468 : vector<32x1xf32> to vector<32x256xf32>
    %470 = arith.mulf %467, %469 : vector<32x256xf32>
    %471 = arith.addf %464, %470 : vector<32x256xf32>
    %c0_112 = arith.constant 0 : index
    %c288 = arith.constant 288 : index
    %472 = vector.load %arg12[%c0_112, %c288] : memref<32x640xf32, #tpu.memory_space<vmem>>, vector<32x256xf32>
    %473 = vector.broadcast %183 : vector<1x256xf32> to vector<32x256xf32>
    %474 = arith.mulf %472, %473 : vector<32x256xf32>
    %475 = vector.extract_strided_slice %182 {offsets = [0, 42], sizes = [32, 1], strides = [1, 1]} : vector<32x49xf32> to vector<32x1xf32>
    %476 = vector.broadcast %475 : vector<32x1xf32> to vector<32x256xf32>
    %477 = arith.mulf %474, %476 : vector<32x256xf32>
    %478 = arith.addf %471, %477 : vector<32x256xf32>
    %c0_113 = arith.constant 0 : index
    %c291 = arith.constant 291 : index
    %479 = vector.load %arg12[%c0_113, %c291] : memref<32x640xf32, #tpu.memory_space<vmem>>, vector<32x256xf32>
    %480 = vector.broadcast %184 : vector<1x256xf32> to vector<32x256xf32>
    %481 = arith.mulf %479, %480 : vector<32x256xf32>
    %482 = vector.extract_strided_slice %182 {offsets = [0, 43], sizes = [32, 1], strides = [1, 1]} : vector<32x49xf32> to vector<32x1xf32>
    %483 = vector.broadcast %482 : vector<32x1xf32> to vector<32x256xf32>
    %484 = arith.mulf %481, %483 : vector<32x256xf32>
    %485 = arith.addf %478, %484 : vector<32x256xf32>
    %c0_114 = arith.constant 0 : index
    %c294 = arith.constant 294 : index
    %486 = vector.load %arg12[%c0_114, %c294] : memref<32x640xf32, #tpu.memory_space<vmem>>, vector<32x256xf32>
    %487 = vector.broadcast %185 : vector<1x256xf32> to vector<32x256xf32>
    %488 = arith.mulf %486, %487 : vector<32x256xf32>
    %489 = vector.extract_strided_slice %182 {offsets = [0, 44], sizes = [32, 1], strides = [1, 1]} : vector<32x49xf32> to vector<32x1xf32>
    %490 = vector.broadcast %489 : vector<32x1xf32> to vector<32x256xf32>
    %491 = arith.mulf %488, %490 : vector<32x256xf32>
    %492 = arith.addf %485, %491 : vector<32x256xf32>
    %c0_115 = arith.constant 0 : index
    %c297 = arith.constant 297 : index
    %493 = vector.load %arg12[%c0_115, %c297] : memref<32x640xf32, #tpu.memory_space<vmem>>, vector<32x256xf32>
    %494 = vector.extract_strided_slice %182 {offsets = [0, 45], sizes = [32, 1], strides = [1, 1]} : vector<32x49xf32> to vector<32x1xf32>
    %495 = vector.broadcast %494 : vector<32x1xf32> to vector<32x256xf32>
    %496 = arith.mulf %493, %495 : vector<32x256xf32>
    %497 = arith.addf %492, %496 : vector<32x256xf32>
    %c0_116 = arith.constant 0 : index
    %c300 = arith.constant 300 : index
    %498 = vector.load %arg12[%c0_116, %c300] : memref<32x640xf32, #tpu.memory_space<vmem>>, vector<32x256xf32>
    %499 = vector.broadcast %186 : vector<1x256xf32> to vector<32x256xf32>
    %500 = arith.mulf %498, %499 : vector<32x256xf32>
    %501 = vector.extract_strided_slice %182 {offsets = [0, 46], sizes = [32, 1], strides = [1, 1]} : vector<32x49xf32> to vector<32x1xf32>
    %502 = vector.broadcast %501 : vector<32x1xf32> to vector<32x256xf32>
    %503 = arith.mulf %500, %502 : vector<32x256xf32>
    %504 = arith.addf %497, %503 : vector<32x256xf32>
    %c0_117 = arith.constant 0 : index
    %c303 = arith.constant 303 : index
    %505 = vector.load %arg12[%c0_117, %c303] : memref<32x640xf32, #tpu.memory_space<vmem>>, vector<32x256xf32>
    %506 = vector.broadcast %187 : vector<1x256xf32> to vector<32x256xf32>
    %507 = arith.mulf %505, %506 : vector<32x256xf32>
    %508 = vector.extract_strided_slice %182 {offsets = [0, 47], sizes = [32, 1], strides = [1, 1]} : vector<32x49xf32> to vector<32x1xf32>
    %509 = vector.broadcast %508 : vector<32x1xf32> to vector<32x256xf32>
    %510 = arith.mulf %507, %509 : vector<32x256xf32>
    %511 = arith.addf %504, %510 : vector<32x256xf32>
    %c0_118 = arith.constant 0 : index
    %c306 = arith.constant 306 : index
    %512 = vector.load %arg12[%c0_118, %c306] : memref<32x640xf32, #tpu.memory_space<vmem>>, vector<32x256xf32>
    %513 = vector.broadcast %188 : vector<1x256xf32> to vector<32x256xf32>
    %514 = arith.mulf %512, %513 : vector<32x256xf32>
    %515 = vector.extract_strided_slice %182 {offsets = [0, 48], sizes = [32, 1], strides = [1, 1]} : vector<32x49xf32> to vector<32x1xf32>
    %516 = vector.broadcast %515 : vector<32x1xf32> to vector<32x256xf32>
    %517 = arith.mulf %514, %516 : vector<32x256xf32>
    %518 = arith.addf %511, %517 : vector<32x256xf32>
    %c0_119 = arith.constant 0 : index
    %c0_120 = arith.constant 0 : index
    %519 = vector.load %arg7[%c0_119, %c0_120] : memref<32x1xf32, #tpu.memory_space<vmem>>, vector<32x1xf32>
    %520 = vector.broadcast %519 : vector<32x1xf32> to vector<32x256xf32>
    %521 = arith.addf %518, %520 : vector<32x256xf32>
    %c0_121 = arith.constant 0 : index
    %c0_122 = arith.constant 0 : index
    %522 = vector.load %arg8[%c0_121, %c0_122] : memref<32x32xf32, #tpu.memory_space<vmem>>, vector<32x32xf32>
    %cst_123 = arith.constant dense<0.000000e+00> : vector<32x256xf32>
    %523 = tpu.matmul %522, %521, %cst_123 {dimension_numbers = #tpu.dot_dimension_numbers<[1], [0], [0], [1], [0, 0, 1, 1], [], []>} : vector<32x32xf32>, vector<32x256xf32>, vector<32x256xf32> -> vector<32x256xf32>
    %c0_124 = arith.constant 0 : index
    %c0_125 = arith.constant 0 : index
    %524 = vector.load %arg9[%c0_124, %c0_125] : memref<32x1xf32, #tpu.memory_space<vmem>>, vector<32x1xf32>
    %525 = vector.broadcast %524 : vector<32x1xf32> to vector<32x256xf32>
    %526 = arith.addf %523, %525 : vector<32x256xf32>
    %527 = arith.mulf %1, %526 : vector<32x256xf32>
    %c0_126 = arith.constant 0 : index
    %c0_127 = arith.constant 0 : index
    %c0_128 = arith.constant 0 : index
    %528 = vector.load %arg10[%c0_126, %c0_127, %c0_128] : memref<1x32x256xf32, #tpu.memory_space<vmem>>, vector<1x32x256xf32>
    %529 = vector.shape_cast %528 : vector<1x32x256xf32> to vector<32x256xf32>
    %530 = vector.shape_cast %527 : vector<32x256xf32> to vector<1x32x256xf32>
    tpu.vector_store %arg10[%c0_126, %c0_127, %c0_128], %530 {strides = array<i32>} : memref<1x32x256xf32, #tpu.memory_space<vmem>>, vector<1x32x256xf32>,
    return
  }
  func.func @transform_0(%arg0: i32) -> (i32, i32, i32) {
    %c0_i32 = arith.constant 0 : i32
    %c0_i32_0 = arith.constant 0 : i32
    %c0_i32_1 = arith.constant 0 : i32
    return %arg0, %c0_i32, %c0_i32_0 : i32, i32, i32
  }
  func.func @transform_1(%arg0: i32) -> (i32, i32) {
    %c0_i32 = arith.constant 0 : i32
    %c0_i32_0 = arith.constant 0 : i32
    %c0_i32_1 = arith.constant 0 : i32
    return %c0_i32, %c0_i32_0 : i32, i32
  }
  func.func @transform_2(%arg0: i32) -> (i32, i32) {
    %c0_i32 = arith.constant 0 : i32
    %c0_i32_0 = arith.constant 0 : i32
    %c0_i32_1 = arith.constant 0 : i32
    return %c0_i32, %c0_i32_0 : i32, i32
  }
  func.func @transform_3(%arg0: i32) -> (i32, i32) {
    %c0_i32 = arith.constant 0 : i32
    %c0_i32_0 = arith.constant 0 : i32
    %c0_i32_1 = arith.constant 0 : i32
    return %c0_i32, %c0_i32_0 : i32, i32
  }
  func.func @transform_4(%arg0: i32) -> (i32, i32) {
    %c0_i32 = arith.constant 0 : i32
    %c0_i32_0 = arith.constant 0 : i32
    %c0_i32_1 = arith.constant 0 : i32
    return %c0_i32, %c0_i32_0 : i32, i32
  }
  func.func @transform_5(%arg0: i32) -> (i32, i32) {
    %c0_i32 = arith.constant 0 : i32
    %c0_i32_0 = arith.constant 0 : i32
    %c0_i32_1 = arith.constant 0 : i32
    return %c0_i32, %c0_i32_0 : i32, i32
  }
  func.func @transform_6(%arg0: i32) -> (i32, i32) {
    %c0_i32 = arith.constant 0 : i32
    %c0_i32_0 = arith.constant 0 : i32
    %c0_i32_1 = arith.constant 0 : i32
    return %c0_i32, %c0_i32_0 : i32, i32
  }
  func.func @transform_7(%arg0: i32) -> (i32, i32) {
    %c0_i32 = arith.constant 0 : i32
    %c0_i32_0 = arith.constant 0 : i32
    %c0_i32_1 = arith.constant 0 : i32
    return %c0_i32, %c0_i32_0 : i32, i32
  }
  func.func @transform_8(%arg0: i32) -> (i32, i32) {
    %c0_i32 = arith.constant 0 : i32
    %c0_i32_0 = arith.constant 0 : i32
    %c0_i32_1 = arith.constant 0 : i32
    return %c0_i32, %c0_i32_0 : i32, i32
  }
  func.func @transform_9(%arg0: i32) -> (i32, i32, i32) {
    %c0_i32 = arith.constant 0 : i32
    %c0_i32_0 = arith.constant 0 : i32
    %c0_i32_1 = arith.constant 0 : i32
    return %arg0, %c0_i32, %c0_i32_0 : i32, i32, i32
  }
}

</mosaic_0001>

<llo_original>
// kernel: attention_module_forward.1
$region0: #{attention_module_forward.1}
  #allocation0 [shape = 'u32[]', space=smem, size = 0x4, offset = 0x4, fixed_abs, tag = 'smem constant byte address 0x4 - core index']
  #allocation1 [shape = 'u32[72,128]{1,0:T(1,128)}', space=vmem, size = 0x9000, scoped, tag = 'internal scratch']
  #allocation2 [shape = 'f32[32,384]{1,0:T(8,128)}', space=vmem, size = 0xc000, scoped, tag = 'scratch operand']
  #allocation3 [shape = 'f32[32,640]{1,0:T(8,128)}', space=vmem, size = 0x14000, scoped, tag = 'scratch operand']
  %s0 = inlined_call_operand.vmem [shape: f32[2,32,256], index: 0, kind: input, shape index: {}]
  %s1 = inlined_call_operand.vmem [shape: f32[5,256], index: 1, kind: input, shape index: {}]
  %s2 = inlined_call_operand.vmem [shape: f32[7,256], index: 2, kind: input, shape index: {}]
  %s3 = inlined_call_operand.vmem [shape: f32[32,25], index: 3, kind: input, shape index: {}]
  %s4 = inlined_call_operand.vmem [shape: f32[32,1], index: 4, kind: input, shape index: {}]
  %s5 = inlined_call_operand.vmem [shape: f32[32,49], index: 5, kind: input, shape index: {}]
  %s6 = inlined_call_operand.vmem [shape: f32[32,1], index: 6, kind: input, shape index: {}]
  %s7 = inlined_call_operand.vmem [shape: f32[32,32], index: 7, kind: input, shape index: {}]
  %s8 = inlined_call_operand.vmem [shape: f32[32,1], index: 8, kind: input, shape index: {}]
  %s9 = inlined_call_operand.vmem [shape: f32[2,32,256], index: 9, kind: output, shape index: {}]
  %s10 = sld [smem:[#allocation0]]
  $region69: #{attention_module_forward.1} parent=0
    _
  %s12 = ssub.s32 1, %s10
  %s13 = scalar_select 0, %s12, %s10
  loop: start=0, step=1, limit=4
  $region2: #{attention_module_forward.1} parent=0 // loop_pre_header
    _
  $region3: #{attention_module_forward.1} parent=0 // loop_header
    %s15 = sphi 0, %s19
    %p16 = scmp.ge.s32.totalorder %s15, 4
    %s25 = sphi 0, %s27
    %s28 = sphi 0, %s25
    %s29 = sphi 0, %s28
    %s45 = sphi 0, %s29
    %s49 = sphi 0, %s49
    %s51 = sphi 0, %s49
    %s52 = sphi 0, %s51
    %s66 = sphi 0, %s52
    %s70 = sphi 0, %s70
    %s72 = sphi 0, %s70
    %s73 = sphi 0, %s72
    %s87 = sphi 0, %s73
    %s91 = sphi 0, %s91
    %s93 = sphi 0, %s91
    %s94 = sphi 0, %s93
    %s108 = sphi 0, %s94
    %s112 = sphi 0, %s112
    %s114 = sphi 0, %s112
    %s115 = sphi 0, %s114
    %s129 = sphi 0, %s115
    %s133 = sphi 0, %s133
    %s135 = sphi 0, %s133
    %s136 = sphi 0, %s135
    %s150 = sphi 0, %s136
    %s154 = sphi 0, %s154
    %s156 = sphi 0, %s154
    %s157 = sphi 0, %s156
    %s171 = sphi 0, %s157
    %s175 = sphi 0, %s175
    %s177 = sphi 0, %s175
    %s178 = sphi 0, %s177
    %s192 = sphi 0, %s178
    %s196 = sphi 0, %s196
    %s198 = sphi 0, %s196
    %s199 = sphi 0, %s198
    %s213 = sphi 0, %s199
    %s219 = sphi 0, %s221
    %s222 = sphi 0, %s219
    %s223 = sphi 0, %s222
    %s239 = sphi 0, %s223
  $region4: #{attention_module_forward.1} parent=0 // loop_header_branch
    %18 = sbr.rel (%p16) target = $region8
  $region5: #{attention_module_forward.1} parent=0 // loop_body
    %s20 = ssub.s32 %s15, 1
    %s21 = ssub.s32 %s15, 2
    %s22 = sadd.s32 %s15, 1
    %s23 = ssub.s32 %s15, %s22
    %p24 = scmp.eq.s32.totalorder %s23, 0
    %s26 = sadd.s32 %s25, 1
    %s27 = scalar_select %p24, %s25, %s26
    %p30 = pneg %p24
    %p31 = scmp.eq.s32.totalorder %s15, 1
    %p32 = por %p30, %p31
    %p33 = scmp.ne.s32.totalorder %s25, %s28
    %p34 = scmp.eq.s32.totalorder %s15, 0
    %p35 = por %p33, %p34
    %p36 = scmp.ne.s32.totalorder %s25, %s28
    %p37 = scmp.eq.s32.totalorder %s20, 1
    %p38 = por %p36, %p37
    %p39 = scmp.ne.s32.totalorder %s28, %s29
    %p40 = scmp.eq.s32.totalorder %s20, 0
    %p41 = por %p39, %p40
    %p42 = scmp.ne.s32.totalorder %s28, %s29
    %p43 = scmp.eq.s32.totalorder %s21, 1
    %p44 = por %p42, %p43
    %p46 = scmp.ne.s32.totalorder %s29, %s45
    %p47 = scmp.eq.s32.totalorder %s21, 0
    %p48 = por %p46, %p47
    %s50 = sadd.s32 %s49, 1
    %p53 = scmp.eq.s32.totalorder %s15, 1
    %p54 = scmp.ne.s32.totalorder %s49, %s51
    %p55 = scmp.eq.s32.totalorder %s15, 0
    %p56 = por %p54, %p55
    %p57 = scmp.ne.s32.totalorder %s49, %s51
    %p58 = scmp.eq.s32.totalorder %s20, 1
    %p59 = por %p57, %p58
    %p60 = scmp.ne.s32.totalorder %s51, %s52
    %p61 = scmp.eq.s32.totalorder %s20, 0
    %p62 = por %p60, %p61
    %p63 = scmp.ne.s32.totalorder %s51, %s52
    %p64 = scmp.eq.s32.totalorder %s21, 1
    %p65 = por %p63, %p64
    %p67 = scmp.ne.s32.totalorder %s52, %s66
    %p68 = scmp.eq.s32.totalorder %s21, 0
    %p69 = por %p67, %p68
    %s71 = sadd.s32 %s70, 1
    %p74 = scmp.eq.s32.totalorder %s15, 1
    %p75 = scmp.ne.s32.totalorder %s70, %s72
    %p76 = scmp.eq.s32.totalorder %s15, 0
    %p77 = por %p75, %p76
    %p78 = scmp.ne.s32.totalorder %s70, %s72
    %p79 = scmp.eq.s32.totalorder %s20, 1
    %p80 = por %p78, %p79
    %p81 = scmp.ne.s32.totalorder %s72, %s73
    %p82 = scmp.eq.s32.totalorder %s20, 0
    %p83 = por %p81, %p82
    %p84 = scmp.ne.s32.totalorder %s72, %s73
    %p85 = scmp.eq.s32.totalorder %s21, 1
    %p86 = por %p84, %p85
    %p88 = scmp.ne.s32.totalorder %s73, %s87
    %p89 = scmp.eq.s32.totalorder %s21, 0
    %p90 = por %p88, %p89
    %s92 = sadd.s32 %s91, 1
    %p95 = scmp.eq.s32.totalorder %s15, 1
    %p96 = scmp.ne.s32.totalorder %s91, %s93
    %p97 = scmp.eq.s32.totalorder %s15, 0
    %p98 = por %p96, %p97
    %p99 = scmp.ne.s32.totalorder %s91, %s93
    %p100 = scmp.eq.s32.totalorder %s20, 1
    %p101 = por %p99, %p100
    %p102 = scmp.ne.s32.totalorder %s93, %s94
    %p103 = scmp.eq.s32.totalorder %s20, 0
    %p104 = por %p102, %p103
    %p105 = scmp.ne.s32.totalorder %s93, %s94
    %p106 = scmp.eq.s32.totalorder %s21, 1
    %p107 = por %p105, %p106
    %p109 = scmp.ne.s32.totalorder %s94, %s108
    %p110 = scmp.eq.s32.totalorder %s21, 0
    %p111 = por %p109, %p110
    %s113 = sadd.s32 %s112, 1
    %p116 = scmp.eq.s32.totalorder %s15, 1
    %p117 = scmp.ne.s32.totalorder %s112, %s114
    %p118 = scmp.eq.s32.totalorder %s15, 0
    %p119 = por %p117, %p118
    %p120 = scmp.ne.s32.totalorder %s112, %s114
    %p121 = scmp.eq.s32.totalorder %s20, 1
    %p122 = por %p120, %p121
    %p123 = scmp.ne.s32.totalorder %s114, %s115
    %p124 = scmp.eq.s32.totalorder %s20, 0
    %p125 = por %p123, %p124
    %p126 = scmp.ne.s32.totalorder %s114, %s115
    %p127 = scmp.eq.s32.totalorder %s21, 1
    %p128 = por %p126, %p127
    %p130 = scmp.ne.s32.totalorder %s115, %s129
    %p131 = scmp.eq.s32.totalorder %s21, 0
    %p132 = por %p130, %p131
    %s134 = sadd.s32 %s133, 1
    %p137 = scmp.eq.s32.totalorder %s15, 1
    %p138 = scmp.ne.s32.totalorder %s133, %s135
    %p139 = scmp.eq.s32.totalorder %s15, 0
    %p140 = por %p138, %p139
    %p141 = scmp.ne.s32.totalorder %s133, %s135
    %p142 = scmp.eq.s32.totalorder %s20, 1
    %p143 = por %p141, %p142
    %p144 = scmp.ne.s32.totalorder %s135, %s136
    %p145 = scmp.eq.s32.totalorder %s20, 0
    %p146 = por %p144, %p145
    %p147 = scmp.ne.s32.totalorder %s135, %s136
    %p148 = scmp.eq.s32.totalorder %s21, 1
    %p149 = por %p147, %p148
    %p151 = scmp.ne.s32.totalorder %s136, %s150
    %p152 = scmp.eq.s32.totalorder %s21, 0
    %p153 = por %p151, %p152
    %s155 = sadd.s32 %s154, 1
    %p158 = scmp.eq.s32.totalorder %s15, 1
    %p159 = scmp.ne.s32.totalorder %s154, %s156
    %p160 = scmp.eq.s32.totalorder %s15, 0
    %p161 = por %p159, %p160
    %p162 = scmp.ne.s32.totalorder %s154, %s156
    %p163 = scmp.eq.s32.totalorder %s20, 1
    %p164 = por %p162, %p163
    %p165 = scmp.ne.s32.totalorder %s156, %s157
    %p166 = scmp.eq.s32.totalorder %s20, 0
    %p167 = por %p165, %p166
    %p168 = scmp.ne.s32.totalorder %s156, %s157
    %p169 = scmp.eq.s32.totalorder %s21, 1
    %p170 = por %p168, %p169
    %p172 = scmp.ne.s32.totalorder %s157, %s171
    %p173 = scmp.eq.s32.totalorder %s21, 0
    %p174 = por %p172, %p173
    %s176 = sadd.s32 %s175, 1
    %p179 = scmp.eq.s32.totalorder %s15, 1
    %p180 = scmp.ne.s32.totalorder %s175, %s177
    %p181 = scmp.eq.s32.totalorder %s15, 0
    %p182 = por %p180, %p181
    %p183 = scmp.ne.s32.totalorder %s175, %s177
    %p184 = scmp.eq.s32.totalorder %s20, 1
    %p185 = por %p183, %p184
    %p186 = scmp.ne.s32.totalorder %s177, %s178
    %p187 = scmp.eq.s32.totalorder %s20, 0
    %p188 = por %p186, %p187
    %p189 = scmp.ne.s32.totalorder %s177, %s178
    %p190 = scmp.eq.s32.totalorder %s21, 1
    %p191 = por %p189, %p190
    %p193 = scmp.ne.s32.totalorder %s178, %s192
    %p194 = scmp.eq.s32.totalorder %s21, 0
    %p195 = por %p193, %p194
    %s197 = sadd.s32 %s196, 1
    %p200 = scmp.eq.s32.totalorder %s15, 1
    %p201 = scmp.ne.s32.totalorder %s196, %s198
    %p202 = scmp.eq.s32.totalorder %s15, 0
    %p203 = por %p201, %p202
    %p204 = scmp.ne.s32.totalorder %s196, %s198
    %p205 = scmp.eq.s32.totalorder %s20, 1
    %p206 = por %p204, %p205
    %p207 = scmp.ne.s32.totalorder %s198, %s199
    %p208 = scmp.eq.s32.totalorder %s20, 0
    %p209 = por %p207, %p208
    %p210 = scmp.ne.s32.totalorder %s198, %s199
    %p211 = scmp.eq.s32.totalorder %s21, 1
    %p212 = por %p210, %p211
    %p214 = scmp.ne.s32.totalorder %s199, %s213
    %p215 = scmp.eq.s32.totalorder %s21, 0
    %p216 = por %p214, %p215
    %s217 = ssub.s32 %s15, %s22
    %p218 = scmp.eq.s32.totalorder %s217, 0
    %s220 = sadd.s32 %s219, 1
    %s221 = scalar_select %p218, %s219, %s220
    %p224 = pneg %p218
    %p225 = scmp.eq.s32.totalorder %s15, 1
    %p226 = por %p224, %p225
    %p227 = scmp.ne.s32.totalorder %s219, %s222
    %p228 = scmp.eq.s32.totalorder %s15, 0
    %p229 = por %p227, %p228
    %p230 = scmp.ne.s32.totalorder %s219, %s222
    %p231 = scmp.eq.s32.totalorder %s20, 1
    %p232 = por %p230, %p231
    %p233 = scmp.ne.s32.totalorder %s222, %s223
    %p234 = scmp.eq.s32.totalorder %s20, 0
    %p235 = por %p233, %p234
    %p236 = scmp.ne.s32.totalorder %s222, %s223
    %p237 = scmp.eq.s32.totalorder %s21, 1
    %p238 = por %p236, %p237
    %p240 = scmp.ne.s32.totalorder %s223, %s239
    %p241 = scmp.eq.s32.totalorder %s21, 0
    %p242 = por %p240, %p241
    %p243 = scmp.le.s32.totalorder 1, %s15
    %p244 = scmp.lt.s32.totalorder %s15, 3
    %p245 = pnand %p243, %p244
    %p246 = pneg %p245
    // Predicated region
    $region9: #{attention_module_forward.1} parent=5 // pred_check
      _
    $region10: #{attention_module_forward.1} parent=5 // pred_check_branch
      %248 = sbr.rel (%p245) target = $region12
    $region11: #{attention_module_forward.1} parent=5 // pred_region
      %s249 = ssub.s32 %s15, 1
      // Predicated region
      $region13: #{attention_module_forward.1} parent=11 // pred_check
        %p250 = pneg %p62
      $region14: #{attention_module_forward.1} parent=11 // pred_check_branch
        %252 = sbr.rel (%p250) target = $region16
      $region15: #{attention_module_forward.1} parent=11 // pred_region
        _
      $region16: #{attention_module_forward.1} parent=11 // pred_fallthru
        _
      // Predicated region
      $region17: #{attention_module_forward.1} parent=11 // pred_check
        %p253 = pneg %p83
      $region18: #{attention_module_forward.1} parent=11 // pred_check_branch
        %255 = sbr.rel (%p253) target = $region20
      $region19: #{attention_module_forward.1} parent=11 // pred_region
        _
      $region20: #{attention_module_forward.1} parent=11 // pred_fallthru
        _
      // Predicated region
      $region21: #{attention_module_forward.1} parent=11 // pred_check
        %p256 = pneg %p104
      $region22: #{attention_module_forward.1} parent=11 // pred_check_branch
        %258 = sbr.rel (%p256) target = $region24
      $region23: #{attention_module_forward.1} parent=11 // pred_region
        _
      $region24: #{attention_module_forward.1} parent=11 // pred_fallthru
        _
      // Predicated region
      $region25: #{attention_module_forward.1} parent=11 // pred_check
        %p259 = pneg %p125
      $region26: #{attention_module_forward.1} parent=11 // pred_check_branch
        %261 = sbr.rel (%p259) target = $region28
      $region27: #{attention_module_forward.1} parent=11 // pred_region
        _
      $region28: #{attention_module_forward.1} parent=11 // pred_fallthru
        _
      // Predicated region
      $region29: #{attention_module_forward.1} parent=11 // pred_check
        %p262 = pneg %p146
      $region30: #{attention_module_forward.1} parent=11 // pred_check_branch
        %264 = sbr.rel (%p262) target = $region32
      $region31: #{attention_module_forward.1} parent=11 // pred_region
        _
      $region32: #{attention_module_forward.1} parent=11 // pred_fallthru
        _
      // Predicated region
      $region33: #{attention_module_forward.1} parent=11 // pred_check
        %p265 = pneg %p167
      $region34: #{attention_module_forward.1} parent=11 // pred_check_branch
        %267 = sbr.rel (%p265) target = $region36
      $region35: #{attention_module_forward.1} parent=11 // pred_region
        _
      $region36: #{attention_module_forward.1} parent=11 // pred_fallthru
        _
      // Predicated region
      $region37: #{attention_module_forward.1} parent=11 // pred_check
        %p268 = pneg %p188
      $region38: #{attention_module_forward.1} parent=11 // pred_check_branch
        %270 = sbr.rel (%p268) target = $region40
      $region39: #{attention_module_forward.1} parent=11 // pred_region
        _
      $region40: #{attention_module_forward.1} parent=11 // pred_fallthru
        _
      // Predicated region
      $region41: #{attention_module_forward.1} parent=11 // pred_check
        %p271 = pneg %p209
      $region42: #{attention_module_forward.1} parent=11 // pred_check_branch
        %273 = sbr.rel (%p271) target = $region44
      $region43: #{attention_module_forward.1} parent=11 // pred_region
        _
      $region44: #{attention_module_forward.1} parent=11 // pred_fallthru
        _
    $region12: #{attention_module_forward.1} parent=5 // pred_fallthru
      _
    %p274 = scmp.lt.s32.totalorder %s15, 2
    // Predicated region
    $region45: #{attention_module_forward.1} parent=5 // pred_check
      %p275 = pneg %p274
    $region46: #{attention_module_forward.1} parent=5 // pred_check_branch
      %277 = sbr.rel (%p275) target = $region48
    $region47: #{attention_module_forward.1} parent=5 // pred_region
      // Predicated region
      $region49: #{attention_module_forward.1} parent=47 // pred_check
        %p278 = pneg %p35
      $region50: #{attention_module_forward.1} parent=47 // pred_check_branch
        %280 = sbr.rel (%p278) target = $region52
      $region51: #{attention_module_forward.1} parent=47 // pred_region
        %p281 = scmp.lt.s32.totalorder %s15, 1
        %s282 = scalar_select %p281, %s15, 1
        %s283 = smul.addr %s282, 8
        %s284 = smul.addr %s283, 8
        %s285 = scalar_lea.vmem %s0, %s284
      $region52: #{attention_module_forward.1} parent=47 // pred_fallthru
        _
    $region48: #{attention_module_forward.1} parent=5 // pred_fallthru
      _
    %p286 = scmp.le.s32.totalorder 1, %s15
    %p287 = scmp.lt.s32.totalorder %s15, 3
    %p288 = pnand %p286, %p287
    %p289 = pneg %p288
    // Predicated region
    $region53: #{attention_module_forward.1} parent=5 // pred_check
      _
    $region54: #{attention_module_forward.1} parent=5 // pred_check_branch
      %291 = sbr.rel (%p288) target = $region56
    $region55: #{attention_module_forward.1} parent=5 // pred_region
      %s292 = ssub.s32 %s15, 1
      %p293 = scmp.lt.s32.totalorder %s20, 1
      %s294 = scalar_select %p293, %s20, 1
      %s295 = smul.addr %s294, 8
      %s296 = smul.addr %s295, 8
      %s297 = scalar_lea.vmem %s0, %s296
      %p298 = pneg %p41
      %p299 = pneg %p38
      %p300 = pneg %p62
      %p301 = pneg %p59
      %p302 = pneg %p83
      %p303 = pneg %p80
      %p304 = pneg %p104
      %p305 = pneg %p101
      %p306 = pneg %p125
      %p307 = pneg %p122
      %p308 = pneg %p146
      %p309 = pneg %p143
      %p310 = pneg %p167
      %p311 = pneg %p164
      %p312 = pneg %p188
      %p313 = pneg %p185
      %p314 = pneg %p209
      %p315 = pneg %p206
      %p316 = pneg %p235
      %p317 = pneg %p232
      %p318 = scmp.lt.s32.totalorder %s20, 1
      %s319 = scalar_select %p318, %s20, 1
      %s320 = smul.addr %s319, 8
      %s321 = smul.addr %s320, 8
      %s322 = scalar_lea.vmem %s9, %s321
      %p323 = scmp.lt.s32.totalorder %s20, 1
      %s324 = scalar_select %p323, %s20, 1
      %s325 = smul.addr %s324, 8
      %s326 = smul.addr %s325, 8
      %s327 = scalar_lea.vmem %s0, %s326
      %p328 = scmp.lt.s32.totalorder %s20, 1
      %s329 = scalar_select %p328, %s20, 1
      %s330 = smul.addr %s329, 8
      %s331 = smul.addr %s330, 8
      %s332 = scalar_lea.vmem %s9, %s331
      %v333 = vld [vmem:[%s327] sm:$0xff]
      %v334 = vld [vmem:[%s327 + $0x8] sm:$0xff]
      %v335 = vld [vmem:[%s327 + $0x10] sm:$0xff]
      %v336 = vld [vmem:[%s327 + $0x18] sm:$0xff]
      %v337 = vld [vmem:[%s327 + $0x20] sm:$0xff]
      %v338 = vld [vmem:[%s327 + $0x28] sm:$0xff]
      %v339 = vld [vmem:[%s327 + $0x30] sm:$0xff]
      %v340 = vld [vmem:[%s327 + $0x38] sm:$0xff]
      %341 = vst [vmem:[#allocation2] sm:$0xff] 0.0
      %342 = vst [vmem:[#allocation2 + $0x8] sm:$0xff] 0.0
      %343 = vst [vmem:[#allocation2 + $0x10] sm:$0xff] 0.0
      %344 = vst [vmem:[#allocation2 + $0x18] sm:$0xff] 0.0
      %345 = vst [vmem:[#allocation2 + $0x20] sm:$0xff] 0.0
      %346 = vst [vmem:[#allocation2 + $0x28] sm:$0xff] 0.0
      %347 = vst [vmem:[#allocation2 + $0x30] sm:$0xff] 0.0
      %348 = vst [vmem:[#allocation2 + $0x38] sm:$0xff] 0.0
      %349 = vst [vmem:[#allocation2 + $0x40] sm:$0xff] 0.0
      %350 = vst [vmem:[#allocation2 + $0x48] sm:$0xff] 0.0
      %351 = vst [vmem:[#allocation2 + $0x50] sm:$0xff] 0.0
      %352 = vst [vmem:[#allocation2 + $0x58] sm:$0xff] 0.0
      %361 = vrot.lane.b32.xlu0 %v333, 34
      %v362 = vpop.permute.xlu0 %361
      %363 = vrot.lane.b32.xlu0 %v334, 34
      %v364 = vpop.permute.xlu0 %363
      %365 = vrot.lane.b32.xlu0 %v335, 34
      %v366 = vpop.permute.xlu0 %365
      %367 = vrot.lane.b32.xlu0 %v336, 34
      %v368 = vpop.permute.xlu0 %367
      %369 = vrot.lane.b32.xlu0 %v337, 34
      %v370 = vpop.permute.xlu0 %369
      %371 = vrot.lane.b32.xlu0 %v338, 34
      %v372 = vpop.permute.xlu0 %371
      %373 = vrot.lane.b32.xlu0 %v339, 34
      %v374 = vpop.permute.xlu0 %373
      %375 = vrot.lane.b32.xlu0 %v340, 34
      %v376 = vpop.permute.xlu0 %375
      %vm377 = vcmask 277504
      %v378 = vsel %vm377, %v362, %v364
      %v379 = vsel %vm377, %v366, %v368
      %v380 = vsel %vm377, %v370, %v372
      %v381 = vsel %vm377, %v374, %v376
      %vm394 = vcmask 1047824
      %395 = vst.msk [vmem:[#allocation2] sm:$0xff] %vm394, %v362
      %396 = vst [vmem:[#allocation2 + $0x8] sm:$0xff] %v378
      %397 = vst.msk [vmem:[#allocation2 + $0x10] sm:$0xff] %vm377, %v364
      %398 = vst.msk [vmem:[#allocation2 + $0x18] sm:$0xff] %vm394, %v366
      %399 = vst [vmem:[#allocation2 + $0x20] sm:$0xff] %v379
      %400 = vst.msk [vmem:[#allocation2 + $0x28] sm:$0xff] %vm377, %v368
      %401 = vst.msk [vmem:[#allocation2 + $0x30] sm:$0xff] %vm394, %v370
      %402 = vst [vmem:[#allocation2 + $0x38] sm:$0xff] %v380
      %403 = vst.msk [vmem:[#allocation2 + $0x40] sm:$0xff] %vm377, %v372
      %404 = vst.msk [vmem:[#allocation2 + $0x48] sm:$0xff] %vm394, %v374
      %405 = vst [vmem:[#allocation2 + $0x50] sm:$0xff] %v381
      %406 = vst.msk [vmem:[#allocation2 + $0x58] sm:$0xff] %vm377, %v376
      %v407 = vld [vmem:[%s3] sm:$0xff]
      %v408 = vld [vmem:[%s3 + $0x8] sm:$0xff]
      %v409 = vld [vmem:[%s3 + $0x10] sm:$0xff]
      %v410 = vld [vmem:[%s3 + $0x18] sm:$0xff]
      %v411 = vld [vmem:[%s1] ss:$8 sm:$0x3]
      %s412 = scalar_lea.vmem %s1, 1
      %v413 = vld [vmem:[%s412] ss:$8 sm:$0x3]
      %s414 = scalar_lea.vmem %s1, 3
      %v415 = vld [vmem:[%s414] ss:$8 sm:$0x3]
      %s416 = scalar_lea.vmem %s1, 4
      %v417 = vld [vmem:[%s416] ss:$8 sm:$0x3]
      %v418 = vld [vmem:[#allocation2] sm:$0xff]
      %v419 = vld [vmem:[#allocation2 + $0x8] sm:$0xff]
      %v420 = vld [vmem:[#allocation2 + $0x18] sm:$0xff]
      %v421 = vld [vmem:[#allocation2 + $0x20] sm:$0xff]
      %v422 = vld [vmem:[#allocation2 + $0x30] sm:$0xff]
      %v423 = vld [vmem:[#allocation2 + $0x38] sm:$0xff]
      %v424 = vld [vmem:[#allocation2 + $0x48] sm:$0xff]
      %v425 = vld [vmem:[#allocation2 + $0x50] sm:$0xff]
      %v427 = vperm.slane %v411, 0
      %v428 = vperm.slane %v411, 1
      %v431 = vmul.f32 %v418, %v427
      %v432 = vmul.f32 %v419, %v428
      %v433 = vmul.f32 %v420, %v427
      %v434 = vmul.f32 %v421, %v428
      %v435 = vmul.f32 %v422, %v427
      %v436 = vmul.f32 %v423, %v428
      %v437 = vmul.f32 %v424, %v427
      %v438 = vmul.f32 %v425, %v428
      %440 = vset.pattern.permute.xlu0 0
      %441 = vperm.xlu0 %440, %v407
      %v442 = vpop.permute.xlu0 %441
      %445 = vset.pattern.permute.xlu0 0
      %446 = vperm.xlu0 %445, %v408
      %v447 = vpop.permute.xlu0 %446
      %450 = vset.pattern.permute.xlu0 0
      %451 = vperm.xlu0 %450, %v409
      %v452 = vpop.permute.xlu0 %451
      %455 = vset.pattern.permute.xlu0 0
      %456 = vperm.xlu0 %455, %v410
      %v457 = vpop.permute.xlu0 %456
      %v459 = vmul.f32 %v431, %v442
      %v460 = vmul.f32 %v432, %v442
      %v461 = vmul.f32 %v433, %v447
      %v462 = vmul.f32 %v434, %v447
      %v463 = vmul.f32 %v435, %v452
      %v464 = vmul.f32 %v436, %v452
      %v465 = vmul.f32 %v437, %v457
      %v466 = vmul.f32 %v438, %v457
      %v467 = vadd.f32 %v459, 0.0
      %v468 = vadd.f32 %v460, 0.0
      %v469 = vadd.f32 %v461, 0.0
      %v470 = vadd.f32 %v462, 0.0
      %v471 = vadd.f32 %v463, 0.0
      %v472 = vadd.f32 %v464, 0.0
      %v473 = vadd.f32 %v465, 0.0
      %v474 = vadd.f32 %v466, 0.0
      %v475 = vld [vmem:[#allocation2] sm:$0xff]
      %v476 = vld [vmem:[#allocation2 + $0x8] sm:$0xff]
      %v477 = vld [vmem:[#allocation2 + $0x10] sm:$0xff]
      %v478 = vld [vmem:[#allocation2 + $0x18] sm:$0xff]
      %v479 = vld [vmem:[#allocation2 + $0x20] sm:$0xff]
      %v480 = vld [vmem:[#allocation2 + $0x28] sm:$0xff]
      %v481 = vld [vmem:[#allocation2 + $0x30] sm:$0xff]
      %v482 = vld [vmem:[#allocation2 + $0x38] sm:$0xff]
      %v483 = vld [vmem:[#allocation2 + $0x40] sm:$0xff]
      %v484 = vld [vmem:[#allocation2 + $0x48] sm:$0xff]
      %v485 = vld [vmem:[#allocation2 + $0x50] sm:$0xff]
      %v486 = vld [vmem:[#allocation2 + $0x58] sm:$0xff]
      %v488 = vperm.slane %v413, 0
      %v489 = vperm.slane %v413, 1
      %490 = vrot.lane.b32.xlu0 %v488, 1
      %v491 = vpop.permute.xlu0 %490
      %492 = vrot.lane.b32.xlu0 %v489, 1
      %v493 = vpop.permute.xlu0 %492
      %vm494 = vcmask 7168
      %v495 = vsel %vm494, %v491, %v493
      %v499 = vmul.f32 %v475, %v491
      %v500 = vmul.f32 %v476, %v495
      %v501 = vmul.f32 %v477, %v493
      %v502 = vmul.f32 %v478, %v491
      %v503 = vmul.f32 %v479, %v495
      %v504 = vmul.f32 %v480, %v493
      %v505 = vmul.f32 %v481, %v491
      %v506 = vmul.f32 %v482, %v495
      %v507 = vmul.f32 %v483, %v493
      %v508 = vmul.f32 %v484, %v491
      %v509 = vmul.f32 %v485, %v495
      %v510 = vmul.f32 %v486, %v493
      %511 = vset.pattern.permute.xlu0 1
      %512 = vperm.xlu0 %511, %v407
      %v513 = vpop.permute.xlu0 %512
      %515 = vset.pattern.permute.xlu0 1
      %516 = vperm.xlu0 %515, %v408
      %v517 = vpop.permute.xlu0 %516
      %519 = vset.pattern.permute.xlu0 1
      %520 = vperm.xlu0 %519, %v409
      %v521 = vpop.permute.xlu0 %520
      %523 = vset.pattern.permute.xlu0 1
      %524 = vperm.xlu0 %523, %v410
      %v525 = vpop.permute.xlu0 %524
      %v527 = vmul.f32 %v499, %v513
      %v528 = vmul.f32 %v500, %v513
      %v529 = vmul.f32 %v501, %v513
      %v530 = vmul.f32 %v502, %v517
      %v531 = vmul.f32 %v503, %v517
      %v532 = vmul.f32 %v504, %v517
      %v533 = vmul.f32 %v505, %v521
      %v534 = vmul.f32 %v506, %v521
      %v535 = vmul.f32 %v507, %v521
      %v536 = vmul.f32 %v508, %v525
      %v537 = vmul.f32 %v509, %v525
      %v538 = vmul.f32 %v510, %v525
      %551 = vrot.lane.b32.xlu0 %v527, 127
      %v552 = vpop.permute.xlu0 %551
      %553 = vrot.lane.b32.xlu0 %v528, 127
      %v554 = vpop.permute.xlu0 %553
      %555 = vrot.lane.b32.xlu0 %v529, 127
      %v556 = vpop.permute.xlu0 %555
      %557 = vrot.lane.b32.xlu0 %v530, 127
      %v558 = vpop.permute.xlu0 %557
      %559 = vrot.lane.b32.xlu0 %v531, 127
      %v560 = vpop.permute.xlu0 %559
      %561 = vrot.lane.b32.xlu0 %v532, 127
      %v562 = vpop.permute.xlu0 %561
      %563 = vrot.lane.b32.xlu0 %v533, 127
      %v564 = vpop.permute.xlu0 %563
      %565 = vrot.lane.b32.xlu0 %v534, 127
      %v566 = vpop.permute.xlu0 %565
      %567 = vrot.lane.b32.xlu0 %v535, 127
      %v568 = vpop.permute.xlu0 %567
      %569 = vrot.lane.b32.xlu0 %v536, 127
      %v570 = vpop.permute.xlu0 %569
      %571 = vrot.lane.b32.xlu0 %v537, 127
      %v572 = vpop.permute.xlu0 %571
      %573 = vrot.lane.b32.xlu0 %v538, 127
      %v574 = vpop.permute.xlu0 %573
      %vm575 = vcmask 1039360
      %v576 = vsel %vm575, %v552, %v554
      %v577 = vsel %vm575, %v554, %v556
      %v578 = vsel %vm575, %v558, %v560
      %v579 = vsel %vm575, %v560, %v562
      %v580 = vsel %vm575, %v564, %v566
      %v581 = vsel %vm575, %v566, %v568
      %v582 = vsel %vm575, %v570, %v572
      %v583 = vsel %vm575, %v572, %v574
      %v592 = vadd.f32 %v467, %v576
      %v593 = vadd.f32 %v468, %v577
      %v594 = vadd.f32 %v469, %v578
      %v595 = vadd.f32 %v470, %v579
      %v596 = vadd.f32 %v471, %v580
      %v597 = vadd.f32 %v472, %v581
      %v598 = vadd.f32 %v473, %v582
      %v599 = vadd.f32 %v474, %v583
      %600 = vset.pattern.permute.xlu0 2
      %601 = vperm.xlu0 %600, %v407
      %v602 = vpop.permute.xlu0 %601
      %604 = vset.pattern.permute.xlu0 2
      %605 = vperm.xlu0 %604, %v408
      %v606 = vpop.permute.xlu0 %605
      %608 = vset.pattern.permute.xlu0 2
      %609 = vperm.xlu0 %608, %v409
      %v610 = vpop.permute.xlu0 %609
      %612 = vset.pattern.permute.xlu0 2
      %613 = vperm.xlu0 %612, %v410
      %v614 = vpop.permute.xlu0 %613
      %v616 = vmul.f32 %v475, %v602
      %v617 = vmul.f32 %v476, %v602
      %v618 = vmul.f32 %v477, %v602
      %v619 = vmul.f32 %v478, %v606
      %v620 = vmul.f32 %v479, %v606
      %v621 = vmul.f32 %v480, %v606
      %v622 = vmul.f32 %v481, %v610
      %v623 = vmul.f32 %v482, %v610
      %v624 = vmul.f32 %v483, %v610
      %v625 = vmul.f32 %v484, %v614
      %v626 = vmul.f32 %v485, %v614
      %v627 = vmul.f32 %v486, %v614
      %640 = vrot.lane.b32.xlu0 %v616, 126
      %v641 = vpop.permute.xlu0 %640
      %642 = vrot.lane.b32.xlu0 %v617, 126
      %v643 = vpop.permute.xlu0 %642
      %644 = vrot.lane.b32.xlu0 %v618, 126
      %v645 = vpop.permute.xlu0 %644
      %646 = vrot.lane.b32.xlu0 %v619, 126
      %v647 = vpop.permute.xlu0 %646
      %648 = vrot.lane.b32.xlu0 %v620, 126
      %v649 = vpop.permute.xlu0 %648
      %650 = vrot.lane.b32.xlu0 %v621, 126
      %v651 = vpop.permute.xlu0 %650
      %652 = vrot.lane.b32.xlu0 %v622, 126
      %v653 = vpop.permute.xlu0 %652
      %654 = vrot.lane.b32.xlu0 %v623, 126
      %v655 = vpop.permute.xlu0 %654
      %656 = vrot.lane.b32.xlu0 %v624, 126
      %v657 = vpop.permute.xlu0 %656
      %658 = vrot.lane.b32.xlu0 %v625, 126
      %v659 = vpop.permute.xlu0 %658
      %660 = vrot.lane.b32.xlu0 %v626, 126
      %v661 = vpop.permute.xlu0 %660
      %662 = vrot.lane.b32.xlu0 %v627, 126
      %v663 = vpop.permute.xlu0 %662
      %vm664 = vcmask 1031168
      %v665 = vsel %vm664, %v641, %v643
      %v666 = vsel %vm664, %v643, %v645
      %v667 = vsel %vm664, %v647, %v649
      %v668 = vsel %vm664, %v649, %v651
      %v669 = vsel %vm664, %v653, %v655
      %v670 = vsel %vm664, %v655, %v657
      %v671 = vsel %vm664, %v659, %v661
      %v672 = vsel %vm664, %v661, %v663
      %v681 = vadd.f32 %v592, %v665
      %v682 = vadd.f32 %v593, %v666
      %v683 = vadd.f32 %v594, %v667
      %v684 = vadd.f32 %v595, %v668
      %v685 = vadd.f32 %v596, %v669
      %v686 = vadd.f32 %v597, %v670
      %v687 = vadd.f32 %v598, %v671
      %v688 = vadd.f32 %v599, %v672
      %v690 = vperm.slane %v415, 0
      %v691 = vperm.slane %v415, 1
      %692 = vrot.lane.b32.xlu0 %v690, 3
      %v693 = vpop.permute.xlu0 %692
      %694 = vrot.lane.b32.xlu0 %v691, 3
      %v695 = vpop.permute.xlu0 %694
      %vm696 = vcmask 23552
      %v697 = vsel %vm696, %v693, %v695
      %v701 = vmul.f32 %v475, %v693
      %v702 = vmul.f32 %v476, %v697
      %v703 = vmul.f32 %v477, %v695
      %v704 = vmul.f32 %v478, %v693
      %v705 = vmul.f32 %v479, %v697
      %v706 = vmul.f32 %v480, %v695
      %v707 = vmul.f32 %v481, %v693
      %v708 = vmul.f32 %v482, %v697
      %v709 = vmul.f32 %v483, %v695
      %v710 = vmul.f32 %v484, %v693
      %v711 = vmul.f32 %v485, %v697
      %v712 = vmul.f32 %v486, %v695
      %713 = vset.pattern.permute.xlu0 3
      %714 = vperm.xlu0 %713, %v407
      %v715 = vpop.permute.xlu0 %714
      %717 = vset.pattern.permute.xlu0 3
      %718 = vperm.xlu0 %717, %v408
      %v719 = vpop.permute.xlu0 %718
      %721 = vset.pattern.permute.xlu0 3
      %722 = vperm.xlu0 %721, %v409
      %v723 = vpop.permute.xlu0 %722
      %725 = vset.pattern.permute.xlu0 3
      %726 = vperm.xlu0 %725, %v410
      %v727 = vpop.permute.xlu0 %726
      %v729 = vmul.f32 %v701, %v715
      %v730 = vmul.f32 %v702, %v715
      %v731 = vmul.f32 %v703, %v715
      %v732 = vmul.f32 %v704, %v719
      %v733 = vmul.f32 %v705, %v719
      %v734 = vmul.f32 %v706, %v719
      %v735 = vmul.f32 %v707, %v723
      %v736 = vmul.f32 %v708, %v723
      %v737 = vmul.f32 %v709, %v723
      %v738 = vmul.f32 %v710, %v727
      %v739 = vmul.f32 %v711, %v727
      %v740 = vmul.f32 %v712, %v727
      %753 = vrot.lane.b32.xlu0 %v729, 125
      %v754 = vpop.permute.xlu0 %753
      %755 = vrot.lane.b32.xlu0 %v730, 125
      %v756 = vpop.permute.xlu0 %755
      %757 = vrot.lane.b32.xlu0 %v731, 125
      %v758 = vpop.permute.xlu0 %757
      %759 = vrot.lane.b32.xlu0 %v732, 125
      %v760 = vpop.permute.xlu0 %759
      %761 = vrot.lane.b32.xlu0 %v733, 125
      %v762 = vpop.permute.xlu0 %761
      %763 = vrot.lane.b32.xlu0 %v734, 125
      %v764 = vpop.permute.xlu0 %763
      %765 = vrot.lane.b32.xlu0 %v735, 125
      %v766 = vpop.permute.xlu0 %765
      %767 = vrot.lane.b32.xlu0 %v736, 125
      %v768 = vpop.permute.xlu0 %767
      %769 = vrot.lane.b32.xlu0 %v737, 125
      %v770 = vpop.permute.xlu0 %769
      %771 = vrot.lane.b32.xlu0 %v738, 125
      %v772 = vpop.permute.xlu0 %771
      %773 = vrot.lane.b32.xlu0 %v739, 125
      %v774 = vpop.permute.xlu0 %773
      %775 = vrot.lane.b32.xlu0 %v740, 125
      %v776 = vpop.permute.xlu0 %775
      %vm777 = vcmask 1022976
      %v778 = vsel %vm777, %v754, %v756
      %v779 = vsel %vm777, %v756, %v758
      %v780 = vsel %vm777, %v760, %v762
      %v781 = vsel %vm777, %v762, %v764
      %v782 = vsel %vm777, %v766, %v768
      %v783 = vsel %vm777, %v768, %v770
      %v784 = vsel %vm777, %v772, %v774
      %v785 = vsel %vm777, %v774, %v776
      %v794 = vadd.f32 %v681, %v778
      %v795 = vadd.f32 %v682, %v779
      %v796 = vadd.f32 %v683, %v780
      %v797 = vadd.f32 %v684, %v781
      %v798 = vadd.f32 %v685, %v782
      %v799 = vadd.f32 %v686, %v783
      %v800 = vadd.f32 %v687, %v784
      %v801 = vadd.f32 %v688, %v785
      %v803 = vperm.slane %v417, 0
      %v804 = vperm.slane %v417, 1
      %805 = vrot.lane.b32.xlu0 %v803, 4
      %v806 = vpop.permute.xlu0 %805
      %807 = vrot.lane.b32.xlu0 %v804, 4
      %v808 = vpop.permute.xlu0 %807
      %vm809 = vcmask 31744
      %v810 = vsel %vm809, %v806, %v808
      %v814 = vmul.f32 %v475, %v806
      %v815 = vmul.f32 %v476, %v810
      %v816 = vmul.f32 %v477, %v808
      %v817 = vmul.f32 %v478, %v806
      %v818 = vmul.f32 %v479, %v810
      %v819 = vmul.f32 %v480, %v808
      %v820 = vmul.f32 %v481, %v806
      %v821 = vmul.f32 %v482, %v810
      %v822 = vmul.f32 %v483, %v808
      %v823 = vmul.f32 %v484, %v806
      %v824 = vmul.f32 %v485, %v810
      %v825 = vmul.f32 %v486, %v808
      %826 = vset.pattern.permute.xlu0 4
      %827 = vperm.xlu0 %826, %v407
      %v828 = vpop.permute.xlu0 %827
      %830 = vset.pattern.permute.xlu0 4
      %831 = vperm.xlu0 %830, %v408
      %v832 = vpop.permute.xlu0 %831
      %834 = vset.pattern.permute.xlu0 4
      %835 = vperm.xlu0 %834, %v409
      %v836 = vpop.permute.xlu0 %835
      %838 = vset.pattern.permute.xlu0 4
      %839 = vperm.xlu0 %838, %v410
      %v840 = vpop.permute.xlu0 %839
      %v842 = vmul.f32 %v814, %v828
      %v843 = vmul.f32 %v815, %v828
      %v844 = vmul.f32 %v816, %v828
      %v845 = vmul.f32 %v817, %v832
      %v846 = vmul.f32 %v818, %v832
      %v847 = vmul.f32 %v819, %v832
      %v848 = vmul.f32 %v820, %v836
      %v849 = vmul.f32 %v821, %v836
      %v850 = vmul.f32 %v822, %v836
      %v851 = vmul.f32 %v823, %v840
      %v852 = vmul.f32 %v824, %v840
      %v853 = vmul.f32 %v825, %v840
      %866 = vrot.lane.b32.xlu0 %v842, 124
      %v867 = vpop.permute.xlu0 %866
      %868 = vrot.lane.b32.xlu0 %v843, 124
      %v869 = vpop.permute.xlu0 %868
      %870 = vrot.lane.b32.xlu0 %v844, 124
      %v871 = vpop.permute.xlu0 %870
      %872 = vrot.lane.b32.xlu0 %v845, 124
      %v873 = vpop.permute.xlu0 %872
      %874 = vrot.lane.b32.xlu0 %v846, 124
      %v875 = vpop.permute.xlu0 %874
      %876 = vrot.lane.b32.xlu0 %v847, 124
      %v877 = vpop.permute.xlu0 %876
      %878 = vrot.lane.b32.xlu0 %v848, 124
      %v879 = vpop.permute.xlu0 %878
      %880 = vrot.lane.b32.xlu0 %v849, 124
      %v881 = vpop.permute.xlu0 %880
      %882 = vrot.lane.b32.xlu0 %v850, 124
      %v883 = vpop.permute.xlu0 %882
      %884 = vrot.lane.b32.xlu0 %v851, 124
      %v885 = vpop.permute.xlu0 %884
      %886 = vrot.lane.b32.xlu0 %v852, 124
      %v887 = vpop.permute.xlu0 %886
      %888 = vrot.lane.b32.xlu0 %v853, 124
      %v889 = vpop.permute.xlu0 %888
      %vm890 = vcmask 1014784
      %v891 = vsel %vm890, %v867, %v869
      %v892 = vsel %vm890, %v869, %v871
      %v893 = vsel %vm890, %v873, %v875
      %v894 = vsel %vm890, %v875, %v877
      %v895 = vsel %vm890, %v879, %v881
      %v896 = vsel %vm890, %v881, %v883
      %v897 = vsel %vm890, %v885, %v887
      %v898 = vsel %vm890, %v887, %v889
      %v907 = vadd.f32 %v794, %v891
      %v908 = vadd.f32 %v795, %v892
      %v909 = vadd.f32 %v796, %v893
      %v910 = vadd.f32 %v797, %v894
      %v911 = vadd.f32 %v798, %v895
      %v912 = vadd.f32 %v799, %v896
      %v913 = vadd.f32 %v800, %v897
      %v914 = vadd.f32 %v801, %v898
      %915 = vrot.lane.b32.xlu0 %v427, 16
      %v916 = vpop.permute.xlu0 %915
      %917 = vrot.lane.b32.xlu0 %v428, 16
      %v918 = vpop.permute.xlu0 %917
      %vm919 = vcmask 130048
      %v920 = vsel %vm919, %v916, %v918
      %v924 = vmul.f32 %v475, %v916
      %v925 = vmul.f32 %v476, %v920
      %v926 = vmul.f32 %v477, %v918
      %v927 = vmul.f32 %v478, %v916
      %v928 = vmul.f32 %v479, %v920
      %v929 = vmul.f32 %v480, %v918
      %v930 = vmul.f32 %v481, %v916
      %v931 = vmul.f32 %v482, %v920
      %v932 = vmul.f32 %v483, %v918
      %v933 = vmul.f32 %v484, %v916
      %v934 = vmul.f32 %v485, %v920
      %v935 = vmul.f32 %v486, %v918
      %936 = vset.pattern.permute.xlu0 5
      %937 = vperm.xlu0 %936, %v407
      %v938 = vpop.permute.xlu0 %937
      %940 = vset.pattern.permute.xlu0 5
      %941 = vperm.xlu0 %940, %v408
      %v942 = vpop.permute.xlu0 %941
      %944 = vset.pattern.permute.xlu0 5
      %945 = vperm.xlu0 %944, %v409
      %v946 = vpop.permute.xlu0 %945
      %948 = vset.pattern.permute.xlu0 5
      %949 = vperm.xlu0 %948, %v410
      %v950 = vpop.permute.xlu0 %949
      %v952 = vmul.f32 %v924, %v938
      %v953 = vmul.f32 %v925, %v938
      %v954 = vmul.f32 %v926, %v938
      %v955 = vmul.f32 %v927, %v942
      %v956 = vmul.f32 %v928, %v942
      %v957 = vmul.f32 %v929, %v942
      %v958 = vmul.f32 %v930, %v946
      %v959 = vmul.f32 %v931, %v946
      %v960 = vmul.f32 %v932, %v946
      %v961 = vmul.f32 %v933, %v950
      %v962 = vmul.f32 %v934, %v950
      %v963 = vmul.f32 %v935, %v950
      %976 = vrot.lane.b32.xlu0 %v952, 112
      %v977 = vpop.permute.xlu0 %976
      %978 = vrot.lane.b32.xlu0 %v953, 112
      %v979 = vpop.permute.xlu0 %978
      %980 = vrot.lane.b32.xlu0 %v954, 112
      %v981 = vpop.permute.xlu0 %980
      %982 = vrot.lane.b32.xlu0 %v955, 112
      %v983 = vpop.permute.xlu0 %982
      %984 = vrot.lane.b32.xlu0 %v956, 112
      %v985 = vpop.permute.xlu0 %984
      %986 = vrot.lane.b32.xlu0 %v957, 112
      %v987 = vpop.permute.xlu0 %986
      %988 = vrot.lane.b32.xlu0 %v958, 112
      %v989 = vpop.permute.xlu0 %988
      %990 = vrot.lane.b32.xlu0 %v959, 112
      %v991 = vpop.permute.xlu0 %990
      %992 = vrot.lane.b32.xlu0 %v960, 112
      %v993 = vpop.permute.xlu0 %992
      %994 = vrot.lane.b32.xlu0 %v961, 112
      %v995 = vpop.permute.xlu0 %994
      %996 = vrot.lane.b32.xlu0 %v962, 112
      %v997 = vpop.permute.xlu0 %996
      %998 = vrot.lane.b32.xlu0 %v963, 112
      %v999 = vpop.permute.xlu0 %998
      %vm1000 = vcmask 916480
      %v1001 = vsel %vm1000, %v977, %v979
      %v1002 = vsel %vm1000, %v979, %v981
      %v1003 = vsel %vm1000, %v983, %v985
      %v1004 = vsel %vm1000, %v985, %v987
      %v1005 = vsel %vm1000, %v989, %v991
      %v1006 = vsel %vm1000, %v991, %v993
      %v1007 = vsel %vm1000, %v995, %v997
      %v1008 = vsel %vm1000, %v997, %v999
      %v1017 = vadd.f32 %v907, %v1001
      %v1018 = vadd.f32 %v908, %v1002
      %v1019 = vadd.f32 %v909, %v1003
      %v1020 = vadd.f32 %v910, %v1004
      %v1021 = vadd.f32 %v911, %v1005
      %v1022 = vadd.f32 %v912, %v1006
      %v1023 = vadd.f32 %v913, %v1007
      %v1024 = vadd.f32 %v914, %v1008
      %1025 = vrot.lane.b32.xlu0 %v488, 17
      %v1026 = vpop.permute.xlu0 %1025
      %1027 = vrot.lane.b32.xlu0 %v489, 17
      %v1028 = vpop.permute.xlu0 %1027
      %vm1029 = vcmask 138240
      %v1030 = vsel %vm1029, %v1026, %v1028
      %v1034 = vmul.f32 %v475, %v1026
      %v1035 = vmul.f32 %v476, %v1030
      %v1036 = vmul.f32 %v477, %v1028
      %v1037 = vmul.f32 %v478, %v1026
      %v1038 = vmul.f32 %v479, %v1030
      %v1039 = vmul.f32 %v480, %v1028
      %v1040 = vmul.f32 %v481, %v1026
      %v1041 = vmul.f32 %v482, %v1030
      %v1042 = vmul.f32 %v483, %v1028
      %v1043 = vmul.f32 %v484, %v1026
      %v1044 = vmul.f32 %v485, %v1030
      %v1045 = vmul.f32 %v486, %v1028
      %1046 = vset.pattern.permute.xlu0 6
      %1047 = vperm.xlu0 %1046, %v407
      %v1048 = vpop.permute.xlu0 %1047
      %1050 = vset.pattern.permute.xlu0 6
      %1051 = vperm.xlu0 %1050, %v408
      %v1052 = vpop.permute.xlu0 %1051
      %1054 = vset.pattern.permute.xlu0 6
      %1055 = vperm.xlu0 %1054, %v409
      %v1056 = vpop.permute.xlu0 %1055
      %1058 = vset.pattern.permute.xlu0 6
      %1059 = vperm.xlu0 %1058, %v410
      %v1060 = vpop.permute.xlu0 %1059
      %v1062 = vmul.f32 %v1034, %v1048
      %v1063 = vmul.f32 %v1035, %v1048
      %v1064 = vmul.f32 %v1036, %v1048
      %v1065 = vmul.f32 %v1037, %v1052
      %v1066 = vmul.f32 %v1038, %v1052
      %v1067 = vmul.f32 %v1039, %v1052
      %v1068 = vmul.f32 %v1040, %v1056
      %v1069 = vmul.f32 %v1041, %v1056
      %v1070 = vmul.f32 %v1042, %v1056
      %v1071 = vmul.f32 %v1043, %v1060
      %v1072 = vmul.f32 %v1044, %v1060
      %v1073 = vmul.f32 %v1045, %v1060
      %1086 = vrot.lane.b32.xlu0 %v1062, 111
      %v1087 = vpop.permute.xlu0 %1086
      %1088 = vrot.lane.b32.xlu0 %v1063, 111
      %v1089 = vpop.permute.xlu0 %1088
      %1090 = vrot.lane.b32.xlu0 %v1064, 111
      %v1091 = vpop.permute.xlu0 %1090
      %1092 = vrot.lane.b32.xlu0 %v1065, 111
      %v1093 = vpop.permute.xlu0 %1092
      %1094 = vrot.lane.b32.xlu0 %v1066, 111
      %v1095 = vpop.permute.xlu0 %1094
      %1096 = vrot.lane.b32.xlu0 %v1067, 111
      %v1097 = vpop.permute.xlu0 %1096
      %1098 = vrot.lane.b32.xlu0 %v1068, 111
      %v1099 = vpop.permute.xlu0 %1098
      %1100 = vrot.lane.b32.xlu0 %v1069, 111
      %v1101 = vpop.permute.xlu0 %1100
      %1102 = vrot.lane.b32.xlu0 %v1070, 111
      %v1103 = vpop.permute.xlu0 %1102
      %1104 = vrot.lane.b32.xlu0 %v1071, 111
      %v1105 = vpop.permute.xlu0 %1104
      %1106 = vrot.lane.b32.xlu0 %v1072, 111
      %v1107 = vpop.permute.xlu0 %1106
      %1108 = vrot.lane.b32.xlu0 %v1073, 111
      %v1109 = vpop.permute.xlu0 %1108
      %vm1110 = vcmask 908288
      %v1111 = vsel %vm1110, %v1087, %v1089
      %v1112 = vsel %vm1110, %v1089, %v1091
      %v1113 = vsel %vm1110, %v1093, %v1095
      %v1114 = vsel %vm1110, %v1095, %v1097
      %v1115 = vsel %vm1110, %v1099, %v1101
      %v1116 = vsel %vm1110, %v1101, %v1103
      %v1117 = vsel %vm1110, %v1105, %v1107
      %v1118 = vsel %vm1110, %v1107, %v1109
      %v1127 = vadd.f32 %v1017, %v1111
      %v1128 = vadd.f32 %v1018, %v1112
      %v1129 = vadd.f32 %v1019, %v1113
      %v1130 = vadd.f32 %v1020, %v1114
      %v1131 = vadd.f32 %v1021, %v1115
      %v1132 = vadd.f32 %v1022, %v1116
      %v1133 = vadd.f32 %v1023, %v1117
      %v1134 = vadd.f32 %v1024, %v1118
      %1135 = vset.pattern.permute.xlu0 7
      %1136 = vperm.xlu0 %1135, %v407
      %v1137 = vpop.permute.xlu0 %1136
      %1139 = vset.pattern.permute.xlu0 7
      %1140 = vperm.xlu0 %1139, %v408
      %v1141 = vpop.permute.xlu0 %1140
      %1143 = vset.pattern.permute.xlu0 7
      %1144 = vperm.xlu0 %1143, %v409
      %v1145 = vpop.permute.xlu0 %1144
      %1147 = vset.pattern.permute.xlu0 7
      %1148 = vperm.xlu0 %1147, %v410
      %v1149 = vpop.permute.xlu0 %1148
      %v1151 = vmul.f32 %v475, %v1137
      %v1152 = vmul.f32 %v476, %v1137
      %v1153 = vmul.f32 %v477, %v1137
      %v1154 = vmul.f32 %v478, %v1141
      %v1155 = vmul.f32 %v479, %v1141
      %v1156 = vmul.f32 %v480, %v1141
      %v1157 = vmul.f32 %v481, %v1145
      %v1158 = vmul.f32 %v482, %v1145
      %v1159 = vmul.f32 %v483, %v1145
      %v1160 = vmul.f32 %v484, %v1149
      %v1161 = vmul.f32 %v485, %v1149
      %v1162 = vmul.f32 %v486, %v1149
      %1175 = vrot.lane.b32.xlu0 %v1151, 110
      %v1176 = vpop.permute.xlu0 %1175
      %1177 = vrot.lane.b32.xlu0 %v1152, 110
      %v1178 = vpop.permute.xlu0 %1177
      %1179 = vrot.lane.b32.xlu0 %v1153, 110
      %v1180 = vpop.permute.xlu0 %1179
      %1181 = vrot.lane.b32.xlu0 %v1154, 110
      %v1182 = vpop.permute.xlu0 %1181
      %1183 = vrot.lane.b32.xlu0 %v1155, 110
      %v1184 = vpop.permute.xlu0 %1183
      %1185 = vrot.lane.b32.xlu0 %v1156, 110
      %v1186 = vpop.permute.xlu0 %1185
      %1187 = vrot.lane.b32.xlu0 %v1157, 110
      %v1188 = vpop.permute.xlu0 %1187
      %1189 = vrot.lane.b32.xlu0 %v1158, 110
      %v1190 = vpop.permute.xlu0 %1189
      %1191 = vrot.lane.b32.xlu0 %v1159, 110
      %v1192 = vpop.permute.xlu0 %1191
      %1193 = vrot.lane.b32.xlu0 %v1160, 110
      %v1194 = vpop.permute.xlu0 %1193
      %1195 = vrot.lane.b32.xlu0 %v1161, 110
      %v1196 = vpop.permute.xlu0 %1195
      %1197 = vrot.lane.b32.xlu0 %v1162, 110
      %v1198 = vpop.permute.xlu0 %1197
      %vm1199 = vcmask 900096
      %v1200 = vsel %vm1199, %v1176, %v1178
      %v1201 = vsel %vm1199, %v1178, %v1180
      %v1202 = vsel %vm1199, %v1182, %v1184
      %v1203 = vsel %vm1199, %v1184, %v1186
      %v1204 = vsel %vm1199, %v1188, %v1190
      %v1205 = vsel %vm1199, %v1190, %v1192
      %v1206 = vsel %vm1199, %v1194, %v1196
      %v1207 = vsel %vm1199, %v1196, %v1198
      %v1216 = vadd.f32 %v1127, %v1200
      %v1217 = vadd.f32 %v1128, %v1201
      %v1218 = vadd.f32 %v1129, %v1202
      %v1219 = vadd.f32 %v1130, %v1203
      %v1220 = vadd.f32 %v1131, %v1204
      %v1221 = vadd.f32 %v1132, %v1205
      %v1222 = vadd.f32 %v1133, %v1206
      %v1223 = vadd.f32 %v1134, %v1207
      %1224 = vrot.lane.b32.xlu0 %v690, 19
      %v1225 = vpop.permute.xlu0 %1224
      %1226 = vrot.lane.b32.xlu0 %v691, 19
      %v1227 = vpop.permute.xlu0 %1226
      %vm1228 = vcmask 154624
      %v1229 = vsel %vm1228, %v1225, %v1227
      %v1233 = vmul.f32 %v475, %v1225
      %v1234 = vmul.f32 %v476, %v1229
      %v1235 = vmul.f32 %v477, %v1227
      %v1236 = vmul.f32 %v478, %v1225
      %v1237 = vmul.f32 %v479, %v1229
      %v1238 = vmul.f32 %v480, %v1227
      %v1239 = vmul.f32 %v481, %v1225
      %v1240 = vmul.f32 %v482, %v1229
      %v1241 = vmul.f32 %v483, %v1227
      %v1242 = vmul.f32 %v484, %v1225
      %v1243 = vmul.f32 %v485, %v1229
      %v1244 = vmul.f32 %v486, %v1227
      %1245 = vset.pattern.permute.xlu0 8
      %1246 = vperm.xlu0 %1245, %v407
      %v1247 = vpop.permute.xlu0 %1246
      %1249 = vset.pattern.permute.xlu0 8
      %1250 = vperm.xlu0 %1249, %v408
      %v1251 = vpop.permute.xlu0 %1250
      %1253 = vset.pattern.permute.xlu0 8
      %1254 = vperm.xlu0 %1253, %v409
      %v1255 = vpop.permute.xlu0 %1254
      %1257 = vset.pattern.permute.xlu0 8
      %1258 = vperm.xlu0 %1257, %v410
      %v1259 = vpop.permute.xlu0 %1258
      %v1261 = vmul.f32 %v1233, %v1247
      %v1262 = vmul.f32 %v1234, %v1247
      %v1263 = vmul.f32 %v1235, %v1247
      %v1264 = vmul.f32 %v1236, %v1251
      %v1265 = vmul.f32 %v1237, %v1251
      %v1266 = vmul.f32 %v1238, %v1251
      %v1267 = vmul.f32 %v1239, %v1255
      %v1268 = vmul.f32 %v1240, %v1255
      %v1269 = vmul.f32 %v1241, %v1255
      %v1270 = vmul.f32 %v1242, %v1259
      %v1271 = vmul.f32 %v1243, %v1259
      %v1272 = vmul.f32 %v1244, %v1259
      %1285 = vrot.lane.b32.xlu0 %v1261, 109
      %v1286 = vpop.permute.xlu0 %1285
      %1287 = vrot.lane.b32.xlu0 %v1262, 109
      %v1288 = vpop.permute.xlu0 %1287
      %1289 = vrot.lane.b32.xlu0 %v1263, 109
      %v1290 = vpop.permute.xlu0 %1289
      %1291 = vrot.lane.b32.xlu0 %v1264, 109
      %v1292 = vpop.permute.xlu0 %1291
      %1293 = vrot.lane.b32.xlu0 %v1265, 109
      %v1294 = vpop.permute.xlu0 %1293
      %1295 = vrot.lane.b32.xlu0 %v1266, 109
      %v1296 = vpop.permute.xlu0 %1295
      %1297 = vrot.lane.b32.xlu0 %v1267, 109
      %v1298 = vpop.permute.xlu0 %1297
      %1299 = vrot.lane.b32.xlu0 %v1268, 109
      %v1300 = vpop.permute.xlu0 %1299
      %1301 = vrot.lane.b32.xlu0 %v1269, 109
      %v1302 = vpop.permute.xlu0 %1301
      %1303 = vrot.lane.b32.xlu0 %v1270, 109
      %v1304 = vpop.permute.xlu0 %1303
      %1305 = vrot.lane.b32.xlu0 %v1271, 109
      %v1306 = vpop.permute.xlu0 %1305
      %1307 = vrot.lane.b32.xlu0 %v1272, 109
      %v1308 = vpop.permute.xlu0 %1307
      %vm1309 = vcmask 891904
      %v1310 = vsel %vm1309, %v1286, %v1288
      %v1311 = vsel %vm1309, %v1288, %v1290
      %v1312 = vsel %vm1309, %v1292, %v1294
      %v1313 = vsel %vm1309, %v1294, %v1296
      %v1314 = vsel %vm1309, %v1298, %v1300
      %v1315 = vsel %vm1309, %v1300, %v1302
      %v1316 = vsel %vm1309, %v1304, %v1306
      %v1317 = vsel %vm1309, %v1306, %v1308
      %v1326 = vadd.f32 %v1216, %v1310
      %v1327 = vadd.f32 %v1217, %v1311
      %v1328 = vadd.f32 %v1218, %v1312
      %v1329 = vadd.f32 %v1219, %v1313
      %v1330 = vadd.f32 %v1220, %v1314
      %v1331 = vadd.f32 %v1221, %v1315
      %v1332 = vadd.f32 %v1222, %v1316
      %v1333 = vadd.f32 %v1223, %v1317
      %1334 = vrot.lane.b32.xlu0 %v803, 20
      %v1335 = vpop.permute.xlu0 %1334
      %1336 = vrot.lane.b32.xlu0 %v804, 20
      %v1337 = vpop.permute.xlu0 %1336
      %vm1338 = vcmask 162816
      %v1339 = vsel %vm1338, %v1335, %v1337
      %v1343 = vmul.f32 %v475, %v1335
      %v1344 = vmul.f32 %v476, %v1339
      %v1345 = vmul.f32 %v477, %v1337
      %v1346 = vmul.f32 %v478, %v1335
      %v1347 = vmul.f32 %v479, %v1339
      %v1348 = vmul.f32 %v480, %v1337
      %v1349 = vmul.f32 %v481, %v1335
      %v1350 = vmul.f32 %v482, %v1339
      %v1351 = vmul.f32 %v483, %v1337
      %v1352 = vmul.f32 %v484, %v1335
      %v1353 = vmul.f32 %v485, %v1339
      %v1354 = vmul.f32 %v486, %v1337
      %1355 = vset.pattern.permute.xlu0 9
      %1356 = vperm.xlu0 %1355, %v407
      %v1357 = vpop.permute.xlu0 %1356
      %1359 = vset.pattern.permute.xlu0 9
      %1360 = vperm.xlu0 %1359, %v408
      %v1361 = vpop.permute.xlu0 %1360
      %1363 = vset.pattern.permute.xlu0 9
      %1364 = vperm.xlu0 %1363, %v409
      %v1365 = vpop.permute.xlu0 %1364
      %1367 = vset.pattern.permute.xlu0 9
      %1368 = vperm.xlu0 %1367, %v410
      %v1369 = vpop.permute.xlu0 %1368
      %v1371 = vmul.f32 %v1343, %v1357
      %v1372 = vmul.f32 %v1344, %v1357
      %v1373 = vmul.f32 %v1345, %v1357
      %v1374 = vmul.f32 %v1346, %v1361
      %v1375 = vmul.f32 %v1347, %v1361
      %v1376 = vmul.f32 %v1348, %v1361
      %v1377 = vmul.f32 %v1349, %v1365
      %v1378 = vmul.f32 %v1350, %v1365
      %v1379 = vmul.f32 %v1351, %v1365
      %v1380 = vmul.f32 %v1352, %v1369
      %v1381 = vmul.f32 %v1353, %v1369
      %v1382 = vmul.f32 %v1354, %v1369
      %1395 = vrot.lane.b32.xlu0 %v1371, 108
      %v1396 = vpop.permute.xlu0 %1395
      %1397 = vrot.lane.b32.xlu0 %v1372, 108
      %v1398 = vpop.permute.xlu0 %1397
      %1399 = vrot.lane.b32.xlu0 %v1373, 108
      %v1400 = vpop.permute.xlu0 %1399
      %1401 = vrot.lane.b32.xlu0 %v1374, 108
      %v1402 = vpop.permute.xlu0 %1401
      %1403 = vrot.lane.b32.xlu0 %v1375, 108
      %v1404 = vpop.permute.xlu0 %1403
      %1405 = vrot.lane.b32.xlu0 %v1376, 108
      %v1406 = vpop.permute.xlu0 %1405
      %1407 = vrot.lane.b32.xlu0 %v1377, 108
      %v1408 = vpop.permute.xlu0 %1407
      %1409 = vrot.lane.b32.xlu0 %v1378, 108
      %v1410 = vpop.permute.xlu0 %1409
      %1411 = vrot.lane.b32.xlu0 %v1379, 108
      %v1412 = vpop.permute.xlu0 %1411
      %1413 = vrot.lane.b32.xlu0 %v1380, 108
      %v1414 = vpop.permute.xlu0 %1413
      %1415 = vrot.lane.b32.xlu0 %v1381, 108
      %v1416 = vpop.permute.xlu0 %1415
      %1417 = vrot.lane.b32.xlu0 %v1382, 108
      %v1418 = vpop.permute.xlu0 %1417
      %vm1419 = vcmask 883712
      %v1420 = vsel %vm1419, %v1396, %v1398
      %v1421 = vsel %vm1419, %v1398, %v1400
      %v1422 = vsel %vm1419, %v1402, %v1404
      %v1423 = vsel %vm1419, %v1404, %v1406
      %v1424 = vsel %vm1419, %v1408, %v1410
      %v1425 = vsel %vm1419, %v1410, %v1412
      %v1426 = vsel %vm1419, %v1414, %v1416
      %v1427 = vsel %vm1419, %v1416, %v1418
      %v1436 = vadd.f32 %v1326, %v1420
      %v1437 = vadd.f32 %v1327, %v1421
      %v1438 = vadd.f32 %v1328, %v1422
      %v1439 = vadd.f32 %v1329, %v1423
      %v1440 = vadd.f32 %v1330, %v1424
      %v1441 = vadd.f32 %v1331, %v1425
      %v1442 = vadd.f32 %v1332, %v1426
      %v1443 = vadd.f32 %v1333, %v1427
      %1444 = vrot.lane.b32.xlu0 %v427, 32
      %v1445 = vpop.permute.xlu0 %1444
      %1446 = vrot.lane.b32.xlu0 %v428, 32
      %v1447 = vpop.permute.xlu0 %1446
      %vm1448 = vcmask 261120
      %v1449 = vsel %vm1448, %v1445, %v1447
      %v1453 = vmul.f32 %v475, %v1445
      %v1454 = vmul.f32 %v476, %v1449
      %v1455 = vmul.f32 %v477, %v1447
      %v1456 = vmul.f32 %v478, %v1445
      %v1457 = vmul.f32 %v479, %v1449
      %v1458 = vmul.f32 %v480, %v1447
      %v1459 = vmul.f32 %v481, %v1445
      %v1460 = vmul.f32 %v482, %v1449
      %v1461 = vmul.f32 %v483, %v1447
      %v1462 = vmul.f32 %v484, %v1445
      %v1463 = vmul.f32 %v485, %v1449
      %v1464 = vmul.f32 %v486, %v1447
      %1465 = vset.pattern.permute.xlu0 10
      %1466 = vperm.xlu0 %1465, %v407
      %v1467 = vpop.permute.xlu0 %1466
      %1469 = vset.pattern.permute.xlu0 10
      %1470 = vperm.xlu0 %1469, %v408
      %v1471 = vpop.permute.xlu0 %1470
      %1473 = vset.pattern.permute.xlu0 10
      %1474 = vperm.xlu0 %1473, %v409
      %v1475 = vpop.permute.xlu0 %1474
      %1477 = vset.pattern.permute.xlu0 10
      %1478 = vperm.xlu0 %1477, %v410
      %v1479 = vpop.permute.xlu0 %1478
      %v1481 = vmul.f32 %v1453, %v1467
      %v1482 = vmul.f32 %v1454, %v1467
      %v1483 = vmul.f32 %v1455, %v1467
      %v1484 = vmul.f32 %v1456, %v1471
      %v1485 = vmul.f32 %v1457, %v1471
      %v1486 = vmul.f32 %v1458, %v1471
      %v1487 = vmul.f32 %v1459, %v1475
      %v1488 = vmul.f32 %v1460, %v1475
      %v1489 = vmul.f32 %v1461, %v1475
      %v1490 = vmul.f32 %v1462, %v1479
      %v1491 = vmul.f32 %v1463, %v1479
      %v1492 = vmul.f32 %v1464, %v1479
      %1505 = vrot.lane.b32.xlu0 %v1481, 96
      %v1506 = vpop.permute.xlu0 %1505
      %1507 = vrot.lane.b32.xlu0 %v1482, 96
      %v1508 = vpop.permute.xlu0 %1507
      %1509 = vrot.lane.b32.xlu0 %v1483, 96
      %v1510 = vpop.permute.xlu0 %1509
      %1511 = vrot.lane.b32.xlu0 %v1484, 96
      %v1512 = vpop.permute.xlu0 %1511
      %1513 = vrot.lane.b32.xlu0 %v1485, 96
      %v1514 = vpop.permute.xlu0 %1513
      %1515 = vrot.lane.b32.xlu0 %v1486, 96
      %v1516 = vpop.permute.xlu0 %1515
      %1517 = vrot.lane.b32.xlu0 %v1487, 96
      %v1518 = vpop.permute.xlu0 %1517
      %1519 = vrot.lane.b32.xlu0 %v1488, 96
      %v1520 = vpop.permute.xlu0 %1519
      %1521 = vrot.lane.b32.xlu0 %v1489, 96
      %v1522 = vpop.permute.xlu0 %1521
      %1523 = vrot.lane.b32.xlu0 %v1490, 96
      %v1524 = vpop.permute.xlu0 %1523
      %1525 = vrot.lane.b32.xlu0 %v1491, 96
      %v1526 = vpop.permute.xlu0 %1525
      %1527 = vrot.lane.b32.xlu0 %v1492, 96
      %v1528 = vpop.permute.xlu0 %1527
      %vm1529 = vcmask 785408
      %v1530 = vsel %vm1529, %v1506, %v1508
      %v1531 = vsel %vm1529, %v1508, %v1510
      %v1532 = vsel %vm1529, %v1512, %v1514
      %v1533 = vsel %vm1529, %v1514, %v1516
      %v1534 = vsel %vm1529, %v1518, %v1520
      %v1535 = vsel %vm1529, %v1520, %v1522
      %v1536 = vsel %vm1529, %v1524, %v1526
      %v1537 = vsel %vm1529, %v1526, %v1528
      %v1546 = vadd.f32 %v1436, %v1530
      %v1547 = vadd.f32 %v1437, %v1531
      %v1548 = vadd.f32 %v1438, %v1532
      %v1549 = vadd.f32 %v1439, %v1533
      %v1550 = vadd.f32 %v1440, %v1534
      %v1551 = vadd.f32 %v1441, %v1535
      %v1552 = vadd.f32 %v1442, %v1536
      %v1553 = vadd.f32 %v1443, %v1537
      %1554 = vrot.lane.b32.xlu0 %v488, 33
      %v1555 = vpop.permute.xlu0 %1554
      %1556 = vrot.lane.b32.xlu0 %v489, 33
      %v1557 = vpop.permute.xlu0 %1556
      %vm1558 = vcmask 269312
      %v1559 = vsel %vm1558, %v1555, %v1557
      %v1563 = vmul.f32 %v475, %v1555
      %v1564 = vmul.f32 %v476, %v1559
      %v1565 = vmul.f32 %v477, %v1557
      %v1566 = vmul.f32 %v478, %v1555
      %v1567 = vmul.f32 %v479, %v1559
      %v1568 = vmul.f32 %v480, %v1557
      %v1569 = vmul.f32 %v481, %v1555
      %v1570 = vmul.f32 %v482, %v1559
      %v1571 = vmul.f32 %v483, %v1557
      %v1572 = vmul.f32 %v484, %v1555
      %v1573 = vmul.f32 %v485, %v1559
      %v1574 = vmul.f32 %v486, %v1557
      %1575 = vset.pattern.permute.xlu0 11
      %1576 = vperm.xlu0 %1575, %v407
      %v1577 = vpop.permute.xlu0 %1576
      %1579 = vset.pattern.permute.xlu0 11
      %1580 = vperm.xlu0 %1579, %v408
      %v1581 = vpop.permute.xlu0 %1580
      %1583 = vset.pattern.permute.xlu0 11
      %1584 = vperm.xlu0 %1583, %v409
      %v1585 = vpop.permute.xlu0 %1584
      %1587 = vset.pattern.permute.xlu0 11
      %1588 = vperm.xlu0 %1587, %v410
      %v1589 = vpop.permute.xlu0 %1588
      %v1591 = vmul.f32 %v1563, %v1577
      %v1592 = vmul.f32 %v1564, %v1577
      %v1593 = vmul.f32 %v1565, %v1577
      %v1594 = vmul.f32 %v1566, %v1581
      %v1595 = vmul.f32 %v1567, %v1581
      %v1596 = vmul.f32 %v1568, %v1581
      %v1597 = vmul.f32 %v1569, %v1585
      %v1598 = vmul.f32 %v1570, %v1585
      %v1599 = vmul.f32 %v1571, %v1585
      %v1600 = vmul.f32 %v1572, %v1589
      %v1601 = vmul.f32 %v1573, %v1589
      %v1602 = vmul.f32 %v1574, %v1589
      %1615 = vrot.lane.b32.xlu0 %v1591, 95
      %v1616 = vpop.permute.xlu0 %1615
      %1617 = vrot.lane.b32.xlu0 %v1592, 95
      %v1618 = vpop.permute.xlu0 %1617
      %1619 = vrot.lane.b32.xlu0 %v1593, 95
      %v1620 = vpop.permute.xlu0 %1619
      %1621 = vrot.lane.b32.xlu0 %v1594, 95
      %v1622 = vpop.permute.xlu0 %1621
      %1623 = vrot.lane.b32.xlu0 %v1595, 95
      %v1624 = vpop.permute.xlu0 %1623
      %1625 = vrot.lane.b32.xlu0 %v1596, 95
      %v1626 = vpop.permute.xlu0 %1625
      %1627 = vrot.lane.b32.xlu0 %v1597, 95
      %v1628 = vpop.permute.xlu0 %1627
      %1629 = vrot.lane.b32.xlu0 %v1598, 95
      %v1630 = vpop.permute.xlu0 %1629
      %1631 = vrot.lane.b32.xlu0 %v1599, 95
      %v1632 = vpop.permute.xlu0 %1631
      %1633 = vrot.lane.b32.xlu0 %v1600, 95
      %v1634 = vpop.permute.xlu0 %1633
      %1635 = vrot.lane.b32.xlu0 %v1601, 95
      %v1636 = vpop.permute.xlu0 %1635
      %1637 = vrot.lane.b32.xlu0 %v1602, 95
      %v1638 = vpop.permute.xlu0 %1637
      %vm1639 = vcmask 777216
      %v1640 = vsel %vm1639, %v1616, %v1618
      %v1641 = vsel %vm1639, %v1618, %v1620
      %v1642 = vsel %vm1639, %v1622, %v1624
      %v1643 = vsel %vm1639, %v1624, %v1626
      %v1644 = vsel %vm1639, %v1628, %v1630
      %v1645 = vsel %vm1639, %v1630, %v1632
      %v1646 = vsel %vm1639, %v1634, %v1636
      %v1647 = vsel %vm1639, %v1636, %v1638
      %v1656 = vadd.f32 %v1546, %v1640
      %v1657 = vadd.f32 %v1547, %v1641
      %v1658 = vadd.f32 %v1548, %v1642
      %v1659 = vadd.f32 %v1549, %v1643
      %v1660 = vadd.f32 %v1550, %v1644
      %v1661 = vadd.f32 %v1551, %v1645
      %v1662 = vadd.f32 %v1552, %v1646
      %v1663 = vadd.f32 %v1553, %v1647
      %1664 = vset.pattern.permute.xlu0 12
      %1665 = vperm.xlu0 %1664, %v407
      %v1666 = vpop.permute.xlu0 %1665
      %1668 = vset.pattern.permute.xlu0 12
      %1669 = vperm.xlu0 %1668, %v408
      %v1670 = vpop.permute.xlu0 %1669
      %1672 = vset.pattern.permute.xlu0 12
      %1673 = vperm.xlu0 %1672, %v409
      %v1674 = vpop.permute.xlu0 %1673
      %1676 = vset.pattern.permute.xlu0 12
      %1677 = vperm.xlu0 %1676, %v410
      %v1678 = vpop.permute.xlu0 %1677
      %v1680 = vmul.f32 %v475, %v1666
      %v1681 = vmul.f32 %v476, %v1666
      %v1682 = vmul.f32 %v477, %v1666
      %v1683 = vmul.f32 %v478, %v1670
      %v1684 = vmul.f32 %v479, %v1670
      %v1685 = vmul.f32 %v480, %v1670
      %v1686 = vmul.f32 %v481, %v1674
      %v1687 = vmul.f32 %v482, %v1674
      %v1688 = vmul.f32 %v483, %v1674
      %v1689 = vmul.f32 %v484, %v1678
      %v1690 = vmul.f32 %v485, %v1678
      %v1691 = vmul.f32 %v486, %v1678
      %1704 = vrot.lane.b32.xlu0 %v1680, 94
      %v1705 = vpop.permute.xlu0 %1704
      %1706 = vrot.lane.b32.xlu0 %v1681, 94
      %v1707 = vpop.permute.xlu0 %1706
      %1708 = vrot.lane.b32.xlu0 %v1682, 94
      %v1709 = vpop.permute.xlu0 %1708
      %1710 = vrot.lane.b32.xlu0 %v1683, 94
      %v1711 = vpop.permute.xlu0 %1710
      %1712 = vrot.lane.b32.xlu0 %v1684, 94
      %v1713 = vpop.permute.xlu0 %1712
      %1714 = vrot.lane.b32.xlu0 %v1685, 94
      %v1715 = vpop.permute.xlu0 %1714
      %1716 = vrot.lane.b32.xlu0 %v1686, 94
      %v1717 = vpop.permute.xlu0 %1716
      %1718 = vrot.lane.b32.xlu0 %v1687, 94
      %v1719 = vpop.permute.xlu0 %1718
      %1720 = vrot.lane.b32.xlu0 %v1688, 94
      %v1721 = vpop.permute.xlu0 %1720
      %1722 = vrot.lane.b32.xlu0 %v1689, 94
      %v1723 = vpop.permute.xlu0 %1722
      %1724 = vrot.lane.b32.xlu0 %v1690, 94
      %v1725 = vpop.permute.xlu0 %1724
      %1726 = vrot.lane.b32.xlu0 %v1691, 94
      %v1727 = vpop.permute.xlu0 %1726
      %vm1728 = vcmask 769024
      %v1729 = vsel %vm1728, %v1705, %v1707
      %v1730 = vsel %vm1728, %v1707, %v1709
      %v1731 = vsel %vm1728, %v1711, %v1713
      %v1732 = vsel %vm1728, %v1713, %v1715
      %v1733 = vsel %vm1728, %v1717, %v1719
      %v1734 = vsel %vm1728, %v1719, %v1721
      %v1735 = vsel %vm1728, %v1723, %v1725
      %v1736 = vsel %vm1728, %v1725, %v1727
      %v1745 = vadd.f32 %v1656, %v1729
      %v1746 = vadd.f32 %v1657, %v1730
      %v1747 = vadd.f32 %v1658, %v1731
      %v1748 = vadd.f32 %v1659, %v1732
      %v1749 = vadd.f32 %v1660, %v1733
      %v1750 = vadd.f32 %v1661, %v1734
      %v1751 = vadd.f32 %v1662, %v1735
      %v1752 = vadd.f32 %v1663, %v1736
      %1753 = vrot.lane.b32.xlu0 %v690, 35
      %v1754 = vpop.permute.xlu0 %1753
      %1755 = vrot.lane.b32.xlu0 %v691, 35
      %v1756 = vpop.permute.xlu0 %1755
      %vm1757 = vcmask 285696
      %v1758 = vsel %vm1757, %v1754, %v1756
      %v1762 = vmul.f32 %v475, %v1754
      %v1763 = vmul.f32 %v476, %v1758
      %v1764 = vmul.f32 %v477, %v1756
      %v1765 = vmul.f32 %v478, %v1754
      %v1766 = vmul.f32 %v479, %v1758
      %v1767 = vmul.f32 %v480, %v1756
      %v1768 = vmul.f32 %v481, %v1754
      %v1769 = vmul.f32 %v482, %v1758
      %v1770 = vmul.f32 %v483, %v1756
      %v1771 = vmul.f32 %v484, %v1754
      %v1772 = vmul.f32 %v485, %v1758
      %v1773 = vmul.f32 %v486, %v1756
      %1774 = vset.pattern.permute.xlu0 13
      %1775 = vperm.xlu0 %1774, %v407
      %v1776 = vpop.permute.xlu0 %1775
      %1778 = vset.pattern.permute.xlu0 13
      %1779 = vperm.xlu0 %1778, %v408
      %v1780 = vpop.permute.xlu0 %1779
      %1782 = vset.pattern.permute.xlu0 13
      %1783 = vperm.xlu0 %1782, %v409
      %v1784 = vpop.permute.xlu0 %1783
      %1786 = vset.pattern.permute.xlu0 13
      %1787 = vperm.xlu0 %1786, %v410
      %v1788 = vpop.permute.xlu0 %1787
      %v1790 = vmul.f32 %v1762, %v1776
      %v1791 = vmul.f32 %v1763, %v1776
      %v1792 = vmul.f32 %v1764, %v1776
      %v1793 = vmul.f32 %v1765, %v1780
      %v1794 = vmul.f32 %v1766, %v1780
      %v1795 = vmul.f32 %v1767, %v1780
      %v1796 = vmul.f32 %v1768, %v1784
      %v1797 = vmul.f32 %v1769, %v1784
      %v1798 = vmul.f32 %v1770, %v1784
      %v1799 = vmul.f32 %v1771, %v1788
      %v1800 = vmul.f32 %v1772, %v1788
      %v1801 = vmul.f32 %v1773, %v1788
      %1814 = vrot.lane.b32.xlu0 %v1790, 93
      %v1815 = vpop.permute.xlu0 %1814
      %1816 = vrot.lane.b32.xlu0 %v1791, 93
      %v1817 = vpop.permute.xlu0 %1816
      %1818 = vrot.lane.b32.xlu0 %v1792, 93
      %v1819 = vpop.permute.xlu0 %1818
      %1820 = vrot.lane.b32.xlu0 %v1793, 93
      %v1821 = vpop.permute.xlu0 %1820
      %1822 = vrot.lane.b32.xlu0 %v1794, 93
      %v1823 = vpop.permute.xlu0 %1822
      %1824 = vrot.lane.b32.xlu0 %v1795, 93
      %v1825 = vpop.permute.xlu0 %1824
      %1826 = vrot.lane.b32.xlu0 %v1796, 93
      %v1827 = vpop.permute.xlu0 %1826
      %1828 = vrot.lane.b32.xlu0 %v1797, 93
      %v1829 = vpop.permute.xlu0 %1828
      %1830 = vrot.lane.b32.xlu0 %v1798, 93
      %v1831 = vpop.permute.xlu0 %1830
      %1832 = vrot.lane.b32.xlu0 %v1799, 93
      %v1833 = vpop.permute.xlu0 %1832
      %1834 = vrot.lane.b32.xlu0 %v1800, 93
      %v1835 = vpop.permute.xlu0 %1834
      %1836 = vrot.lane.b32.xlu0 %v1801, 93
      %v1837 = vpop.permute.xlu0 %1836
      %vm1838 = vcmask 760832
      %v1839 = vsel %vm1838, %v1815, %v1817
      %v1840 = vsel %vm1838, %v1817, %v1819
      %v1841 = vsel %vm1838, %v1821, %v1823
      %v1842 = vsel %vm1838, %v1823, %v1825
      %v1843 = vsel %vm1838, %v1827, %v1829
      %v1844 = vsel %vm1838, %v1829, %v1831
      %v1845 = vsel %vm1838, %v1833, %v1835
      %v1846 = vsel %vm1838, %v1835, %v1837
      %v1855 = vadd.f32 %v1745, %v1839
      %v1856 = vadd.f32 %v1746, %v1840
      %v1857 = vadd.f32 %v1747, %v1841
      %v1858 = vadd.f32 %v1748, %v1842
      %v1859 = vadd.f32 %v1749, %v1843
      %v1860 = vadd.f32 %v1750, %v1844
      %v1861 = vadd.f32 %v1751, %v1845
      %v1862 = vadd.f32 %v1752, %v1846
      %1863 = vrot.lane.b32.xlu0 %v803, 36
      %v1864 = vpop.permute.xlu0 %1863
      %1865 = vrot.lane.b32.xlu0 %v804, 36
      %v1866 = vpop.permute.xlu0 %1865
      %vm1867 = vcmask 293888
      %v1868 = vsel %vm1867, %v1864, %v1866
      %v1872 = vmul.f32 %v475, %v1864
      %v1873 = vmul.f32 %v476, %v1868
      %v1874 = vmul.f32 %v477, %v1866
      %v1875 = vmul.f32 %v478, %v1864
      %v1876 = vmul.f32 %v479, %v1868
      %v1877 = vmul.f32 %v480, %v1866
      %v1878 = vmul.f32 %v481, %v1864
      %v1879 = vmul.f32 %v482, %v1868
      %v1880 = vmul.f32 %v483, %v1866
      %v1881 = vmul.f32 %v484, %v1864
      %v1882 = vmul.f32 %v485, %v1868
      %v1883 = vmul.f32 %v486, %v1866
      %1884 = vset.pattern.permute.xlu0 14
      %1885 = vperm.xlu0 %1884, %v407
      %v1886 = vpop.permute.xlu0 %1885
      %1888 = vset.pattern.permute.xlu0 14
      %1889 = vperm.xlu0 %1888, %v408
      %v1890 = vpop.permute.xlu0 %1889
      %1892 = vset.pattern.permute.xlu0 14
      %1893 = vperm.xlu0 %1892, %v409
      %v1894 = vpop.permute.xlu0 %1893
      %1896 = vset.pattern.permute.xlu0 14
      %1897 = vperm.xlu0 %1896, %v410
      %v1898 = vpop.permute.xlu0 %1897
      %v1900 = vmul.f32 %v1872, %v1886
      %v1901 = vmul.f32 %v1873, %v1886
      %v1902 = vmul.f32 %v1874, %v1886
      %v1903 = vmul.f32 %v1875, %v1890
      %v1904 = vmul.f32 %v1876, %v1890
      %v1905 = vmul.f32 %v1877, %v1890
      %v1906 = vmul.f32 %v1878, %v1894
      %v1907 = vmul.f32 %v1879, %v1894
      %v1908 = vmul.f32 %v1880, %v1894
      %v1909 = vmul.f32 %v1881, %v1898
      %v1910 = vmul.f32 %v1882, %v1898
      %v1911 = vmul.f32 %v1883, %v1898
      %1924 = vrot.lane.b32.xlu0 %v1900, 92
      %v1925 = vpop.permute.xlu0 %1924
      %1926 = vrot.lane.b32.xlu0 %v1901, 92
      %v1927 = vpop.permute.xlu0 %1926
      %1928 = vrot.lane.b32.xlu0 %v1902, 92
      %v1929 = vpop.permute.xlu0 %1928
      %1930 = vrot.lane.b32.xlu0 %v1903, 92
      %v1931 = vpop.permute.xlu0 %1930
      %1932 = vrot.lane.b32.xlu0 %v1904, 92
      %v1933 = vpop.permute.xlu0 %1932
      %1934 = vrot.lane.b32.xlu0 %v1905, 92
      %v1935 = vpop.permute.xlu0 %1934
      %1936 = vrot.lane.b32.xlu0 %v1906, 92
      %v1937 = vpop.permute.xlu0 %1936
      %1938 = vrot.lane.b32.xlu0 %v1907, 92
      %v1939 = vpop.permute.xlu0 %1938
      %1940 = vrot.lane.b32.xlu0 %v1908, 92
      %v1941 = vpop.permute.xlu0 %1940
      %1942 = vrot.lane.b32.xlu0 %v1909, 92
      %v1943 = vpop.permute.xlu0 %1942
      %1944 = vrot.lane.b32.xlu0 %v1910, 92
      %v1945 = vpop.permute.xlu0 %1944
      %1946 = vrot.lane.b32.xlu0 %v1911, 92
      %v1947 = vpop.permute.xlu0 %1946
      %vm1948 = vcmask 752640
      %v1949 = vsel %vm1948, %v1925, %v1927
      %v1950 = vsel %vm1948, %v1927, %v1929
      %v1951 = vsel %vm1948, %v1931, %v1933
      %v1952 = vsel %vm1948, %v1933, %v1935
      %v1953 = vsel %vm1948, %v1937, %v1939
      %v1954 = vsel %vm1948, %v1939, %v1941
      %v1955 = vsel %vm1948, %v1943, %v1945
      %v1956 = vsel %vm1948, %v1945, %v1947
      %v1965 = vadd.f32 %v1855, %v1949
      %v1966 = vadd.f32 %v1856, %v1950
      %v1967 = vadd.f32 %v1857, %v1951
      %v1968 = vadd.f32 %v1858, %v1952
      %v1969 = vadd.f32 %v1859, %v1953
      %v1970 = vadd.f32 %v1860, %v1954
      %v1971 = vadd.f32 %v1861, %v1955
      %v1972 = vadd.f32 %v1862, %v1956
      %1973 = vrot.lane.b32.xlu0 %v427, 48
      %v1974 = vpop.permute.xlu0 %1973
      %1975 = vrot.lane.b32.xlu0 %v428, 48
      %v1976 = vpop.permute.xlu0 %1975
      %vm1977 = vcmask 392192
      %v1978 = vsel %vm1977, %v1974, %v1976
      %v1982 = vmul.f32 %v475, %v1974
      %v1983 = vmul.f32 %v476, %v1978
      %v1984 = vmul.f32 %v477, %v1976
      %v1985 = vmul.f32 %v478, %v1974
      %v1986 = vmul.f32 %v479, %v1978
      %v1987 = vmul.f32 %v480, %v1976
      %v1988 = vmul.f32 %v481, %v1974
      %v1989 = vmul.f32 %v482, %v1978
      %v1990 = vmul.f32 %v483, %v1976
      %v1991 = vmul.f32 %v484, %v1974
      %v1992 = vmul.f32 %v485, %v1978
      %v1993 = vmul.f32 %v486, %v1976
      %1994 = vset.pattern.permute.xlu0 15
      %1995 = vperm.xlu0 %1994, %v407
      %v1996 = vpop.permute.xlu0 %1995
      %1998 = vset.pattern.permute.xlu0 15
      %1999 = vperm.xlu0 %1998, %v408
      %v2000 = vpop.permute.xlu0 %1999
      %2002 = vset.pattern.permute.xlu0 15
      %2003 = vperm.xlu0 %2002, %v409
      %v2004 = vpop.permute.xlu0 %2003
      %2006 = vset.pattern.permute.xlu0 15
      %2007 = vperm.xlu0 %2006, %v410
      %v2008 = vpop.permute.xlu0 %2007
      %v2010 = vmul.f32 %v1982, %v1996
      %v2011 = vmul.f32 %v1983, %v1996
      %v2012 = vmul.f32 %v1984, %v1996
      %v2013 = vmul.f32 %v1985, %v2000
      %v2014 = vmul.f32 %v1986, %v2000
      %v2015 = vmul.f32 %v1987, %v2000
      %v2016 = vmul.f32 %v1988, %v2004
      %v2017 = vmul.f32 %v1989, %v2004
      %v2018 = vmul.f32 %v1990, %v2004
      %v2019 = vmul.f32 %v1991, %v2008
      %v2020 = vmul.f32 %v1992, %v2008
      %v2021 = vmul.f32 %v1993, %v2008
      %2034 = vrot.lane.b32.xlu0 %v2010, 80
      %v2035 = vpop.permute.xlu0 %2034
      %2036 = vrot.lane.b32.xlu0 %v2011, 80
      %v2037 = vpop.permute.xlu0 %2036
      %2038 = vrot.lane.b32.xlu0 %v2012, 80
      %v2039 = vpop.permute.xlu0 %2038
      %2040 = vrot.lane.b32.xlu0 %v2013, 80
      %v2041 = vpop.permute.xlu0 %2040
      %2042 = vrot.lane.b32.xlu0 %v2014, 80
      %v2043 = vpop.permute.xlu0 %2042
      %2044 = vrot.lane.b32.xlu0 %v2015, 80
      %v2045 = vpop.permute.xlu0 %2044
      %2046 = vrot.lane.b32.xlu0 %v2016, 80
      %v2047 = vpop.permute.xlu0 %2046
      %2048 = vrot.lane.b32.xlu0 %v2017, 80
      %v2049 = vpop.permute.xlu0 %2048
      %2050 = vrot.lane.b32.xlu0 %v2018, 80
      %v2051 = vpop.permute.xlu0 %2050
      %2052 = vrot.lane.b32.xlu0 %v2019, 80
      %v2053 = vpop.permute.xlu0 %2052
      %2054 = vrot.lane.b32.xlu0 %v2020, 80
      %v2055 = vpop.permute.xlu0 %2054
      %2056 = vrot.lane.b32.xlu0 %v2021, 80
      %v2057 = vpop.permute.xlu0 %2056
      %vm2058 = vcmask 654336
      %v2059 = vsel %vm2058, %v2035, %v2037
      %v2060 = vsel %vm2058, %v2037, %v2039
      %v2061 = vsel %vm2058, %v2041, %v2043
      %v2062 = vsel %vm2058, %v2043, %v2045
      %v2063 = vsel %vm2058, %v2047, %v2049
      %v2064 = vsel %vm2058, %v2049, %v2051
      %v2065 = vsel %vm2058, %v2053, %v2055
      %v2066 = vsel %vm2058, %v2055, %v2057
      %v2075 = vadd.f32 %v1965, %v2059
      %v2076 = vadd.f32 %v1966, %v2060
      %v2077 = vadd.f32 %v1967, %v2061
      %v2078 = vadd.f32 %v1968, %v2062
      %v2079 = vadd.f32 %v1969, %v2063
      %v2080 = vadd.f32 %v1970, %v2064
      %v2081 = vadd.f32 %v1971, %v2065
      %v2082 = vadd.f32 %v1972, %v2066
      %2083 = vrot.lane.b32.xlu0 %v488, 49
      %v2084 = vpop.permute.xlu0 %2083
      %2085 = vrot.lane.b32.xlu0 %v489, 49
      %v2086 = vpop.permute.xlu0 %2085
      %vm2087 = vcmask 400384
      %v2088 = vsel %vm2087, %v2084, %v2086
      %v2092 = vmul.f32 %v475, %v2084
      %v2093 = vmul.f32 %v476, %v2088
      %v2094 = vmul.f32 %v477, %v2086
      %v2095 = vmul.f32 %v478, %v2084
      %v2096 = vmul.f32 %v479, %v2088
      %v2097 = vmul.f32 %v480, %v2086
      %v2098 = vmul.f32 %v481, %v2084
      %v2099 = vmul.f32 %v482, %v2088
      %v2100 = vmul.f32 %v483, %v2086
      %v2101 = vmul.f32 %v484, %v2084
      %v2102 = vmul.f32 %v485, %v2088
      %v2103 = vmul.f32 %v486, %v2086
      %2104 = vset.pattern.permute.xlu0 16
      %2105 = vperm.xlu0 %2104, %v407
      %v2106 = vpop.permute.xlu0 %2105
      %2108 = vset.pattern.permute.xlu0 16
      %2109 = vperm.xlu0 %2108, %v408
      %v2110 = vpop.permute.xlu0 %2109
      %2112 = vset.pattern.permute.xlu0 16
      %2113 = vperm.xlu0 %2112, %v409
      %v2114 = vpop.permute.xlu0 %2113
      %2116 = vset.pattern.permute.xlu0 16
      %2117 = vperm.xlu0 %2116, %v410
      %v2118 = vpop.permute.xlu0 %2117
      %v2120 = vmul.f32 %v2092, %v2106
      %v2121 = vmul.f32 %v2093, %v2106
      %v2122 = vmul.f32 %v2094, %v2106
      %v2123 = vmul.f32 %v2095, %v2110
      %v2124 = vmul.f32 %v2096, %v2110
      %v2125 = vmul.f32 %v2097, %v2110
      %v2126 = vmul.f32 %v2098, %v2114
      %v2127 = vmul.f32 %v2099, %v2114
      %v2128 = vmul.f32 %v2100, %v2114
      %v2129 = vmul.f32 %v2101, %v2118
      %v2130 = vmul.f32 %v2102, %v2118
      %v2131 = vmul.f32 %v2103, %v2118
      %2144 = vrot.lane.b32.xlu0 %v2120, 79
      %v2145 = vpop.permute.xlu0 %2144
      %2146 = vrot.lane.b32.xlu0 %v2121, 79
      %v2147 = vpop.permute.xlu0 %2146
      %2148 = vrot.lane.b32.xlu0 %v2122, 79
      %v2149 = vpop.permute.xlu0 %2148
      %2150 = vrot.lane.b32.xlu0 %v2123, 79
      %v2151 = vpop.permute.xlu0 %2150
      %2152 = vrot.lane.b32.xlu0 %v2124, 79
      %v2153 = vpop.permute.xlu0 %2152
      %2154 = vrot.lane.b32.xlu0 %v2125, 79
      %v2155 = vpop.permute.xlu0 %2154
      %2156 = vrot.lane.b32.xlu0 %v2126, 79
      %v2157 = vpop.permute.xlu0 %2156
      %2158 = vrot.lane.b32.xlu0 %v2127, 79
      %v2159 = vpop.permute.xlu0 %2158
      %2160 = vrot.lane.b32.xlu0 %v2128, 79
      %v2161 = vpop.permute.xlu0 %2160
      %2162 = vrot.lane.b32.xlu0 %v2129, 79
      %v2163 = vpop.permute.xlu0 %2162
      %2164 = vrot.lane.b32.xlu0 %v2130, 79
      %v2165 = vpop.permute.xlu0 %2164
      %2166 = vrot.lane.b32.xlu0 %v2131, 79
      %v2167 = vpop.permute.xlu0 %2166
      %vm2168 = vcmask 646144
      %v2169 = vsel %vm2168, %v2145, %v2147
      %v2170 = vsel %vm2168, %v2147, %v2149
      %v2171 = vsel %vm2168, %v2151, %v2153
      %v2172 = vsel %vm2168, %v2153, %v2155
      %v2173 = vsel %vm2168, %v2157, %v2159
      %v2174 = vsel %vm2168, %v2159, %v2161
      %v2175 = vsel %vm2168, %v2163, %v2165
      %v2176 = vsel %vm2168, %v2165, %v2167
      %v2185 = vadd.f32 %v2075, %v2169
      %v2186 = vadd.f32 %v2076, %v2170
      %v2187 = vadd.f32 %v2077, %v2171
      %v2188 = vadd.f32 %v2078, %v2172
      %v2189 = vadd.f32 %v2079, %v2173
      %v2190 = vadd.f32 %v2080, %v2174
      %v2191 = vadd.f32 %v2081, %v2175
      %v2192 = vadd.f32 %v2082, %v2176
      %2193 = vset.pattern.permute.xlu0 17
      %2194 = vperm.xlu0 %2193, %v407
      %v2195 = vpop.permute.xlu0 %2194
      %2197 = vset.pattern.permute.xlu0 17
      %2198 = vperm.xlu0 %2197, %v408
      %v2199 = vpop.permute.xlu0 %2198
      %2201 = vset.pattern.permute.xlu0 17
      %2202 = vperm.xlu0 %2201, %v409
      %v2203 = vpop.permute.xlu0 %2202
      %2205 = vset.pattern.permute.xlu0 17
      %2206 = vperm.xlu0 %2205, %v410
      %v2207 = vpop.permute.xlu0 %2206
      %v2209 = vmul.f32 %v475, %v2195
      %v2210 = vmul.f32 %v476, %v2195
      %v2211 = vmul.f32 %v477, %v2195
      %v2212 = vmul.f32 %v478, %v2199
      %v2213 = vmul.f32 %v479, %v2199
      %v2214 = vmul.f32 %v480, %v2199
      %v2215 = vmul.f32 %v481, %v2203
      %v2216 = vmul.f32 %v482, %v2203
      %v2217 = vmul.f32 %v483, %v2203
      %v2218 = vmul.f32 %v484, %v2207
      %v2219 = vmul.f32 %v485, %v2207
      %v2220 = vmul.f32 %v486, %v2207
      %2233 = vrot.lane.b32.xlu0 %v2209, 78
      %v2234 = vpop.permute.xlu0 %2233
      %2235 = vrot.lane.b32.xlu0 %v2210, 78
      %v2236 = vpop.permute.xlu0 %2235
      %2237 = vrot.lane.b32.xlu0 %v2211, 78
      %v2238 = vpop.permute.xlu0 %2237
      %2239 = vrot.lane.b32.xlu0 %v2212, 78
      %v2240 = vpop.permute.xlu0 %2239
      %2241 = vrot.lane.b32.xlu0 %v2213, 78
      %v2242 = vpop.permute.xlu0 %2241
      %2243 = vrot.lane.b32.xlu0 %v2214, 78
      %v2244 = vpop.permute.xlu0 %2243
      %2245 = vrot.lane.b32.xlu0 %v2215, 78
      %v2246 = vpop.permute.xlu0 %2245
      %2247 = vrot.lane.b32.xlu0 %v2216, 78
      %v2248 = vpop.permute.xlu0 %2247
      %2249 = vrot.lane.b32.xlu0 %v2217, 78
      %v2250 = vpop.permute.xlu0 %2249
      %2251 = vrot.lane.b32.xlu0 %v2218, 78
      %v2252 = vpop.permute.xlu0 %2251
      %2253 = vrot.lane.b32.xlu0 %v2219, 78
      %v2254 = vpop.permute.xlu0 %2253
      %2255 = vrot.lane.b32.xlu0 %v2220, 78
      %v2256 = vpop.permute.xlu0 %2255
      %vm2257 = vcmask 637952
      %v2258 = vsel %vm2257, %v2234, %v2236
      %v2259 = vsel %vm2257, %v2236, %v2238
      %v2260 = vsel %vm2257, %v2240, %v2242
      %v2261 = vsel %vm2257, %v2242, %v2244
      %v2262 = vsel %vm2257, %v2246, %v2248
      %v2263 = vsel %vm2257, %v2248, %v2250
      %v2264 = vsel %vm2257, %v2252, %v2254
      %v2265 = vsel %vm2257, %v2254, %v2256
      %v2274 = vadd.f32 %v2185, %v2258
      %v2275 = vadd.f32 %v2186, %v2259
      %v2276 = vadd.f32 %v2187, %v2260
      %v2277 = vadd.f32 %v2188, %v2261
      %v2278 = vadd.f32 %v2189, %v2262
      %v2279 = vadd.f32 %v2190, %v2263
      %v2280 = vadd.f32 %v2191, %v2264
      %v2281 = vadd.f32 %v2192, %v2265
      %2282 = vrot.lane.b32.xlu0 %v690, 51
      %v2283 = vpop.permute.xlu0 %2282
      %2284 = vrot.lane.b32.xlu0 %v691, 51
      %v2285 = vpop.permute.xlu0 %2284
      %vm2286 = vcmask 416768
      %v2287 = vsel %vm2286, %v2283, %v2285
      %v2291 = vmul.f32 %v475, %v2283
      %v2292 = vmul.f32 %v476, %v2287
      %v2293 = vmul.f32 %v477, %v2285
      %v2294 = vmul.f32 %v478, %v2283
      %v2295 = vmul.f32 %v479, %v2287
      %v2296 = vmul.f32 %v480, %v2285
      %v2297 = vmul.f32 %v481, %v2283
      %v2298 = vmul.f32 %v482, %v2287
      %v2299 = vmul.f32 %v483, %v2285
      %v2300 = vmul.f32 %v484, %v2283
      %v2301 = vmul.f32 %v485, %v2287
      %v2302 = vmul.f32 %v486, %v2285
      %2303 = vset.pattern.permute.xlu0 18
      %2304 = vperm.xlu0 %2303, %v407
      %v2305 = vpop.permute.xlu0 %2304
      %2307 = vset.pattern.permute.xlu0 18
      %2308 = vperm.xlu0 %2307, %v408
      %v2309 = vpop.permute.xlu0 %2308
      %2311 = vset.pattern.permute.xlu0 18
      %2312 = vperm.xlu0 %2311, %v409
      %v2313 = vpop.permute.xlu0 %2312
      %2315 = vset.pattern.permute.xlu0 18
      %2316 = vperm.xlu0 %2315, %v410
      %v2317 = vpop.permute.xlu0 %2316
      %v2319 = vmul.f32 %v2291, %v2305
      %v2320 = vmul.f32 %v2292, %v2305
      %v2321 = vmul.f32 %v2293, %v2305
      %v2322 = vmul.f32 %v2294, %v2309
      %v2323 = vmul.f32 %v2295, %v2309
      %v2324 = vmul.f32 %v2296, %v2309
      %v2325 = vmul.f32 %v2297, %v2313
      %v2326 = vmul.f32 %v2298, %v2313
      %v2327 = vmul.f32 %v2299, %v2313
      %v2328 = vmul.f32 %v2300, %v2317
      %v2329 = vmul.f32 %v2301, %v2317
      %v2330 = vmul.f32 %v2302, %v2317
      %2343 = vrot.lane.b32.xlu0 %v2319, 77
      %v2344 = vpop.permute.xlu0 %2343
      %2345 = vrot.lane.b32.xlu0 %v2320, 77
      %v2346 = vpop.permute.xlu0 %2345
      %2347 = vrot.lane.b32.xlu0 %v2321, 77
      %v2348 = vpop.permute.xlu0 %2347
      %2349 = vrot.lane.b32.xlu0 %v2322, 77
      %v2350 = vpop.permute.xlu0 %2349
      %2351 = vrot.lane.b32.xlu0 %v2323, 77
      %v2352 = vpop.permute.xlu0 %2351
      %2353 = vrot.lane.b32.xlu0 %v2324, 77
      %v2354 = vpop.permute.xlu0 %2353
      %2355 = vrot.lane.b32.xlu0 %v2325, 77
      %v2356 = vpop.permute.xlu0 %2355
      %2357 = vrot.lane.b32.xlu0 %v2326, 77
      %v2358 = vpop.permute.xlu0 %2357
      %2359 = vrot.lane.b32.xlu0 %v2327, 77
      %v2360 = vpop.permute.xlu0 %2359
      %2361 = vrot.lane.b32.xlu0 %v2328, 77
      %v2362 = vpop.permute.xlu0 %2361
      %2363 = vrot.lane.b32.xlu0 %v2329, 77
      %v2364 = vpop.permute.xlu0 %2363
      %2365 = vrot.lane.b32.xlu0 %v2330, 77
      %v2366 = vpop.permute.xlu0 %2365
      %vm2367 = vcmask 629760
      %v2368 = vsel %vm2367, %v2344, %v2346
      %v2369 = vsel %vm2367, %v2346, %v2348
      %v2370 = vsel %vm2367, %v2350, %v2352
      %v2371 = vsel %vm2367, %v2352, %v2354
      %v2372 = vsel %vm2367, %v2356, %v2358
      %v2373 = vsel %vm2367, %v2358, %v2360
      %v2374 = vsel %vm2367, %v2362, %v2364
      %v2375 = vsel %vm2367, %v2364, %v2366
      %v2384 = vadd.f32 %v2274, %v2368
      %v2385 = vadd.f32 %v2275, %v2369
      %v2386 = vadd.f32 %v2276, %v2370
      %v2387 = vadd.f32 %v2277, %v2371
      %v2388 = vadd.f32 %v2278, %v2372
      %v2389 = vadd.f32 %v2279, %v2373
      %v2390 = vadd.f32 %v2280, %v2374
      %v2391 = vadd.f32 %v2281, %v2375
      %2392 = vrot.lane.b32.xlu0 %v803, 52
      %v2393 = vpop.permute.xlu0 %2392
      %2394 = vrot.lane.b32.xlu0 %v804, 52
      %v2395 = vpop.permute.xlu0 %2394
      %vm2396 = vcmask 424960
      %v2397 = vsel %vm2396, %v2393, %v2395
      %v2401 = vmul.f32 %v475, %v2393
      %v2402 = vmul.f32 %v476, %v2397
      %v2403 = vmul.f32 %v477, %v2395
      %v2404 = vmul.f32 %v478, %v2393
      %v2405 = vmul.f32 %v479, %v2397
      %v2406 = vmul.f32 %v480, %v2395
      %v2407 = vmul.f32 %v481, %v2393
      %v2408 = vmul.f32 %v482, %v2397
      %v2409 = vmul.f32 %v483, %v2395
      %v2410 = vmul.f32 %v484, %v2393
      %v2411 = vmul.f32 %v485, %v2397
      %v2412 = vmul.f32 %v486, %v2395
      %2413 = vset.pattern.permute.xlu0 19
      %2414 = vperm.xlu0 %2413, %v407
      %v2415 = vpop.permute.xlu0 %2414
      %2417 = vset.pattern.permute.xlu0 19
      %2418 = vperm.xlu0 %2417, %v408
      %v2419 = vpop.permute.xlu0 %2418
      %2421 = vset.pattern.permute.xlu0 19
      %2422 = vperm.xlu0 %2421, %v409
      %v2423 = vpop.permute.xlu0 %2422
      %2425 = vset.pattern.permute.xlu0 19
      %2426 = vperm.xlu0 %2425, %v410
      %v2427 = vpop.permute.xlu0 %2426
      %v2429 = vmul.f32 %v2401, %v2415
      %v2430 = vmul.f32 %v2402, %v2415
      %v2431 = vmul.f32 %v2403, %v2415
      %v2432 = vmul.f32 %v2404, %v2419
      %v2433 = vmul.f32 %v2405, %v2419
      %v2434 = vmul.f32 %v2406, %v2419
      %v2435 = vmul.f32 %v2407, %v2423
      %v2436 = vmul.f32 %v2408, %v2423
      %v2437 = vmul.f32 %v2409, %v2423
      %v2438 = vmul.f32 %v2410, %v2427
      %v2439 = vmul.f32 %v2411, %v2427
      %v2440 = vmul.f32 %v2412, %v2427
      %2453 = vrot.lane.b32.xlu0 %v2429, 76
      %v2454 = vpop.permute.xlu0 %2453
      %2455 = vrot.lane.b32.xlu0 %v2430, 76
      %v2456 = vpop.permute.xlu0 %2455
      %2457 = vrot.lane.b32.xlu0 %v2431, 76
      %v2458 = vpop.permute.xlu0 %2457
      %2459 = vrot.lane.b32.xlu0 %v2432, 76
      %v2460 = vpop.permute.xlu0 %2459
      %2461 = vrot.lane.b32.xlu0 %v2433, 76
      %v2462 = vpop.permute.xlu0 %2461
      %2463 = vrot.lane.b32.xlu0 %v2434, 76
      %v2464 = vpop.permute.xlu0 %2463
      %2465 = vrot.lane.b32.xlu0 %v2435, 76
      %v2466 = vpop.permute.xlu0 %2465
      %2467 = vrot.lane.b32.xlu0 %v2436, 76
      %v2468 = vpop.permute.xlu0 %2467
      %2469 = vrot.lane.b32.xlu0 %v2437, 76
      %v2470 = vpop.permute.xlu0 %2469
      %2471 = vrot.lane.b32.xlu0 %v2438, 76
      %v2472 = vpop.permute.xlu0 %2471
      %2473 = vrot.lane.b32.xlu0 %v2439, 76
      %v2474 = vpop.permute.xlu0 %2473
      %2475 = vrot.lane.b32.xlu0 %v2440, 76
      %v2476 = vpop.permute.xlu0 %2475
      %vm2477 = vcmask 621568
      %v2478 = vsel %vm2477, %v2454, %v2456
      %v2479 = vsel %vm2477, %v2456, %v2458
      %v2480 = vsel %vm2477, %v2460, %v2462
      %v2481 = vsel %vm2477, %v2462, %v2464
      %v2482 = vsel %vm2477, %v2466, %v2468
      %v2483 = vsel %vm2477, %v2468, %v2470
      %v2484 = vsel %vm2477, %v2472, %v2474
      %v2485 = vsel %vm2477, %v2474, %v2476
      %v2494 = vadd.f32 %v2384, %v2478
      %v2495 = vadd.f32 %v2385, %v2479
      %v2496 = vadd.f32 %v2386, %v2480
      %v2497 = vadd.f32 %v2387, %v2481
      %v2498 = vadd.f32 %v2388, %v2482
      %v2499 = vadd.f32 %v2389, %v2483
      %v2500 = vadd.f32 %v2390, %v2484
      %v2501 = vadd.f32 %v2391, %v2485
      %2502 = vrot.lane.b32.xlu0 %v427, 64
      %v2503 = vpop.permute.xlu0 %2502
      %2504 = vrot.lane.b32.xlu0 %v428, 64
      %v2505 = vpop.permute.xlu0 %2504
      %vm2506 = vcmask 523264
      %v2507 = vsel %vm2506, %v2503, %v2505
      %v2511 = vmul.f32 %v475, %v2503
      %v2512 = vmul.f32 %v476, %v2507
      %v2513 = vmul.f32 %v477, %v2505
      %v2514 = vmul.f32 %v478, %v2503
      %v2515 = vmul.f32 %v479, %v2507
      %v2516 = vmul.f32 %v480, %v2505
      %v2517 = vmul.f32 %v481, %v2503
      %v2518 = vmul.f32 %v482, %v2507
      %v2519 = vmul.f32 %v483, %v2505
      %v2520 = vmul.f32 %v484, %v2503
      %v2521 = vmul.f32 %v485, %v2507
      %v2522 = vmul.f32 %v486, %v2505
      %2523 = vset.pattern.permute.xlu0 20
      %2524 = vperm.xlu0 %2523, %v407
      %v2525 = vpop.permute.xlu0 %2524
      %2527 = vset.pattern.permute.xlu0 20
      %2528 = vperm.xlu0 %2527, %v408
      %v2529 = vpop.permute.xlu0 %2528
      %2531 = vset.pattern.permute.xlu0 20
      %2532 = vperm.xlu0 %2531, %v409
      %v2533 = vpop.permute.xlu0 %2532
      %2535 = vset.pattern.permute.xlu0 20
      %2536 = vperm.xlu0 %2535, %v410
      %v2537 = vpop.permute.xlu0 %2536
      %v2539 = vmul.f32 %v2511, %v2525
      %v2540 = vmul.f32 %v2512, %v2525
      %v2541 = vmul.f32 %v2513, %v2525
      %v2542 = vmul.f32 %v2514, %v2529
      %v2543 = vmul.f32 %v2515, %v2529
      %v2544 = vmul.f32 %v2516, %v2529
      %v2545 = vmul.f32 %v2517, %v2533
      %v2546 = vmul.f32 %v2518, %v2533
      %v2547 = vmul.f32 %v2519, %v2533
      %v2548 = vmul.f32 %v2520, %v2537
      %v2549 = vmul.f32 %v2521, %v2537
      %v2550 = vmul.f32 %v2522, %v2537
      %2563 = vrot.lane.b32.xlu0 %v2539, 64
      %v2564 = vpop.permute.xlu0 %2563
      %2565 = vrot.lane.b32.xlu0 %v2540, 64
      %v2566 = vpop.permute.xlu0 %2565
      %2567 = vrot.lane.b32.xlu0 %v2541, 64
      %v2568 = vpop.permute.xlu0 %2567
      %2569 = vrot.lane.b32.xlu0 %v2542, 64
      %v2570 = vpop.permute.xlu0 %2569
      %2571 = vrot.lane.b32.xlu0 %v2543, 64
      %v2572 = vpop.permute.xlu0 %2571
      %2573 = vrot.lane.b32.xlu0 %v2544, 64
      %v2574 = vpop.permute.xlu0 %2573
      %2575 = vrot.lane.b32.xlu0 %v2545, 64
      %v2576 = vpop.permute.xlu0 %2575
      %2577 = vrot.lane.b32.xlu0 %v2546, 64
      %v2578 = vpop.permute.xlu0 %2577
      %2579 = vrot.lane.b32.xlu0 %v2547, 64
      %v2580 = vpop.permute.xlu0 %2579
      %2581 = vrot.lane.b32.xlu0 %v2548, 64
      %v2582 = vpop.permute.xlu0 %2581
      %2583 = vrot.lane.b32.xlu0 %v2549, 64
      %v2584 = vpop.permute.xlu0 %2583
      %2585 = vrot.lane.b32.xlu0 %v2550, 64
      %v2586 = vpop.permute.xlu0 %2585
      %v2587 = vsel %vm2506, %v2564, %v2566
      %v2588 = vsel %vm2506, %v2566, %v2568
      %v2589 = vsel %vm2506, %v2570, %v2572
      %v2590 = vsel %vm2506, %v2572, %v2574
      %v2591 = vsel %vm2506, %v2576, %v2578
      %v2592 = vsel %vm2506, %v2578, %v2580
      %v2593 = vsel %vm2506, %v2582, %v2584
      %v2594 = vsel %vm2506, %v2584, %v2586
      %v2603 = vadd.f32 %v2494, %v2587
      %v2604 = vadd.f32 %v2495, %v2588
      %v2605 = vadd.f32 %v2496, %v2589
      %v2606 = vadd.f32 %v2497, %v2590
      %v2607 = vadd.f32 %v2498, %v2591
      %v2608 = vadd.f32 %v2499, %v2592
      %v2609 = vadd.f32 %v2500, %v2593
      %v2610 = vadd.f32 %v2501, %v2594
      %2611 = vrot.lane.b32.xlu0 %v488, 65
      %v2612 = vpop.permute.xlu0 %2611
      %2613 = vrot.lane.b32.xlu0 %v489, 65
      %v2614 = vpop.permute.xlu0 %2613
      %vm2615 = vcmask 531456
      %v2616 = vsel %vm2615, %v2612, %v2614
      %v2620 = vmul.f32 %v475, %v2612
      %v2621 = vmul.f32 %v476, %v2616
      %v2622 = vmul.f32 %v477, %v2614
      %v2623 = vmul.f32 %v478, %v2612
      %v2624 = vmul.f32 %v479, %v2616
      %v2625 = vmul.f32 %v480, %v2614
      %v2626 = vmul.f32 %v481, %v2612
      %v2627 = vmul.f32 %v482, %v2616
      %v2628 = vmul.f32 %v483, %v2614
      %v2629 = vmul.f32 %v484, %v2612
      %v2630 = vmul.f32 %v485, %v2616
      %v2631 = vmul.f32 %v486, %v2614
      %2632 = vset.pattern.permute.xlu0 21
      %2633 = vperm.xlu0 %2632, %v407
      %v2634 = vpop.permute.xlu0 %2633
      %2636 = vset.pattern.permute.xlu0 21
      %2637 = vperm.xlu0 %2636, %v408
      %v2638 = vpop.permute.xlu0 %2637
      %2640 = vset.pattern.permute.xlu0 21
      %2641 = vperm.xlu0 %2640, %v409
      %v2642 = vpop.permute.xlu0 %2641
      %2644 = vset.pattern.permute.xlu0 21
      %2645 = vperm.xlu0 %2644, %v410
      %v2646 = vpop.permute.xlu0 %2645
      %v2648 = vmul.f32 %v2620, %v2634
      %v2649 = vmul.f32 %v2621, %v2634
      %v2650 = vmul.f32 %v2622, %v2634
      %v2651 = vmul.f32 %v2623, %v2638
      %v2652 = vmul.f32 %v2624, %v2638
      %v2653 = vmul.f32 %v2625, %v2638
      %v2654 = vmul.f32 %v2626, %v2642
      %v2655 = vmul.f32 %v2627, %v2642
      %v2656 = vmul.f32 %v2628, %v2642
      %v2657 = vmul.f32 %v2629, %v2646
      %v2658 = vmul.f32 %v2630, %v2646
      %v2659 = vmul.f32 %v2631, %v2646
      %2672 = vrot.lane.b32.xlu0 %v2648, 63
      %v2673 = vpop.permute.xlu0 %2672
      %2674 = vrot.lane.b32.xlu0 %v2649, 63
      %v2675 = vpop.permute.xlu0 %2674
      %2676 = vrot.lane.b32.xlu0 %v2650, 63
      %v2677 = vpop.permute.xlu0 %2676
      %2678 = vrot.lane.b32.xlu0 %v2651, 63
      %v2679 = vpop.permute.xlu0 %2678
      %2680 = vrot.lane.b32.xlu0 %v2652, 63
      %v2681 = vpop.permute.xlu0 %2680
      %2682 = vrot.lane.b32.xlu0 %v2653, 63
      %v2683 = vpop.permute.xlu0 %2682
      %2684 = vrot.lane.b32.xlu0 %v2654, 63
      %v2685 = vpop.permute.xlu0 %2684
      %2686 = vrot.lane.b32.xlu0 %v2655, 63
      %v2687 = vpop.permute.xlu0 %2686
      %2688 = vrot.lane.b32.xlu0 %v2656, 63
      %v2689 = vpop.permute.xlu0 %2688
      %2690 = vrot.lane.b32.xlu0 %v2657, 63
      %v2691 = vpop.permute.xlu0 %2690
      %2692 = vrot.lane.b32.xlu0 %v2658, 63
      %v2693 = vpop.permute.xlu0 %2692
      %2694 = vrot.lane.b32.xlu0 %v2659, 63
      %v2695 = vpop.permute.xlu0 %2694
      %vm2696 = vcmask 515072
      %v2697 = vsel %vm2696, %v2673, %v2675
      %v2698 = vsel %vm2696, %v2675, %v2677
      %v2699 = vsel %vm2696, %v2679, %v2681
      %v2700 = vsel %vm2696, %v2681, %v2683
      %v2701 = vsel %vm2696, %v2685, %v2687
      %v2702 = vsel %vm2696, %v2687, %v2689
      %v2703 = vsel %vm2696, %v2691, %v2693
      %v2704 = vsel %vm2696, %v2693, %v2695
      %v2713 = vadd.f32 %v2603, %v2697
      %v2714 = vadd.f32 %v2604, %v2698
      %v2715 = vadd.f32 %v2605, %v2699
      %v2716 = vadd.f32 %v2606, %v2700
      %v2717 = vadd.f32 %v2607, %v2701
      %v2718 = vadd.f32 %v2608, %v2702
      %v2719 = vadd.f32 %v2609, %v2703
      %v2720 = vadd.f32 %v2610, %v2704
      %2721 = vset.pattern.permute.xlu0 22
      %2722 = vperm.xlu0 %2721, %v407
      %v2723 = vpop.permute.xlu0 %2722
      %2725 = vset.pattern.permute.xlu0 22
      %2726 = vperm.xlu0 %2725, %v408
      %v2727 = vpop.permute.xlu0 %2726
      %2729 = vset.pattern.permute.xlu0 22
      %2730 = vperm.xlu0 %2729, %v409
      %v2731 = vpop.permute.xlu0 %2730
      %2733 = vset.pattern.permute.xlu0 22
      %2734 = vperm.xlu0 %2733, %v410
      %v2735 = vpop.permute.xlu0 %2734
      %v2737 = vmul.f32 %v475, %v2723
      %v2738 = vmul.f32 %v476, %v2723
      %v2739 = vmul.f32 %v477, %v2723
      %v2740 = vmul.f32 %v478, %v2727
      %v2741 = vmul.f32 %v479, %v2727
      %v2742 = vmul.f32 %v480, %v2727
      %v2743 = vmul.f32 %v481, %v2731
      %v2744 = vmul.f32 %v482, %v2731
      %v2745 = vmul.f32 %v483, %v2731
      %v2746 = vmul.f32 %v484, %v2735
      %v2747 = vmul.f32 %v485, %v2735
      %v2748 = vmul.f32 %v486, %v2735
      %2761 = vrot.lane.b32.xlu0 %v2737, 62
      %v2762 = vpop.permute.xlu0 %2761
      %2763 = vrot.lane.b32.xlu0 %v2738, 62
      %v2764 = vpop.permute.xlu0 %2763
      %2765 = vrot.lane.b32.xlu0 %v2739, 62
      %v2766 = vpop.permute.xlu0 %2765
      %2767 = vrot.lane.b32.xlu0 %v2740, 62
      %v2768 = vpop.permute.xlu0 %2767
      %2769 = vrot.lane.b32.xlu0 %v2741, 62
      %v2770 = vpop.permute.xlu0 %2769
      %2771 = vrot.lane.b32.xlu0 %v2742, 62
      %v2772 = vpop.permute.xlu0 %2771
      %2773 = vrot.lane.b32.xlu0 %v2743, 62
      %v2774 = vpop.permute.xlu0 %2773
      %2775 = vrot.lane.b32.xlu0 %v2744, 62
      %v2776 = vpop.permute.xlu0 %2775
      %2777 = vrot.lane.b32.xlu0 %v2745, 62
      %v2778 = vpop.permute.xlu0 %2777
      %2779 = vrot.lane.b32.xlu0 %v2746, 62
      %v2780 = vpop.permute.xlu0 %2779
      %2781 = vrot.lane.b32.xlu0 %v2747, 62
      %v2782 = vpop.permute.xlu0 %2781
      %2783 = vrot.lane.b32.xlu0 %v2748, 62
      %v2784 = vpop.permute.xlu0 %2783
      %vm2785 = vcmask 506880
      %v2786 = vsel %vm2785, %v2762, %v2764
      %v2787 = vsel %vm2785, %v2764, %v2766
      %v2788 = vsel %vm2785, %v2768, %v2770
      %v2789 = vsel %vm2785, %v2770, %v2772
      %v2790 = vsel %vm2785, %v2774, %v2776
      %v2791 = vsel %vm2785, %v2776, %v2778
      %v2792 = vsel %vm2785, %v2780, %v2782
      %v2793 = vsel %vm2785, %v2782, %v2784
      %v2802 = vadd.f32 %v2713, %v2786
      %v2803 = vadd.f32 %v2714, %v2787
      %v2804 = vadd.f32 %v2715, %v2788
      %v2805 = vadd.f32 %v2716, %v2789
      %v2806 = vadd.f32 %v2717, %v2790
      %v2807 = vadd.f32 %v2718, %v2791
      %v2808 = vadd.f32 %v2719, %v2792
      %v2809 = vadd.f32 %v2720, %v2793
      %2810 = vrot.lane.b32.xlu0 %v690, 67
      %v2811 = vpop.permute.xlu0 %2810
      %2812 = vrot.lane.b32.xlu0 %v691, 67
      %v2813 = vpop.permute.xlu0 %2812
      %vm2814 = vcmask 547840
      %v2815 = vsel %vm2814, %v2811, %v2813
      %v2819 = vmul.f32 %v475, %v2811
      %v2820 = vmul.f32 %v476, %v2815
      %v2821 = vmul.f32 %v477, %v2813
      %v2822 = vmul.f32 %v478, %v2811
      %v2823 = vmul.f32 %v479, %v2815
      %v2824 = vmul.f32 %v480, %v2813
      %v2825 = vmul.f32 %v481, %v2811
      %v2826 = vmul.f32 %v482, %v2815
      %v2827 = vmul.f32 %v483, %v2813
      %v2828 = vmul.f32 %v484, %v2811
      %v2829 = vmul.f32 %v485, %v2815
      %v2830 = vmul.f32 %v486, %v2813
      %2831 = vset.pattern.permute.xlu0 23
      %2832 = vperm.xlu0 %2831, %v407
      %v2833 = vpop.permute.xlu0 %2832
      %2835 = vset.pattern.permute.xlu0 23
      %2836 = vperm.xlu0 %2835, %v408
      %v2837 = vpop.permute.xlu0 %2836
      %2839 = vset.pattern.permute.xlu0 23
      %2840 = vperm.xlu0 %2839, %v409
      %v2841 = vpop.permute.xlu0 %2840
      %2843 = vset.pattern.permute.xlu0 23
      %2844 = vperm.xlu0 %2843, %v410
      %v2845 = vpop.permute.xlu0 %2844
      %v2847 = vmul.f32 %v2819, %v2833
      %v2848 = vmul.f32 %v2820, %v2833
      %v2849 = vmul.f32 %v2821, %v2833
      %v2850 = vmul.f32 %v2822, %v2837
      %v2851 = vmul.f32 %v2823, %v2837
      %v2852 = vmul.f32 %v2824, %v2837
      %v2853 = vmul.f32 %v2825, %v2841
      %v2854 = vmul.f32 %v2826, %v2841
      %v2855 = vmul.f32 %v2827, %v2841
      %v2856 = vmul.f32 %v2828, %v2845
      %v2857 = vmul.f32 %v2829, %v2845
      %v2858 = vmul.f32 %v2830, %v2845
      %2871 = vrot.lane.b32.xlu0 %v2847, 61
      %v2872 = vpop.permute.xlu0 %2871
      %2873 = vrot.lane.b32.xlu0 %v2848, 61
      %v2874 = vpop.permute.xlu0 %2873
      %2875 = vrot.lane.b32.xlu0 %v2849, 61
      %v2876 = vpop.permute.xlu0 %2875
      %2877 = vrot.lane.b32.xlu0 %v2850, 61
      %v2878 = vpop.permute.xlu0 %2877
      %2879 = vrot.lane.b32.xlu0 %v2851, 61
      %v2880 = vpop.permute.xlu0 %2879
      %2881 = vrot.lane.b32.xlu0 %v2852, 61
      %v2882 = vpop.permute.xlu0 %2881
      %2883 = vrot.lane.b32.xlu0 %v2853, 61
      %v2884 = vpop.permute.xlu0 %2883
      %2885 = vrot.lane.b32.xlu0 %v2854, 61
      %v2886 = vpop.permute.xlu0 %2885
      %2887 = vrot.lane.b32.xlu0 %v2855, 61
      %v2888 = vpop.permute.xlu0 %2887
      %2889 = vrot.lane.b32.xlu0 %v2856, 61
      %v2890 = vpop.permute.xlu0 %2889
      %2891 = vrot.lane.b32.xlu0 %v2857, 61
      %v2892 = vpop.permute.xlu0 %2891
      %2893 = vrot.lane.b32.xlu0 %v2858, 61
      %v2894 = vpop.permute.xlu0 %2893
      %vm2895 = vcmask 498688
      %v2896 = vsel %vm2895, %v2872, %v2874
      %v2897 = vsel %vm2895, %v2874, %v2876
      %v2898 = vsel %vm2895, %v2878, %v2880
      %v2899 = vsel %vm2895, %v2880, %v2882
      %v2900 = vsel %vm2895, %v2884, %v2886
      %v2901 = vsel %vm2895, %v2886, %v2888
      %v2902 = vsel %vm2895, %v2890, %v2892
      %v2903 = vsel %vm2895, %v2892, %v2894
      %v2912 = vadd.f32 %v2802, %v2896
      %v2913 = vadd.f32 %v2803, %v2897
      %v2914 = vadd.f32 %v2804, %v2898
      %v2915 = vadd.f32 %v2805, %v2899
      %v2916 = vadd.f32 %v2806, %v2900
      %v2917 = vadd.f32 %v2807, %v2901
      %v2918 = vadd.f32 %v2808, %v2902
      %v2919 = vadd.f32 %v2809, %v2903
      %2920 = vrot.lane.b32.xlu0 %v803, 68
      %v2921 = vpop.permute.xlu0 %2920
      %2922 = vrot.lane.b32.xlu0 %v804, 68
      %v2923 = vpop.permute.xlu0 %2922
      %vm2924 = vcmask 556032
      %v2925 = vsel %vm2924, %v2921, %v2923
      %v2929 = vmul.f32 %v475, %v2921
      %v2930 = vmul.f32 %v476, %v2925
      %v2931 = vmul.f32 %v477, %v2923
      %v2932 = vmul.f32 %v478, %v2921
      %v2933 = vmul.f32 %v479, %v2925
      %v2934 = vmul.f32 %v480, %v2923
      %v2935 = vmul.f32 %v481, %v2921
      %v2936 = vmul.f32 %v482, %v2925
      %v2937 = vmul.f32 %v483, %v2923
      %v2938 = vmul.f32 %v484, %v2921
      %v2939 = vmul.f32 %v485, %v2925
      %v2940 = vmul.f32 %v486, %v2923
      %2941 = vset.pattern.permute.xlu0 24
      %2942 = vperm.xlu0 %2941, %v407
      %v2943 = vpop.permute.xlu0 %2942
      %2945 = vset.pattern.permute.xlu0 24
      %2946 = vperm.xlu0 %2945, %v408
      %v2947 = vpop.permute.xlu0 %2946
      %2949 = vset.pattern.permute.xlu0 24
      %2950 = vperm.xlu0 %2949, %v409
      %v2951 = vpop.permute.xlu0 %2950
      %2953 = vset.pattern.permute.xlu0 24
      %2954 = vperm.xlu0 %2953, %v410
      %v2955 = vpop.permute.xlu0 %2954
      %v2957 = vmul.f32 %v2929, %v2943
      %v2958 = vmul.f32 %v2930, %v2943
      %v2959 = vmul.f32 %v2931, %v2943
      %v2960 = vmul.f32 %v2932, %v2947
      %v2961 = vmul.f32 %v2933, %v2947
      %v2962 = vmul.f32 %v2934, %v2947
      %v2963 = vmul.f32 %v2935, %v2951
      %v2964 = vmul.f32 %v2936, %v2951
      %v2965 = vmul.f32 %v2937, %v2951
      %v2966 = vmul.f32 %v2938, %v2955
      %v2967 = vmul.f32 %v2939, %v2955
      %v2968 = vmul.f32 %v2940, %v2955
      %2981 = vrot.lane.b32.xlu0 %v2957, 60
      %v2982 = vpop.permute.xlu0 %2981
      %2983 = vrot.lane.b32.xlu0 %v2958, 60
      %v2984 = vpop.permute.xlu0 %2983
      %2985 = vrot.lane.b32.xlu0 %v2959, 60
      %v2986 = vpop.permute.xlu0 %2985
      %2987 = vrot.lane.b32.xlu0 %v2960, 60
      %v2988 = vpop.permute.xlu0 %2987
      %2989 = vrot.lane.b32.xlu0 %v2961, 60
      %v2990 = vpop.permute.xlu0 %2989
      %2991 = vrot.lane.b32.xlu0 %v2962, 60
      %v2992 = vpop.permute.xlu0 %2991
      %2993 = vrot.lane.b32.xlu0 %v2963, 60
      %v2994 = vpop.permute.xlu0 %2993
      %2995 = vrot.lane.b32.xlu0 %v2964, 60
      %v2996 = vpop.permute.xlu0 %2995
      %2997 = vrot.lane.b32.xlu0 %v2965, 60
      %v2998 = vpop.permute.xlu0 %2997
      %2999 = vrot.lane.b32.xlu0 %v2966, 60
      %v3000 = vpop.permute.xlu0 %2999
      %3001 = vrot.lane.b32.xlu0 %v2967, 60
      %v3002 = vpop.permute.xlu0 %3001
      %3003 = vrot.lane.b32.xlu0 %v2968, 60
      %v3004 = vpop.permute.xlu0 %3003
      %vm3005 = vcmask 490496
      %v3006 = vsel %vm3005, %v2982, %v2984
      %v3007 = vsel %vm3005, %v2984, %v2986
      %v3008 = vsel %vm3005, %v2988, %v2990
      %v3009 = vsel %vm3005, %v2990, %v2992
      %v3010 = vsel %vm3005, %v2994, %v2996
      %v3011 = vsel %vm3005, %v2996, %v2998
      %v3012 = vsel %vm3005, %v3000, %v3002
      %v3013 = vsel %vm3005, %v3002, %v3004
      %v3022 = vadd.f32 %v2912, %v3006
      %v3023 = vadd.f32 %v2913, %v3007
      %v3024 = vadd.f32 %v2914, %v3008
      %v3025 = vadd.f32 %v2915, %v3009
      %v3026 = vadd.f32 %v2916, %v3010
      %v3027 = vadd.f32 %v2917, %v3011
      %v3028 = vadd.f32 %v2918, %v3012
      %v3029 = vadd.f32 %v2919, %v3013
      %v3030 = vld [vmem:[%s4] sm:$0xff]
      %v3031 = vld [vmem:[%s4 + $0x8] sm:$0xff]
      %v3032 = vld [vmem:[%s4 + $0x10] sm:$0xff]
      %v3033 = vld [vmem:[%s4 + $0x18] sm:$0xff]
      %3035 = vset.pattern.permute.xlu0 0
      %3036 = vperm.xlu0 %3035, %v3030
      %v3037 = vpop.permute.xlu0 %3036
      %3040 = vset.pattern.permute.xlu0 0
      %3041 = vperm.xlu0 %3040, %v3031
      %v3042 = vpop.permute.xlu0 %3041
      %3045 = vset.pattern.permute.xlu0 0
      %3046 = vperm.xlu0 %3045, %v3032
      %v3047 = vpop.permute.xlu0 %3046
      %3050 = vset.pattern.permute.xlu0 0
      %3051 = vperm.xlu0 %3050, %v3033
      %v3052 = vpop.permute.xlu0 %3051
      %v3054 = vadd.f32 %v3022, %v3037
      %v3055 = vadd.f32 %v3023, %v3037
      %v3056 = vadd.f32 %v3024, %v3042
      %v3057 = vadd.f32 %v3025, %v3042
      %v3058 = vadd.f32 %v3026, %v3047
      %v3059 = vadd.f32 %v3027, %v3047
      %v3060 = vadd.f32 %v3028, %v3052
      %v3061 = vadd.f32 %v3029, %v3052
      %3062 = vst [vmem:[#allocation3] sm:$0xff] 0.0
      %3063 = vst [vmem:[#allocation3 + $0x8] sm:$0xff] 0.0
      %3064 = vst [vmem:[#allocation3 + $0x10] sm:$0xff] 0.0
      %3065 = vst [vmem:[#allocation3 + $0x18] sm:$0xff] 0.0
      %3066 = vst [vmem:[#allocation3 + $0x20] sm:$0xff] 0.0
      %3067 = vst [vmem:[#allocation3 + $0x28] sm:$0xff] 0.0
      %3068 = vst [vmem:[#allocation3 + $0x30] sm:$0xff] 0.0
      %3069 = vst [vmem:[#allocation3 + $0x38] sm:$0xff] 0.0
      %3070 = vst [vmem:[#allocation3 + $0x40] sm:$0xff] 0.0
      %3071 = vst [vmem:[#allocation3 + $0x48] sm:$0xff] 0.0
      %3072 = vst [vmem:[#allocation3 + $0x50] sm:$0xff] 0.0
      %3073 = vst [vmem:[#allocation3 + $0x58] sm:$0xff] 0.0
      %3074 = vst [vmem:[#allocation3 + $0x60] sm:$0xff] 0.0
      %3075 = vst [vmem:[#allocation3 + $0x68] sm:$0xff] 0.0
      %3076 = vst [vmem:[#allocation3 + $0x70] sm:$0xff] 0.0
      %3077 = vst [vmem:[#allocation3 + $0x78] sm:$0xff] 0.0
      %3078 = vst [vmem:[#allocation3 + $0x80] sm:$0xff] 0.0
      %3079 = vst [vmem:[#allocation3 + $0x88] sm:$0xff] 0.0
      %3080 = vst [vmem:[#allocation3 + $0x90] sm:$0xff] 0.0
      %3081 = vst [vmem:[#allocation3 + $0x98] sm:$0xff] 0.0
      %3090 = vrot.lane.b32.xlu0 %v3054, 25
      %v3091 = vpop.permute.xlu0 %3090
      %3092 = vrot.lane.b32.xlu0 %v3055, 25
      %v3093 = vpop.permute.xlu0 %3092
      %3094 = vrot.lane.b32.xlu0 %v3056, 25
      %v3095 = vpop.permute.xlu0 %3094
      %3096 = vrot.lane.b32.xlu0 %v3057, 25
      %v3097 = vpop.permute.xlu0 %3096
      %3098 = vrot.lane.b32.xlu0 %v3058, 25
      %v3099 = vpop.permute.xlu0 %3098
      %3100 = vrot.lane.b32.xlu0 %v3059, 25
      %v3101 = vpop.permute.xlu0 %3100
      %3102 = vrot.lane.b32.xlu0 %v3060, 25
      %v3103 = vpop.permute.xlu0 %3102
      %3104 = vrot.lane.b32.xlu0 %v3061, 25
      %v3105 = vpop.permute.xlu0 %3104
      %vm3106 = vcmask 203776
      %v3107 = vsel %vm3106, %v3091, %v3093
      %v3108 = vsel %vm3106, %v3095, %v3097
      %v3109 = vsel %vm3106, %v3099, %v3101
      %v3110 = vsel %vm3106, %v3103, %v3105
      %vm3123 = vcmask 1047752
      %3124 = vst.msk [vmem:[#allocation3 + $0x8] sm:$0xff] %vm3123, %v3091
      %3125 = vst [vmem:[#allocation3 + $0x10] sm:$0xff] %v3107
      %3126 = vst.msk [vmem:[#allocation3 + $0x18] sm:$0xff] %vm3106, %v3093
      %3127 = vst.msk [vmem:[#allocation3 + $0x30] sm:$0xff] %vm3123, %v3095
      %3128 = vst [vmem:[#allocation3 + $0x38] sm:$0xff] %v3108
      %3129 = vst.msk [vmem:[#allocation3 + $0x40] sm:$0xff] %vm3106, %v3097
      %3130 = vst.msk [vmem:[#allocation3 + $0x58] sm:$0xff] %vm3123, %v3099
      %3131 = vst [vmem:[#allocation3 + $0x60] sm:$0xff] %v3109
      %3132 = vst.msk [vmem:[#allocation3 + $0x68] sm:$0xff] %vm3106, %v3101
      %3133 = vst.msk [vmem:[#allocation3 + $0x80] sm:$0xff] %vm3123, %v3103
      %3134 = vst [vmem:[#allocation3 + $0x88] sm:$0xff] %v3110
      %3135 = vst.msk [vmem:[#allocation3 + $0x90] sm:$0xff] %vm3106, %v3105
      %v3136 = vld [vmem:[%s5] sm:$0xff]
      %v3137 = vld [vmem:[%s5 + $0x8] sm:$0xff]
      %v3138 = vld [vmem:[%s5 + $0x10] sm:$0xff]
      %v3139 = vld [vmem:[%s5 + $0x18] sm:$0xff]
      %v3140 = vld [vmem:[%s2] ss:$8 sm:$0x3]
      %s3141 = scalar_lea.vmem %s2, 1
      %v3142 = vld [vmem:[%s3141] ss:$8 sm:$0x3]
      %s3143 = scalar_lea.vmem %s2, 2
      %v3144 = vld [vmem:[%s3143] ss:$8 sm:$0x3]
      %s3145 = scalar_lea.vmem %s2, 4
      %v3146 = vld [vmem:[%s3145] ss:$8 sm:$0x3]
      %s3147 = scalar_lea.vmem %s2, 5
      %v3148 = vld [vmem:[%s3147] ss:$8 sm:$0x3]
      %s3149 = scalar_lea.vmem %s2, 6
      %v3150 = vld [vmem:[%s3149] ss:$8 sm:$0x3]
      %v3151 = vld [vmem:[#allocation3] sm:$0xff]
      %v3152 = vld [vmem:[#allocation3 + $0x8] sm:$0xff]
      %v3153 = vld [vmem:[#allocation3 + $0x28] sm:$0xff]
      %v3154 = vld [vmem:[#allocation3 + $0x30] sm:$0xff]
      %v3155 = vld [vmem:[#allocation3 + $0x50] sm:$0xff]
      %v3156 = vld [vmem:[#allocation3 + $0x58] sm:$0xff]
      %v3157 = vld [vmem:[#allocation3 + $0x78] sm:$0xff]
      %v3158 = vld [vmem:[#allocation3 + $0x80] sm:$0xff]
      %v3160 = vperm.slane %v3140, 0
      %v3161 = vperm.slane %v3140, 1
      %v3164 = vmul.f32 %v3151, %v3160
      %v3165 = vmul.f32 %v3152, %v3161
      %v3166 = vmul.f32 %v3153, %v3160
      %v3167 = vmul.f32 %v3154, %v3161
      %v3168 = vmul.f32 %v3155, %v3160
      %v3169 = vmul.f32 %v3156, %v3161
      %v3170 = vmul.f32 %v3157, %v3160
      %v3171 = vmul.f32 %v3158, %v3161
      %3173 = vset.pattern.permute.xlu0 0
      %3174 = vperm.xlu0 %3173, %v3136
      %v3175 = vpop.permute.xlu0 %3174
      %3178 = vset.pattern.permute.xlu0 0
      %3179 = vperm.xlu0 %3178, %v3137
      %v3180 = vpop.permute.xlu0 %3179
      %3183 = vset.pattern.permute.xlu0 0
      %3184 = vperm.xlu0 %3183, %v3138
      %v3185 = vpop.permute.xlu0 %3184
      %3188 = vset.pattern.permute.xlu0 0
      %3189 = vperm.xlu0 %3188, %v3139
      %v3190 = vpop.permute.xlu0 %3189
      %v3192 = vmul.f32 %v3164, %v3175
      %v3193 = vmul.f32 %v3165, %v3175
      %v3194 = vmul.f32 %v3166, %v3180
      %v3195 = vmul.f32 %v3167, %v3180
      %v3196 = vmul.f32 %v3168, %v3185
      %v3197 = vmul.f32 %v3169, %v3185
      %v3198 = vmul.f32 %v3170, %v3190
      %v3199 = vmul.f32 %v3171, %v3190
      %v3200 = vadd.f32 %v3192, 0.0
      %v3201 = vadd.f32 %v3193, 0.0
      %v3202 = vadd.f32 %v3194, 0.0
      %v3203 = vadd.f32 %v3195, 0.0
      %v3204 = vadd.f32 %v3196, 0.0
      %v3205 = vadd.f32 %v3197, 0.0
      %v3206 = vadd.f32 %v3198, 0.0
      %v3207 = vadd.f32 %v3199, 0.0
      %v3208 = vld [vmem:[#allocation3] sm:$0xff]
      %v3209 = vld [vmem:[#allocation3 + $0x8] sm:$0xff]
      %v3210 = vld [vmem:[#allocation3 + $0x10] sm:$0xff]
      %v3211 = vld [vmem:[#allocation3 + $0x28] sm:$0xff]
      %v3212 = vld [vmem:[#allocation3 + $0x30] sm:$0xff]
      %v3213 = vld [vmem:[#allocation3 + $0x38] sm:$0xff]
      %v3214 = vld [vmem:[#allocation3 + $0x50] sm:$0xff]
      %v3215 = vld [vmem:[#allocation3 + $0x58] sm:$0xff]
      %v3216 = vld [vmem:[#allocation3 + $0x60] sm:$0xff]
      %v3217 = vld [vmem:[#allocation3 + $0x78] sm:$0xff]
      %v3218 = vld [vmem:[#allocation3 + $0x80] sm:$0xff]
      %v3219 = vld [vmem:[#allocation3 + $0x88] sm:$0xff]
      %v3221 = vperm.slane %v3142, 0
      %v3222 = vperm.slane %v3142, 1
      %3223 = vrot.lane.b32.xlu0 %v3221, 3
      %v3224 = vpop.permute.xlu0 %3223
      %3225 = vrot.lane.b32.xlu0 %v3222, 3
      %v3226 = vpop.permute.xlu0 %3225
      %v3227 = vsel %vm696, %v3224, %v3226
      %v3231 = vmul.f32 %v3208, %v3224
      %v3232 = vmul.f32 %v3209, %v3227
      %v3233 = vmul.f32 %v3210, %v3226
      %v3234 = vmul.f32 %v3211, %v3224
      %v3235 = vmul.f32 %v3212, %v3227
      %v3236 = vmul.f32 %v3213, %v3226
      %v3237 = vmul.f32 %v3214, %v3224
      %v3238 = vmul.f32 %v3215, %v3227
      %v3239 = vmul.f32 %v3216, %v3226
      %v3240 = vmul.f32 %v3217, %v3224
      %v3241 = vmul.f32 %v3218, %v3227
      %v3242 = vmul.f32 %v3219, %v3226
      %3243 = vset.pattern.permute.xlu0 1
      %3244 = vperm.xlu0 %3243, %v3136
      %v3245 = vpop.permute.xlu0 %3244
      %3247 = vset.pattern.permute.xlu0 1
      %3248 = vperm.xlu0 %3247, %v3137
      %v3249 = vpop.permute.xlu0 %3248
      %3251 = vset.pattern.permute.xlu0 1
      %3252 = vperm.xlu0 %3251, %v3138
      %v3253 = vpop.permute.xlu0 %3252
      %3255 = vset.pattern.permute.xlu0 1
      %3256 = vperm.xlu0 %3255, %v3139
      %v3257 = vpop.permute.xlu0 %3256
      %v3259 = vmul.f32 %v3231, %v3245
      %v3260 = vmul.f32 %v3232, %v3245
      %v3261 = vmul.f32 %v3233, %v3245
      %v3262 = vmul.f32 %v3234, %v3249
      %v3263 = vmul.f32 %v3235, %v3249
      %v3264 = vmul.f32 %v3236, %v3249
      %v3265 = vmul.f32 %v3237, %v3253
      %v3266 = vmul.f32 %v3238, %v3253
      %v3267 = vmul.f32 %v3239, %v3253
      %v3268 = vmul.f32 %v3240, %v3257
      %v3269 = vmul.f32 %v3241, %v3257
      %v3270 = vmul.f32 %v3242, %v3257
      %3283 = vrot.lane.b32.xlu0 %v3259, 125
      %v3284 = vpop.permute.xlu0 %3283
      %3285 = vrot.lane.b32.xlu0 %v3260, 125
      %v3286 = vpop.permute.xlu0 %3285
      %3287 = vrot.lane.b32.xlu0 %v3261, 125
      %v3288 = vpop.permute.xlu0 %3287
      %3289 = vrot.lane.b32.xlu0 %v3262, 125
      %v3290 = vpop.permute.xlu0 %3289
      %3291 = vrot.lane.b32.xlu0 %v3263, 125
      %v3292 = vpop.permute.xlu0 %3291
      %3293 = vrot.lane.b32.xlu0 %v3264, 125
      %v3294 = vpop.permute.xlu0 %3293
      %3295 = vrot.lane.b32.xlu0 %v3265, 125
      %v3296 = vpop.permute.xlu0 %3295
      %3297 = vrot.lane.b32.xlu0 %v3266, 125
      %v3298 = vpop.permute.xlu0 %3297
      %3299 = vrot.lane.b32.xlu0 %v3267, 125
      %v3300 = vpop.permute.xlu0 %3299
      %3301 = vrot.lane.b32.xlu0 %v3268, 125
      %v3302 = vpop.permute.xlu0 %3301
      %3303 = vrot.lane.b32.xlu0 %v3269, 125
      %v3304 = vpop.permute.xlu0 %3303
      %3305 = vrot.lane.b32.xlu0 %v3270, 125
      %v3306 = vpop.permute.xlu0 %3305
      %v3307 = vsel %vm777, %v3284, %v3286
      %v3308 = vsel %vm777, %v3286, %v3288
      %v3309 = vsel %vm777, %v3290, %v3292
      %v3310 = vsel %vm777, %v3292, %v3294
      %v3311 = vsel %vm777, %v3296, %v3298
      %v3312 = vsel %vm777, %v3298, %v3300
      %v3313 = vsel %vm777, %v3302, %v3304
      %v3314 = vsel %vm777, %v3304, %v3306
      %v3323 = vadd.f32 %v3200, %v3307
      %v3324 = vadd.f32 %v3201, %v3308
      %v3325 = vadd.f32 %v3202, %v3309
      %v3326 = vadd.f32 %v3203, %v3310
      %v3327 = vadd.f32 %v3204, %v3311
      %v3328 = vadd.f32 %v3205, %v3312
      %v3329 = vadd.f32 %v3206, %v3313
      %v3330 = vadd.f32 %v3207, %v3314
      %v3332 = vperm.slane %v3144, 0
      %v3333 = vperm.slane %v3144, 1
      %3334 = vrot.lane.b32.xlu0 %v3332, 6
      %v3335 = vpop.permute.xlu0 %3334
      %3336 = vrot.lane.b32.xlu0 %v3333, 6
      %v3337 = vpop.permute.xlu0 %3336
      %vm3338 = vcmask 48128
      %v3339 = vsel %vm3338, %v3335, %v3337
      %v3343 = vmul.f32 %v3208, %v3335
      %v3344 = vmul.f32 %v3209, %v3339
      %v3345 = vmul.f32 %v3210, %v3337
      %v3346 = vmul.f32 %v3211, %v3335
      %v3347 = vmul.f32 %v3212, %v3339
      %v3348 = vmul.f32 %v3213, %v3337
      %v3349 = vmul.f32 %v3214, %v3335
      %v3350 = vmul.f32 %v3215, %v3339
      %v3351 = vmul.f32 %v3216, %v3337
      %v3352 = vmul.f32 %v3217, %v3335
      %v3353 = vmul.f32 %v3218, %v3339
      %v3354 = vmul.f32 %v3219, %v3337
      %3355 = vset.pattern.permute.xlu0 2
      %3356 = vperm.xlu0 %3355, %v3136
      %v3357 = vpop.permute.xlu0 %3356
      %3359 = vset.pattern.permute.xlu0 2
      %3360 = vperm.xlu0 %3359, %v3137
      %v3361 = vpop.permute.xlu0 %3360
      %3363 = vset.pattern.permute.xlu0 2
      %3364 = vperm.xlu0 %3363, %v3138
      %v3365 = vpop.permute.xlu0 %3364
      %3367 = vset.pattern.permute.xlu0 2
      %3368 = vperm.xlu0 %3367, %v3139
      %v3369 = vpop.permute.xlu0 %3368
      %v3371 = vmul.f32 %v3343, %v3357
      %v3372 = vmul.f32 %v3344, %v3357
      %v3373 = vmul.f32 %v3345, %v3357
      %v3374 = vmul.f32 %v3346, %v3361
      %v3375 = vmul.f32 %v3347, %v3361
      %v3376 = vmul.f32 %v3348, %v3361
      %v3377 = vmul.f32 %v3349, %v3365
      %v3378 = vmul.f32 %v3350, %v3365
      %v3379 = vmul.f32 %v3351, %v3365
      %v3380 = vmul.f32 %v3352, %v3369
      %v3381 = vmul.f32 %v3353, %v3369
      %v3382 = vmul.f32 %v3354, %v3369
      %3395 = vrot.lane.b32.xlu0 %v3371, 122
      %v3396 = vpop.permute.xlu0 %3395
      %3397 = vrot.lane.b32.xlu0 %v3372, 122
      %v3398 = vpop.permute.xlu0 %3397
      %3399 = vrot.lane.b32.xlu0 %v3373, 122
      %v3400 = vpop.permute.xlu0 %3399
      %3401 = vrot.lane.b32.xlu0 %v3374, 122
      %v3402 = vpop.permute.xlu0 %3401
      %3403 = vrot.lane.b32.xlu0 %v3375, 122
      %v3404 = vpop.permute.xlu0 %3403
      %3405 = vrot.lane.b32.xlu0 %v3376, 122
      %v3406 = vpop.permute.xlu0 %3405
      %3407 = vrot.lane.b32.xlu0 %v3377, 122
      %v3408 = vpop.permute.xlu0 %3407
      %3409 = vrot.lane.b32.xlu0 %v3378, 122
      %v3410 = vpop.permute.xlu0 %3409
      %3411 = vrot.lane.b32.xlu0 %v3379, 122
      %v3412 = vpop.permute.xlu0 %3411
      %3413 = vrot.lane.b32.xlu0 %v3380, 122
      %v3414 = vpop.permute.xlu0 %3413
      %3415 = vrot.lane.b32.xlu0 %v3381, 122
      %v3416 = vpop.permute.xlu0 %3415
      %3417 = vrot.lane.b32.xlu0 %v3382, 122
      %v3418 = vpop.permute.xlu0 %3417
      %vm3419 = vcmask 998400
      %v3420 = vsel %vm3419, %v3396, %v3398
      %v3421 = vsel %vm3419, %v3398, %v3400
      %v3422 = vsel %vm3419, %v3402, %v3404
      %v3423 = vsel %vm3419, %v3404, %v3406
      %v3424 = vsel %vm3419, %v3408, %v3410
      %v3425 = vsel %vm3419, %v3410, %v3412
      %v3426 = vsel %vm3419, %v3414, %v3416
      %v3427 = vsel %vm3419, %v3416, %v3418
      %v3436 = vadd.f32 %v3323, %v3420
      %v3437 = vadd.f32 %v3324, %v3421
      %v3438 = vadd.f32 %v3325, %v3422
      %v3439 = vadd.f32 %v3326, %v3423
      %v3440 = vadd.f32 %v3327, %v3424
      %v3441 = vadd.f32 %v3328, %v3425
      %v3442 = vadd.f32 %v3329, %v3426
      %v3443 = vadd.f32 %v3330, %v3427
      %3444 = vset.pattern.permute.xlu0 3
      %3445 = vperm.xlu0 %3444, %v3136
      %v3446 = vpop.permute.xlu0 %3445
      %3448 = vset.pattern.permute.xlu0 3
      %3449 = vperm.xlu0 %3448, %v3137
      %v3450 = vpop.permute.xlu0 %3449
      %3452 = vset.pattern.permute.xlu0 3
      %3453 = vperm.xlu0 %3452, %v3138
      %v3454 = vpop.permute.xlu0 %3453
      %3456 = vset.pattern.permute.xlu0 3
      %3457 = vperm.xlu0 %3456, %v3139
      %v3458 = vpop.permute.xlu0 %3457
      %v3460 = vmul.f32 %v3208, %v3446
      %v3461 = vmul.f32 %v3209, %v3446
      %v3462 = vmul.f32 %v3210, %v3446
      %v3463 = vmul.f32 %v3211, %v3450
      %v3464 = vmul.f32 %v3212, %v3450
      %v3465 = vmul.f32 %v3213, %v3450
      %v3466 = vmul.f32 %v3214, %v3454
      %v3467 = vmul.f32 %v3215, %v3454
      %v3468 = vmul.f32 %v3216, %v3454
      %v3469 = vmul.f32 %v3217, %v3458
      %v3470 = vmul.f32 %v3218, %v3458
      %v3471 = vmul.f32 %v3219, %v3458
      %3484 = vrot.lane.b32.xlu0 %v3460, 119
      %v3485 = vpop.permute.xlu0 %3484
      %3486 = vrot.lane.b32.xlu0 %v3461, 119
      %v3487 = vpop.permute.xlu0 %3486
      %3488 = vrot.lane.b32.xlu0 %v3462, 119
      %v3489 = vpop.permute.xlu0 %3488
      %3490 = vrot.lane.b32.xlu0 %v3463, 119
      %v3491 = vpop.permute.xlu0 %3490
      %3492 = vrot.lane.b32.xlu0 %v3464, 119
      %v3493 = vpop.permute.xlu0 %3492
      %3494 = vrot.lane.b32.xlu0 %v3465, 119
      %v3495 = vpop.permute.xlu0 %3494
      %3496 = vrot.lane.b32.xlu0 %v3466, 119
      %v3497 = vpop.permute.xlu0 %3496
      %3498 = vrot.lane.b32.xlu0 %v3467, 119
      %v3499 = vpop.permute.xlu0 %3498
      %3500 = vrot.lane.b32.xlu0 %v3468, 119
      %v3501 = vpop.permute.xlu0 %3500
      %3502 = vrot.lane.b32.xlu0 %v3469, 119
      %v3503 = vpop.permute.xlu0 %3502
      %3504 = vrot.lane.b32.xlu0 %v3470, 119
      %v3505 = vpop.permute.xlu0 %3504
      %3506 = vrot.lane.b32.xlu0 %v3471, 119
      %v3507 = vpop.permute.xlu0 %3506
      %vm3508 = vcmask 973824
      %v3509 = vsel %vm3508, %v3485, %v3487
      %v3510 = vsel %vm3508, %v3487, %v3489
      %v3511 = vsel %vm3508, %v3491, %v3493
      %v3512 = vsel %vm3508, %v3493, %v3495
      %v3513 = vsel %vm3508, %v3497, %v3499
      %v3514 = vsel %vm3508, %v3499, %v3501
      %v3515 = vsel %vm3508, %v3503, %v3505
      %v3516 = vsel %vm3508, %v3505, %v3507
      %v3525 = vadd.f32 %v3436, %v3509
      %v3526 = vadd.f32 %v3437, %v3510
      %v3527 = vadd.f32 %v3438, %v3511
      %v3528 = vadd.f32 %v3439, %v3512
      %v3529 = vadd.f32 %v3440, %v3513
      %v3530 = vadd.f32 %v3441, %v3514
      %v3531 = vadd.f32 %v3442, %v3515
      %v3532 = vadd.f32 %v3443, %v3516
      %v3534 = vperm.slane %v3146, 0
      %v3535 = vperm.slane %v3146, 1
      %3536 = vrot.lane.b32.xlu0 %v3534, 12
      %v3537 = vpop.permute.xlu0 %3536
      %3538 = vrot.lane.b32.xlu0 %v3535, 12
      %v3539 = vpop.permute.xlu0 %3538
      %vm3540 = vcmask 97280
      %v3541 = vsel %vm3540, %v3537, %v3539
      %v3545 = vmul.f32 %v3208, %v3537
      %v3546 = vmul.f32 %v3209, %v3541
      %v3547 = vmul.f32 %v3210, %v3539
      %v3548 = vmul.f32 %v3211, %v3537
      %v3549 = vmul.f32 %v3212, %v3541
      %v3550 = vmul.f32 %v3213, %v3539
      %v3551 = vmul.f32 %v3214, %v3537
      %v3552 = vmul.f32 %v3215, %v3541
      %v3553 = vmul.f32 %v3216, %v3539
      %v3554 = vmul.f32 %v3217, %v3537
      %v3555 = vmul.f32 %v3218, %v3541
      %v3556 = vmul.f32 %v3219, %v3539
      %3557 = vset.pattern.permute.xlu0 4
      %3558 = vperm.xlu0 %3557, %v3136
      %v3559 = vpop.permute.xlu0 %3558
      %3561 = vset.pattern.permute.xlu0 4
      %3562 = vperm.xlu0 %3561, %v3137
      %v3563 = vpop.permute.xlu0 %3562
      %3565 = vset.pattern.permute.xlu0 4
      %3566 = vperm.xlu0 %3565, %v3138
      %v3567 = vpop.permute.xlu0 %3566
      %3569 = vset.pattern.permute.xlu0 4
      %3570 = vperm.xlu0 %3569, %v3139
      %v3571 = vpop.permute.xlu0 %3570
      %v3573 = vmul.f32 %v3545, %v3559
      %v3574 = vmul.f32 %v3546, %v3559
      %v3575 = vmul.f32 %v3547, %v3559
      %v3576 = vmul.f32 %v3548, %v3563
      %v3577 = vmul.f32 %v3549, %v3563
      %v3578 = vmul.f32 %v3550, %v3563
      %v3579 = vmul.f32 %v3551, %v3567
      %v3580 = vmul.f32 %v3552, %v3567
      %v3581 = vmul.f32 %v3553, %v3567
      %v3582 = vmul.f32 %v3554, %v3571
      %v3583 = vmul.f32 %v3555, %v3571
      %v3584 = vmul.f32 %v3556, %v3571
      %3597 = vrot.lane.b32.xlu0 %v3573, 116
      %v3598 = vpop.permute.xlu0 %3597
      %3599 = vrot.lane.b32.xlu0 %v3574, 116
      %v3600 = vpop.permute.xlu0 %3599
      %3601 = vrot.lane.b32.xlu0 %v3575, 116
      %v3602 = vpop.permute.xlu0 %3601
      %3603 = vrot.lane.b32.xlu0 %v3576, 116
      %v3604 = vpop.permute.xlu0 %3603
      %3605 = vrot.lane.b32.xlu0 %v3577, 116
      %v3606 = vpop.permute.xlu0 %3605
      %3607 = vrot.lane.b32.xlu0 %v3578, 116
      %v3608 = vpop.permute.xlu0 %3607
      %3609 = vrot.lane.b32.xlu0 %v3579, 116
      %v3610 = vpop.permute.xlu0 %3609
      %3611 = vrot.lane.b32.xlu0 %v3580, 116
      %v3612 = vpop.permute.xlu0 %3611
      %3613 = vrot.lane.b32.xlu0 %v3581, 116
      %v3614 = vpop.permute.xlu0 %3613
      %3615 = vrot.lane.b32.xlu0 %v3582, 116
      %v3616 = vpop.permute.xlu0 %3615
      %3617 = vrot.lane.b32.xlu0 %v3583, 116
      %v3618 = vpop.permute.xlu0 %3617
      %3619 = vrot.lane.b32.xlu0 %v3584, 116
      %v3620 = vpop.permute.xlu0 %3619
      %vm3621 = vcmask 949248
      %v3622 = vsel %vm3621, %v3598, %v3600
      %v3623 = vsel %vm3621, %v3600, %v3602
      %v3624 = vsel %vm3621, %v3604, %v3606
      %v3625 = vsel %vm3621, %v3606, %v3608
      %v3626 = vsel %vm3621, %v3610, %v3612
      %v3627 = vsel %vm3621, %v3612, %v3614
      %v3628 = vsel %vm3621, %v3616, %v3618
      %v3629 = vsel %vm3621, %v3618, %v3620
      %v3638 = vadd.f32 %v3525, %v3622
      %v3639 = vadd.f32 %v3526, %v3623
      %v3640 = vadd.f32 %v3527, %v3624
      %v3641 = vadd.f32 %v3528, %v3625
      %v3642 = vadd.f32 %v3529, %v3626
      %v3643 = vadd.f32 %v3530, %v3627
      %v3644 = vadd.f32 %v3531, %v3628
      %v3645 = vadd.f32 %v3532, %v3629
      %v3647 = vperm.slane %v3148, 0
      %v3648 = vperm.slane %v3148, 1
      %3649 = vrot.lane.b32.xlu0 %v3647, 15
      %v3650 = vpop.permute.xlu0 %3649
      %3651 = vrot.lane.b32.xlu0 %v3648, 15
      %v3652 = vpop.permute.xlu0 %3651
      %vm3653 = vcmask 121856
      %v3654 = vsel %vm3653, %v3650, %v3652
      %v3658 = vmul.f32 %v3208, %v3650
      %v3659 = vmul.f32 %v3209, %v3654
      %v3660 = vmul.f32 %v3210, %v3652
      %v3661 = vmul.f32 %v3211, %v3650
      %v3662 = vmul.f32 %v3212, %v3654
      %v3663 = vmul.f32 %v3213, %v3652
      %v3664 = vmul.f32 %v3214, %v3650
      %v3665 = vmul.f32 %v3215, %v3654
      %v3666 = vmul.f32 %v3216, %v3652
      %v3667 = vmul.f32 %v3217, %v3650
      %v3668 = vmul.f32 %v3218, %v3654
      %v3669 = vmul.f32 %v3219, %v3652
      %3670 = vset.pattern.permute.xlu0 5
      %3671 = vperm.xlu0 %3670, %v3136
      %v3672 = vpop.permute.xlu0 %3671
      %3674 = vset.pattern.permute.xlu0 5
      %3675 = vperm.xlu0 %3674, %v3137
      %v3676 = vpop.permute.xlu0 %3675
      %3678 = vset.pattern.permute.xlu0 5
      %3679 = vperm.xlu0 %3678, %v3138
      %v3680 = vpop.permute.xlu0 %3679
      %3682 = vset.pattern.permute.xlu0 5
      %3683 = vperm.xlu0 %3682, %v3139
      %v3684 = vpop.permute.xlu0 %3683
      %v3686 = vmul.f32 %v3658, %v3672
      %v3687 = vmul.f32 %v3659, %v3672
      %v3688 = vmul.f32 %v3660, %v3672
      %v3689 = vmul.f32 %v3661, %v3676
      %v3690 = vmul.f32 %v3662, %v3676
      %v3691 = vmul.f32 %v3663, %v3676
      %v3692 = vmul.f32 %v3664, %v3680
      %v3693 = vmul.f32 %v3665, %v3680
      %v3694 = vmul.f32 %v3666, %v3680
      %v3695 = vmul.f32 %v3667, %v3684
      %v3696 = vmul.f32 %v3668, %v3684
      %v3697 = vmul.f32 %v3669, %v3684
      %3710 = vrot.lane.b32.xlu0 %v3686, 113
      %v3711 = vpop.permute.xlu0 %3710
      %3712 = vrot.lane.b32.xlu0 %v3687, 113
      %v3713 = vpop.permute.xlu0 %3712
      %3714 = vrot.lane.b32.xlu0 %v3688, 113
      %v3715 = vpop.permute.xlu0 %3714
      %3716 = vrot.lane.b32.xlu0 %v3689, 113
      %v3717 = vpop.permute.xlu0 %3716
      %3718 = vrot.lane.b32.xlu0 %v3690, 113
      %v3719 = vpop.permute.xlu0 %3718
      %3720 = vrot.lane.b32.xlu0 %v3691, 113
      %v3721 = vpop.permute.xlu0 %3720
      %3722 = vrot.lane.b32.xlu0 %v3692, 113
      %v3723 = vpop.permute.xlu0 %3722
      %3724 = vrot.lane.b32.xlu0 %v3693, 113
      %v3725 = vpop.permute.xlu0 %3724
      %3726 = vrot.lane.b32.xlu0 %v3694, 113
      %v3727 = vpop.permute.xlu0 %3726
      %3728 = vrot.lane.b32.xlu0 %v3695, 113
      %v3729 = vpop.permute.xlu0 %3728
      %3730 = vrot.lane.b32.xlu0 %v3696, 113
      %v3731 = vpop.permute.xlu0 %3730
      %3732 = vrot.lane.b32.xlu0 %v3697, 113
      %v3733 = vpop.permute.xlu0 %3732
      %vm3734 = vcmask 924672
      %v3735 = vsel %vm3734, %v3711, %v3713
      %v3736 = vsel %vm3734, %v3713, %v3715
      %v3737 = vsel %vm3734, %v3717, %v3719
      %v3738 = vsel %vm3734, %v3719, %v3721
      %v3739 = vsel %vm3734, %v3723, %v3725
      %v3740 = vsel %vm3734, %v3725, %v3727
      %v3741 = vsel %vm3734, %v3729, %v3731
      %v3742 = vsel %vm3734, %v3731, %v3733
      %v3751 = vadd.f32 %v3638, %v3735
      %v3752 = vadd.f32 %v3639, %v3736
      %v3753 = vadd.f32 %v3640, %v3737
      %v3754 = vadd.f32 %v3641, %v3738
      %v3755 = vadd.f32 %v3642, %v3739
      %v3756 = vadd.f32 %v3643, %v3740
      %v3757 = vadd.f32 %v3644, %v3741
      %v3758 = vadd.f32 %v3645, %v3742
      %v3760 = vperm.slane %v3150, 0
      %v3761 = vperm.slane %v3150, 1
      %3762 = vrot.lane.b32.xlu0 %v3760, 18
      %v3763 = vpop.permute.xlu0 %3762
      %3764 = vrot.lane.b32.xlu0 %v3761, 18
      %v3765 = vpop.permute.xlu0 %3764
      %vm3766 = vcmask 146432
      %v3767 = vsel %vm3766, %v3763, %v3765
      %v3771 = vmul.f32 %v3208, %v3763
      %v3772 = vmul.f32 %v3209, %v3767
      %v3773 = vmul.f32 %v3210, %v3765
      %v3774 = vmul.f32 %v3211, %v3763
      %v3775 = vmul.f32 %v3212, %v3767
      %v3776 = vmul.f32 %v3213, %v3765
      %v3777 = vmul.f32 %v3214, %v3763
      %v3778 = vmul.f32 %v3215, %v3767
      %v3779 = vmul.f32 %v3216, %v3765
      %v3780 = vmul.f32 %v3217, %v3763
      %v3781 = vmul.f32 %v3218, %v3767
      %v3782 = vmul.f32 %v3219, %v3765
      %3783 = vset.pattern.permute.xlu0 6
      %3784 = vperm.xlu0 %3783, %v3136
      %v3785 = vpop.permute.xlu0 %3784
      %3787 = vset.pattern.permute.xlu0 6
      %3788 = vperm.xlu0 %3787, %v3137
      %v3789 = vpop.permute.xlu0 %3788
      %3791 = vset.pattern.permute.xlu0 6
      %3792 = vperm.xlu0 %3791, %v3138
      %v3793 = vpop.permute.xlu0 %3792
      %3795 = vset.pattern.permute.xlu0 6
      %3796 = vperm.xlu0 %3795, %v3139
      %v3797 = vpop.permute.xlu0 %3796
      %v3799 = vmul.f32 %v3771, %v3785
      %v3800 = vmul.f32 %v3772, %v3785
      %v3801 = vmul.f32 %v3773, %v3785
      %v3802 = vmul.f32 %v3774, %v3789
      %v3803 = vmul.f32 %v3775, %v3789
      %v3804 = vmul.f32 %v3776, %v3789
      %v3805 = vmul.f32 %v3777, %v3793
      %v3806 = vmul.f32 %v3778, %v3793
      %v3807 = vmul.f32 %v3779, %v3793
      %v3808 = vmul.f32 %v3780, %v3797
      %v3809 = vmul.f32 %v3781, %v3797
      %v3810 = vmul.f32 %v3782, %v3797
      %3823 = vrot.lane.b32.xlu0 %v3799, 110
      %v3824 = vpop.permute.xlu0 %3823
      %3825 = vrot.lane.b32.xlu0 %v3800, 110
      %v3826 = vpop.permute.xlu0 %3825
      %3827 = vrot.lane.b32.xlu0 %v3801, 110
      %v3828 = vpop.permute.xlu0 %3827
      %3829 = vrot.lane.b32.xlu0 %v3802, 110
      %v3830 = vpop.permute.xlu0 %3829
      %3831 = vrot.lane.b32.xlu0 %v3803, 110
      %v3832 = vpop.permute.xlu0 %3831
      %3833 = vrot.lane.b32.xlu0 %v3804, 110
      %v3834 = vpop.permute.xlu0 %3833
      %3835 = vrot.lane.b32.xlu0 %v3805, 110
      %v3836 = vpop.permute.xlu0 %3835
      %3837 = vrot.lane.b32.xlu0 %v3806, 110
      %v3838 = vpop.permute.xlu0 %3837
      %3839 = vrot.lane.b32.xlu0 %v3807, 110
      %v3840 = vpop.permute.xlu0 %3839
      %3841 = vrot.lane.b32.xlu0 %v3808, 110
      %v3842 = vpop.permute.xlu0 %3841
      %3843 = vrot.lane.b32.xlu0 %v3809, 110
      %v3844 = vpop.permute.xlu0 %3843
      %3845 = vrot.lane.b32.xlu0 %v3810, 110
      %v3846 = vpop.permute.xlu0 %3845
      %v3847 = vsel %vm1199, %v3824, %v3826
      %v3848 = vsel %vm1199, %v3826, %v3828
      %v3849 = vsel %vm1199, %v3830, %v3832
      %v3850 = vsel %vm1199, %v3832, %v3834
      %v3851 = vsel %vm1199, %v3836, %v3838
      %v3852 = vsel %vm1199, %v3838, %v3840
      %v3853 = vsel %vm1199, %v3842, %v3844
      %v3854 = vsel %vm1199, %v3844, %v3846
      %v3863 = vadd.f32 %v3751, %v3847
      %v3864 = vadd.f32 %v3752, %v3848
      %v3865 = vadd.f32 %v3753, %v3849
      %v3866 = vadd.f32 %v3754, %v3850
      %v3867 = vadd.f32 %v3755, %v3851
      %v3868 = vadd.f32 %v3756, %v3852
      %v3869 = vadd.f32 %v3757, %v3853
      %v3870 = vadd.f32 %v3758, %v3854
      %3871 = vrot.lane.b32.xlu0 %v3160, 48
      %v3872 = vpop.permute.xlu0 %3871
      %3873 = vrot.lane.b32.xlu0 %v3161, 48
      %v3874 = vpop.permute.xlu0 %3873
      %v3875 = vsel %vm1977, %v3872, %v3874
      %v3879 = vmul.f32 %v3208, %v3872
      %v3880 = vmul.f32 %v3209, %v3875
      %v3881 = vmul.f32 %v3210, %v3874
      %v3882 = vmul.f32 %v3211, %v3872
      %v3883 = vmul.f32 %v3212, %v3875
      %v3884 = vmul.f32 %v3213, %v3874
      %v3885 = vmul.f32 %v3214, %v3872
      %v3886 = vmul.f32 %v3215, %v3875
      %v3887 = vmul.f32 %v3216, %v3874
      %v3888 = vmul.f32 %v3217, %v3872
      %v3889 = vmul.f32 %v3218, %v3875
      %v3890 = vmul.f32 %v3219, %v3874
      %3891 = vset.pattern.permute.xlu0 7
      %3892 = vperm.xlu0 %3891, %v3136
      %v3893 = vpop.permute.xlu0 %3892
      %3895 = vset.pattern.permute.xlu0 7
      %3896 = vperm.xlu0 %3895, %v3137
      %v3897 = vpop.permute.xlu0 %3896
      %3899 = vset.pattern.permute.xlu0 7
      %3900 = vperm.xlu0 %3899, %v3138
      %v3901 = vpop.permute.xlu0 %3900
      %3903 = vset.pattern.permute.xlu0 7
      %3904 = vperm.xlu0 %3903, %v3139
      %v3905 = vpop.permute.xlu0 %3904
      %v3907 = vmul.f32 %v3879, %v3893
      %v3908 = vmul.f32 %v3880, %v3893
      %v3909 = vmul.f32 %v3881, %v3893
      %v3910 = vmul.f32 %v3882, %v3897
      %v3911 = vmul.f32 %v3883, %v3897
      %v3912 = vmul.f32 %v3884, %v3897
      %v3913 = vmul.f32 %v3885, %v3901
      %v3914 = vmul.f32 %v3886, %v3901
      %v3915 = vmul.f32 %v3887, %v3901
      %v3916 = vmul.f32 %v3888, %v3905
      %v3917 = vmul.f32 %v3889, %v3905
      %v3918 = vmul.f32 %v3890, %v3905
      %3931 = vrot.lane.b32.xlu0 %v3907, 80
      %v3932 = vpop.permute.xlu0 %3931
      %3933 = vrot.lane.b32.xlu0 %v3908, 80
      %v3934 = vpop.permute.xlu0 %3933
      %3935 = vrot.lane.b32.xlu0 %v3909, 80
      %v3936 = vpop.permute.xlu0 %3935
      %3937 = vrot.lane.b32.xlu0 %v3910, 80
      %v3938 = vpop.permute.xlu0 %3937
      %3939 = vrot.lane.b32.xlu0 %v3911, 80
      %v3940 = vpop.permute.xlu0 %3939
      %3941 = vrot.lane.b32.xlu0 %v3912, 80
      %v3942 = vpop.permute.xlu0 %3941
      %3943 = vrot.lane.b32.xlu0 %v3913, 80
      %v3944 = vpop.permute.xlu0 %3943
      %3945 = vrot.lane.b32.xlu0 %v3914, 80
      %v3946 = vpop.permute.xlu0 %3945
      %3947 = vrot.lane.b32.xlu0 %v3915, 80
      %v3948 = vpop.permute.xlu0 %3947
      %3949 = vrot.lane.b32.xlu0 %v3916, 80
      %v3950 = vpop.permute.xlu0 %3949
      %3951 = vrot.lane.b32.xlu0 %v3917, 80
      %v3952 = vpop.permute.xlu0 %3951
      %3953 = vrot.lane.b32.xlu0 %v3918, 80
      %v3954 = vpop.permute.xlu0 %3953
      %v3955 = vsel %vm2058, %v3932, %v3934
      %v3956 = vsel %vm2058, %v3934, %v3936
      %v3957 = vsel %vm2058, %v3938, %v3940
      %v3958 = vsel %vm2058, %v3940, %v3942
      %v3959 = vsel %vm2058, %v3944, %v3946
      %v3960 = vsel %vm2058, %v3946, %v3948
      %v3961 = vsel %vm2058, %v3950, %v3952
      %v3962 = vsel %vm2058, %v3952, %v3954
      %v3971 = vadd.f32 %v3863, %v3955
      %v3972 = vadd.f32 %v3864, %v3956
      %v3973 = vadd.f32 %v3865, %v3957
      %v3974 = vadd.f32 %v3866, %v3958
      %v3975 = vadd.f32 %v3867, %v3959
      %v3976 = vadd.f32 %v3868, %v3960
      %v3977 = vadd.f32 %v3869, %v3961
      %v3978 = vadd.f32 %v3870, %v3962
      %3979 = vrot.lane.b32.xlu0 %v3221, 51
      %v3980 = vpop.permute.xlu0 %3979
      %3981 = vrot.lane.b32.xlu0 %v3222, 51
      %v3982 = vpop.permute.xlu0 %3981
      %v3983 = vsel %vm2286, %v3980, %v3982
      %v3987 = vmul.f32 %v3208, %v3980
      %v3988 = vmul.f32 %v3209, %v3983
      %v3989 = vmul.f32 %v3210, %v3982
      %v3990 = vmul.f32 %v3211, %v3980
      %v3991 = vmul.f32 %v3212, %v3983
      %v3992 = vmul.f32 %v3213, %v3982
      %v3993 = vmul.f32 %v3214, %v3980
      %v3994 = vmul.f32 %v3215, %v3983
      %v3995 = vmul.f32 %v3216, %v3982
      %v3996 = vmul.f32 %v3217, %v3980
      %v3997 = vmul.f32 %v3218, %v3983
      %v3998 = vmul.f32 %v3219, %v3982
      %3999 = vset.pattern.permute.xlu0 8
      %4000 = vperm.xlu0 %3999, %v3136
      %v4001 = vpop.permute.xlu0 %4000
      %4003 = vset.pattern.permute.xlu0 8
      %4004 = vperm.xlu0 %4003, %v3137
      %v4005 = vpop.permute.xlu0 %4004
      %4007 = vset.pattern.permute.xlu0 8
      %4008 = vperm.xlu0 %4007, %v3138
      %v4009 = vpop.permute.xlu0 %4008
      %4011 = vset.pattern.permute.xlu0 8
      %4012 = vperm.xlu0 %4011, %v3139
      %v4013 = vpop.permute.xlu0 %4012
      %v4015 = vmul.f32 %v3987, %v4001
      %v4016 = vmul.f32 %v3988, %v4001
      %v4017 = vmul.f32 %v3989, %v4001
      %v4018 = vmul.f32 %v3990, %v4005
      %v4019 = vmul.f32 %v3991, %v4005
      %v4020 = vmul.f32 %v3992, %v4005
      %v4021 = vmul.f32 %v3993, %v4009
      %v4022 = vmul.f32 %v3994, %v4009
      %v4023 = vmul.f32 %v3995, %v4009
      %v4024 = vmul.f32 %v3996, %v4013
      %v4025 = vmul.f32 %v3997, %v4013
      %v4026 = vmul.f32 %v3998, %v4013
      %4039 = vrot.lane.b32.xlu0 %v4015, 77
      %v4040 = vpop.permute.xlu0 %4039
      %4041 = vrot.lane.b32.xlu0 %v4016, 77
      %v4042 = vpop.permute.xlu0 %4041
      %4043 = vrot.lane.b32.xlu0 %v4017, 77
      %v4044 = vpop.permute.xlu0 %4043
      %4045 = vrot.lane.b32.xlu0 %v4018, 77
      %v4046 = vpop.permute.xlu0 %4045
      %4047 = vrot.lane.b32.xlu0 %v4019, 77
      %v4048 = vpop.permute.xlu0 %4047
      %4049 = vrot.lane.b32.xlu0 %v4020, 77
      %v4050 = vpop.permute.xlu0 %4049
      %4051 = vrot.lane.b32.xlu0 %v4021, 77
      %v4052 = vpop.permute.xlu0 %4051
      %4053 = vrot.lane.b32.xlu0 %v4022, 77
      %v4054 = vpop.permute.xlu0 %4053
      %4055 = vrot.lane.b32.xlu0 %v4023, 77
      %v4056 = vpop.permute.xlu0 %4055
      %4057 = vrot.lane.b32.xlu0 %v4024, 77
      %v4058 = vpop.permute.xlu0 %4057
      %4059 = vrot.lane.b32.xlu0 %v4025, 77
      %v4060 = vpop.permute.xlu0 %4059
      %4061 = vrot.lane.b32.xlu0 %v4026, 77
      %v4062 = vpop.permute.xlu0 %4061
      %v4063 = vsel %vm2367, %v4040, %v4042
      %v4064 = vsel %vm2367, %v4042, %v4044
      %v4065 = vsel %vm2367, %v4046, %v4048
      %v4066 = vsel %vm2367, %v4048, %v4050
      %v4067 = vsel %vm2367, %v4052, %v4054
      %v4068 = vsel %vm2367, %v4054, %v4056
      %v4069 = vsel %vm2367, %v4058, %v4060
      %v4070 = vsel %vm2367, %v4060, %v4062
      %v4079 = vadd.f32 %v3971, %v4063
      %v4080 = vadd.f32 %v3972, %v4064
      %v4081 = vadd.f32 %v3973, %v4065
      %v4082 = vadd.f32 %v3974, %v4066
      %v4083 = vadd.f32 %v3975, %v4067
      %v4084 = vadd.f32 %v3976, %v4068
      %v4085 = vadd.f32 %v3977, %v4069
      %v4086 = vadd.f32 %v3978, %v4070
      %4087 = vrot.lane.b32.xlu0 %v3332, 54
      %v4088 = vpop.permute.xlu0 %4087
      %4089 = vrot.lane.b32.xlu0 %v3333, 54
      %v4090 = vpop.permute.xlu0 %4089
      %vm4091 = vcmask 441344
      %v4092 = vsel %vm4091, %v4088, %v4090
      %v4096 = vmul.f32 %v3208, %v4088
      %v4097 = vmul.f32 %v3209, %v4092
      %v4098 = vmul.f32 %v3210, %v4090
      %v4099 = vmul.f32 %v3211, %v4088
      %v4100 = vmul.f32 %v3212, %v4092
      %v4101 = vmul.f32 %v3213, %v4090
      %v4102 = vmul.f32 %v3214, %v4088
      %v4103 = vmul.f32 %v3215, %v4092
      %v4104 = vmul.f32 %v3216, %v4090
      %v4105 = vmul.f32 %v3217, %v4088
      %v4106 = vmul.f32 %v3218, %v4092
      %v4107 = vmul.f32 %v3219, %v4090
      %4108 = vset.pattern.permute.xlu0 9
      %4109 = vperm.xlu0 %4108, %v3136
      %v4110 = vpop.permute.xlu0 %4109
      %4112 = vset.pattern.permute.xlu0 9
      %4113 = vperm.xlu0 %4112, %v3137
      %v4114 = vpop.permute.xlu0 %4113
      %4116 = vset.pattern.permute.xlu0 9
      %4117 = vperm.xlu0 %4116, %v3138
      %v4118 = vpop.permute.xlu0 %4117
      %4120 = vset.pattern.permute.xlu0 9
      %4121 = vperm.xlu0 %4120, %v3139
      %v4122 = vpop.permute.xlu0 %4121
      %v4124 = vmul.f32 %v4096, %v4110
      %v4125 = vmul.f32 %v4097, %v4110
      %v4126 = vmul.f32 %v4098, %v4110
      %v4127 = vmul.f32 %v4099, %v4114
      %v4128 = vmul.f32 %v4100, %v4114
      %v4129 = vmul.f32 %v4101, %v4114
      %v4130 = vmul.f32 %v4102, %v4118
      %v4131 = vmul.f32 %v4103, %v4118
      %v4132 = vmul.f32 %v4104, %v4118
      %v4133 = vmul.f32 %v4105, %v4122
      %v4134 = vmul.f32 %v4106, %v4122
      %v4135 = vmul.f32 %v4107, %v4122
      %4148 = vrot.lane.b32.xlu0 %v4124, 74
      %v4149 = vpop.permute.xlu0 %4148
      %4150 = vrot.lane.b32.xlu0 %v4125, 74
      %v4151 = vpop.permute.xlu0 %4150
      %4152 = vrot.lane.b32.xlu0 %v4126, 74
      %v4153 = vpop.permute.xlu0 %4152
      %4154 = vrot.lane.b32.xlu0 %v4127, 74
      %v4155 = vpop.permute.xlu0 %4154
      %4156 = vrot.lane.b32.xlu0 %v4128, 74
      %v4157 = vpop.permute.xlu0 %4156
      %4158 = vrot.lane.b32.xlu0 %v4129, 74
      %v4159 = vpop.permute.xlu0 %4158
      %4160 = vrot.lane.b32.xlu0 %v4130, 74
      %v4161 = vpop.permute.xlu0 %4160
      %4162 = vrot.lane.b32.xlu0 %v4131, 74
      %v4163 = vpop.permute.xlu0 %4162
      %4164 = vrot.lane.b32.xlu0 %v4132, 74
      %v4165 = vpop.permute.xlu0 %4164
      %4166 = vrot.lane.b32.xlu0 %v4133, 74
      %v4167 = vpop.permute.xlu0 %4166
      %4168 = vrot.lane.b32.xlu0 %v4134, 74
      %v4169 = vpop.permute.xlu0 %4168
      %4170 = vrot.lane.b32.xlu0 %v4135, 74
      %v4171 = vpop.permute.xlu0 %4170
      %vm4172 = vcmask 605184
      %v4173 = vsel %vm4172, %v4149, %v4151
      %v4174 = vsel %vm4172, %v4151, %v4153
      %v4175 = vsel %vm4172, %v4155, %v4157
      %v4176 = vsel %vm4172, %v4157, %v4159
      %v4177 = vsel %vm4172, %v4161, %v4163
      %v4178 = vsel %vm4172, %v4163, %v4165
      %v4179 = vsel %vm4172, %v4167, %v4169
      %v4180 = vsel %vm4172, %v4169, %v4171
      %v4189 = vadd.f32 %v4079, %v4173
      %v4190 = vadd.f32 %v4080, %v4174
      %v4191 = vadd.f32 %v4081, %v4175
      %v4192 = vadd.f32 %v4082, %v4176
      %v4193 = vadd.f32 %v4083, %v4177
      %v4194 = vadd.f32 %v4084, %v4178
      %v4195 = vadd.f32 %v4085, %v4179
      %v4196 = vadd.f32 %v4086, %v4180
      %4197 = vset.pattern.permute.xlu0 10
      %4198 = vperm.xlu0 %4197, %v3136
      %v4199 = vpop.permute.xlu0 %4198
      %4201 = vset.pattern.permute.xlu0 10
      %4202 = vperm.xlu0 %4201, %v3137
      %v4203 = vpop.permute.xlu0 %4202
      %4205 = vset.pattern.permute.xlu0 10
      %4206 = vperm.xlu0 %4205, %v3138
      %v4207 = vpop.permute.xlu0 %4206
      %4209 = vset.pattern.permute.xlu0 10
      %4210 = vperm.xlu0 %4209, %v3139
      %v4211 = vpop.permute.xlu0 %4210
      %v4213 = vmul.f32 %v3208, %v4199
      %v4214 = vmul.f32 %v3209, %v4199
      %v4215 = vmul.f32 %v3210, %v4199
      %v4216 = vmul.f32 %v3211, %v4203
      %v4217 = vmul.f32 %v3212, %v4203
      %v4218 = vmul.f32 %v3213, %v4203
      %v4219 = vmul.f32 %v3214, %v4207
      %v4220 = vmul.f32 %v3215, %v4207
      %v4221 = vmul.f32 %v3216, %v4207
      %v4222 = vmul.f32 %v3217, %v4211
      %v4223 = vmul.f32 %v3218, %v4211
      %v4224 = vmul.f32 %v3219, %v4211
      %4237 = vrot.lane.b32.xlu0 %v4213, 71
      %v4238 = vpop.permute.xlu0 %4237
      %4239 = vrot.lane.b32.xlu0 %v4214, 71
      %v4240 = vpop.permute.xlu0 %4239
      %4241 = vrot.lane.b32.xlu0 %v4215, 71
      %v4242 = vpop.permute.xlu0 %4241
      %4243 = vrot.lane.b32.xlu0 %v4216, 71
      %v4244 = vpop.permute.xlu0 %4243
      %4245 = vrot.lane.b32.xlu0 %v4217, 71
      %v4246 = vpop.permute.xlu0 %4245
      %4247 = vrot.lane.b32.xlu0 %v4218, 71
      %v4248 = vpop.permute.xlu0 %4247
      %4249 = vrot.lane.b32.xlu0 %v4219, 71
      %v4250 = vpop.permute.xlu0 %4249
      %4251 = vrot.lane.b32.xlu0 %v4220, 71
      %v4252 = vpop.permute.xlu0 %4251
      %4253 = vrot.lane.b32.xlu0 %v4221, 71
      %v4254 = vpop.permute.xlu0 %4253
      %4255 = vrot.lane.b32.xlu0 %v4222, 71
      %v4256 = vpop.permute.xlu0 %4255
      %4257 = vrot.lane.b32.xlu0 %v4223, 71
      %v4258 = vpop.permute.xlu0 %4257
      %4259 = vrot.lane.b32.xlu0 %v4224, 71
      %v4260 = vpop.permute.xlu0 %4259
      %vm4261 = vcmask 580608
      %v4262 = vsel %vm4261, %v4238, %v4240
      %v4263 = vsel %vm4261, %v4240, %v4242
      %v4264 = vsel %vm4261, %v4244, %v4246
      %v4265 = vsel %vm4261, %v4246, %v4248
      %v4266 = vsel %vm4261, %v4250, %v4252
      %v4267 = vsel %vm4261, %v4252, %v4254
      %v4268 = vsel %vm4261, %v4256, %v4258
      %v4269 = vsel %vm4261, %v4258, %v4260
      %v4278 = vadd.f32 %v4189, %v4262
      %v4279 = vadd.f32 %v4190, %v4263
      %v4280 = vadd.f32 %v4191, %v4264
      %v4281 = vadd.f32 %v4192, %v4265
      %v4282 = vadd.f32 %v4193, %v4266
      %v4283 = vadd.f32 %v4194, %v4267
      %v4284 = vadd.f32 %v4195, %v4268
      %v4285 = vadd.f32 %v4196, %v4269
      %4286 = vrot.lane.b32.xlu0 %v3534, 60
      %v4287 = vpop.permute.xlu0 %4286
      %4288 = vrot.lane.b32.xlu0 %v3535, 60
      %v4289 = vpop.permute.xlu0 %4288
      %v4290 = vsel %vm3005, %v4287, %v4289
      %v4294 = vmul.f32 %v3208, %v4287
      %v4295 = vmul.f32 %v3209, %v4290
      %v4296 = vmul.f32 %v3210, %v4289
      %v4297 = vmul.f32 %v3211, %v4287
      %v4298 = vmul.f32 %v3212, %v4290
      %v4299 = vmul.f32 %v3213, %v4289
      %v4300 = vmul.f32 %v3214, %v4287
      %v4301 = vmul.f32 %v3215, %v4290
      %v4302 = vmul.f32 %v3216, %v4289
      %v4303 = vmul.f32 %v3217, %v4287
      %v4304 = vmul.f32 %v3218, %v4290
      %v4305 = vmul.f32 %v3219, %v4289
      %4306 = vset.pattern.permute.xlu0 11
      %4307 = vperm.xlu0 %4306, %v3136
      %v4308 = vpop.permute.xlu0 %4307
      %4310 = vset.pattern.permute.xlu0 11
      %4311 = vperm.xlu0 %4310, %v3137
      %v4312 = vpop.permute.xlu0 %4311
      %4314 = vset.pattern.permute.xlu0 11
      %4315 = vperm.xlu0 %4314, %v3138
      %v4316 = vpop.permute.xlu0 %4315
      %4318 = vset.pattern.permute.xlu0 11
      %4319 = vperm.xlu0 %4318, %v3139
      %v4320 = vpop.permute.xlu0 %4319
      %v4322 = vmul.f32 %v4294, %v4308
      %v4323 = vmul.f32 %v4295, %v4308
      %v4324 = vmul.f32 %v4296, %v4308
      %v4325 = vmul.f32 %v4297, %v4312
      %v4326 = vmul.f32 %v4298, %v4312
      %v4327 = vmul.f32 %v4299, %v4312
      %v4328 = vmul.f32 %v4300, %v4316
      %v4329 = vmul.f32 %v4301, %v4316
      %v4330 = vmul.f32 %v4302, %v4316
      %v4331 = vmul.f32 %v4303, %v4320
      %v4332 = vmul.f32 %v4304, %v4320
      %v4333 = vmul.f32 %v4305, %v4320
      %4346 = vrot.lane.b32.xlu0 %v4322, 68
      %v4347 = vpop.permute.xlu0 %4346
      %4348 = vrot.lane.b32.xlu0 %v4323, 68
      %v4349 = vpop.permute.xlu0 %4348
      %4350 = vrot.lane.b32.xlu0 %v4324, 68
      %v4351 = vpop.permute.xlu0 %4350
      %4352 = vrot.lane.b32.xlu0 %v4325, 68
      %v4353 = vpop.permute.xlu0 %4352
      %4354 = vrot.lane.b32.xlu0 %v4326, 68
      %v4355 = vpop.permute.xlu0 %4354
      %4356 = vrot.lane.b32.xlu0 %v4327, 68
      %v4357 = vpop.permute.xlu0 %4356
      %4358 = vrot.lane.b32.xlu0 %v4328, 68
      %v4359 = vpop.permute.xlu0 %4358
      %4360 = vrot.lane.b32.xlu0 %v4329, 68
      %v4361 = vpop.permute.xlu0 %4360
      %4362 = vrot.lane.b32.xlu0 %v4330, 68
      %v4363 = vpop.permute.xlu0 %4362
      %4364 = vrot.lane.b32.xlu0 %v4331, 68
      %v4365 = vpop.permute.xlu0 %4364
      %4366 = vrot.lane.b32.xlu0 %v4332, 68
      %v4367 = vpop.permute.xlu0 %4366
      %4368 = vrot.lane.b32.xlu0 %v4333, 68
      %v4369 = vpop.permute.xlu0 %4368
      %v4370 = vsel %vm2924, %v4347, %v4349
      %v4371 = vsel %vm2924, %v4349, %v4351
      %v4372 = vsel %vm2924, %v4353, %v4355
      %v4373 = vsel %vm2924, %v4355, %v4357
      %v4374 = vsel %vm2924, %v4359, %v4361
      %v4375 = vsel %vm2924, %v4361, %v4363
      %v4376 = vsel %vm2924, %v4365, %v4367
      %v4377 = vsel %vm2924, %v4367, %v4369
      %v4386 = vadd.f32 %v4278, %v4370
      %v4387 = vadd.f32 %v4279, %v4371
      %v4388 = vadd.f32 %v4280, %v4372
      %v4389 = vadd.f32 %v4281, %v4373
      %v4390 = vadd.f32 %v4282, %v4374
      %v4391 = vadd.f32 %v4283, %v4375
      %v4392 = vadd.f32 %v4284, %v4376
      %v4393 = vadd.f32 %v4285, %v4377
      %4394 = vrot.lane.b32.xlu0 %v3647, 63
      %v4395 = vpop.permute.xlu0 %4394
      %4396 = vrot.lane.b32.xlu0 %v3648, 63
      %v4397 = vpop.permute.xlu0 %4396
      %v4398 = vsel %vm2696, %v4395, %v4397
      %v4402 = vmul.f32 %v3208, %v4395
      %v4403 = vmul.f32 %v3209, %v4398
      %v4404 = vmul.f32 %v3210, %v4397
      %v4405 = vmul.f32 %v3211, %v4395
      %v4406 = vmul.f32 %v3212, %v4398
      %v4407 = vmul.f32 %v3213, %v4397
      %v4408 = vmul.f32 %v3214, %v4395
      %v4409 = vmul.f32 %v3215, %v4398
      %v4410 = vmul.f32 %v3216, %v4397
      %v4411 = vmul.f32 %v3217, %v4395
      %v4412 = vmul.f32 %v3218, %v4398
      %v4413 = vmul.f32 %v3219, %v4397
      %4414 = vset.pattern.permute.xlu0 12
      %4415 = vperm.xlu0 %4414, %v3136
      %v4416 = vpop.permute.xlu0 %4415
      %4418 = vset.pattern.permute.xlu0 12
      %4419 = vperm.xlu0 %4418, %v3137
      %v4420 = vpop.permute.xlu0 %4419
      %4422 = vset.pattern.permute.xlu0 12
      %4423 = vperm.xlu0 %4422, %v3138
      %v4424 = vpop.permute.xlu0 %4423
      %4426 = vset.pattern.permute.xlu0 12
      %4427 = vperm.xlu0 %4426, %v3139
      %v4428 = vpop.permute.xlu0 %4427
      %v4430 = vmul.f32 %v4402, %v4416
      %v4431 = vmul.f32 %v4403, %v4416
      %v4432 = vmul.f32 %v4404, %v4416
      %v4433 = vmul.f32 %v4405, %v4420
      %v4434 = vmul.f32 %v4406, %v4420
      %v4435 = vmul.f32 %v4407, %v4420
      %v4436 = vmul.f32 %v4408, %v4424
      %v4437 = vmul.f32 %v4409, %v4424
      %v4438 = vmul.f32 %v4410, %v4424
      %v4439 = vmul.f32 %v4411, %v4428
      %v4440 = vmul.f32 %v4412, %v4428
      %v4441 = vmul.f32 %v4413, %v4428
      %4454 = vrot.lane.b32.xlu0 %v4430, 65
      %v4455 = vpop.permute.xlu0 %4454
      %4456 = vrot.lane.b32.xlu0 %v4431, 65
      %v4457 = vpop.permute.xlu0 %4456
      %4458 = vrot.lane.b32.xlu0 %v4432, 65
      %v4459 = vpop.permute.xlu0 %4458
      %4460 = vrot.lane.b32.xlu0 %v4433, 65
      %v4461 = vpop.permute.xlu0 %4460
      %4462 = vrot.lane.b32.xlu0 %v4434, 65
      %v4463 = vpop.permute.xlu0 %4462
      %4464 = vrot.lane.b32.xlu0 %v4435, 65
      %v4465 = vpop.permute.xlu0 %4464
      %4466 = vrot.lane.b32.xlu0 %v4436, 65
      %v4467 = vpop.permute.xlu0 %4466
      %4468 = vrot.lane.b32.xlu0 %v4437, 65
      %v4469 = vpop.permute.xlu0 %4468
      %4470 = vrot.lane.b32.xlu0 %v4438, 65
      %v4471 = vpop.permute.xlu0 %4470
      %4472 = vrot.lane.b32.xlu0 %v4439, 65
      %v4473 = vpop.permute.xlu0 %4472
      %4474 = vrot.lane.b32.xlu0 %v4440, 65
      %v4475 = vpop.permute.xlu0 %4474
      %4476 = vrot.lane.b32.xlu0 %v4441, 65
      %v4477 = vpop.permute.xlu0 %4476
      %v4478 = vsel %vm2615, %v4455, %v4457
      %v4479 = vsel %vm2615, %v4457, %v4459
      %v4480 = vsel %vm2615, %v4461, %v4463
      %v4481 = vsel %vm2615, %v4463, %v4465
      %v4482 = vsel %vm2615, %v4467, %v4469
      %v4483 = vsel %vm2615, %v4469, %v4471
      %v4484 = vsel %vm2615, %v4473, %v4475
      %v4485 = vsel %vm2615, %v4475, %v4477
      %v4494 = vadd.f32 %v4386, %v4478
      %v4495 = vadd.f32 %v4387, %v4479
      %v4496 = vadd.f32 %v4388, %v4480
      %v4497 = vadd.f32 %v4389, %v4481
      %v4498 = vadd.f32 %v4390, %v4482
      %v4499 = vadd.f32 %v4391, %v4483
      %v4500 = vadd.f32 %v4392, %v4484
      %v4501 = vadd.f32 %v4393, %v4485
      %4502 = vrot.lane.b32.xlu0 %v3760, 66
      %v4503 = vpop.permute.xlu0 %4502
      %4504 = vrot.lane.b32.xlu0 %v3761, 66
      %v4505 = vpop.permute.xlu0 %4504
      %vm4506 = vcmask 539648
      %v4507 = vsel %vm4506, %v4503, %v4505
      %v4511 = vmul.f32 %v3208, %v4503
      %v4512 = vmul.f32 %v3209, %v4507
      %v4513 = vmul.f32 %v3210, %v4505
      %v4514 = vmul.f32 %v3211, %v4503
      %v4515 = vmul.f32 %v3212, %v4507
      %v4516 = vmul.f32 %v3213, %v4505
      %v4517 = vmul.f32 %v3214, %v4503
      %v4518 = vmul.f32 %v3215, %v4507
      %v4519 = vmul.f32 %v3216, %v4505
      %v4520 = vmul.f32 %v3217, %v4503
      %v4521 = vmul.f32 %v3218, %v4507
      %v4522 = vmul.f32 %v3219, %v4505
      %4523 = vset.pattern.permute.xlu0 13
      %4524 = vperm.xlu0 %4523, %v3136
      %v4525 = vpop.permute.xlu0 %4524
      %4527 = vset.pattern.permute.xlu0 13
      %4528 = vperm.xlu0 %4527, %v3137
      %v4529 = vpop.permute.xlu0 %4528
      %4531 = vset.pattern.permute.xlu0 13
      %4532 = vperm.xlu0 %4531, %v3138
      %v4533 = vpop.permute.xlu0 %4532
      %4535 = vset.pattern.permute.xlu0 13
      %4536 = vperm.xlu0 %4535, %v3139
      %v4537 = vpop.permute.xlu0 %4536
      %v4539 = vmul.f32 %v4511, %v4525
      %v4540 = vmul.f32 %v4512, %v4525
      %v4541 = vmul.f32 %v4513, %v4525
      %v4542 = vmul.f32 %v4514, %v4529
      %v4543 = vmul.f32 %v4515, %v4529
      %v4544 = vmul.f32 %v4516, %v4529
      %v4545 = vmul.f32 %v4517, %v4533
      %v4546 = vmul.f32 %v4518, %v4533
      %v4547 = vmul.f32 %v4519, %v4533
      %v4548 = vmul.f32 %v4520, %v4537
      %v4549 = vmul.f32 %v4521, %v4537
      %v4550 = vmul.f32 %v4522, %v4537
      %4563 = vrot.lane.b32.xlu0 %v4539, 62
      %v4564 = vpop.permute.xlu0 %4563
      %4565 = vrot.lane.b32.xlu0 %v4540, 62
      %v4566 = vpop.permute.xlu0 %4565
      %4567 = vrot.lane.b32.xlu0 %v4541, 62
      %v4568 = vpop.permute.xlu0 %4567
      %4569 = vrot.lane.b32.xlu0 %v4542, 62
      %v4570 = vpop.permute.xlu0 %4569
      %4571 = vrot.lane.b32.xlu0 %v4543, 62
      %v4572 = vpop.permute.xlu0 %4571
      %4573 = vrot.lane.b32.xlu0 %v4544, 62
      %v4574 = vpop.permute.xlu0 %4573
      %4575 = vrot.lane.b32.xlu0 %v4545, 62
      %v4576 = vpop.permute.xlu0 %4575
      %4577 = vrot.lane.b32.xlu0 %v4546, 62
      %v4578 = vpop.permute.xlu0 %4577
      %4579 = vrot.lane.b32.xlu0 %v4547, 62
      %v4580 = vpop.permute.xlu0 %4579
      %4581 = vrot.lane.b32.xlu0 %v4548, 62
      %v4582 = vpop.permute.xlu0 %4581
      %4583 = vrot.lane.b32.xlu0 %v4549, 62
      %v4584 = vpop.permute.xlu0 %4583
      %4585 = vrot.lane.b32.xlu0 %v4550, 62
      %v4586 = vpop.permute.xlu0 %4585
      %v4587 = vsel %vm2785, %v4564, %v4566
      %v4588 = vsel %vm2785, %v4566, %v4568
      %v4589 = vsel %vm2785, %v4570, %v4572
      %v4590 = vsel %vm2785, %v4572, %v4574
      %v4591 = vsel %vm2785, %v4576, %v4578
      %v4592 = vsel %vm2785, %v4578, %v4580
      %v4593 = vsel %vm2785, %v4582, %v4584
      %v4594 = vsel %vm2785, %v4584, %v4586
      %v4603 = vadd.f32 %v4494, %v4587
      %v4604 = vadd.f32 %v4495, %v4588
      %v4605 = vadd.f32 %v4496, %v4589
      %v4606 = vadd.f32 %v4497, %v4590
      %v4607 = vadd.f32 %v4498, %v4591
      %v4608 = vadd.f32 %v4499, %v4592
      %v4609 = vadd.f32 %v4500, %v4593
      %v4610 = vadd.f32 %v4501, %v4594
      %4611 = vrot.lane.b32.xlu0 %v3160, 96
      %v4612 = vpop.permute.xlu0 %4611
      %4613 = vrot.lane.b32.xlu0 %v3161, 96
      %v4614 = vpop.permute.xlu0 %4613
      %v4615 = vsel %vm1529, %v4612, %v4614
      %v4619 = vmul.f32 %v3208, %v4612
      %v4620 = vmul.f32 %v3209, %v4615
      %v4621 = vmul.f32 %v3210, %v4614
      %v4622 = vmul.f32 %v3211, %v4612
      %v4623 = vmul.f32 %v3212, %v4615
      %v4624 = vmul.f32 %v3213, %v4614
      %v4625 = vmul.f32 %v3214, %v4612
      %v4626 = vmul.f32 %v3215, %v4615
      %v4627 = vmul.f32 %v3216, %v4614
      %v4628 = vmul.f32 %v3217, %v4612
      %v4629 = vmul.f32 %v3218, %v4615
      %v4630 = vmul.f32 %v3219, %v4614
      %4631 = vset.pattern.permute.xlu0 14
      %4632 = vperm.xlu0 %4631, %v3136
      %v4633 = vpop.permute.xlu0 %4632
      %4635 = vset.pattern.permute.xlu0 14
      %4636 = vperm.xlu0 %4635, %v3137
      %v4637 = vpop.permute.xlu0 %4636
      %4639 = vset.pattern.permute.xlu0 14
      %4640 = vperm.xlu0 %4639, %v3138
      %v4641 = vpop.permute.xlu0 %4640
      %4643 = vset.pattern.permute.xlu0 14
      %4644 = vperm.xlu0 %4643, %v3139
      %v4645 = vpop.permute.xlu0 %4644
      %v4647 = vmul.f32 %v4619, %v4633
      %v4648 = vmul.f32 %v4620, %v4633
      %v4649 = vmul.f32 %v4621, %v4633
      %v4650 = vmul.f32 %v4622, %v4637
      %v4651 = vmul.f32 %v4623, %v4637
      %v4652 = vmul.f32 %v4624, %v4637
      %v4653 = vmul.f32 %v4625, %v4641
      %v4654 = vmul.f32 %v4626, %v4641
      %v4655 = vmul.f32 %v4627, %v4641
      %v4656 = vmul.f32 %v4628, %v4645
      %v4657 = vmul.f32 %v4629, %v4645
      %v4658 = vmul.f32 %v4630, %v4645
      %4671 = vrot.lane.b32.xlu0 %v4647, 32
      %v4672 = vpop.permute.xlu0 %4671
      %4673 = vrot.lane.b32.xlu0 %v4648, 32
      %v4674 = vpop.permute.xlu0 %4673
      %4675 = vrot.lane.b32.xlu0 %v4649, 32
      %v4676 = vpop.permute.xlu0 %4675
      %4677 = vrot.lane.b32.xlu0 %v4650, 32
      %v4678 = vpop.permute.xlu0 %4677
      %4679 = vrot.lane.b32.xlu0 %v4651, 32
      %v4680 = vpop.permute.xlu0 %4679
      %4681 = vrot.lane.b32.xlu0 %v4652, 32
      %v4682 = vpop.permute.xlu0 %4681
      %4683 = vrot.lane.b32.xlu0 %v4653, 32
      %v4684 = vpop.permute.xlu0 %4683
      %4685 = vrot.lane.b32.xlu0 %v4654, 32
      %v4686 = vpop.permute.xlu0 %4685
      %4687 = vrot.lane.b32.xlu0 %v4655, 32
      %v4688 = vpop.permute.xlu0 %4687
      %4689 = vrot.lane.b32.xlu0 %v4656, 32
      %v4690 = vpop.permute.xlu0 %4689
      %4691 = vrot.lane.b32.xlu0 %v4657, 32
      %v4692 = vpop.permute.xlu0 %4691
      %4693 = vrot.lane.b32.xlu0 %v4658, 32
      %v4694 = vpop.permute.xlu0 %4693
      %v4695 = vsel %vm1448, %v4672, %v4674
      %v4696 = vsel %vm1448, %v4674, %v4676
      %v4697 = vsel %vm1448, %v4678, %v4680
      %v4698 = vsel %vm1448, %v4680, %v4682
      %v4699 = vsel %vm1448, %v4684, %v4686
      %v4700 = vsel %vm1448, %v4686, %v4688
      %v4701 = vsel %vm1448, %v4690, %v4692
      %v4702 = vsel %vm1448, %v4692, %v4694
      %v4711 = vadd.f32 %v4603, %v4695
      %v4712 = vadd.f32 %v4604, %v4696
      %v4713 = vadd.f32 %v4605, %v4697
      %v4714 = vadd.f32 %v4606, %v4698
      %v4715 = vadd.f32 %v4607, %v4699
      %v4716 = vadd.f32 %v4608, %v4700
      %v4717 = vadd.f32 %v4609, %v4701
      %v4718 = vadd.f32 %v4610, %v4702
      %4719 = vrot.lane.b32.xlu0 %v3221, 99
      %v4720 = vpop.permute.xlu0 %4719
      %4721 = vrot.lane.b32.xlu0 %v3222, 99
      %v4722 = vpop.permute.xlu0 %4721
      %vm4723 = vcmask 809984
      %v4724 = vsel %vm4723, %v4720, %v4722
      %v4728 = vmul.f32 %v3208, %v4720
      %v4729 = vmul.f32 %v3209, %v4724
      %v4730 = vmul.f32 %v3210, %v4722
      %v4731 = vmul.f32 %v3211, %v4720
      %v4732 = vmul.f32 %v3212, %v4724
      %v4733 = vmul.f32 %v3213, %v4722
      %v4734 = vmul.f32 %v3214, %v4720
      %v4735 = vmul.f32 %v3215, %v4724
      %v4736 = vmul.f32 %v3216, %v4722
      %v4737 = vmul.f32 %v3217, %v4720
      %v4738 = vmul.f32 %v3218, %v4724
      %v4739 = vmul.f32 %v3219, %v4722
      %4740 = vset.pattern.permute.xlu0 15
      %4741 = vperm.xlu0 %4740, %v3136
      %v4742 = vpop.permute.xlu0 %4741
      %4744 = vset.pattern.permute.xlu0 15
      %4745 = vperm.xlu0 %4744, %v3137
      %v4746 = vpop.permute.xlu0 %4745
      %4748 = vset.pattern.permute.xlu0 15
      %4749 = vperm.xlu0 %4748, %v3138
      %v4750 = vpop.permute.xlu0 %4749
      %4752 = vset.pattern.permute.xlu0 15
      %4753 = vperm.xlu0 %4752, %v3139
      %v4754 = vpop.permute.xlu0 %4753
      %v4756 = vmul.f32 %v4728, %v4742
      %v4757 = vmul.f32 %v4729, %v4742
      %v4758 = vmul.f32 %v4730, %v4742
      %v4759 = vmul.f32 %v4731, %v4746
      %v4760 = vmul.f32 %v4732, %v4746
      %v4761 = vmul.f32 %v4733, %v4746
      %v4762 = vmul.f32 %v4734, %v4750
      %v4763 = vmul.f32 %v4735, %v4750
      %v4764 = vmul.f32 %v4736, %v4750
      %v4765 = vmul.f32 %v4737, %v4754
      %v4766 = vmul.f32 %v4738, %v4754
      %v4767 = vmul.f32 %v4739, %v4754
      %4780 = vrot.lane.b32.xlu0 %v4756, 29
      %v4781 = vpop.permute.xlu0 %4780
      %4782 = vrot.lane.b32.xlu0 %v4757, 29
      %v4783 = vpop.permute.xlu0 %4782
      %4784 = vrot.lane.b32.xlu0 %v4758, 29
      %v4785 = vpop.permute.xlu0 %4784
      %4786 = vrot.lane.b32.xlu0 %v4759, 29
      %v4787 = vpop.permute.xlu0 %4786
      %4788 = vrot.lane.b32.xlu0 %v4760, 29
      %v4789 = vpop.permute.xlu0 %4788
      %4790 = vrot.lane.b32.xlu0 %v4761, 29
      %v4791 = vpop.permute.xlu0 %4790
      %4792 = vrot.lane.b32.xlu0 %v4762, 29
      %v4793 = vpop.permute.xlu0 %4792
      %4794 = vrot.lane.b32.xlu0 %v4763, 29
      %v4795 = vpop.permute.xlu0 %4794
      %4796 = vrot.lane.b32.xlu0 %v4764, 29
      %v4797 = vpop.permute.xlu0 %4796
      %4798 = vrot.lane.b32.xlu0 %v4765, 29
      %v4799 = vpop.permute.xlu0 %4798
      %4800 = vrot.lane.b32.xlu0 %v4766, 29
      %v4801 = vpop.permute.xlu0 %4800
      %4802 = vrot.lane.b32.xlu0 %v4767, 29
      %v4803 = vpop.permute.xlu0 %4802
      %vm4804 = vcmask 236544
      %v4805 = vsel %vm4804, %v4781, %v4783
      %v4806 = vsel %vm4804, %v4783, %v4785
      %v4807 = vsel %vm4804, %v4787, %v4789
      %v4808 = vsel %vm4804, %v4789, %v4791
      %v4809 = vsel %vm4804, %v4793, %v4795
      %v4810 = vsel %vm4804, %v4795, %v4797
      %v4811 = vsel %vm4804, %v4799, %v4801
      %v4812 = vsel %vm4804, %v4801, %v4803
      %v4821 = vadd.f32 %v4711, %v4805
      %v4822 = vadd.f32 %v4712, %v4806
      %v4823 = vadd.f32 %v4713, %v4807
      %v4824 = vadd.f32 %v4714, %v4808
      %v4825 = vadd.f32 %v4715, %v4809
      %v4826 = vadd.f32 %v4716, %v4810
      %v4827 = vadd.f32 %v4717, %v4811
      %v4828 = vadd.f32 %v4718, %v4812
      %4829 = vrot.lane.b32.xlu0 %v3332, 102
      %v4830 = vpop.permute.xlu0 %4829
      %4831 = vrot.lane.b32.xlu0 %v3333, 102
      %v4832 = vpop.permute.xlu0 %4831
      %vm4833 = vcmask 834560
      %v4834 = vsel %vm4833, %v4830, %v4832
      %v4838 = vmul.f32 %v3208, %v4830
      %v4839 = vmul.f32 %v3209, %v4834
      %v4840 = vmul.f32 %v3210, %v4832
      %v4841 = vmul.f32 %v3211, %v4830
      %v4842 = vmul.f32 %v3212, %v4834
      %v4843 = vmul.f32 %v3213, %v4832
      %v4844 = vmul.f32 %v3214, %v4830
      %v4845 = vmul.f32 %v3215, %v4834
      %v4846 = vmul.f32 %v3216, %v4832
      %v4847 = vmul.f32 %v3217, %v4830
      %v4848 = vmul.f32 %v3218, %v4834
      %v4849 = vmul.f32 %v3219, %v4832
      %4850 = vset.pattern.permute.xlu0 16
      %4851 = vperm.xlu0 %4850, %v3136
      %v4852 = vpop.permute.xlu0 %4851
      %4854 = vset.pattern.permute.xlu0 16
      %4855 = vperm.xlu0 %4854, %v3137
      %v4856 = vpop.permute.xlu0 %4855
      %4858 = vset.pattern.permute.xlu0 16
      %4859 = vperm.xlu0 %4858, %v3138
      %v4860 = vpop.permute.xlu0 %4859
      %4862 = vset.pattern.permute.xlu0 16
      %4863 = vperm.xlu0 %4862, %v3139
      %v4864 = vpop.permute.xlu0 %4863
      %v4866 = vmul.f32 %v4838, %v4852
      %v4867 = vmul.f32 %v4839, %v4852
      %v4868 = vmul.f32 %v4840, %v4852
      %v4869 = vmul.f32 %v4841, %v4856
      %v4870 = vmul.f32 %v4842, %v4856
      %v4871 = vmul.f32 %v4843, %v4856
      %v4872 = vmul.f32 %v4844, %v4860
      %v4873 = vmul.f32 %v4845, %v4860
      %v4874 = vmul.f32 %v4846, %v4860
      %v4875 = vmul.f32 %v4847, %v4864
      %v4876 = vmul.f32 %v4848, %v4864
      %v4877 = vmul.f32 %v4849, %v4864
      %4890 = vrot.lane.b32.xlu0 %v4866, 26
      %v4891 = vpop.permute.xlu0 %4890
      %4892 = vrot.lane.b32.xlu0 %v4867, 26
      %v4893 = vpop.permute.xlu0 %4892
      %4894 = vrot.lane.b32.xlu0 %v4868, 26
      %v4895 = vpop.permute.xlu0 %4894
      %4896 = vrot.lane.b32.xlu0 %v4869, 26
      %v4897 = vpop.permute.xlu0 %4896
      %4898 = vrot.lane.b32.xlu0 %v4870, 26
      %v4899 = vpop.permute.xlu0 %4898
      %4900 = vrot.lane.b32.xlu0 %v4871, 26
      %v4901 = vpop.permute.xlu0 %4900
      %4902 = vrot.lane.b32.xlu0 %v4872, 26
      %v4903 = vpop.permute.xlu0 %4902
      %4904 = vrot.lane.b32.xlu0 %v4873, 26
      %v4905 = vpop.permute.xlu0 %4904
      %4906 = vrot.lane.b32.xlu0 %v4874, 26
      %v4907 = vpop.permute.xlu0 %4906
      %4908 = vrot.lane.b32.xlu0 %v4875, 26
      %v4909 = vpop.permute.xlu0 %4908
      %4910 = vrot.lane.b32.xlu0 %v4876, 26
      %v4911 = vpop.permute.xlu0 %4910
      %4912 = vrot.lane.b32.xlu0 %v4877, 26
      %v4913 = vpop.permute.xlu0 %4912
      %vm4914 = vcmask 211968
      %v4915 = vsel %vm4914, %v4891, %v4893
      %v4916 = vsel %vm4914, %v4893, %v4895
      %v4917 = vsel %vm4914, %v4897, %v4899
      %v4918 = vsel %vm4914, %v4899, %v4901
      %v4919 = vsel %vm4914, %v4903, %v4905
      %v4920 = vsel %vm4914, %v4905, %v4907
      %v4921 = vsel %vm4914, %v4909, %v4911
      %v4922 = vsel %vm4914, %v4911, %v4913
      %v4931 = vadd.f32 %v4821, %v4915
      %v4932 = vadd.f32 %v4822, %v4916
      %v4933 = vadd.f32 %v4823, %v4917
      %v4934 = vadd.f32 %v4824, %v4918
      %v4935 = vadd.f32 %v4825, %v4919
      %v4936 = vadd.f32 %v4826, %v4920
      %v4937 = vadd.f32 %v4827, %v4921
      %v4938 = vadd.f32 %v4828, %v4922
      %4939 = vset.pattern.permute.xlu0 17
      %4940 = vperm.xlu0 %4939, %v3136
      %v4941 = vpop.permute.xlu0 %4940
      %4943 = vset.pattern.permute.xlu0 17
      %4944 = vperm.xlu0 %4943, %v3137
      %v4945 = vpop.permute.xlu0 %4944
      %4947 = vset.pattern.permute.xlu0 17
      %4948 = vperm.xlu0 %4947, %v3138
      %v4949 = vpop.permute.xlu0 %4948
      %4951 = vset.pattern.permute.xlu0 17
      %4952 = vperm.xlu0 %4951, %v3139
      %v4953 = vpop.permute.xlu0 %4952
      %v4955 = vmul.f32 %v3208, %v4941
      %v4956 = vmul.f32 %v3209, %v4941
      %v4957 = vmul.f32 %v3210, %v4941
      %v4958 = vmul.f32 %v3211, %v4945
      %v4959 = vmul.f32 %v3212, %v4945
      %v4960 = vmul.f32 %v3213, %v4945
      %v4961 = vmul.f32 %v3214, %v4949
      %v4962 = vmul.f32 %v3215, %v4949
      %v4963 = vmul.f32 %v3216, %v4949
      %v4964 = vmul.f32 %v3217, %v4953
      %v4965 = vmul.f32 %v3218, %v4953
      %v4966 = vmul.f32 %v3219, %v4953
      %4979 = vrot.lane.b32.xlu0 %v4955, 23
      %v4980 = vpop.permute.xlu0 %4979
      %4981 = vrot.lane.b32.xlu0 %v4956, 23
      %v4982 = vpop.permute.xlu0 %4981
      %4983 = vrot.lane.b32.xlu0 %v4957, 23
      %v4984 = vpop.permute.xlu0 %4983
      %4985 = vrot.lane.b32.xlu0 %v4958, 23
      %v4986 = vpop.permute.xlu0 %4985
      %4987 = vrot.lane.b32.xlu0 %v4959, 23
      %v4988 = vpop.permute.xlu0 %4987
      %4989 = vrot.lane.b32.xlu0 %v4960, 23
      %v4990 = vpop.permute.xlu0 %4989
      %4991 = vrot.lane.b32.xlu0 %v4961, 23
      %v4992 = vpop.permute.xlu0 %4991
      %4993 = vrot.lane.b32.xlu0 %v4962, 23
      %v4994 = vpop.permute.xlu0 %4993
      %4995 = vrot.lane.b32.xlu0 %v4963, 23
      %v4996 = vpop.permute.xlu0 %4995
      %4997 = vrot.lane.b32.xlu0 %v4964, 23
      %v4998 = vpop.permute.xlu0 %4997
      %4999 = vrot.lane.b32.xlu0 %v4965, 23
      %v5000 = vpop.permute.xlu0 %4999
      %5001 = vrot.lane.b32.xlu0 %v4966, 23
      %v5002 = vpop.permute.xlu0 %5001
      %vm5003 = vcmask 187392
      %v5004 = vsel %vm5003, %v4980, %v4982
      %v5005 = vsel %vm5003, %v4982, %v4984
      %v5006 = vsel %vm5003, %v4986, %v4988
      %v5007 = vsel %vm5003, %v4988, %v4990
      %v5008 = vsel %vm5003, %v4992, %v4994
      %v5009 = vsel %vm5003, %v4994, %v4996
      %v5010 = vsel %vm5003, %v4998, %v5000
      %v5011 = vsel %vm5003, %v5000, %v5002
      %v5020 = vadd.f32 %v4931, %v5004
      %v5021 = vadd.f32 %v4932, %v5005
      %v5022 = vadd.f32 %v4933, %v5006
      %v5023 = vadd.f32 %v4934, %v5007
      %v5024 = vadd.f32 %v4935, %v5008
      %v5025 = vadd.f32 %v4936, %v5009
      %v5026 = vadd.f32 %v4937, %v5010
      %v5027 = vadd.f32 %v4938, %v5011
      %5028 = vrot.lane.b32.xlu0 %v3534, 108
      %v5029 = vpop.permute.xlu0 %5028
      %5030 = vrot.lane.b32.xlu0 %v3535, 108
      %v5031 = vpop.permute.xlu0 %5030
      %v5032 = vsel %vm1419, %v5029, %v5031
      %v5036 = vmul.f32 %v3208, %v5029
      %v5037 = vmul.f32 %v3209, %v5032
      %v5038 = vmul.f32 %v3210, %v5031
      %v5039 = vmul.f32 %v3211, %v5029
      %v5040 = vmul.f32 %v3212, %v5032
      %v5041 = vmul.f32 %v3213, %v5031
      %v5042 = vmul.f32 %v3214, %v5029
      %v5043 = vmul.f32 %v3215, %v5032
      %v5044 = vmul.f32 %v3216, %v5031
      %v5045 = vmul.f32 %v3217, %v5029
      %v5046 = vmul.f32 %v3218, %v5032
      %v5047 = vmul.f32 %v3219, %v5031
      %5048 = vset.pattern.permute.xlu0 18
      %5049 = vperm.xlu0 %5048, %v3136
      %v5050 = vpop.permute.xlu0 %5049
      %5052 = vset.pattern.permute.xlu0 18
      %5053 = vperm.xlu0 %5052, %v3137
      %v5054 = vpop.permute.xlu0 %5053
      %5056 = vset.pattern.permute.xlu0 18
      %5057 = vperm.xlu0 %5056, %v3138
      %v5058 = vpop.permute.xlu0 %5057
      %5060 = vset.pattern.permute.xlu0 18
      %5061 = vperm.xlu0 %5060, %v3139
      %v5062 = vpop.permute.xlu0 %5061
      %v5064 = vmul.f32 %v5036, %v5050
      %v5065 = vmul.f32 %v5037, %v5050
      %v5066 = vmul.f32 %v5038, %v5050
      %v5067 = vmul.f32 %v5039, %v5054
      %v5068 = vmul.f32 %v5040, %v5054
      %v5069 = vmul.f32 %v5041, %v5054
      %v5070 = vmul.f32 %v5042, %v5058
      %v5071 = vmul.f32 %v5043, %v5058
      %v5072 = vmul.f32 %v5044, %v5058
      %v5073 = vmul.f32 %v5045, %v5062
      %v5074 = vmul.f32 %v5046, %v5062
      %v5075 = vmul.f32 %v5047, %v5062
      %5088 = vrot.lane.b32.xlu0 %v5064, 20
      %v5089 = vpop.permute.xlu0 %5088
      %5090 = vrot.lane.b32.xlu0 %v5065, 20
      %v5091 = vpop.permute.xlu0 %5090
      %5092 = vrot.lane.b32.xlu0 %v5066, 20
      %v5093 = vpop.permute.xlu0 %5092
      %5094 = vrot.lane.b32.xlu0 %v5067, 20
      %v5095 = vpop.permute.xlu0 %5094
      %5096 = vrot.lane.b32.xlu0 %v5068, 20
      %v5097 = vpop.permute.xlu0 %5096
      %5098 = vrot.lane.b32.xlu0 %v5069, 20
      %v5099 = vpop.permute.xlu0 %5098
      %5100 = vrot.lane.b32.xlu0 %v5070, 20
      %v5101 = vpop.permute.xlu0 %5100
      %5102 = vrot.lane.b32.xlu0 %v5071, 20
      %v5103 = vpop.permute.xlu0 %5102
      %5104 = vrot.lane.b32.xlu0 %v5072, 20
      %v5105 = vpop.permute.xlu0 %5104
      %5106 = vrot.lane.b32.xlu0 %v5073, 20
      %v5107 = vpop.permute.xlu0 %5106
      %5108 = vrot.lane.b32.xlu0 %v5074, 20
      %v5109 = vpop.permute.xlu0 %5108
      %5110 = vrot.lane.b32.xlu0 %v5075, 20
      %v5111 = vpop.permute.xlu0 %5110
      %v5112 = vsel %vm1338, %v5089, %v5091
      %v5113 = vsel %vm1338, %v5091, %v5093
      %v5114 = vsel %vm1338, %v5095, %v5097
      %v5115 = vsel %vm1338, %v5097, %v5099
      %v5116 = vsel %vm1338, %v5101, %v5103
      %v5117 = vsel %vm1338, %v5103, %v5105
      %v5118 = vsel %vm1338, %v5107, %v5109
      %v5119 = vsel %vm1338, %v5109, %v5111
      %v5128 = vadd.f32 %v5020, %v5112
      %v5129 = vadd.f32 %v5021, %v5113
      %v5130 = vadd.f32 %v5022, %v5114
      %v5131 = vadd.f32 %v5023, %v5115
      %v5132 = vadd.f32 %v5024, %v5116
      %v5133 = vadd.f32 %v5025, %v5117
      %v5134 = vadd.f32 %v5026, %v5118
      %v5135 = vadd.f32 %v5027, %v5119
      %5136 = vrot.lane.b32.xlu0 %v3647, 111
      %v5137 = vpop.permute.xlu0 %5136
      %5138 = vrot.lane.b32.xlu0 %v3648, 111
      %v5139 = vpop.permute.xlu0 %5138
      %v5140 = vsel %vm1110, %v5137, %v5139
      %v5144 = vmul.f32 %v3208, %v5137
      %v5145 = vmul.f32 %v3209, %v5140
      %v5146 = vmul.f32 %v3210, %v5139
      %v5147 = vmul.f32 %v3211, %v5137
      %v5148 = vmul.f32 %v3212, %v5140
      %v5149 = vmul.f32 %v3213, %v5139
      %v5150 = vmul.f32 %v3214, %v5137
      %v5151 = vmul.f32 %v3215, %v5140
      %v5152 = vmul.f32 %v3216, %v5139
      %v5153 = vmul.f32 %v3217, %v5137
      %v5154 = vmul.f32 %v3218, %v5140
      %v5155 = vmul.f32 %v3219, %v5139
      %5156 = vset.pattern.permute.xlu0 19
      %5157 = vperm.xlu0 %5156, %v3136
      %v5158 = vpop.permute.xlu0 %5157
      %5160 = vset.pattern.permute.xlu0 19
      %5161 = vperm.xlu0 %5160, %v3137
      %v5162 = vpop.permute.xlu0 %5161
      %5164 = vset.pattern.permute.xlu0 19
      %5165 = vperm.xlu0 %5164, %v3138
      %v5166 = vpop.permute.xlu0 %5165
      %5168 = vset.pattern.permute.xlu0 19
      %5169 = vperm.xlu0 %5168, %v3139
      %v5170 = vpop.permute.xlu0 %5169
      %v5172 = vmul.f32 %v5144, %v5158
      %v5173 = vmul.f32 %v5145, %v5158
      %v5174 = vmul.f32 %v5146, %v5158
      %v5175 = vmul.f32 %v5147, %v5162
      %v5176 = vmul.f32 %v5148, %v5162
      %v5177 = vmul.f32 %v5149, %v5162
      %v5178 = vmul.f32 %v5150, %v5166
      %v5179 = vmul.f32 %v5151, %v5166
      %v5180 = vmul.f32 %v5152, %v5166
      %v5181 = vmul.f32 %v5153, %v5170
      %v5182 = vmul.f32 %v5154, %v5170
      %v5183 = vmul.f32 %v5155, %v5170
      %5196 = vrot.lane.b32.xlu0 %v5172, 17
      %v5197 = vpop.permute.xlu0 %5196
      %5198 = vrot.lane.b32.xlu0 %v5173, 17
      %v5199 = vpop.permute.xlu0 %5198
      %5200 = vrot.lane.b32.xlu0 %v5174, 17
      %v5201 = vpop.permute.xlu0 %5200
      %5202 = vrot.lane.b32.xlu0 %v5175, 17
      %v5203 = vpop.permute.xlu0 %5202
      %5204 = vrot.lane.b32.xlu0 %v5176, 17
      %v5205 = vpop.permute.xlu0 %5204
      %5206 = vrot.lane.b32.xlu0 %v5177, 17
      %v5207 = vpop.permute.xlu0 %5206
      %5208 = vrot.lane.b32.xlu0 %v5178, 17
      %v5209 = vpop.permute.xlu0 %5208
      %5210 = vrot.lane.b32.xlu0 %v5179, 17
      %v5211 = vpop.permute.xlu0 %5210
      %5212 = vrot.lane.b32.xlu0 %v5180, 17
      %v5213 = vpop.permute.xlu0 %5212
      %5214 = vrot.lane.b32.xlu0 %v5181, 17
      %v5215 = vpop.permute.xlu0 %5214
      %5216 = vrot.lane.b32.xlu0 %v5182, 17
      %v5217 = vpop.permute.xlu0 %5216
      %5218 = vrot.lane.b32.xlu0 %v5183, 17
      %v5219 = vpop.permute.xlu0 %5218
      %v5220 = vsel %vm1029, %v5197, %v5199
      %v5221 = vsel %vm1029, %v5199, %v5201
      %v5222 = vsel %vm1029, %v5203, %v5205
      %v5223 = vsel %vm1029, %v5205, %v5207
      %v5224 = vsel %vm1029, %v5209, %v5211
      %v5225 = vsel %vm1029, %v5211, %v5213
      %v5226 = vsel %vm1029, %v5215, %v5217
      %v5227 = vsel %vm1029, %v5217, %v5219
      %v5236 = vadd.f32 %v5128, %v5220
      %v5237 = vadd.f32 %v5129, %v5221
      %v5238 = vadd.f32 %v5130, %v5222
      %v5239 = vadd.f32 %v5131, %v5223
      %v5240 = vadd.f32 %v5132, %v5224
      %v5241 = vadd.f32 %v5133, %v5225
      %v5242 = vadd.f32 %v5134, %v5226
      %v5243 = vadd.f32 %v5135, %v5227
      %5244 = vrot.lane.b32.xlu0 %v3760, 114
      %v5245 = vpop.permute.xlu0 %5244
      %5246 = vrot.lane.b32.xlu0 %v3761, 114
      %v5247 = vpop.permute.xlu0 %5246
      %vm5248 = vcmask 932864
      %v5249 = vsel %vm5248, %v5245, %v5247
      %v5253 = vmul.f32 %v3208, %v5245
      %v5254 = vmul.f32 %v3209, %v5249
      %v5255 = vmul.f32 %v3210, %v5247
      %v5256 = vmul.f32 %v3211, %v5245
      %v5257 = vmul.f32 %v3212, %v5249
      %v5258 = vmul.f32 %v3213, %v5247
      %v5259 = vmul.f32 %v3214, %v5245
      %v5260 = vmul.f32 %v3215, %v5249
      %v5261 = vmul.f32 %v3216, %v5247
      %v5262 = vmul.f32 %v3217, %v5245
      %v5263 = vmul.f32 %v3218, %v5249
      %v5264 = vmul.f32 %v3219, %v5247
      %5265 = vset.pattern.permute.xlu0 20
      %5266 = vperm.xlu0 %5265, %v3136
      %v5267 = vpop.permute.xlu0 %5266
      %5269 = vset.pattern.permute.xlu0 20
      %5270 = vperm.xlu0 %5269, %v3137
      %v5271 = vpop.permute.xlu0 %5270
      %5273 = vset.pattern.permute.xlu0 20
      %5274 = vperm.xlu0 %5273, %v3138
      %v5275 = vpop.permute.xlu0 %5274
      %5277 = vset.pattern.permute.xlu0 20
      %5278 = vperm.xlu0 %5277, %v3139
      %v5279 = vpop.permute.xlu0 %5278
      %v5281 = vmul.f32 %v5253, %v5267
      %v5282 = vmul.f32 %v5254, %v5267
      %v5283 = vmul.f32 %v5255, %v5267
      %v5284 = vmul.f32 %v5256, %v5271
      %v5285 = vmul.f32 %v5257, %v5271
      %v5286 = vmul.f32 %v5258, %v5271
      %v5287 = vmul.f32 %v5259, %v5275
      %v5288 = vmul.f32 %v5260, %v5275
      %v5289 = vmul.f32 %v5261, %v5275
      %v5290 = vmul.f32 %v5262, %v5279
      %v5291 = vmul.f32 %v5263, %v5279
      %v5292 = vmul.f32 %v5264, %v5279
      %5305 = vrot.lane.b32.xlu0 %v5281, 14
      %v5306 = vpop.permute.xlu0 %5305
      %5307 = vrot.lane.b32.xlu0 %v5282, 14
      %v5308 = vpop.permute.xlu0 %5307
      %5309 = vrot.lane.b32.xlu0 %v5283, 14
      %v5310 = vpop.permute.xlu0 %5309
      %5311 = vrot.lane.b32.xlu0 %v5284, 14
      %v5312 = vpop.permute.xlu0 %5311
      %5313 = vrot.lane.b32.xlu0 %v5285, 14
      %v5314 = vpop.permute.xlu0 %5313
      %5315 = vrot.lane.b32.xlu0 %v5286, 14
      %v5316 = vpop.permute.xlu0 %5315
      %5317 = vrot.lane.b32.xlu0 %v5287, 14
      %v5318 = vpop.permute.xlu0 %5317
      %5319 = vrot.lane.b32.xlu0 %v5288, 14
      %v5320 = vpop.permute.xlu0 %5319
      %5321 = vrot.lane.b32.xlu0 %v5289, 14
      %v5322 = vpop.permute.xlu0 %5321
      %5323 = vrot.lane.b32.xlu0 %v5290, 14
      %v5324 = vpop.permute.xlu0 %5323
      %5325 = vrot.lane.b32.xlu0 %v5291, 14
      %v5326 = vpop.permute.xlu0 %5325
      %5327 = vrot.lane.b32.xlu0 %v5292, 14
      %v5328 = vpop.permute.xlu0 %5327
      %vm5329 = vcmask 113664
      %v5330 = vsel %vm5329, %v5306, %v5308
      %v5331 = vsel %vm5329, %v5308, %v5310
      %v5332 = vsel %vm5329, %v5312, %v5314
      %v5333 = vsel %vm5329, %v5314, %v5316
      %v5334 = vsel %vm5329, %v5318, %v5320
      %v5335 = vsel %vm5329, %v5320, %v5322
      %v5336 = vsel %vm5329, %v5324, %v5326
      %v5337 = vsel %vm5329, %v5326, %v5328
      %v5346 = vadd.f32 %v5236, %v5330
      %v5347 = vadd.f32 %v5237, %v5331
      %v5348 = vadd.f32 %v5238, %v5332
      %v5349 = vadd.f32 %v5239, %v5333
      %v5350 = vadd.f32 %v5240, %v5334
      %v5351 = vadd.f32 %v5241, %v5335
      %v5352 = vadd.f32 %v5242, %v5336
      %v5353 = vadd.f32 %v5243, %v5337
      %v5354 = vld [vmem:[#allocation3 + $0x8] sm:$0xff]
      %v5355 = vld [vmem:[#allocation3 + $0x10] sm:$0xff]
      %v5356 = vld [vmem:[#allocation3 + $0x18] sm:$0xff]
      %v5357 = vld [vmem:[#allocation3 + $0x30] sm:$0xff]
      %v5358 = vld [vmem:[#allocation3 + $0x38] sm:$0xff]
      %v5359 = vld [vmem:[#allocation3 + $0x40] sm:$0xff]
      %v5360 = vld [vmem:[#allocation3 + $0x58] sm:$0xff]
      %v5361 = vld [vmem:[#allocation3 + $0x60] sm:$0xff]
      %v5362 = vld [vmem:[#allocation3 + $0x68] sm:$0xff]
      %v5363 = vld [vmem:[#allocation3 + $0x80] sm:$0xff]
      %v5364 = vld [vmem:[#allocation3 + $0x88] sm:$0xff]
      %v5365 = vld [vmem:[#allocation3 + $0x90] sm:$0xff]
      %5366 = vrot.lane.b32.xlu0 %v3160, 16
      %v5367 = vpop.permute.xlu0 %5366
      %5368 = vrot.lane.b32.xlu0 %v3161, 16
      %v5369 = vpop.permute.xlu0 %5368
      %v5370 = vsel %vm919, %v5367, %v5369
      %v5374 = vmul.f32 %v5354, %v5367
      %v5375 = vmul.f32 %v5355, %v5370
      %v5376 = vmul.f32 %v5356, %v5369
      %v5377 = vmul.f32 %v5357, %v5367
      %v5378 = vmul.f32 %v5358, %v5370
      %v5379 = vmul.f32 %v5359, %v5369
      %v5380 = vmul.f32 %v5360, %v5367
      %v5381 = vmul.f32 %v5361, %v5370
      %v5382 = vmul.f32 %v5362, %v5369
      %v5383 = vmul.f32 %v5363, %v5367
      %v5384 = vmul.f32 %v5364, %v5370
      %v5385 = vmul.f32 %v5365, %v5369
      %5386 = vset.pattern.permute.xlu0 21
      %5387 = vperm.xlu0 %5386, %v3136
      %v5388 = vpop.permute.xlu0 %5387
      %5390 = vset.pattern.permute.xlu0 21
      %5391 = vperm.xlu0 %5390, %v3137
      %v5392 = vpop.permute.xlu0 %5391
      %5394 = vset.pattern.permute.xlu0 21
      %5395 = vperm.xlu0 %5394, %v3138
      %v5396 = vpop.permute.xlu0 %5395
      %5398 = vset.pattern.permute.xlu0 21
      %5399 = vperm.xlu0 %5398, %v3139
      %v5400 = vpop.permute.xlu0 %5399
      %v5402 = vmul.f32 %v5374, %v5388
      %v5403 = vmul.f32 %v5375, %v5388
      %v5404 = vmul.f32 %v5376, %v5388
      %v5405 = vmul.f32 %v5377, %v5392
      %v5406 = vmul.f32 %v5378, %v5392
      %v5407 = vmul.f32 %v5379, %v5392
      %v5408 = vmul.f32 %v5380, %v5396
      %v5409 = vmul.f32 %v5381, %v5396
      %v5410 = vmul.f32 %v5382, %v5396
      %v5411 = vmul.f32 %v5383, %v5400
      %v5412 = vmul.f32 %v5384, %v5400
      %v5413 = vmul.f32 %v5385, %v5400
      %5426 = vrot.lane.b32.xlu0 %v5402, 112
      %v5427 = vpop.permute.xlu0 %5426
      %5428 = vrot.lane.b32.xlu0 %v5403, 112
      %v5429 = vpop.permute.xlu0 %5428
      %5430 = vrot.lane.b32.xlu0 %v5404, 112
      %v5431 = vpop.permute.xlu0 %5430
      %5432 = vrot.lane.b32.xlu0 %v5405, 112
      %v5433 = vpop.permute.xlu0 %5432
      %5434 = vrot.lane.b32.xlu0 %v5406, 112
      %v5435 = vpop.permute.xlu0 %5434
      %5436 = vrot.lane.b32.xlu0 %v5407, 112
      %v5437 = vpop.permute.xlu0 %5436
      %5438 = vrot.lane.b32.xlu0 %v5408, 112
      %v5439 = vpop.permute.xlu0 %5438
      %5440 = vrot.lane.b32.xlu0 %v5409, 112
      %v5441 = vpop.permute.xlu0 %5440
      %5442 = vrot.lane.b32.xlu0 %v5410, 112
      %v5443 = vpop.permute.xlu0 %5442
      %5444 = vrot.lane.b32.xlu0 %v5411, 112
      %v5445 = vpop.permute.xlu0 %5444
      %5446 = vrot.lane.b32.xlu0 %v5412, 112
      %v5447 = vpop.permute.xlu0 %5446
      %5448 = vrot.lane.b32.xlu0 %v5413, 112
      %v5449 = vpop.permute.xlu0 %5448
      %v5450 = vsel %vm1000, %v5427, %v5429
      %v5451 = vsel %vm1000, %v5429, %v5431
      %v5452 = vsel %vm1000, %v5433, %v5435
      %v5453 = vsel %vm1000, %v5435, %v5437
      %v5454 = vsel %vm1000, %v5439, %v5441
      %v5455 = vsel %vm1000, %v5441, %v5443
      %v5456 = vsel %vm1000, %v5445, %v5447
      %v5457 = vsel %vm1000, %v5447, %v5449
      %v5466 = vadd.f32 %v5346, %v5450
      %v5467 = vadd.f32 %v5347, %v5451
      %v5468 = vadd.f32 %v5348, %v5452
      %v5469 = vadd.f32 %v5349, %v5453
      %v5470 = vadd.f32 %v5350, %v5454
      %v5471 = vadd.f32 %v5351, %v5455
      %v5472 = vadd.f32 %v5352, %v5456
      %v5473 = vadd.f32 %v5353, %v5457
      %5474 = vrot.lane.b32.xlu0 %v3221, 19
      %v5475 = vpop.permute.xlu0 %5474
      %5476 = vrot.lane.b32.xlu0 %v3222, 19
      %v5477 = vpop.permute.xlu0 %5476
      %v5478 = vsel %vm1228, %v5475, %v5477
      %v5482 = vmul.f32 %v5354, %v5475
      %v5483 = vmul.f32 %v5355, %v5478
      %v5484 = vmul.f32 %v5356, %v5477
      %v5485 = vmul.f32 %v5357, %v5475
      %v5486 = vmul.f32 %v5358, %v5478
      %v5487 = vmul.f32 %v5359, %v5477
      %v5488 = vmul.f32 %v5360, %v5475
      %v5489 = vmul.f32 %v5361, %v5478
      %v5490 = vmul.f32 %v5362, %v5477
      %v5491 = vmul.f32 %v5363, %v5475
      %v5492 = vmul.f32 %v5364, %v5478
      %v5493 = vmul.f32 %v5365, %v5477
      %5494 = vset.pattern.permute.xlu0 22
      %5495 = vperm.xlu0 %5494, %v3136
      %v5496 = vpop.permute.xlu0 %5495
      %5498 = vset.pattern.permute.xlu0 22
      %5499 = vperm.xlu0 %5498, %v3137
      %v5500 = vpop.permute.xlu0 %5499
      %5502 = vset.pattern.permute.xlu0 22
      %5503 = vperm.xlu0 %5502, %v3138
      %v5504 = vpop.permute.xlu0 %5503
      %5506 = vset.pattern.permute.xlu0 22
      %5507 = vperm.xlu0 %5506, %v3139
      %v5508 = vpop.permute.xlu0 %5507
      %v5510 = vmul.f32 %v5482, %v5496
      %v5511 = vmul.f32 %v5483, %v5496
      %v5512 = vmul.f32 %v5484, %v5496
      %v5513 = vmul.f32 %v5485, %v5500
      %v5514 = vmul.f32 %v5486, %v5500
      %v5515 = vmul.f32 %v5487, %v5500
      %v5516 = vmul.f32 %v5488, %v5504
      %v5517 = vmul.f32 %v5489, %v5504
      %v5518 = vmul.f32 %v5490, %v5504
      %v5519 = vmul.f32 %v5491, %v5508
      %v5520 = vmul.f32 %v5492, %v5508
      %v5521 = vmul.f32 %v5493, %v5508
      %5534 = vrot.lane.b32.xlu0 %v5510, 109
      %v5535 = vpop.permute.xlu0 %5534
      %5536 = vrot.lane.b32.xlu0 %v5511, 109
      %v5537 = vpop.permute.xlu0 %5536
      %5538 = vrot.lane.b32.xlu0 %v5512, 109
      %v5539 = vpop.permute.xlu0 %5538
      %5540 = vrot.lane.b32.xlu0 %v5513, 109
      %v5541 = vpop.permute.xlu0 %5540
      %5542 = vrot.lane.b32.xlu0 %v5514, 109
      %v5543 = vpop.permute.xlu0 %5542
      %5544 = vrot.lane.b32.xlu0 %v5515, 109
      %v5545 = vpop.permute.xlu0 %5544
      %5546 = vrot.lane.b32.xlu0 %v5516, 109
      %v5547 = vpop.permute.xlu0 %5546
      %5548 = vrot.lane.b32.xlu0 %v5517, 109
      %v5549 = vpop.permute.xlu0 %5548
      %5550 = vrot.lane.b32.xlu0 %v5518, 109
      %v5551 = vpop.permute.xlu0 %5550
      %5552 = vrot.lane.b32.xlu0 %v5519, 109
      %v5553 = vpop.permute.xlu0 %5552
      %5554 = vrot.lane.b32.xlu0 %v5520, 109
      %v5555 = vpop.permute.xlu0 %5554
      %5556 = vrot.lane.b32.xlu0 %v5521, 109
      %v5557 = vpop.permute.xlu0 %5556
      %v5558 = vsel %vm1309, %v5535, %v5537
      %v5559 = vsel %vm1309, %v5537, %v5539
      %v5560 = vsel %vm1309, %v5541, %v5543
      %v5561 = vsel %vm1309, %v5543, %v5545
      %v5562 = vsel %vm1309, %v5547, %v5549
      %v5563 = vsel %vm1309, %v5549, %v5551
      %v5564 = vsel %vm1309, %v5553, %v5555
      %v5565 = vsel %vm1309, %v5555, %v5557
      %v5574 = vadd.f32 %v5466, %v5558
      %v5575 = vadd.f32 %v5467, %v5559
      %v5576 = vadd.f32 %v5468, %v5560
      %v5577 = vadd.f32 %v5469, %v5561
      %v5578 = vadd.f32 %v5470, %v5562
      %v5579 = vadd.f32 %v5471, %v5563
      %v5580 = vadd.f32 %v5472, %v5564
      %v5581 = vadd.f32 %v5473, %v5565
      %5582 = vrot.lane.b32.xlu0 %v3332, 22
      %v5583 = vpop.permute.xlu0 %5582
      %5584 = vrot.lane.b32.xlu0 %v3333, 22
      %v5585 = vpop.permute.xlu0 %5584
      %vm5586 = vcmask 179200
      %v5587 = vsel %vm5586, %v5583, %v5585
      %v5591 = vmul.f32 %v5354, %v5583
      %v5592 = vmul.f32 %v5355, %v5587
      %v5593 = vmul.f32 %v5356, %v5585
      %v5594 = vmul.f32 %v5357, %v5583
      %v5595 = vmul.f32 %v5358, %v5587
      %v5596 = vmul.f32 %v5359, %v5585
      %v5597 = vmul.f32 %v5360, %v5583
      %v5598 = vmul.f32 %v5361, %v5587
      %v5599 = vmul.f32 %v5362, %v5585
      %v5600 = vmul.f32 %v5363, %v5583
      %v5601 = vmul.f32 %v5364, %v5587
      %v5602 = vmul.f32 %v5365, %v5585
      %5603 = vset.pattern.permute.xlu0 23
      %5604 = vperm.xlu0 %5603, %v3136
      %v5605 = vpop.permute.xlu0 %5604
      %5607 = vset.pattern.permute.xlu0 23
      %5608 = vperm.xlu0 %5607, %v3137
      %v5609 = vpop.permute.xlu0 %5608
      %5611 = vset.pattern.permute.xlu0 23
      %5612 = vperm.xlu0 %5611, %v3138
      %v5613 = vpop.permute.xlu0 %5612
      %5615 = vset.pattern.permute.xlu0 23
      %5616 = vperm.xlu0 %5615, %v3139
      %v5617 = vpop.permute.xlu0 %5616
      %v5619 = vmul.f32 %v5591, %v5605
      %v5620 = vmul.f32 %v5592, %v5605
      %v5621 = vmul.f32 %v5593, %v5605
      %v5622 = vmul.f32 %v5594, %v5609
      %v5623 = vmul.f32 %v5595, %v5609
      %v5624 = vmul.f32 %v5596, %v5609
      %v5625 = vmul.f32 %v5597, %v5613
      %v5626 = vmul.f32 %v5598, %v5613
      %v5627 = vmul.f32 %v5599, %v5613
      %v5628 = vmul.f32 %v5600, %v5617
      %v5629 = vmul.f32 %v5601, %v5617
      %v5630 = vmul.f32 %v5602, %v5617
      %5643 = vrot.lane.b32.xlu0 %v5619, 106
      %v5644 = vpop.permute.xlu0 %5643
      %5645 = vrot.lane.b32.xlu0 %v5620, 106
      %v5646 = vpop.permute.xlu0 %5645
      %5647 = vrot.lane.b32.xlu0 %v5621, 106
      %v5648 = vpop.permute.xlu0 %5647
      %5649 = vrot.lane.b32.xlu0 %v5622, 106
      %v5650 = vpop.permute.xlu0 %5649
      %5651 = vrot.lane.b32.xlu0 %v5623, 106
      %v5652 = vpop.permute.xlu0 %5651
      %5653 = vrot.lane.b32.xlu0 %v5624, 106
      %v5654 = vpop.permute.xlu0 %5653
      %5655 = vrot.lane.b32.xlu0 %v5625, 106
      %v5656 = vpop.permute.xlu0 %5655
      %5657 = vrot.lane.b32.xlu0 %v5626, 106
      %v5658 = vpop.permute.xlu0 %5657
      %5659 = vrot.lane.b32.xlu0 %v5627, 106
      %v5660 = vpop.permute.xlu0 %5659
      %5661 = vrot.lane.b32.xlu0 %v5628, 106
      %v5662 = vpop.permute.xlu0 %5661
      %5663 = vrot.lane.b32.xlu0 %v5629, 106
      %v5664 = vpop.permute.xlu0 %5663
      %5665 = vrot.lane.b32.xlu0 %v5630, 106
      %v5666 = vpop.permute.xlu0 %5665
      %vm5667 = vcmask 867328
      %v5668 = vsel %vm5667, %v5644, %v5646
      %v5669 = vsel %vm5667, %v5646, %v5648
      %v5670 = vsel %vm5667, %v5650, %v5652
      %v5671 = vsel %vm5667, %v5652, %v5654
      %v5672 = vsel %vm5667, %v5656, %v5658
      %v5673 = vsel %vm5667, %v5658, %v5660
      %v5674 = vsel %vm5667, %v5662, %v5664
      %v5675 = vsel %vm5667, %v5664, %v5666
      %v5684 = vadd.f32 %v5574, %v5668
      %v5685 = vadd.f32 %v5575, %v5669
      %v5686 = vadd.f32 %v5576, %v5670
      %v5687 = vadd.f32 %v5577, %v5671
      %v5688 = vadd.f32 %v5578, %v5672
      %v5689 = vadd.f32 %v5579, %v5673
      %v5690 = vadd.f32 %v5580, %v5674
      %v5691 = vadd.f32 %v5581, %v5675
      %5692 = vset.pattern.permute.xlu0 24
      %5693 = vperm.xlu0 %5692, %v3136
      %v5694 = vpop.permute.xlu0 %5693
      %5696 = vset.pattern.permute.xlu0 24
      %5697 = vperm.xlu0 %5696, %v3137
      %v5698 = vpop.permute.xlu0 %5697
      %5700 = vset.pattern.permute.xlu0 24
      %5701 = vperm.xlu0 %5700, %v3138
      %v5702 = vpop.permute.xlu0 %5701
      %5704 = vset.pattern.permute.xlu0 24
      %5705 = vperm.xlu0 %5704, %v3139
      %v5706 = vpop.permute.xlu0 %5705
      %v5708 = vmul.f32 %v5354, %v5694
      %v5709 = vmul.f32 %v5355, %v5694
      %v5710 = vmul.f32 %v5356, %v5694
      %v5711 = vmul.f32 %v5357, %v5698
      %v5712 = vmul.f32 %v5358, %v5698
      %v5713 = vmul.f32 %v5359, %v5698
      %v5714 = vmul.f32 %v5360, %v5702
      %v5715 = vmul.f32 %v5361, %v5702
      %v5716 = vmul.f32 %v5362, %v5702
      %v5717 = vmul.f32 %v5363, %v5706
      %v5718 = vmul.f32 %v5364, %v5706
      %v5719 = vmul.f32 %v5365, %v5706
      %5732 = vrot.lane.b32.xlu0 %v5708, 103
      %v5733 = vpop.permute.xlu0 %5732
      %5734 = vrot.lane.b32.xlu0 %v5709, 103
      %v5735 = vpop.permute.xlu0 %5734
      %5736 = vrot.lane.b32.xlu0 %v5710, 103
      %v5737 = vpop.permute.xlu0 %5736
      %5738 = vrot.lane.b32.xlu0 %v5711, 103
      %v5739 = vpop.permute.xlu0 %5738
      %5740 = vrot.lane.b32.xlu0 %v5712, 103
      %v5741 = vpop.permute.xlu0 %5740
      %5742 = vrot.lane.b32.xlu0 %v5713, 103
      %v5743 = vpop.permute.xlu0 %5742
      %5744 = vrot.lane.b32.xlu0 %v5714, 103
      %v5745 = vpop.permute.xlu0 %5744
      %5746 = vrot.lane.b32.xlu0 %v5715, 103
      %v5747 = vpop.permute.xlu0 %5746
      %5748 = vrot.lane.b32.xlu0 %v5716, 103
      %v5749 = vpop.permute.xlu0 %5748
      %5750 = vrot.lane.b32.xlu0 %v5717, 103
      %v5751 = vpop.permute.xlu0 %5750
      %5752 = vrot.lane.b32.xlu0 %v5718, 103
      %v5753 = vpop.permute.xlu0 %5752
      %5754 = vrot.lane.b32.xlu0 %v5719, 103
      %v5755 = vpop.permute.xlu0 %5754
      %vm5756 = vcmask 842752
      %v5757 = vsel %vm5756, %v5733, %v5735
      %v5758 = vsel %vm5756, %v5735, %v5737
      %v5759 = vsel %vm5756, %v5739, %v5741
      %v5760 = vsel %vm5756, %v5741, %v5743
      %v5761 = vsel %vm5756, %v5745, %v5747
      %v5762 = vsel %vm5756, %v5747, %v5749
      %v5763 = vsel %vm5756, %v5751, %v5753
      %v5764 = vsel %vm5756, %v5753, %v5755
      %v5773 = vadd.f32 %v5684, %v5757
      %v5774 = vadd.f32 %v5685, %v5758
      %v5775 = vadd.f32 %v5686, %v5759
      %v5776 = vadd.f32 %v5687, %v5760
      %v5777 = vadd.f32 %v5688, %v5761
      %v5778 = vadd.f32 %v5689, %v5762
      %v5779 = vadd.f32 %v5690, %v5763
      %v5780 = vadd.f32 %v5691, %v5764
      %5781 = vrot.lane.b32.xlu0 %v3534, 28
      %v5782 = vpop.permute.xlu0 %5781
      %5783 = vrot.lane.b32.xlu0 %v3535, 28
      %v5784 = vpop.permute.xlu0 %5783
      %vm5785 = vcmask 228352
      %v5786 = vsel %vm5785, %v5782, %v5784
      %v5790 = vmul.f32 %v5354, %v5782
      %v5791 = vmul.f32 %v5355, %v5786
      %v5792 = vmul.f32 %v5356, %v5784
      %v5793 = vmul.f32 %v5357, %v5782
      %v5794 = vmul.f32 %v5358, %v5786
      %v5795 = vmul.f32 %v5359, %v5784
      %v5796 = vmul.f32 %v5360, %v5782
      %v5797 = vmul.f32 %v5361, %v5786
      %v5798 = vmul.f32 %v5362, %v5784
      %v5799 = vmul.f32 %v5363, %v5782
      %v5800 = vmul.f32 %v5364, %v5786
      %v5801 = vmul.f32 %v5365, %v5784
      %5802 = vset.pattern.permute.xlu0 25
      %5803 = vperm.xlu0 %5802, %v3136
      %v5804 = vpop.permute.xlu0 %5803
      %5806 = vset.pattern.permute.xlu0 25
      %5807 = vperm.xlu0 %5806, %v3137
      %v5808 = vpop.permute.xlu0 %5807
      %5810 = vset.pattern.permute.xlu0 25
      %5811 = vperm.xlu0 %5810, %v3138
      %v5812 = vpop.permute.xlu0 %5811
      %5814 = vset.pattern.permute.xlu0 25
      %5815 = vperm.xlu0 %5814, %v3139
      %v5816 = vpop.permute.xlu0 %5815
      %v5818 = vmul.f32 %v5790, %v5804
      %v5819 = vmul.f32 %v5791, %v5804
      %v5820 = vmul.f32 %v5792, %v5804
      %v5821 = vmul.f32 %v5793, %v5808
      %v5822 = vmul.f32 %v5794, %v5808
      %v5823 = vmul.f32 %v5795, %v5808
      %v5824 = vmul.f32 %v5796, %v5812
      %v5825 = vmul.f32 %v5797, %v5812
      %v5826 = vmul.f32 %v5798, %v5812
      %v5827 = vmul.f32 %v5799, %v5816
      %v5828 = vmul.f32 %v5800, %v5816
      %v5829 = vmul.f32 %v5801, %v5816
      %5842 = vrot.lane.b32.xlu0 %v5818, 100
      %v5843 = vpop.permute.xlu0 %5842
      %5844 = vrot.lane.b32.xlu0 %v5819, 100
      %v5845 = vpop.permute.xlu0 %5844
      %5846 = vrot.lane.b32.xlu0 %v5820, 100
      %v5847 = vpop.permute.xlu0 %5846
      %5848 = vrot.lane.b32.xlu0 %v5821, 100
      %v5849 = vpop.permute.xlu0 %5848
      %5850 = vrot.lane.b32.xlu0 %v5822, 100
      %v5851 = vpop.permute.xlu0 %5850
      %5852 = vrot.lane.b32.xlu0 %v5823, 100
      %v5853 = vpop.permute.xlu0 %5852
      %5854 = vrot.lane.b32.xlu0 %v5824, 100
      %v5855 = vpop.permute.xlu0 %5854
      %5856 = vrot.lane.b32.xlu0 %v5825, 100
      %v5857 = vpop.permute.xlu0 %5856
      %5858 = vrot.lane.b32.xlu0 %v5826, 100
      %v5859 = vpop.permute.xlu0 %5858
      %5860 = vrot.lane.b32.xlu0 %v5827, 100
      %v5861 = vpop.permute.xlu0 %5860
      %5862 = vrot.lane.b32.xlu0 %v5828, 100
      %v5863 = vpop.permute.xlu0 %5862
      %5864 = vrot.lane.b32.xlu0 %v5829, 100
      %v5865 = vpop.permute.xlu0 %5864
      %vm5866 = vcmask 818176
      %v5867 = vsel %vm5866, %v5843, %v5845
      %v5868 = vsel %vm5866, %v5845, %v5847
      %v5869 = vsel %vm5866, %v5849, %v5851
      %v5870 = vsel %vm5866, %v5851, %v5853
      %v5871 = vsel %vm5866, %v5855, %v5857
      %v5872 = vsel %vm5866, %v5857, %v5859
      %v5873 = vsel %vm5866, %v5861, %v5863
      %v5874 = vsel %vm5866, %v5863, %v5865
      %v5883 = vadd.f32 %v5773, %v5867
      %v5884 = vadd.f32 %v5774, %v5868
      %v5885 = vadd.f32 %v5775, %v5869
      %v5886 = vadd.f32 %v5776, %v5870
      %v5887 = vadd.f32 %v5777, %v5871
      %v5888 = vadd.f32 %v5778, %v5872
      %v5889 = vadd.f32 %v5779, %v5873
      %v5890 = vadd.f32 %v5780, %v5874
      %5891 = vrot.lane.b32.xlu0 %v3647, 31
      %v5892 = vpop.permute.xlu0 %5891
      %5893 = vrot.lane.b32.xlu0 %v3648, 31
      %v5894 = vpop.permute.xlu0 %5893
      %vm5895 = vcmask 252928
      %v5896 = vsel %vm5895, %v5892, %v5894
      %v5900 = vmul.f32 %v5354, %v5892
      %v5901 = vmul.f32 %v5355, %v5896
      %v5902 = vmul.f32 %v5356, %v5894
      %v5903 = vmul.f32 %v5357, %v5892
      %v5904 = vmul.f32 %v5358, %v5896
      %v5905 = vmul.f32 %v5359, %v5894
      %v5906 = vmul.f32 %v5360, %v5892
      %v5907 = vmul.f32 %v5361, %v5896
      %v5908 = vmul.f32 %v5362, %v5894
      %v5909 = vmul.f32 %v5363, %v5892
      %v5910 = vmul.f32 %v5364, %v5896
      %v5911 = vmul.f32 %v5365, %v5894
      %5912 = vset.pattern.permute.xlu0 26
      %5913 = vperm.xlu0 %5912, %v3136
      %v5914 = vpop.permute.xlu0 %5913
      %5916 = vset.pattern.permute.xlu0 26
      %5917 = vperm.xlu0 %5916, %v3137
      %v5918 = vpop.permute.xlu0 %5917
      %5920 = vset.pattern.permute.xlu0 26
      %5921 = vperm.xlu0 %5920, %v3138
      %v5922 = vpop.permute.xlu0 %5921
      %5924 = vset.pattern.permute.xlu0 26
      %5925 = vperm.xlu0 %5924, %v3139
      %v5926 = vpop.permute.xlu0 %5925
      %v5928 = vmul.f32 %v5900, %v5914
      %v5929 = vmul.f32 %v5901, %v5914
      %v5930 = vmul.f32 %v5902, %v5914
      %v5931 = vmul.f32 %v5903, %v5918
      %v5932 = vmul.f32 %v5904, %v5918
      %v5933 = vmul.f32 %v5905, %v5918
      %v5934 = vmul.f32 %v5906, %v5922
      %v5935 = vmul.f32 %v5907, %v5922
      %v5936 = vmul.f32 %v5908, %v5922
      %v5937 = vmul.f32 %v5909, %v5926
      %v5938 = vmul.f32 %v5910, %v5926
      %v5939 = vmul.f32 %v5911, %v5926
      %5952 = vrot.lane.b32.xlu0 %v5928, 97
      %v5953 = vpop.permute.xlu0 %5952
      %5954 = vrot.lane.b32.xlu0 %v5929, 97
      %v5955 = vpop.permute.xlu0 %5954
      %5956 = vrot.lane.b32.xlu0 %v5930, 97
      %v5957 = vpop.permute.xlu0 %5956
      %5958 = vrot.lane.b32.xlu0 %v5931, 97
      %v5959 = vpop.permute.xlu0 %5958
      %5960 = vrot.lane.b32.xlu0 %v5932, 97
      %v5961 = vpop.permute.xlu0 %5960
      %5962 = vrot.lane.b32.xlu0 %v5933, 97
      %v5963 = vpop.permute.xlu0 %5962
      %5964 = vrot.lane.b32.xlu0 %v5934, 97
      %v5965 = vpop.permute.xlu0 %5964
      %5966 = vrot.lane.b32.xlu0 %v5935, 97
      %v5967 = vpop.permute.xlu0 %5966
      %5968 = vrot.lane.b32.xlu0 %v5936, 97
      %v5969 = vpop.permute.xlu0 %5968
      %5970 = vrot.lane.b32.xlu0 %v5937, 97
      %v5971 = vpop.permute.xlu0 %5970
      %5972 = vrot.lane.b32.xlu0 %v5938, 97
      %v5973 = vpop.permute.xlu0 %5972
      %5974 = vrot.lane.b32.xlu0 %v5939, 97
      %v5975 = vpop.permute.xlu0 %5974
      %vm5976 = vcmask 793600
      %v5977 = vsel %vm5976, %v5953, %v5955
      %v5978 = vsel %vm5976, %v5955, %v5957
      %v5979 = vsel %vm5976, %v5959, %v5961
      %v5980 = vsel %vm5976, %v5961, %v5963
      %v5981 = vsel %vm5976, %v5965, %v5967
      %v5982 = vsel %vm5976, %v5967, %v5969
      %v5983 = vsel %vm5976, %v5971, %v5973
      %v5984 = vsel %vm5976, %v5973, %v5975
      %v5993 = vadd.f32 %v5883, %v5977
      %v5994 = vadd.f32 %v5884, %v5978
      %v5995 = vadd.f32 %v5885, %v5979
      %v5996 = vadd.f32 %v5886, %v5980
      %v5997 = vadd.f32 %v5887, %v5981
      %v5998 = vadd.f32 %v5888, %v5982
      %v5999 = vadd.f32 %v5889, %v5983
      %v6000 = vadd.f32 %v5890, %v5984
      %6001 = vrot.lane.b32.xlu0 %v3760, 34
      %v6002 = vpop.permute.xlu0 %6001
      %6003 = vrot.lane.b32.xlu0 %v3761, 34
      %v6004 = vpop.permute.xlu0 %6003
      %v6005 = vsel %vm377, %v6002, %v6004
      %v6009 = vmul.f32 %v5354, %v6002
      %v6010 = vmul.f32 %v5355, %v6005
      %v6011 = vmul.f32 %v5356, %v6004
      %v6012 = vmul.f32 %v5357, %v6002
      %v6013 = vmul.f32 %v5358, %v6005
      %v6014 = vmul.f32 %v5359, %v6004
      %v6015 = vmul.f32 %v5360, %v6002
      %v6016 = vmul.f32 %v5361, %v6005
      %v6017 = vmul.f32 %v5362, %v6004
      %v6018 = vmul.f32 %v5363, %v6002
      %v6019 = vmul.f32 %v5364, %v6005
      %v6020 = vmul.f32 %v5365, %v6004
      %6021 = vset.pattern.permute.xlu0 27
      %6022 = vperm.xlu0 %6021, %v3136
      %v6023 = vpop.permute.xlu0 %6022
      %6025 = vset.pattern.permute.xlu0 27
      %6026 = vperm.xlu0 %6025, %v3137
      %v6027 = vpop.permute.xlu0 %6026
      %6029 = vset.pattern.permute.xlu0 27
      %6030 = vperm.xlu0 %6029, %v3138
      %v6031 = vpop.permute.xlu0 %6030
      %6033 = vset.pattern.permute.xlu0 27
      %6034 = vperm.xlu0 %6033, %v3139
      %v6035 = vpop.permute.xlu0 %6034
      %v6037 = vmul.f32 %v6009, %v6023
      %v6038 = vmul.f32 %v6010, %v6023
      %v6039 = vmul.f32 %v6011, %v6023
      %v6040 = vmul.f32 %v6012, %v6027
      %v6041 = vmul.f32 %v6013, %v6027
      %v6042 = vmul.f32 %v6014, %v6027
      %v6043 = vmul.f32 %v6015, %v6031
      %v6044 = vmul.f32 %v6016, %v6031
      %v6045 = vmul.f32 %v6017, %v6031
      %v6046 = vmul.f32 %v6018, %v6035
      %v6047 = vmul.f32 %v6019, %v6035
      %v6048 = vmul.f32 %v6020, %v6035
      %6061 = vrot.lane.b32.xlu0 %v6037, 94
      %v6062 = vpop.permute.xlu0 %6061
      %6063 = vrot.lane.b32.xlu0 %v6038, 94
      %v6064 = vpop.permute.xlu0 %6063
      %6065 = vrot.lane.b32.xlu0 %v6039, 94
      %v6066 = vpop.permute.xlu0 %6065
      %6067 = vrot.lane.b32.xlu0 %v6040, 94
      %v6068 = vpop.permute.xlu0 %6067
      %6069 = vrot.lane.b32.xlu0 %v6041, 94
      %v6070 = vpop.permute.xlu0 %6069
      %6071 = vrot.lane.b32.xlu0 %v6042, 94
      %v6072 = vpop.permute.xlu0 %6071
      %6073 = vrot.lane.b32.xlu0 %v6043, 94
      %v6074 = vpop.permute.xlu0 %6073
      %6075 = vrot.lane.b32.xlu0 %v6044, 94
      %v6076 = vpop.permute.xlu0 %6075
      %6077 = vrot.lane.b32.xlu0 %v6045, 94
      %v6078 = vpop.permute.xlu0 %6077
      %6079 = vrot.lane.b32.xlu0 %v6046, 94
      %v6080 = vpop.permute.xlu0 %6079
      %6081 = vrot.lane.b32.xlu0 %v6047, 94
      %v6082 = vpop.permute.xlu0 %6081
      %6083 = vrot.lane.b32.xlu0 %v6048, 94
      %v6084 = vpop.permute.xlu0 %6083
      %v6085 = vsel %vm1728, %v6062, %v6064
      %v6086 = vsel %vm1728, %v6064, %v6066
      %v6087 = vsel %vm1728, %v6068, %v6070
      %v6088 = vsel %vm1728, %v6070, %v6072
      %v6089 = vsel %vm1728, %v6074, %v6076
      %v6090 = vsel %vm1728, %v6076, %v6078
      %v6091 = vsel %vm1728, %v6080, %v6082
      %v6092 = vsel %vm1728, %v6082, %v6084
      %v6101 = vadd.f32 %v5993, %v6085
      %v6102 = vadd.f32 %v5994, %v6086
      %v6103 = vadd.f32 %v5995, %v6087
      %v6104 = vadd.f32 %v5996, %v6088
      %v6105 = vadd.f32 %v5997, %v6089
      %v6106 = vadd.f32 %v5998, %v6090
      %v6107 = vadd.f32 %v5999, %v6091
      %v6108 = vadd.f32 %v6000, %v6092
      %6109 = vrot.lane.b32.xlu0 %v3160, 64
      %v6110 = vpop.permute.xlu0 %6109
      %6111 = vrot.lane.b32.xlu0 %v3161, 64
      %v6112 = vpop.permute.xlu0 %6111
      %v6113 = vsel %vm2506, %v6110, %v6112
      %v6117 = vmul.f32 %v5354, %v6110
      %v6118 = vmul.f32 %v5355, %v6113
      %v6119 = vmul.f32 %v5356, %v6112
      %v6120 = vmul.f32 %v5357, %v6110
      %v6121 = vmul.f32 %v5358, %v6113
      %v6122 = vmul.f32 %v5359, %v6112
      %v6123 = vmul.f32 %v5360, %v6110
      %v6124 = vmul.f32 %v5361, %v6113
      %v6125 = vmul.f32 %v5362, %v6112
      %v6126 = vmul.f32 %v5363, %v6110
      %v6127 = vmul.f32 %v5364, %v6113
      %v6128 = vmul.f32 %v5365, %v6112
      %6129 = vset.pattern.permute.xlu0 28
      %6130 = vperm.xlu0 %6129, %v3136
      %v6131 = vpop.permute.xlu0 %6130
      %6133 = vset.pattern.permute.xlu0 28
      %6134 = vperm.xlu0 %6133, %v3137
      %v6135 = vpop.permute.xlu0 %6134
      %6137 = vset.pattern.permute.xlu0 28
      %6138 = vperm.xlu0 %6137, %v3138
      %v6139 = vpop.permute.xlu0 %6138
      %6141 = vset.pattern.permute.xlu0 28
      %6142 = vperm.xlu0 %6141, %v3139
      %v6143 = vpop.permute.xlu0 %6142
      %v6145 = vmul.f32 %v6117, %v6131
      %v6146 = vmul.f32 %v6118, %v6131
      %v6147 = vmul.f32 %v6119, %v6131
      %v6148 = vmul.f32 %v6120, %v6135
      %v6149 = vmul.f32 %v6121, %v6135
      %v6150 = vmul.f32 %v6122, %v6135
      %v6151 = vmul.f32 %v6123, %v6139
      %v6152 = vmul.f32 %v6124, %v6139
      %v6153 = vmul.f32 %v6125, %v6139
      %v6154 = vmul.f32 %v6126, %v6143
      %v6155 = vmul.f32 %v6127, %v6143
      %v6156 = vmul.f32 %v6128, %v6143
      %6169 = vrot.lane.b32.xlu0 %v6145, 64
      %v6170 = vpop.permute.xlu0 %6169
      %6171 = vrot.lane.b32.xlu0 %v6146, 64
      %v6172 = vpop.permute.xlu0 %6171
      %6173 = vrot.lane.b32.xlu0 %v6147, 64
      %v6174 = vpop.permute.xlu0 %6173
      %6175 = vrot.lane.b32.xlu0 %v6148, 64
      %v6176 = vpop.permute.xlu0 %6175
      %6177 = vrot.lane.b32.xlu0 %v6149, 64
      %v6178 = vpop.permute.xlu0 %6177
      %6179 = vrot.lane.b32.xlu0 %v6150, 64
      %v6180 = vpop.permute.xlu0 %6179
      %6181 = vrot.lane.b32.xlu0 %v6151, 64
      %v6182 = vpop.permute.xlu0 %6181
      %6183 = vrot.lane.b32.xlu0 %v6152, 64
      %v6184 = vpop.permute.xlu0 %6183
      %6185 = vrot.lane.b32.xlu0 %v6153, 64
      %v6186 = vpop.permute.xlu0 %6185
      %6187 = vrot.lane.b32.xlu0 %v6154, 64
      %v6188 = vpop.permute.xlu0 %6187
      %6189 = vrot.lane.b32.xlu0 %v6155, 64
      %v6190 = vpop.permute.xlu0 %6189
      %6191 = vrot.lane.b32.xlu0 %v6156, 64
      %v6192 = vpop.permute.xlu0 %6191
      %v6193 = vsel %vm2506, %v6170, %v6172
      %v6194 = vsel %vm2506, %v6172, %v6174
      %v6195 = vsel %vm2506, %v6176, %v6178
      %v6196 = vsel %vm2506, %v6178, %v6180
      %v6197 = vsel %vm2506, %v6182, %v6184
      %v6198 = vsel %vm2506, %v6184, %v6186
      %v6199 = vsel %vm2506, %v6188, %v6190
      %v6200 = vsel %vm2506, %v6190, %v6192
      %v6209 = vadd.f32 %v6101, %v6193
      %v6210 = vadd.f32 %v6102, %v6194
      %v6211 = vadd.f32 %v6103, %v6195
      %v6212 = vadd.f32 %v6104, %v6196
      %v6213 = vadd.f32 %v6105, %v6197
      %v6214 = vadd.f32 %v6106, %v6198
      %v6215 = vadd.f32 %v6107, %v6199
      %v6216 = vadd.f32 %v6108, %v6200
      %6217 = vrot.lane.b32.xlu0 %v3221, 67
      %v6218 = vpop.permute.xlu0 %6217
      %6219 = vrot.lane.b32.xlu0 %v3222, 67
      %v6220 = vpop.permute.xlu0 %6219
      %v6221 = vsel %vm2814, %v6218, %v6220
      %v6225 = vmul.f32 %v5354, %v6218
      %v6226 = vmul.f32 %v5355, %v6221
      %v6227 = vmul.f32 %v5356, %v6220
      %v6228 = vmul.f32 %v5357, %v6218
      %v6229 = vmul.f32 %v5358, %v6221
      %v6230 = vmul.f32 %v5359, %v6220
      %v6231 = vmul.f32 %v5360, %v6218
      %v6232 = vmul.f32 %v5361, %v6221
      %v6233 = vmul.f32 %v5362, %v6220
      %v6234 = vmul.f32 %v5363, %v6218
      %v6235 = vmul.f32 %v5364, %v6221
      %v6236 = vmul.f32 %v5365, %v6220
      %6237 = vset.pattern.permute.xlu0 29
      %6238 = vperm.xlu0 %6237, %v3136
      %v6239 = vpop.permute.xlu0 %6238
      %6241 = vset.pattern.permute.xlu0 29
      %6242 = vperm.xlu0 %6241, %v3137
      %v6243 = vpop.permute.xlu0 %6242
      %6245 = vset.pattern.permute.xlu0 29
      %6246 = vperm.xlu0 %6245, %v3138
      %v6247 = vpop.permute.xlu0 %6246
      %6249 = vset.pattern.permute.xlu0 29
      %6250 = vperm.xlu0 %6249, %v3139
      %v6251 = vpop.permute.xlu0 %6250
      %v6253 = vmul.f32 %v6225, %v6239
      %v6254 = vmul.f32 %v6226, %v6239
      %v6255 = vmul.f32 %v6227, %v6239
      %v6256 = vmul.f32 %v6228, %v6243
      %v6257 = vmul.f32 %v6229, %v6243
      %v6258 = vmul.f32 %v6230, %v6243
      %v6259 = vmul.f32 %v6231, %v6247
      %v6260 = vmul.f32 %v6232, %v6247
      %v6261 = vmul.f32 %v6233, %v6247
      %v6262 = vmul.f32 %v6234, %v6251
      %v6263 = vmul.f32 %v6235, %v6251
      %v6264 = vmul.f32 %v6236, %v6251
      %6277 = vrot.lane.b32.xlu0 %v6253, 61
      %v6278 = vpop.permute.xlu0 %6277
      %6279 = vrot.lane.b32.xlu0 %v6254, 61
      %v6280 = vpop.permute.xlu0 %6279
      %6281 = vrot.lane.b32.xlu0 %v6255, 61
      %v6282 = vpop.permute.xlu0 %6281
      %6283 = vrot.lane.b32.xlu0 %v6256, 61
      %v6284 = vpop.permute.xlu0 %6283
      %6285 = vrot.lane.b32.xlu0 %v6257, 61
      %v6286 = vpop.permute.xlu0 %6285
      %6287 = vrot.lane.b32.xlu0 %v6258, 61
      %v6288 = vpop.permute.xlu0 %6287
      %6289 = vrot.lane.b32.xlu0 %v6259, 61
      %v6290 = vpop.permute.xlu0 %6289
      %6291 = vrot.lane.b32.xlu0 %v6260, 61
      %v6292 = vpop.permute.xlu0 %6291
      %6293 = vrot.lane.b32.xlu0 %v6261, 61
      %v6294 = vpop.permute.xlu0 %6293
      %6295 = vrot.lane.b32.xlu0 %v6262, 61
      %v6296 = vpop.permute.xlu0 %6295
      %6297 = vrot.lane.b32.xlu0 %v6263, 61
      %v6298 = vpop.permute.xlu0 %6297
      %6299 = vrot.lane.b32.xlu0 %v6264, 61
      %v6300 = vpop.permute.xlu0 %6299
      %v6301 = vsel %vm2895, %v6278, %v6280
      %v6302 = vsel %vm2895, %v6280, %v6282
      %v6303 = vsel %vm2895, %v6284, %v6286
      %v6304 = vsel %vm2895, %v6286, %v6288
      %v6305 = vsel %vm2895, %v6290, %v6292
      %v6306 = vsel %vm2895, %v6292, %v6294
      %v6307 = vsel %vm2895, %v6296, %v6298
      %v6308 = vsel %vm2895, %v6298, %v6300
      %v6317 = vadd.f32 %v6209, %v6301
      %v6318 = vadd.f32 %v6210, %v6302
      %v6319 = vadd.f32 %v6211, %v6303
      %v6320 = vadd.f32 %v6212, %v6304
      %v6321 = vadd.f32 %v6213, %v6305
      %v6322 = vadd.f32 %v6214, %v6306
      %v6323 = vadd.f32 %v6215, %v6307
      %v6324 = vadd.f32 %v6216, %v6308
      %6325 = vrot.lane.b32.xlu0 %v3332, 70
      %v6326 = vpop.permute.xlu0 %6325
      %6327 = vrot.lane.b32.xlu0 %v3333, 70
      %v6328 = vpop.permute.xlu0 %6327
      %vm6329 = vcmask 572416
      %v6330 = vsel %vm6329, %v6326, %v6328
      %v6334 = vmul.f32 %v5354, %v6326
      %v6335 = vmul.f32 %v5355, %v6330
      %v6336 = vmul.f32 %v5356, %v6328
      %v6337 = vmul.f32 %v5357, %v6326
      %v6338 = vmul.f32 %v5358, %v6330
      %v6339 = vmul.f32 %v5359, %v6328
      %v6340 = vmul.f32 %v5360, %v6326
      %v6341 = vmul.f32 %v5361, %v6330
      %v6342 = vmul.f32 %v5362, %v6328
      %v6343 = vmul.f32 %v5363, %v6326
      %v6344 = vmul.f32 %v5364, %v6330
      %v6345 = vmul.f32 %v5365, %v6328
      %6346 = vset.pattern.permute.xlu0 30
      %6347 = vperm.xlu0 %6346, %v3136
      %v6348 = vpop.permute.xlu0 %6347
      %6350 = vset.pattern.permute.xlu0 30
      %6351 = vperm.xlu0 %6350, %v3137
      %v6352 = vpop.permute.xlu0 %6351
      %6354 = vset.pattern.permute.xlu0 30
      %6355 = vperm.xlu0 %6354, %v3138
      %v6356 = vpop.permute.xlu0 %6355
      %6358 = vset.pattern.permute.xlu0 30
      %6359 = vperm.xlu0 %6358, %v3139
      %v6360 = vpop.permute.xlu0 %6359
      %v6362 = vmul.f32 %v6334, %v6348
      %v6363 = vmul.f32 %v6335, %v6348
      %v6364 = vmul.f32 %v6336, %v6348
      %v6365 = vmul.f32 %v6337, %v6352
      %v6366 = vmul.f32 %v6338, %v6352
      %v6367 = vmul.f32 %v6339, %v6352
      %v6368 = vmul.f32 %v6340, %v6356
      %v6369 = vmul.f32 %v6341, %v6356
      %v6370 = vmul.f32 %v6342, %v6356
      %v6371 = vmul.f32 %v6343, %v6360
      %v6372 = vmul.f32 %v6344, %v6360
      %v6373 = vmul.f32 %v6345, %v6360
      %6386 = vrot.lane.b32.xlu0 %v6362, 58
      %v6387 = vpop.permute.xlu0 %6386
      %6388 = vrot.lane.b32.xlu0 %v6363, 58
      %v6389 = vpop.permute.xlu0 %6388
      %6390 = vrot.lane.b32.xlu0 %v6364, 58
      %v6391 = vpop.permute.xlu0 %6390
      %6392 = vrot.lane.b32.xlu0 %v6365, 58
      %v6393 = vpop.permute.xlu0 %6392
      %6394 = vrot.lane.b32.xlu0 %v6366, 58
      %v6395 = vpop.permute.xlu0 %6394
      %6396 = vrot.lane.b32.xlu0 %v6367, 58
      %v6397 = vpop.permute.xlu0 %6396
      %6398 = vrot.lane.b32.xlu0 %v6368, 58
      %v6399 = vpop.permute.xlu0 %6398
      %6400 = vrot.lane.b32.xlu0 %v6369, 58
      %v6401 = vpop.permute.xlu0 %6400
      %6402 = vrot.lane.b32.xlu0 %v6370, 58
      %v6403 = vpop.permute.xlu0 %6402
      %6404 = vrot.lane.b32.xlu0 %v6371, 58
      %v6405 = vpop.permute.xlu0 %6404
      %6406 = vrot.lane.b32.xlu0 %v6372, 58
      %v6407 = vpop.permute.xlu0 %6406
      %6408 = vrot.lane.b32.xlu0 %v6373, 58
      %v6409 = vpop.permute.xlu0 %6408
      %vm6410 = vcmask 474112
      %v6411 = vsel %vm6410, %v6387, %v6389
      %v6412 = vsel %vm6410, %v6389, %v6391
      %v6413 = vsel %vm6410, %v6393, %v6395
      %v6414 = vsel %vm6410, %v6395, %v6397
      %v6415 = vsel %vm6410, %v6399, %v6401
      %v6416 = vsel %vm6410, %v6401, %v6403
      %v6417 = vsel %vm6410, %v6405, %v6407
      %v6418 = vsel %vm6410, %v6407, %v6409
      %v6427 = vadd.f32 %v6317, %v6411
      %v6428 = vadd.f32 %v6318, %v6412
      %v6429 = vadd.f32 %v6319, %v6413
      %v6430 = vadd.f32 %v6320, %v6414
      %v6431 = vadd.f32 %v6321, %v6415
      %v6432 = vadd.f32 %v6322, %v6416
      %v6433 = vadd.f32 %v6323, %v6417
      %v6434 = vadd.f32 %v6324, %v6418
      %6435 = vset.pattern.permute.xlu0 31
      %6436 = vperm.xlu0 %6435, %v3136
      %v6437 = vpop.permute.xlu0 %6436
      %6439 = vset.pattern.permute.xlu0 31
      %6440 = vperm.xlu0 %6439, %v3137
      %v6441 = vpop.permute.xlu0 %6440
      %6443 = vset.pattern.permute.xlu0 31
      %6444 = vperm.xlu0 %6443, %v3138
      %v6445 = vpop.permute.xlu0 %6444
      %6447 = vset.pattern.permute.xlu0 31
      %6448 = vperm.xlu0 %6447, %v3139
      %v6449 = vpop.permute.xlu0 %6448
      %v6451 = vmul.f32 %v5354, %v6437
      %v6452 = vmul.f32 %v5355, %v6437
      %v6453 = vmul.f32 %v5356, %v6437
      %v6454 = vmul.f32 %v5357, %v6441
      %v6455 = vmul.f32 %v5358, %v6441
      %v6456 = vmul.f32 %v5359, %v6441
      %v6457 = vmul.f32 %v5360, %v6445
      %v6458 = vmul.f32 %v5361, %v6445
      %v6459 = vmul.f32 %v5362, %v6445
      %v6460 = vmul.f32 %v5363, %v6449
      %v6461 = vmul.f32 %v5364, %v6449
      %v6462 = vmul.f32 %v5365, %v6449
      %6475 = vrot.lane.b32.xlu0 %v6451, 55
      %v6476 = vpop.permute.xlu0 %6475
      %6477 = vrot.lane.b32.xlu0 %v6452, 55
      %v6478 = vpop.permute.xlu0 %6477
      %6479 = vrot.lane.b32.xlu0 %v6453, 55
      %v6480 = vpop.permute.xlu0 %6479
      %6481 = vrot.lane.b32.xlu0 %v6454, 55
      %v6482 = vpop.permute.xlu0 %6481
      %6483 = vrot.lane.b32.xlu0 %v6455, 55
      %v6484 = vpop.permute.xlu0 %6483
      %6485 = vrot.lane.b32.xlu0 %v6456, 55
      %v6486 = vpop.permute.xlu0 %6485
      %6487 = vrot.lane.b32.xlu0 %v6457, 55
      %v6488 = vpop.permute.xlu0 %6487
      %6489 = vrot.lane.b32.xlu0 %v6458, 55
      %v6490 = vpop.permute.xlu0 %6489
      %6491 = vrot.lane.b32.xlu0 %v6459, 55
      %v6492 = vpop.permute.xlu0 %6491
      %6493 = vrot.lane.b32.xlu0 %v6460, 55
      %v6494 = vpop.permute.xlu0 %6493
      %6495 = vrot.lane.b32.xlu0 %v6461, 55
      %v6496 = vpop.permute.xlu0 %6495
      %6497 = vrot.lane.b32.xlu0 %v6462, 55
      %v6498 = vpop.permute.xlu0 %6497
      %vm6499 = vcmask 449536
      %v6500 = vsel %vm6499, %v6476, %v6478
      %v6501 = vsel %vm6499, %v6478, %v6480
      %v6502 = vsel %vm6499, %v6482, %v6484
      %v6503 = vsel %vm6499, %v6484, %v6486
      %v6504 = vsel %vm6499, %v6488, %v6490
      %v6505 = vsel %vm6499, %v6490, %v6492
      %v6506 = vsel %vm6499, %v6494, %v6496
      %v6507 = vsel %vm6499, %v6496, %v6498
      %v6516 = vadd.f32 %v6427, %v6500
      %v6517 = vadd.f32 %v6428, %v6501
      %v6518 = vadd.f32 %v6429, %v6502
      %v6519 = vadd.f32 %v6430, %v6503
      %v6520 = vadd.f32 %v6431, %v6504
      %v6521 = vadd.f32 %v6432, %v6505
      %v6522 = vadd.f32 %v6433, %v6506
      %v6523 = vadd.f32 %v6434, %v6507
      %6524 = vrot.lane.b32.xlu0 %v3534, 76
      %v6525 = vpop.permute.xlu0 %6524
      %6526 = vrot.lane.b32.xlu0 %v3535, 76
      %v6527 = vpop.permute.xlu0 %6526
      %v6528 = vsel %vm2477, %v6525, %v6527
      %v6532 = vmul.f32 %v5354, %v6525
      %v6533 = vmul.f32 %v5355, %v6528
      %v6534 = vmul.f32 %v5356, %v6527
      %v6535 = vmul.f32 %v5357, %v6525
      %v6536 = vmul.f32 %v5358, %v6528
      %v6537 = vmul.f32 %v5359, %v6527
      %v6538 = vmul.f32 %v5360, %v6525
      %v6539 = vmul.f32 %v5361, %v6528
      %v6540 = vmul.f32 %v5362, %v6527
      %v6541 = vmul.f32 %v5363, %v6525
      %v6542 = vmul.f32 %v5364, %v6528
      %v6543 = vmul.f32 %v5365, %v6527
      %6544 = vset.pattern.permute.xlu0 32
      %6545 = vperm.xlu0 %6544, %v3136
      %v6546 = vpop.permute.xlu0 %6545
      %6548 = vset.pattern.permute.xlu0 32
      %6549 = vperm.xlu0 %6548, %v3137
      %v6550 = vpop.permute.xlu0 %6549
      %6552 = vset.pattern.permute.xlu0 32
      %6553 = vperm.xlu0 %6552, %v3138
      %v6554 = vpop.permute.xlu0 %6553
      %6556 = vset.pattern.permute.xlu0 32
      %6557 = vperm.xlu0 %6556, %v3139
      %v6558 = vpop.permute.xlu0 %6557
      %v6560 = vmul.f32 %v6532, %v6546
      %v6561 = vmul.f32 %v6533, %v6546
      %v6562 = vmul.f32 %v6534, %v6546
      %v6563 = vmul.f32 %v6535, %v6550
      %v6564 = vmul.f32 %v6536, %v6550
      %v6565 = vmul.f32 %v6537, %v6550
      %v6566 = vmul.f32 %v6538, %v6554
      %v6567 = vmul.f32 %v6539, %v6554
      %v6568 = vmul.f32 %v6540, %v6554
      %v6569 = vmul.f32 %v6541, %v6558
      %v6570 = vmul.f32 %v6542, %v6558
      %v6571 = vmul.f32 %v6543, %v6558
      %6584 = vrot.lane.b32.xlu0 %v6560, 52
      %v6585 = vpop.permute.xlu0 %6584
      %6586 = vrot.lane.b32.xlu0 %v6561, 52
      %v6587 = vpop.permute.xlu0 %6586
      %6588 = vrot.lane.b32.xlu0 %v6562, 52
      %v6589 = vpop.permute.xlu0 %6588
      %6590 = vrot.lane.b32.xlu0 %v6563, 52
      %v6591 = vpop.permute.xlu0 %6590
      %6592 = vrot.lane.b32.xlu0 %v6564, 52
      %v6593 = vpop.permute.xlu0 %6592
      %6594 = vrot.lane.b32.xlu0 %v6565, 52
      %v6595 = vpop.permute.xlu0 %6594
      %6596 = vrot.lane.b32.xlu0 %v6566, 52
      %v6597 = vpop.permute.xlu0 %6596
      %6598 = vrot.lane.b32.xlu0 %v6567, 52
      %v6599 = vpop.permute.xlu0 %6598
      %6600 = vrot.lane.b32.xlu0 %v6568, 52
      %v6601 = vpop.permute.xlu0 %6600
      %6602 = vrot.lane.b32.xlu0 %v6569, 52
      %v6603 = vpop.permute.xlu0 %6602
      %6604 = vrot.lane.b32.xlu0 %v6570, 52
      %v6605 = vpop.permute.xlu0 %6604
      %6606 = vrot.lane.b32.xlu0 %v6571, 52
      %v6607 = vpop.permute.xlu0 %6606
      %v6608 = vsel %vm2396, %v6585, %v6587
      %v6609 = vsel %vm2396, %v6587, %v6589
      %v6610 = vsel %vm2396, %v6591, %v6593
      %v6611 = vsel %vm2396, %v6593, %v6595
      %v6612 = vsel %vm2396, %v6597, %v6599
      %v6613 = vsel %vm2396, %v6599, %v6601
      %v6614 = vsel %vm2396, %v6603, %v6605
      %v6615 = vsel %vm2396, %v6605, %v6607
      %v6624 = vadd.f32 %v6516, %v6608
      %v6625 = vadd.f32 %v6517, %v6609
      %v6626 = vadd.f32 %v6518, %v6610
      %v6627 = vadd.f32 %v6519, %v6611
      %v6628 = vadd.f32 %v6520, %v6612
      %v6629 = vadd.f32 %v6521, %v6613
      %v6630 = vadd.f32 %v6522, %v6614
      %v6631 = vadd.f32 %v6523, %v6615
      %6632 = vrot.lane.b32.xlu0 %v3647, 79
      %v6633 = vpop.permute.xlu0 %6632
      %6634 = vrot.lane.b32.xlu0 %v3648, 79
      %v6635 = vpop.permute.xlu0 %6634
      %v6636 = vsel %vm2168, %v6633, %v6635
      %v6640 = vmul.f32 %v5354, %v6633
      %v6641 = vmul.f32 %v5355, %v6636
      %v6642 = vmul.f32 %v5356, %v6635
      %v6643 = vmul.f32 %v5357, %v6633
      %v6644 = vmul.f32 %v5358, %v6636
      %v6645 = vmul.f32 %v5359, %v6635
      %v6646 = vmul.f32 %v5360, %v6633
      %v6647 = vmul.f32 %v5361, %v6636
      %v6648 = vmul.f32 %v5362, %v6635
      %v6649 = vmul.f32 %v5363, %v6633
      %v6650 = vmul.f32 %v5364, %v6636
      %v6651 = vmul.f32 %v5365, %v6635
      %6652 = vset.pattern.permute.xlu0 33
      %6653 = vperm.xlu0 %6652, %v3136
      %v6654 = vpop.permute.xlu0 %6653
      %6656 = vset.pattern.permute.xlu0 33
      %6657 = vperm.xlu0 %6656, %v3137
      %v6658 = vpop.permute.xlu0 %6657
      %6660 = vset.pattern.permute.xlu0 33
      %6661 = vperm.xlu0 %6660, %v3138
      %v6662 = vpop.permute.xlu0 %6661
      %6664 = vset.pattern.permute.xlu0 33
      %6665 = vperm.xlu0 %6664, %v3139
      %v6666 = vpop.permute.xlu0 %6665
      %v6668 = vmul.f32 %v6640, %v6654
      %v6669 = vmul.f32 %v6641, %v6654
      %v6670 = vmul.f32 %v6642, %v6654
      %v6671 = vmul.f32 %v6643, %v6658
      %v6672 = vmul.f32 %v6644, %v6658
      %v6673 = vmul.f32 %v6645, %v6658
      %v6674 = vmul.f32 %v6646, %v6662
      %v6675 = vmul.f32 %v6647, %v6662
      %v6676 = vmul.f32 %v6648, %v6662
      %v6677 = vmul.f32 %v6649, %v6666
      %v6678 = vmul.f32 %v6650, %v6666
      %v6679 = vmul.f32 %v6651, %v6666
      %6692 = vrot.lane.b32.xlu0 %v6668, 49
      %v6693 = vpop.permute.xlu0 %6692
      %6694 = vrot.lane.b32.xlu0 %v6669, 49
      %v6695 = vpop.permute.xlu0 %6694
      %6696 = vrot.lane.b32.xlu0 %v6670, 49
      %v6697 = vpop.permute.xlu0 %6696
      %6698 = vrot.lane.b32.xlu0 %v6671, 49
      %v6699 = vpop.permute.xlu0 %6698
      %6700 = vrot.lane.b32.xlu0 %v6672, 49
      %v6701 = vpop.permute.xlu0 %6700
      %6702 = vrot.lane.b32.xlu0 %v6673, 49
      %v6703 = vpop.permute.xlu0 %6702
      %6704 = vrot.lane.b32.xlu0 %v6674, 49
      %v6705 = vpop.permute.xlu0 %6704
      %6706 = vrot.lane.b32.xlu0 %v6675, 49
      %v6707 = vpop.permute.xlu0 %6706
      %6708 = vrot.lane.b32.xlu0 %v6676, 49
      %v6709 = vpop.permute.xlu0 %6708
      %6710 = vrot.lane.b32.xlu0 %v6677, 49
      %v6711 = vpop.permute.xlu0 %6710
      %6712 = vrot.lane.b32.xlu0 %v6678, 49
      %v6713 = vpop.permute.xlu0 %6712
      %6714 = vrot.lane.b32.xlu0 %v6679, 49
      %v6715 = vpop.permute.xlu0 %6714
      %v6716 = vsel %vm2087, %v6693, %v6695
      %v6717 = vsel %vm2087, %v6695, %v6697
      %v6718 = vsel %vm2087, %v6699, %v6701
      %v6719 = vsel %vm2087, %v6701, %v6703
      %v6720 = vsel %vm2087, %v6705, %v6707
      %v6721 = vsel %vm2087, %v6707, %v6709
      %v6722 = vsel %vm2087, %v6711, %v6713
      %v6723 = vsel %vm2087, %v6713, %v6715
      %v6732 = vadd.f32 %v6624, %v6716
      %v6733 = vadd.f32 %v6625, %v6717
      %v6734 = vadd.f32 %v6626, %v6718
      %v6735 = vadd.f32 %v6627, %v6719
      %v6736 = vadd.f32 %v6628, %v6720
      %v6737 = vadd.f32 %v6629, %v6721
      %v6738 = vadd.f32 %v6630, %v6722
      %v6739 = vadd.f32 %v6631, %v6723
      %6740 = vrot.lane.b32.xlu0 %v3760, 82
      %v6741 = vpop.permute.xlu0 %6740
      %6742 = vrot.lane.b32.xlu0 %v3761, 82
      %v6743 = vpop.permute.xlu0 %6742
      %vm6744 = vcmask 670720
      %v6745 = vsel %vm6744, %v6741, %v6743
      %v6749 = vmul.f32 %v5354, %v6741
      %v6750 = vmul.f32 %v5355, %v6745
      %v6751 = vmul.f32 %v5356, %v6743
      %v6752 = vmul.f32 %v5357, %v6741
      %v6753 = vmul.f32 %v5358, %v6745
      %v6754 = vmul.f32 %v5359, %v6743
      %v6755 = vmul.f32 %v5360, %v6741
      %v6756 = vmul.f32 %v5361, %v6745
      %v6757 = vmul.f32 %v5362, %v6743
      %v6758 = vmul.f32 %v5363, %v6741
      %v6759 = vmul.f32 %v5364, %v6745
      %v6760 = vmul.f32 %v5365, %v6743
      %6761 = vset.pattern.permute.xlu0 34
      %6762 = vperm.xlu0 %6761, %v3136
      %v6763 = vpop.permute.xlu0 %6762
      %6765 = vset.pattern.permute.xlu0 34
      %6766 = vperm.xlu0 %6765, %v3137
      %v6767 = vpop.permute.xlu0 %6766
      %6769 = vset.pattern.permute.xlu0 34
      %6770 = vperm.xlu0 %6769, %v3138
      %v6771 = vpop.permute.xlu0 %6770
      %6773 = vset.pattern.permute.xlu0 34
      %6774 = vperm.xlu0 %6773, %v3139
      %v6775 = vpop.permute.xlu0 %6774
      %v6777 = vmul.f32 %v6749, %v6763
      %v6778 = vmul.f32 %v6750, %v6763
      %v6779 = vmul.f32 %v6751, %v6763
      %v6780 = vmul.f32 %v6752, %v6767
      %v6781 = vmul.f32 %v6753, %v6767
      %v6782 = vmul.f32 %v6754, %v6767
      %v6783 = vmul.f32 %v6755, %v6771
      %v6784 = vmul.f32 %v6756, %v6771
      %v6785 = vmul.f32 %v6757, %v6771
      %v6786 = vmul.f32 %v6758, %v6775
      %v6787 = vmul.f32 %v6759, %v6775
      %v6788 = vmul.f32 %v6760, %v6775
      %6801 = vrot.lane.b32.xlu0 %v6777, 46
      %v6802 = vpop.permute.xlu0 %6801
      %6803 = vrot.lane.b32.xlu0 %v6778, 46
      %v6804 = vpop.permute.xlu0 %6803
      %6805 = vrot.lane.b32.xlu0 %v6779, 46
      %v6806 = vpop.permute.xlu0 %6805
      %6807 = vrot.lane.b32.xlu0 %v6780, 46
      %v6808 = vpop.permute.xlu0 %6807
      %6809 = vrot.lane.b32.xlu0 %v6781, 46
      %v6810 = vpop.permute.xlu0 %6809
      %6811 = vrot.lane.b32.xlu0 %v6782, 46
      %v6812 = vpop.permute.xlu0 %6811
      %6813 = vrot.lane.b32.xlu0 %v6783, 46
      %v6814 = vpop.permute.xlu0 %6813
      %6815 = vrot.lane.b32.xlu0 %v6784, 46
      %v6816 = vpop.permute.xlu0 %6815
      %6817 = vrot.lane.b32.xlu0 %v6785, 46
      %v6818 = vpop.permute.xlu0 %6817
      %6819 = vrot.lane.b32.xlu0 %v6786, 46
      %v6820 = vpop.permute.xlu0 %6819
      %6821 = vrot.lane.b32.xlu0 %v6787, 46
      %v6822 = vpop.permute.xlu0 %6821
      %6823 = vrot.lane.b32.xlu0 %v6788, 46
      %v6824 = vpop.permute.xlu0 %6823
      %vm6825 = vcmask 375808
      %v6826 = vsel %vm6825, %v6802, %v6804
      %v6827 = vsel %vm6825, %v6804, %v6806
      %v6828 = vsel %vm6825, %v6808, %v6810
      %v6829 = vsel %vm6825, %v6810, %v6812
      %v6830 = vsel %vm6825, %v6814, %v6816
      %v6831 = vsel %vm6825, %v6816, %v6818
      %v6832 = vsel %vm6825, %v6820, %v6822
      %v6833 = vsel %vm6825, %v6822, %v6824
      %v6842 = vadd.f32 %v6732, %v6826
      %v6843 = vadd.f32 %v6733, %v6827
      %v6844 = vadd.f32 %v6734, %v6828
      %v6845 = vadd.f32 %v6735, %v6829
      %v6846 = vadd.f32 %v6736, %v6830
      %v6847 = vadd.f32 %v6737, %v6831
      %v6848 = vadd.f32 %v6738, %v6832
      %v6849 = vadd.f32 %v6739, %v6833
      %6850 = vrot.lane.b32.xlu0 %v3160, 112
      %v6851 = vpop.permute.xlu0 %6850
      %6852 = vrot.lane.b32.xlu0 %v3161, 112
      %v6853 = vpop.permute.xlu0 %6852
      %v6854 = vsel %vm1000, %v6851, %v6853
      %v6858 = vmul.f32 %v5354, %v6851
      %v6859 = vmul.f32 %v5355, %v6854
      %v6860 = vmul.f32 %v5356, %v6853
      %v6861 = vmul.f32 %v5357, %v6851
      %v6862 = vmul.f32 %v5358, %v6854
      %v6863 = vmul.f32 %v5359, %v6853
      %v6864 = vmul.f32 %v5360, %v6851
      %v6865 = vmul.f32 %v5361, %v6854
      %v6866 = vmul.f32 %v5362, %v6853
      %v6867 = vmul.f32 %v5363, %v6851
      %v6868 = vmul.f32 %v5364, %v6854
      %v6869 = vmul.f32 %v5365, %v6853
      %6870 = vset.pattern.permute.xlu0 35
      %6871 = vperm.xlu0 %6870, %v3136
      %v6872 = vpop.permute.xlu0 %6871
      %6874 = vset.pattern.permute.xlu0 35
      %6875 = vperm.xlu0 %6874, %v3137
      %v6876 = vpop.permute.xlu0 %6875
      %6878 = vset.pattern.permute.xlu0 35
      %6879 = vperm.xlu0 %6878, %v3138
      %v6880 = vpop.permute.xlu0 %6879
      %6882 = vset.pattern.permute.xlu0 35
      %6883 = vperm.xlu0 %6882, %v3139
      %v6884 = vpop.permute.xlu0 %6883
      %v6886 = vmul.f32 %v6858, %v6872
      %v6887 = vmul.f32 %v6859, %v6872
      %v6888 = vmul.f32 %v6860, %v6872
      %v6889 = vmul.f32 %v6861, %v6876
      %v6890 = vmul.f32 %v6862, %v6876
      %v6891 = vmul.f32 %v6863, %v6876
      %v6892 = vmul.f32 %v6864, %v6880
      %v6893 = vmul.f32 %v6865, %v6880
      %v6894 = vmul.f32 %v6866, %v6880
      %v6895 = vmul.f32 %v6867, %v6884
      %v6896 = vmul.f32 %v6868, %v6884
      %v6897 = vmul.f32 %v6869, %v6884
      %6910 = vrot.lane.b32.xlu0 %v6886, 16
      %v6911 = vpop.permute.xlu0 %6910
      %6912 = vrot.lane.b32.xlu0 %v6887, 16
      %v6913 = vpop.permute.xlu0 %6912
      %6914 = vrot.lane.b32.xlu0 %v6888, 16
      %v6915 = vpop.permute.xlu0 %6914
      %6916 = vrot.lane.b32.xlu0 %v6889, 16
      %v6917 = vpop.permute.xlu0 %6916
      %6918 = vrot.lane.b32.xlu0 %v6890, 16
      %v6919 = vpop.permute.xlu0 %6918
      %6920 = vrot.lane.b32.xlu0 %v6891, 16
      %v6921 = vpop.permute.xlu0 %6920
      %6922 = vrot.lane.b32.xlu0 %v6892, 16
      %v6923 = vpop.permute.xlu0 %6922
      %6924 = vrot.lane.b32.xlu0 %v6893, 16
      %v6925 = vpop.permute.xlu0 %6924
      %6926 = vrot.lane.b32.xlu0 %v6894, 16
      %v6927 = vpop.permute.xlu0 %6926
      %6928 = vrot.lane.b32.xlu0 %v6895, 16
      %v6929 = vpop.permute.xlu0 %6928
      %6930 = vrot.lane.b32.xlu0 %v6896, 16
      %v6931 = vpop.permute.xlu0 %6930
      %6932 = vrot.lane.b32.xlu0 %v6897, 16
      %v6933 = vpop.permute.xlu0 %6932
      %v6934 = vsel %vm919, %v6911, %v6913
      %v6935 = vsel %vm919, %v6913, %v6915
      %v6936 = vsel %vm919, %v6917, %v6919
      %v6937 = vsel %vm919, %v6919, %v6921
      %v6938 = vsel %vm919, %v6923, %v6925
      %v6939 = vsel %vm919, %v6925, %v6927
      %v6940 = vsel %vm919, %v6929, %v6931
      %v6941 = vsel %vm919, %v6931, %v6933
      %v6950 = vadd.f32 %v6842, %v6934
      %v6951 = vadd.f32 %v6843, %v6935
      %v6952 = vadd.f32 %v6844, %v6936
      %v6953 = vadd.f32 %v6845, %v6937
      %v6954 = vadd.f32 %v6846, %v6938
      %v6955 = vadd.f32 %v6847, %v6939
      %v6956 = vadd.f32 %v6848, %v6940
      %v6957 = vadd.f32 %v6849, %v6941
      %6958 = vrot.lane.b32.xlu0 %v3221, 115
      %v6959 = vpop.permute.xlu0 %6958
      %6960 = vrot.lane.b32.xlu0 %v3222, 115
      %v6961 = vpop.permute.xlu0 %6960
      %vm6962 = vcmask 941056
      %v6963 = vsel %vm6962, %v6959, %v6961
      %v6967 = vmul.f32 %v5354, %v6959
      %v6968 = vmul.f32 %v5355, %v6963
      %v6969 = vmul.f32 %v5356, %v6961
      %v6970 = vmul.f32 %v5357, %v6959
      %v6971 = vmul.f32 %v5358, %v6963
      %v6972 = vmul.f32 %v5359, %v6961
      %v6973 = vmul.f32 %v5360, %v6959
      %v6974 = vmul.f32 %v5361, %v6963
      %v6975 = vmul.f32 %v5362, %v6961
      %v6976 = vmul.f32 %v5363, %v6959
      %v6977 = vmul.f32 %v5364, %v6963
      %v6978 = vmul.f32 %v5365, %v6961
      %6979 = vset.pattern.permute.xlu0 36
      %6980 = vperm.xlu0 %6979, %v3136
      %v6981 = vpop.permute.xlu0 %6980
      %6983 = vset.pattern.permute.xlu0 36
      %6984 = vperm.xlu0 %6983, %v3137
      %v6985 = vpop.permute.xlu0 %6984
      %6987 = vset.pattern.permute.xlu0 36
      %6988 = vperm.xlu0 %6987, %v3138
      %v6989 = vpop.permute.xlu0 %6988
      %6991 = vset.pattern.permute.xlu0 36
      %6992 = vperm.xlu0 %6991, %v3139
      %v6993 = vpop.permute.xlu0 %6992
      %v6995 = vmul.f32 %v6967, %v6981
      %v6996 = vmul.f32 %v6968, %v6981
      %v6997 = vmul.f32 %v6969, %v6981
      %v6998 = vmul.f32 %v6970, %v6985
      %v6999 = vmul.f32 %v6971, %v6985
      %v7000 = vmul.f32 %v6972, %v6985
      %v7001 = vmul.f32 %v6973, %v6989
      %v7002 = vmul.f32 %v6974, %v6989
      %v7003 = vmul.f32 %v6975, %v6989
      %v7004 = vmul.f32 %v6976, %v6993
      %v7005 = vmul.f32 %v6977, %v6993
      %v7006 = vmul.f32 %v6978, %v6993
      %7019 = vrot.lane.b32.xlu0 %v6995, 13
      %v7020 = vpop.permute.xlu0 %7019
      %7021 = vrot.lane.b32.xlu0 %v6996, 13
      %v7022 = vpop.permute.xlu0 %7021
      %7023 = vrot.lane.b32.xlu0 %v6997, 13
      %v7024 = vpop.permute.xlu0 %7023
      %7025 = vrot.lane.b32.xlu0 %v6998, 13
      %v7026 = vpop.permute.xlu0 %7025
      %7027 = vrot.lane.b32.xlu0 %v6999, 13
      %v7028 = vpop.permute.xlu0 %7027
      %7029 = vrot.lane.b32.xlu0 %v7000, 13
      %v7030 = vpop.permute.xlu0 %7029
      %7031 = vrot.lane.b32.xlu0 %v7001, 13
      %v7032 = vpop.permute.xlu0 %7031
      %7033 = vrot.lane.b32.xlu0 %v7002, 13
      %v7034 = vpop.permute.xlu0 %7033
      %7035 = vrot.lane.b32.xlu0 %v7003, 13
      %v7036 = vpop.permute.xlu0 %7035
      %7037 = vrot.lane.b32.xlu0 %v7004, 13
      %v7038 = vpop.permute.xlu0 %7037
      %7039 = vrot.lane.b32.xlu0 %v7005, 13
      %v7040 = vpop.permute.xlu0 %7039
      %7041 = vrot.lane.b32.xlu0 %v7006, 13
      %v7042 = vpop.permute.xlu0 %7041
      %vm7043 = vcmask 105472
      %v7044 = vsel %vm7043, %v7020, %v7022
      %v7045 = vsel %vm7043, %v7022, %v7024
      %v7046 = vsel %vm7043, %v7026, %v7028
      %v7047 = vsel %vm7043, %v7028, %v7030
      %v7048 = vsel %vm7043, %v7032, %v7034
      %v7049 = vsel %vm7043, %v7034, %v7036
      %v7050 = vsel %vm7043, %v7038, %v7040
      %v7051 = vsel %vm7043, %v7040, %v7042
      %v7060 = vadd.f32 %v6950, %v7044
      %v7061 = vadd.f32 %v6951, %v7045
      %v7062 = vadd.f32 %v6952, %v7046
      %v7063 = vadd.f32 %v6953, %v7047
      %v7064 = vadd.f32 %v6954, %v7048
      %v7065 = vadd.f32 %v6955, %v7049
      %v7066 = vadd.f32 %v6956, %v7050
      %v7067 = vadd.f32 %v6957, %v7051
      %7068 = vrot.lane.b32.xlu0 %v3332, 118
      %v7069 = vpop.permute.xlu0 %7068
      %7070 = vrot.lane.b32.xlu0 %v3333, 118
      %v7071 = vpop.permute.xlu0 %7070
      %vm7072 = vcmask 965632
      %v7073 = vsel %vm7072, %v7069, %v7071
      %v7077 = vmul.f32 %v5354, %v7069
      %v7078 = vmul.f32 %v5355, %v7073
      %v7079 = vmul.f32 %v5356, %v7071
      %v7080 = vmul.f32 %v5357, %v7069
      %v7081 = vmul.f32 %v5358, %v7073
      %v7082 = vmul.f32 %v5359, %v7071
      %v7083 = vmul.f32 %v5360, %v7069
      %v7084 = vmul.f32 %v5361, %v7073
      %v7085 = vmul.f32 %v5362, %v7071
      %v7086 = vmul.f32 %v5363, %v7069
      %v7087 = vmul.f32 %v5364, %v7073
      %v7088 = vmul.f32 %v5365, %v7071
      %7089 = vset.pattern.permute.xlu0 37
      %7090 = vperm.xlu0 %7089, %v3136
      %v7091 = vpop.permute.xlu0 %7090
      %7093 = vset.pattern.permute.xlu0 37
      %7094 = vperm.xlu0 %7093, %v3137
      %v7095 = vpop.permute.xlu0 %7094
      %7097 = vset.pattern.permute.xlu0 37
      %7098 = vperm.xlu0 %7097, %v3138
      %v7099 = vpop.permute.xlu0 %7098
      %7101 = vset.pattern.permute.xlu0 37
      %7102 = vperm.xlu0 %7101, %v3139
      %v7103 = vpop.permute.xlu0 %7102
      %v7105 = vmul.f32 %v7077, %v7091
      %v7106 = vmul.f32 %v7078, %v7091
      %v7107 = vmul.f32 %v7079, %v7091
      %v7108 = vmul.f32 %v7080, %v7095
      %v7109 = vmul.f32 %v7081, %v7095
      %v7110 = vmul.f32 %v7082, %v7095
      %v7111 = vmul.f32 %v7083, %v7099
      %v7112 = vmul.f32 %v7084, %v7099
      %v7113 = vmul.f32 %v7085, %v7099
      %v7114 = vmul.f32 %v7086, %v7103
      %v7115 = vmul.f32 %v7087, %v7103
      %v7116 = vmul.f32 %v7088, %v7103
      %7129 = vrot.lane.b32.xlu0 %v7105, 10
      %v7130 = vpop.permute.xlu0 %7129
      %7131 = vrot.lane.b32.xlu0 %v7106, 10
      %v7132 = vpop.permute.xlu0 %7131
      %7133 = vrot.lane.b32.xlu0 %v7107, 10
      %v7134 = vpop.permute.xlu0 %7133
      %7135 = vrot.lane.b32.xlu0 %v7108, 10
      %v7136 = vpop.permute.xlu0 %7135
      %7137 = vrot.lane.b32.xlu0 %v7109, 10
      %v7138 = vpop.permute.xlu0 %7137
      %7139 = vrot.lane.b32.xlu0 %v7110, 10
      %v7140 = vpop.permute.xlu0 %7139
      %7141 = vrot.lane.b32.xlu0 %v7111, 10
      %v7142 = vpop.permute.xlu0 %7141
      %7143 = vrot.lane.b32.xlu0 %v7112, 10
      %v7144 = vpop.permute.xlu0 %7143
      %7145 = vrot.lane.b32.xlu0 %v7113, 10
      %v7146 = vpop.permute.xlu0 %7145
      %7147 = vrot.lane.b32.xlu0 %v7114, 10
      %v7148 = vpop.permute.xlu0 %7147
      %7149 = vrot.lane.b32.xlu0 %v7115, 10
      %v7150 = vpop.permute.xlu0 %7149
      %7151 = vrot.lane.b32.xlu0 %v7116, 10
      %v7152 = vpop.permute.xlu0 %7151
      %vm7153 = vcmask 80896
      %v7154 = vsel %vm7153, %v7130, %v7132
      %v7155 = vsel %vm7153, %v7132, %v7134
      %v7156 = vsel %vm7153, %v7136, %v7138
      %v7157 = vsel %vm7153, %v7138, %v7140
      %v7158 = vsel %vm7153, %v7142, %v7144
      %v7159 = vsel %vm7153, %v7144, %v7146
      %v7160 = vsel %vm7153, %v7148, %v7150
      %v7161 = vsel %vm7153, %v7150, %v7152
      %v7170 = vadd.f32 %v7060, %v7154
      %v7171 = vadd.f32 %v7061, %v7155
      %v7172 = vadd.f32 %v7062, %v7156
      %v7173 = vadd.f32 %v7063, %v7157
      %v7174 = vadd.f32 %v7064, %v7158
      %v7175 = vadd.f32 %v7065, %v7159
      %v7176 = vadd.f32 %v7066, %v7160
      %v7177 = vadd.f32 %v7067, %v7161
      %7178 = vset.pattern.permute.xlu0 38
      %7179 = vperm.xlu0 %7178, %v3136
      %v7180 = vpop.permute.xlu0 %7179
      %7182 = vset.pattern.permute.xlu0 38
      %7183 = vperm.xlu0 %7182, %v3137
      %v7184 = vpop.permute.xlu0 %7183
      %7186 = vset.pattern.permute.xlu0 38
      %7187 = vperm.xlu0 %7186, %v3138
      %v7188 = vpop.permute.xlu0 %7187
      %7190 = vset.pattern.permute.xlu0 38
      %7191 = vperm.xlu0 %7190, %v3139
      %v7192 = vpop.permute.xlu0 %7191
      %v7194 = vmul.f32 %v5354, %v7180
      %v7195 = vmul.f32 %v5355, %v7180
      %v7196 = vmul.f32 %v5356, %v7180
      %v7197 = vmul.f32 %v5357, %v7184
      %v7198 = vmul.f32 %v5358, %v7184
      %v7199 = vmul.f32 %v5359, %v7184
      %v7200 = vmul.f32 %v5360, %v7188
      %v7201 = vmul.f32 %v5361, %v7188
      %v7202 = vmul.f32 %v5362, %v7188
      %v7203 = vmul.f32 %v5363, %v7192
      %v7204 = vmul.f32 %v5364, %v7192
      %v7205 = vmul.f32 %v5365, %v7192
      %7218 = vrot.lane.b32.xlu0 %v7194, 7
      %v7219 = vpop.permute.xlu0 %7218
      %7220 = vrot.lane.b32.xlu0 %v7195, 7
      %v7221 = vpop.permute.xlu0 %7220
      %7222 = vrot.lane.b32.xlu0 %v7196, 7
      %v7223 = vpop.permute.xlu0 %7222
      %7224 = vrot.lane.b32.xlu0 %v7197, 7
      %v7225 = vpop.permute.xlu0 %7224
      %7226 = vrot.lane.b32.xlu0 %v7198, 7
      %v7227 = vpop.permute.xlu0 %7226
      %7228 = vrot.lane.b32.xlu0 %v7199, 7
      %v7229 = vpop.permute.xlu0 %7228
      %7230 = vrot.lane.b32.xlu0 %v7200, 7
      %v7231 = vpop.permute.xlu0 %7230
      %7232 = vrot.lane.b32.xlu0 %v7201, 7
      %v7233 = vpop.permute.xlu0 %7232
      %7234 = vrot.lane.b32.xlu0 %v7202, 7
      %v7235 = vpop.permute.xlu0 %7234
      %7236 = vrot.lane.b32.xlu0 %v7203, 7
      %v7237 = vpop.permute.xlu0 %7236
      %7238 = vrot.lane.b32.xlu0 %v7204, 7
      %v7239 = vpop.permute.xlu0 %7238
      %7240 = vrot.lane.b32.xlu0 %v7205, 7
      %v7241 = vpop.permute.xlu0 %7240
      %vm7242 = vcmask 56320
      %v7243 = vsel %vm7242, %v7219, %v7221
      %v7244 = vsel %vm7242, %v7221, %v7223
      %v7245 = vsel %vm7242, %v7225, %v7227
      %v7246 = vsel %vm7242, %v7227, %v7229
      %v7247 = vsel %vm7242, %v7231, %v7233
      %v7248 = vsel %vm7242, %v7233, %v7235
      %v7249 = vsel %vm7242, %v7237, %v7239
      %v7250 = vsel %vm7242, %v7239, %v7241
      %v7259 = vadd.f32 %v7170, %v7243
      %v7260 = vadd.f32 %v7171, %v7244
      %v7261 = vadd.f32 %v7172, %v7245
      %v7262 = vadd.f32 %v7173, %v7246
      %v7263 = vadd.f32 %v7174, %v7247
      %v7264 = vadd.f32 %v7175, %v7248
      %v7265 = vadd.f32 %v7176, %v7249
      %v7266 = vadd.f32 %v7177, %v7250
      %7267 = vrot.lane.b32.xlu0 %v3534, 124
      %v7268 = vpop.permute.xlu0 %7267
      %7269 = vrot.lane.b32.xlu0 %v3535, 124
      %v7270 = vpop.permute.xlu0 %7269
      %v7271 = vsel %vm890, %v7268, %v7270
      %v7275 = vmul.f32 %v5354, %v7268
      %v7276 = vmul.f32 %v5355, %v7271
      %v7277 = vmul.f32 %v5356, %v7270
      %v7278 = vmul.f32 %v5357, %v7268
      %v7279 = vmul.f32 %v5358, %v7271
      %v7280 = vmul.f32 %v5359, %v7270
      %v7281 = vmul.f32 %v5360, %v7268
      %v7282 = vmul.f32 %v5361, %v7271
      %v7283 = vmul.f32 %v5362, %v7270
      %v7284 = vmul.f32 %v5363, %v7268
      %v7285 = vmul.f32 %v5364, %v7271
      %v7286 = vmul.f32 %v5365, %v7270
      %7287 = vset.pattern.permute.xlu0 39
      %7288 = vperm.xlu0 %7287, %v3136
      %v7289 = vpop.permute.xlu0 %7288
      %7291 = vset.pattern.permute.xlu0 39
      %7292 = vperm.xlu0 %7291, %v3137
      %v7293 = vpop.permute.xlu0 %7292
      %7295 = vset.pattern.permute.xlu0 39
      %7296 = vperm.xlu0 %7295, %v3138
      %v7297 = vpop.permute.xlu0 %7296
      %7299 = vset.pattern.permute.xlu0 39
      %7300 = vperm.xlu0 %7299, %v3139
      %v7301 = vpop.permute.xlu0 %7300
      %v7303 = vmul.f32 %v7275, %v7289
      %v7304 = vmul.f32 %v7276, %v7289
      %v7305 = vmul.f32 %v7277, %v7289
      %v7306 = vmul.f32 %v7278, %v7293
      %v7307 = vmul.f32 %v7279, %v7293
      %v7308 = vmul.f32 %v7280, %v7293
      %v7309 = vmul.f32 %v7281, %v7297
      %v7310 = vmul.f32 %v7282, %v7297
      %v7311 = vmul.f32 %v7283, %v7297
      %v7312 = vmul.f32 %v7284, %v7301
      %v7313 = vmul.f32 %v7285, %v7301
      %v7314 = vmul.f32 %v7286, %v7301
      %7327 = vrot.lane.b32.xlu0 %v7303, 4
      %v7328 = vpop.permute.xlu0 %7327
      %7329 = vrot.lane.b32.xlu0 %v7304, 4
      %v7330 = vpop.permute.xlu0 %7329
      %7331 = vrot.lane.b32.xlu0 %v7305, 4
      %v7332 = vpop.permute.xlu0 %7331
      %7333 = vrot.lane.b32.xlu0 %v7306, 4
      %v7334 = vpop.permute.xlu0 %7333
      %7335 = vrot.lane.b32.xlu0 %v7307, 4
      %v7336 = vpop.permute.xlu0 %7335
      %7337 = vrot.lane.b32.xlu0 %v7308, 4
      %v7338 = vpop.permute.xlu0 %7337
      %7339 = vrot.lane.b32.xlu0 %v7309, 4
      %v7340 = vpop.permute.xlu0 %7339
      %7341 = vrot.lane.b32.xlu0 %v7310, 4
      %v7342 = vpop.permute.xlu0 %7341
      %7343 = vrot.lane.b32.xlu0 %v7311, 4
      %v7344 = vpop.permute.xlu0 %7343
      %7345 = vrot.lane.b32.xlu0 %v7312, 4
      %v7346 = vpop.permute.xlu0 %7345
      %7347 = vrot.lane.b32.xlu0 %v7313, 4
      %v7348 = vpop.permute.xlu0 %7347
      %7349 = vrot.lane.b32.xlu0 %v7314, 4
      %v7350 = vpop.permute.xlu0 %7349
      %v7351 = vsel %vm809, %v7328, %v7330
      %v7352 = vsel %vm809, %v7330, %v7332
      %v7353 = vsel %vm809, %v7334, %v7336
      %v7354 = vsel %vm809, %v7336, %v7338
      %v7355 = vsel %vm809, %v7340, %v7342
      %v7356 = vsel %vm809, %v7342, %v7344
      %v7357 = vsel %vm809, %v7346, %v7348
      %v7358 = vsel %vm809, %v7348, %v7350
      %v7367 = vadd.f32 %v7259, %v7351
      %v7368 = vadd.f32 %v7260, %v7352
      %v7369 = vadd.f32 %v7261, %v7353
      %v7370 = vadd.f32 %v7262, %v7354
      %v7371 = vadd.f32 %v7263, %v7355
      %v7372 = vadd.f32 %v7264, %v7356
      %v7373 = vadd.f32 %v7265, %v7357
      %v7374 = vadd.f32 %v7266, %v7358
      %7375 = vrot.lane.b32.xlu0 %v3647, 127
      %v7376 = vpop.permute.xlu0 %7375
      %7377 = vrot.lane.b32.xlu0 %v3648, 127
      %v7378 = vpop.permute.xlu0 %7377
      %v7379 = vsel %vm575, %v7376, %v7378
      %v7383 = vmul.f32 %v5354, %v7376
      %v7384 = vmul.f32 %v5355, %v7379
      %v7385 = vmul.f32 %v5356, %v7378
      %v7386 = vmul.f32 %v5357, %v7376
      %v7387 = vmul.f32 %v5358, %v7379
      %v7388 = vmul.f32 %v5359, %v7378
      %v7389 = vmul.f32 %v5360, %v7376
      %v7390 = vmul.f32 %v5361, %v7379
      %v7391 = vmul.f32 %v5362, %v7378
      %v7392 = vmul.f32 %v5363, %v7376
      %v7393 = vmul.f32 %v5364, %v7379
      %v7394 = vmul.f32 %v5365, %v7378
      %7395 = vset.pattern.permute.xlu0 40
      %7396 = vperm.xlu0 %7395, %v3136
      %v7397 = vpop.permute.xlu0 %7396
      %7399 = vset.pattern.permute.xlu0 40
      %7400 = vperm.xlu0 %7399, %v3137
      %v7401 = vpop.permute.xlu0 %7400
      %7403 = vset.pattern.permute.xlu0 40
      %7404 = vperm.xlu0 %7403, %v3138
      %v7405 = vpop.permute.xlu0 %7404
      %7407 = vset.pattern.permute.xlu0 40
      %7408 = vperm.xlu0 %7407, %v3139
      %v7409 = vpop.permute.xlu0 %7408
      %v7411 = vmul.f32 %v7383, %v7397
      %v7412 = vmul.f32 %v7384, %v7397
      %v7413 = vmul.f32 %v7385, %v7397
      %v7414 = vmul.f32 %v7386, %v7401
      %v7415 = vmul.f32 %v7387, %v7401
      %v7416 = vmul.f32 %v7388, %v7401
      %v7417 = vmul.f32 %v7389, %v7405
      %v7418 = vmul.f32 %v7390, %v7405
      %v7419 = vmul.f32 %v7391, %v7405
      %v7420 = vmul.f32 %v7392, %v7409
      %v7421 = vmul.f32 %v7393, %v7409
      %v7422 = vmul.f32 %v7394, %v7409
      %7435 = vrot.lane.b32.xlu0 %v7411, 1
      %v7436 = vpop.permute.xlu0 %7435
      %7437 = vrot.lane.b32.xlu0 %v7412, 1
      %v7438 = vpop.permute.xlu0 %7437
      %7439 = vrot.lane.b32.xlu0 %v7413, 1
      %v7440 = vpop.permute.xlu0 %7439
      %7441 = vrot.lane.b32.xlu0 %v7414, 1
      %v7442 = vpop.permute.xlu0 %7441
      %7443 = vrot.lane.b32.xlu0 %v7415, 1
      %v7444 = vpop.permute.xlu0 %7443
      %7445 = vrot.lane.b32.xlu0 %v7416, 1
      %v7446 = vpop.permute.xlu0 %7445
      %7447 = vrot.lane.b32.xlu0 %v7417, 1
      %v7448 = vpop.permute.xlu0 %7447
      %7449 = vrot.lane.b32.xlu0 %v7418, 1
      %v7450 = vpop.permute.xlu0 %7449
      %7451 = vrot.lane.b32.xlu0 %v7419, 1
      %v7452 = vpop.permute.xlu0 %7451
      %7453 = vrot.lane.b32.xlu0 %v7420, 1
      %v7454 = vpop.permute.xlu0 %7453
      %7455 = vrot.lane.b32.xlu0 %v7421, 1
      %v7456 = vpop.permute.xlu0 %7455
      %7457 = vrot.lane.b32.xlu0 %v7422, 1
      %v7458 = vpop.permute.xlu0 %7457
      %v7459 = vsel %vm494, %v7436, %v7438
      %v7460 = vsel %vm494, %v7438, %v7440
      %v7461 = vsel %vm494, %v7442, %v7444
      %v7462 = vsel %vm494, %v7444, %v7446
      %v7463 = vsel %vm494, %v7448, %v7450
      %v7464 = vsel %vm494, %v7450, %v7452
      %v7465 = vsel %vm494, %v7454, %v7456
      %v7466 = vsel %vm494, %v7456, %v7458
      %v7475 = vadd.f32 %v7367, %v7459
      %v7476 = vadd.f32 %v7368, %v7460
      %v7477 = vadd.f32 %v7369, %v7461
      %v7478 = vadd.f32 %v7370, %v7462
      %v7479 = vadd.f32 %v7371, %v7463
      %v7480 = vadd.f32 %v7372, %v7464
      %v7481 = vadd.f32 %v7373, %v7465
      %v7482 = vadd.f32 %v7374, %v7466
      %v7483 = vld [vmem:[#allocation3 + $0x10] sm:$0xff]
      %v7484 = vld [vmem:[#allocation3 + $0x18] sm:$0xff]
      %v7485 = vld [vmem:[#allocation3 + $0x20] sm:$0xff]
      %v7486 = vld [vmem:[#allocation3 + $0x38] sm:$0xff]
      %v7487 = vld [vmem:[#allocation3 + $0x40] sm:$0xff]
      %v7488 = vld [vmem:[#allocation3 + $0x48] sm:$0xff]
      %v7489 = vld [vmem:[#allocation3 + $0x60] sm:$0xff]
      %v7490 = vld [vmem:[#allocation3 + $0x68] sm:$0xff]
      %v7491 = vld [vmem:[#allocation3 + $0x70] sm:$0xff]
      %v7492 = vld [vmem:[#allocation3 + $0x88] sm:$0xff]
      %v7493 = vld [vmem:[#allocation3 + $0x90] sm:$0xff]
      %v7494 = vld [vmem:[#allocation3 + $0x98] sm:$0xff]
      %7495 = vrot.lane.b32.xlu0 %v3760, 2
      %v7496 = vpop.permute.xlu0 %7495
      %7497 = vrot.lane.b32.xlu0 %v3761, 2
      %v7498 = vpop.permute.xlu0 %7497
      %vm7499 = vcmask 15360
      %v7500 = vsel %vm7499, %v7496, %v7498
      %v7504 = vmul.f32 %v7483, %v7496
      %v7505 = vmul.f32 %v7484, %v7500
      %v7506 = vmul.f32 %v7485, %v7498
      %v7507 = vmul.f32 %v7486, %v7496
      %v7508 = vmul.f32 %v7487, %v7500
      %v7509 = vmul.f32 %v7488, %v7498
      %v7510 = vmul.f32 %v7489, %v7496
      %v7511 = vmul.f32 %v7490, %v7500
      %v7512 = vmul.f32 %v7491, %v7498
      %v7513 = vmul.f32 %v7492, %v7496
      %v7514 = vmul.f32 %v7493, %v7500
      %v7515 = vmul.f32 %v7494, %v7498
      %7516 = vset.pattern.permute.xlu0 41
      %7517 = vperm.xlu0 %7516, %v3136
      %v7518 = vpop.permute.xlu0 %7517
      %7520 = vset.pattern.permute.xlu0 41
      %7521 = vperm.xlu0 %7520, %v3137
      %v7522 = vpop.permute.xlu0 %7521
      %7524 = vset.pattern.permute.xlu0 41
      %7525 = vperm.xlu0 %7524, %v3138
      %v7526 = vpop.permute.xlu0 %7525
      %7528 = vset.pattern.permute.xlu0 41
      %7529 = vperm.xlu0 %7528, %v3139
      %v7530 = vpop.permute.xlu0 %7529
      %v7532 = vmul.f32 %v7504, %v7518
      %v7533 = vmul.f32 %v7505, %v7518
      %v7534 = vmul.f32 %v7506, %v7518
      %v7535 = vmul.f32 %v7507, %v7522
      %v7536 = vmul.f32 %v7508, %v7522
      %v7537 = vmul.f32 %v7509, %v7522
      %v7538 = vmul.f32 %v7510, %v7526
      %v7539 = vmul.f32 %v7511, %v7526
      %v7540 = vmul.f32 %v7512, %v7526
      %v7541 = vmul.f32 %v7513, %v7530
      %v7542 = vmul.f32 %v7514, %v7530
      %v7543 = vmul.f32 %v7515, %v7530
      %7556 = vrot.lane.b32.xlu0 %v7532, 126
      %v7557 = vpop.permute.xlu0 %7556
      %7558 = vrot.lane.b32.xlu0 %v7533, 126
      %v7559 = vpop.permute.xlu0 %7558
      %7560 = vrot.lane.b32.xlu0 %v7534, 126
      %v7561 = vpop.permute.xlu0 %7560
      %7562 = vrot.lane.b32.xlu0 %v7535, 126
      %v7563 = vpop.permute.xlu0 %7562
      %7564 = vrot.lane.b32.xlu0 %v7536, 126
      %v7565 = vpop.permute.xlu0 %7564
      %7566 = vrot.lane.b32.xlu0 %v7537, 126
      %v7567 = vpop.permute.xlu0 %7566
      %7568 = vrot.lane.b32.xlu0 %v7538, 126
      %v7569 = vpop.permute.xlu0 %7568
      %7570 = vrot.lane.b32.xlu0 %v7539, 126
      %v7571 = vpop.permute.xlu0 %7570
      %7572 = vrot.lane.b32.xlu0 %v7540, 126
      %v7573 = vpop.permute.xlu0 %7572
      %7574 = vrot.lane.b32.xlu0 %v7541, 126
      %v7575 = vpop.permute.xlu0 %7574
      %7576 = vrot.lane.b32.xlu0 %v7542, 126
      %v7577 = vpop.permute.xlu0 %7576
      %7578 = vrot.lane.b32.xlu0 %v7543, 126
      %v7579 = vpop.permute.xlu0 %7578
      %v7580 = vsel %vm664, %v7557, %v7559
      %v7581 = vsel %vm664, %v7559, %v7561
      %v7582 = vsel %vm664, %v7563, %v7565
      %v7583 = vsel %vm664, %v7565, %v7567
      %v7584 = vsel %vm664, %v7569, %v7571
      %v7585 = vsel %vm664, %v7571, %v7573
      %v7586 = vsel %vm664, %v7575, %v7577
      %v7587 = vsel %vm664, %v7577, %v7579
      %v7596 = vadd.f32 %v7475, %v7580
      %v7597 = vadd.f32 %v7476, %v7581
      %v7598 = vadd.f32 %v7477, %v7582
      %v7599 = vadd.f32 %v7478, %v7583
      %v7600 = vadd.f32 %v7479, %v7584
      %v7601 = vadd.f32 %v7480, %v7585
      %v7602 = vadd.f32 %v7481, %v7586
      %v7603 = vadd.f32 %v7482, %v7587
      %7604 = vrot.lane.b32.xlu0 %v3160, 32
      %v7605 = vpop.permute.xlu0 %7604
      %7606 = vrot.lane.b32.xlu0 %v3161, 32
      %v7607 = vpop.permute.xlu0 %7606
      %v7608 = vsel %vm1448, %v7605, %v7607
      %v7612 = vmul.f32 %v7483, %v7605
      %v7613 = vmul.f32 %v7484, %v7608
      %v7614 = vmul.f32 %v7485, %v7607
      %v7615 = vmul.f32 %v7486, %v7605
      %v7616 = vmul.f32 %v7487, %v7608
      %v7617 = vmul.f32 %v7488, %v7607
      %v7618 = vmul.f32 %v7489, %v7605
      %v7619 = vmul.f32 %v7490, %v7608
      %v7620 = vmul.f32 %v7491, %v7607
      %v7621 = vmul.f32 %v7492, %v7605
      %v7622 = vmul.f32 %v7493, %v7608
      %v7623 = vmul.f32 %v7494, %v7607
      %7624 = vset.pattern.permute.xlu0 42
      %7625 = vperm.xlu0 %7624, %v3136
      %v7626 = vpop.permute.xlu0 %7625
      %7628 = vset.pattern.permute.xlu0 42
      %7629 = vperm.xlu0 %7628, %v3137
      %v7630 = vpop.permute.xlu0 %7629
      %7632 = vset.pattern.permute.xlu0 42
      %7633 = vperm.xlu0 %7632, %v3138
      %v7634 = vpop.permute.xlu0 %7633
      %7636 = vset.pattern.permute.xlu0 42
      %7637 = vperm.xlu0 %7636, %v3139
      %v7638 = vpop.permute.xlu0 %7637
      %v7640 = vmul.f32 %v7612, %v7626
      %v7641 = vmul.f32 %v7613, %v7626
      %v7642 = vmul.f32 %v7614, %v7626
      %v7643 = vmul.f32 %v7615, %v7630
      %v7644 = vmul.f32 %v7616, %v7630
      %v7645 = vmul.f32 %v7617, %v7630
      %v7646 = vmul.f32 %v7618, %v7634
      %v7647 = vmul.f32 %v7619, %v7634
      %v7648 = vmul.f32 %v7620, %v7634
      %v7649 = vmul.f32 %v7621, %v7638
      %v7650 = vmul.f32 %v7622, %v7638
      %v7651 = vmul.f32 %v7623, %v7638
      %7664 = vrot.lane.b32.xlu0 %v7640, 96
      %v7665 = vpop.permute.xlu0 %7664
      %7666 = vrot.lane.b32.xlu0 %v7641, 96
      %v7667 = vpop.permute.xlu0 %7666
      %7668 = vrot.lane.b32.xlu0 %v7642, 96
      %v7669 = vpop.permute.xlu0 %7668
      %7670 = vrot.lane.b32.xlu0 %v7643, 96
      %v7671 = vpop.permute.xlu0 %7670
      %7672 = vrot.lane.b32.xlu0 %v7644, 96
      %v7673 = vpop.permute.xlu0 %7672
      %7674 = vrot.lane.b32.xlu0 %v7645, 96
      %v7675 = vpop.permute.xlu0 %7674
      %7676 = vrot.lane.b32.xlu0 %v7646, 96
      %v7677 = vpop.permute.xlu0 %7676
      %7678 = vrot.lane.b32.xlu0 %v7647, 96
      %v7679 = vpop.permute.xlu0 %7678
      %7680 = vrot.lane.b32.xlu0 %v7648, 96
      %v7681 = vpop.permute.xlu0 %7680
      %7682 = vrot.lane.b32.xlu0 %v7649, 96
      %v7683 = vpop.permute.xlu0 %7682
      %7684 = vrot.lane.b32.xlu0 %v7650, 96
      %v7685 = vpop.permute.xlu0 %7684
      %7686 = vrot.lane.b32.xlu0 %v7651, 96
      %v7687 = vpop.permute.xlu0 %7686
      %v7688 = vsel %vm1529, %v7665, %v7667
      %v7689 = vsel %vm1529, %v7667, %v7669
      %v7690 = vsel %vm1529, %v7671, %v7673
      %v7691 = vsel %vm1529, %v7673, %v7675
      %v7692 = vsel %vm1529, %v7677, %v7679
      %v7693 = vsel %vm1529, %v7679, %v7681
      %v7694 = vsel %vm1529, %v7683, %v7685
      %v7695 = vsel %vm1529, %v7685, %v7687
      %v7704 = vadd.f32 %v7596, %v7688
      %v7705 = vadd.f32 %v7597, %v7689
      %v7706 = vadd.f32 %v7598, %v7690
      %v7707 = vadd.f32 %v7599, %v7691
      %v7708 = vadd.f32 %v7600, %v7692
      %v7709 = vadd.f32 %v7601, %v7693
      %v7710 = vadd.f32 %v7602, %v7694
      %v7711 = vadd.f32 %v7603, %v7695
      %7712 = vrot.lane.b32.xlu0 %v3221, 35
      %v7713 = vpop.permute.xlu0 %7712
      %7714 = vrot.lane.b32.xlu0 %v3222, 35
      %v7715 = vpop.permute.xlu0 %7714
      %v7716 = vsel %vm1757, %v7713, %v7715
      %v7720 = vmul.f32 %v7483, %v7713
      %v7721 = vmul.f32 %v7484, %v7716
      %v7722 = vmul.f32 %v7485, %v7715
      %v7723 = vmul.f32 %v7486, %v7713
      %v7724 = vmul.f32 %v7487, %v7716
      %v7725 = vmul.f32 %v7488, %v7715
      %v7726 = vmul.f32 %v7489, %v7713
      %v7727 = vmul.f32 %v7490, %v7716
      %v7728 = vmul.f32 %v7491, %v7715
      %v7729 = vmul.f32 %v7492, %v7713
      %v7730 = vmul.f32 %v7493, %v7716
      %v7731 = vmul.f32 %v7494, %v7715
      %7732 = vset.pattern.permute.xlu0 43
      %7733 = vperm.xlu0 %7732, %v3136
      %v7734 = vpop.permute.xlu0 %7733
      %7736 = vset.pattern.permute.xlu0 43
      %7737 = vperm.xlu0 %7736, %v3137
      %v7738 = vpop.permute.xlu0 %7737
      %7740 = vset.pattern.permute.xlu0 43
      %7741 = vperm.xlu0 %7740, %v3138
      %v7742 = vpop.permute.xlu0 %7741
      %7744 = vset.pattern.permute.xlu0 43
      %7745 = vperm.xlu0 %7744, %v3139
      %v7746 = vpop.permute.xlu0 %7745
      %v7748 = vmul.f32 %v7720, %v7734
      %v7749 = vmul.f32 %v7721, %v7734
      %v7750 = vmul.f32 %v7722, %v7734
      %v7751 = vmul.f32 %v7723, %v7738
      %v7752 = vmul.f32 %v7724, %v7738
      %v7753 = vmul.f32 %v7725, %v7738
      %v7754 = vmul.f32 %v7726, %v7742
      %v7755 = vmul.f32 %v7727, %v7742
      %v7756 = vmul.f32 %v7728, %v7742
      %v7757 = vmul.f32 %v7729, %v7746
      %v7758 = vmul.f32 %v7730, %v7746
      %v7759 = vmul.f32 %v7731, %v7746
      %7772 = vrot.lane.b32.xlu0 %v7748, 93
      %v7773 = vpop.permute.xlu0 %7772
      %7774 = vrot.lane.b32.xlu0 %v7749, 93
      %v7775 = vpop.permute.xlu0 %7774
      %7776 = vrot.lane.b32.xlu0 %v7750, 93
      %v7777 = vpop.permute.xlu0 %7776
      %7778 = vrot.lane.b32.xlu0 %v7751, 93
      %v7779 = vpop.permute.xlu0 %7778
      %7780 = vrot.lane.b32.xlu0 %v7752, 93
      %v7781 = vpop.permute.xlu0 %7780
      %7782 = vrot.lane.b32.xlu0 %v7753, 93
      %v7783 = vpop.permute.xlu0 %7782
      %7784 = vrot.lane.b32.xlu0 %v7754, 93
      %v7785 = vpop.permute.xlu0 %7784
      %7786 = vrot.lane.b32.xlu0 %v7755, 93
      %v7787 = vpop.permute.xlu0 %7786
      %7788 = vrot.lane.b32.xlu0 %v7756, 93
      %v7789 = vpop.permute.xlu0 %7788
      %7790 = vrot.lane.b32.xlu0 %v7757, 93
      %v7791 = vpop.permute.xlu0 %7790
      %7792 = vrot.lane.b32.xlu0 %v7758, 93
      %v7793 = vpop.permute.xlu0 %7792
      %7794 = vrot.lane.b32.xlu0 %v7759, 93
      %v7795 = vpop.permute.xlu0 %7794
      %v7796 = vsel %vm1838, %v7773, %v7775
      %v7797 = vsel %vm1838, %v7775, %v7777
      %v7798 = vsel %vm1838, %v7779, %v7781
      %v7799 = vsel %vm1838, %v7781, %v7783
      %v7800 = vsel %vm1838, %v7785, %v7787
      %v7801 = vsel %vm1838, %v7787, %v7789
      %v7802 = vsel %vm1838, %v7791, %v7793
      %v7803 = vsel %vm1838, %v7793, %v7795
      %v7812 = vadd.f32 %v7704, %v7796
      %v7813 = vadd.f32 %v7705, %v7797
      %v7814 = vadd.f32 %v7706, %v7798
      %v7815 = vadd.f32 %v7707, %v7799
      %v7816 = vadd.f32 %v7708, %v7800
      %v7817 = vadd.f32 %v7709, %v7801
      %v7818 = vadd.f32 %v7710, %v7802
      %v7819 = vadd.f32 %v7711, %v7803
      %7820 = vrot.lane.b32.xlu0 %v3332, 38
      %v7821 = vpop.permute.xlu0 %7820
      %7822 = vrot.lane.b32.xlu0 %v3333, 38
      %v7823 = vpop.permute.xlu0 %7822
      %vm7824 = vcmask 310272
      %v7825 = vsel %vm7824, %v7821, %v7823
      %v7829 = vmul.f32 %v7483, %v7821
      %v7830 = vmul.f32 %v7484, %v7825
      %v7831 = vmul.f32 %v7485, %v7823
      %v7832 = vmul.f32 %v7486, %v7821
      %v7833 = vmul.f32 %v7487, %v7825
      %v7834 = vmul.f32 %v7488, %v7823
      %v7835 = vmul.f32 %v7489, %v7821
      %v7836 = vmul.f32 %v7490, %v7825
      %v7837 = vmul.f32 %v7491, %v7823
      %v7838 = vmul.f32 %v7492, %v7821
      %v7839 = vmul.f32 %v7493, %v7825
      %v7840 = vmul.f32 %v7494, %v7823
      %7841 = vset.pattern.permute.xlu0 44
      %7842 = vperm.xlu0 %7841, %v3136
      %v7843 = vpop.permute.xlu0 %7842
      %7845 = vset.pattern.permute.xlu0 44
      %7846 = vperm.xlu0 %7845, %v3137
      %v7847 = vpop.permute.xlu0 %7846
      %7849 = vset.pattern.permute.xlu0 44
      %7850 = vperm.xlu0 %7849, %v3138
      %v7851 = vpop.permute.xlu0 %7850
      %7853 = vset.pattern.permute.xlu0 44
      %7854 = vperm.xlu0 %7853, %v3139
      %v7855 = vpop.permute.xlu0 %7854
      %v7857 = vmul.f32 %v7829, %v7843
      %v7858 = vmul.f32 %v7830, %v7843
      %v7859 = vmul.f32 %v7831, %v7843
      %v7860 = vmul.f32 %v7832, %v7847
      %v7861 = vmul.f32 %v7833, %v7847
      %v7862 = vmul.f32 %v7834, %v7847
      %v7863 = vmul.f32 %v7835, %v7851
      %v7864 = vmul.f32 %v7836, %v7851
      %v7865 = vmul.f32 %v7837, %v7851
      %v7866 = vmul.f32 %v7838, %v7855
      %v7867 = vmul.f32 %v7839, %v7855
      %v7868 = vmul.f32 %v7840, %v7855
      %7881 = vrot.lane.b32.xlu0 %v7857, 90
      %v7882 = vpop.permute.xlu0 %7881
      %7883 = vrot.lane.b32.xlu0 %v7858, 90
      %v7884 = vpop.permute.xlu0 %7883
      %7885 = vrot.lane.b32.xlu0 %v7859, 90
      %v7886 = vpop.permute.xlu0 %7885
      %7887 = vrot.lane.b32.xlu0 %v7860, 90
      %v7888 = vpop.permute.xlu0 %7887
      %7889 = vrot.lane.b32.xlu0 %v7861, 90
      %v7890 = vpop.permute.xlu0 %7889
      %7891 = vrot.lane.b32.xlu0 %v7862, 90
      %v7892 = vpop.permute.xlu0 %7891
      %7893 = vrot.lane.b32.xlu0 %v7863, 90
      %v7894 = vpop.permute.xlu0 %7893
      %7895 = vrot.lane.b32.xlu0 %v7864, 90
      %v7896 = vpop.permute.xlu0 %7895
      %7897 = vrot.lane.b32.xlu0 %v7865, 90
      %v7898 = vpop.permute.xlu0 %7897
      %7899 = vrot.lane.b32.xlu0 %v7866, 90
      %v7900 = vpop.permute.xlu0 %7899
      %7901 = vrot.lane.b32.xlu0 %v7867, 90
      %v7902 = vpop.permute.xlu0 %7901
      %7903 = vrot.lane.b32.xlu0 %v7868, 90
      %v7904 = vpop.permute.xlu0 %7903
      %vm7905 = vcmask 736256
      %v7906 = vsel %vm7905, %v7882, %v7884
      %v7907 = vsel %vm7905, %v7884, %v7886
      %v7908 = vsel %vm7905, %v7888, %v7890
      %v7909 = vsel %vm7905, %v7890, %v7892
      %v7910 = vsel %vm7905, %v7894, %v7896
      %v7911 = vsel %vm7905, %v7896, %v7898
      %v7912 = vsel %vm7905, %v7900, %v7902
      %v7913 = vsel %vm7905, %v7902, %v7904
      %v7922 = vadd.f32 %v7812, %v7906
      %v7923 = vadd.f32 %v7813, %v7907
      %v7924 = vadd.f32 %v7814, %v7908
      %v7925 = vadd.f32 %v7815, %v7909
      %v7926 = vadd.f32 %v7816, %v7910
      %v7927 = vadd.f32 %v7817, %v7911
      %v7928 = vadd.f32 %v7818, %v7912
      %v7929 = vadd.f32 %v7819, %v7913
      %7930 = vset.pattern.permute.xlu0 45
      %7931 = vperm.xlu0 %7930, %v3136
      %v7932 = vpop.permute.xlu0 %7931
      %7934 = vset.pattern.permute.xlu0 45
      %7935 = vperm.xlu0 %7934, %v3137
      %v7936 = vpop.permute.xlu0 %7935
      %7938 = vset.pattern.permute.xlu0 45
      %7939 = vperm.xlu0 %7938, %v3138
      %v7940 = vpop.permute.xlu0 %7939
      %7942 = vset.pattern.permute.xlu0 45
      %7943 = vperm.xlu0 %7942, %v3139
      %v7944 = vpop.permute.xlu0 %7943
      %v7946 = vmul.f32 %v7483, %v7932
      %v7947 = vmul.f32 %v7484, %v7932
      %v7948 = vmul.f32 %v7485, %v7932
      %v7949 = vmul.f32 %v7486, %v7936
      %v7950 = vmul.f32 %v7487, %v7936
      %v7951 = vmul.f32 %v7488, %v7936
      %v7952 = vmul.f32 %v7489, %v7940
      %v7953 = vmul.f32 %v7490, %v7940
      %v7954 = vmul.f32 %v7491, %v7940
      %v7955 = vmul.f32 %v7492, %v7944
      %v7956 = vmul.f32 %v7493, %v7944
      %v7957 = vmul.f32 %v7494, %v7944
      %7970 = vrot.lane.b32.xlu0 %v7946, 87
      %v7971 = vpop.permute.xlu0 %7970
      %7972 = vrot.lane.b32.xlu0 %v7947, 87
      %v7973 = vpop.permute.xlu0 %7972
      %7974 = vrot.lane.b32.xlu0 %v7948, 87
      %v7975 = vpop.permute.xlu0 %7974
      %7976 = vrot.lane.b32.xlu0 %v7949, 87
      %v7977 = vpop.permute.xlu0 %7976
      %7978 = vrot.lane.b32.xlu0 %v7950, 87
      %v7979 = vpop.permute.xlu0 %7978
      %7980 = vrot.lane.b32.xlu0 %v7951, 87
      %v7981 = vpop.permute.xlu0 %7980
      %7982 = vrot.lane.b32.xlu0 %v7952, 87
      %v7983 = vpop.permute.xlu0 %7982
      %7984 = vrot.lane.b32.xlu0 %v7953, 87
      %v7985 = vpop.permute.xlu0 %7984
      %7986 = vrot.lane.b32.xlu0 %v7954, 87
      %v7987 = vpop.permute.xlu0 %7986
      %7988 = vrot.lane.b32.xlu0 %v7955, 87
      %v7989 = vpop.permute.xlu0 %7988
      %7990 = vrot.lane.b32.xlu0 %v7956, 87
      %v7991 = vpop.permute.xlu0 %7990
      %7992 = vrot.lane.b32.xlu0 %v7957, 87
      %v7993 = vpop.permute.xlu0 %7992
      %vm7994 = vcmask 711680
      %v7995 = vsel %vm7994, %v7971, %v7973
      %v7996 = vsel %vm7994, %v7973, %v7975
      %v7997 = vsel %vm7994, %v7977, %v7979
      %v7998 = vsel %vm7994, %v7979, %v7981
      %v7999 = vsel %vm7994, %v7983, %v7985
      %v8000 = vsel %vm7994, %v7985, %v7987
      %v8001 = vsel %vm7994, %v7989, %v7991
      %v8002 = vsel %vm7994, %v7991, %v7993
      %v8011 = vadd.f32 %v7922, %v7995
      %v8012 = vadd.f32 %v7923, %v7996
      %v8013 = vadd.f32 %v7924, %v7997
      %v8014 = vadd.f32 %v7925, %v7998
      %v8015 = vadd.f32 %v7926, %v7999
      %v8016 = vadd.f32 %v7927, %v8000
      %v8017 = vadd.f32 %v7928, %v8001
      %v8018 = vadd.f32 %v7929, %v8002
      %8019 = vrot.lane.b32.xlu0 %v3534, 44
      %v8020 = vpop.permute.xlu0 %8019
      %8021 = vrot.lane.b32.xlu0 %v3535, 44
      %v8022 = vpop.permute.xlu0 %8021
      %vm8023 = vcmask 359424
      %v8024 = vsel %vm8023, %v8020, %v8022
      %v8028 = vmul.f32 %v7483, %v8020
      %v8029 = vmul.f32 %v7484, %v8024
      %v8030 = vmul.f32 %v7485, %v8022
      %v8031 = vmul.f32 %v7486, %v8020
      %v8032 = vmul.f32 %v7487, %v8024
      %v8033 = vmul.f32 %v7488, %v8022
      %v8034 = vmul.f32 %v7489, %v8020
      %v8035 = vmul.f32 %v7490, %v8024
      %v8036 = vmul.f32 %v7491, %v8022
      %v8037 = vmul.f32 %v7492, %v8020
      %v8038 = vmul.f32 %v7493, %v8024
      %v8039 = vmul.f32 %v7494, %v8022
      %8040 = vset.pattern.permute.xlu0 46
      %8041 = vperm.xlu0 %8040, %v3136
      %v8042 = vpop.permute.xlu0 %8041
      %8044 = vset.pattern.permute.xlu0 46
      %8045 = vperm.xlu0 %8044, %v3137
      %v8046 = vpop.permute.xlu0 %8045
      %8048 = vset.pattern.permute.xlu0 46
      %8049 = vperm.xlu0 %8048, %v3138
      %v8050 = vpop.permute.xlu0 %8049
      %8052 = vset.pattern.permute.xlu0 46
      %8053 = vperm.xlu0 %8052, %v3139
      %v8054 = vpop.permute.xlu0 %8053
      %v8056 = vmul.f32 %v8028, %v8042
      %v8057 = vmul.f32 %v8029, %v8042
      %v8058 = vmul.f32 %v8030, %v8042
      %v8059 = vmul.f32 %v8031, %v8046
      %v8060 = vmul.f32 %v8032, %v8046
      %v8061 = vmul.f32 %v8033, %v8046
      %v8062 = vmul.f32 %v8034, %v8050
      %v8063 = vmul.f32 %v8035, %v8050
      %v8064 = vmul.f32 %v8036, %v8050
      %v8065 = vmul.f32 %v8037, %v8054
      %v8066 = vmul.f32 %v8038, %v8054
      %v8067 = vmul.f32 %v8039, %v8054
      %8080 = vrot.lane.b32.xlu0 %v8056, 84
      %v8081 = vpop.permute.xlu0 %8080
      %8082 = vrot.lane.b32.xlu0 %v8057, 84
      %v8083 = vpop.permute.xlu0 %8082
      %8084 = vrot.lane.b32.xlu0 %v8058, 84
      %v8085 = vpop.permute.xlu0 %8084
      %8086 = vrot.lane.b32.xlu0 %v8059, 84
      %v8087 = vpop.permute.xlu0 %8086
      %8088 = vrot.lane.b32.xlu0 %v8060, 84
      %v8089 = vpop.permute.xlu0 %8088
      %8090 = vrot.lane.b32.xlu0 %v8061, 84
      %v8091 = vpop.permute.xlu0 %8090
      %8092 = vrot.lane.b32.xlu0 %v8062, 84
      %v8093 = vpop.permute.xlu0 %8092
      %8094 = vrot.lane.b32.xlu0 %v8063, 84
      %v8095 = vpop.permute.xlu0 %8094
      %8096 = vrot.lane.b32.xlu0 %v8064, 84
      %v8097 = vpop.permute.xlu0 %8096
      %8098 = vrot.lane.b32.xlu0 %v8065, 84
      %v8099 = vpop.permute.xlu0 %8098
      %8100 = vrot.lane.b32.xlu0 %v8066, 84
      %v8101 = vpop.permute.xlu0 %8100
      %8102 = vrot.lane.b32.xlu0 %v8067, 84
      %v8103 = vpop.permute.xlu0 %8102
      %vm8104 = vcmask 687104
      %v8105 = vsel %vm8104, %v8081, %v8083
      %v8106 = vsel %vm8104, %v8083, %v8085
      %v8107 = vsel %vm8104, %v8087, %v8089
      %v8108 = vsel %vm8104, %v8089, %v8091
      %v8109 = vsel %vm8104, %v8093, %v8095
      %v8110 = vsel %vm8104, %v8095, %v8097
      %v8111 = vsel %vm8104, %v8099, %v8101
      %v8112 = vsel %vm8104, %v8101, %v8103
      %v8121 = vadd.f32 %v8011, %v8105
      %v8122 = vadd.f32 %v8012, %v8106
      %v8123 = vadd.f32 %v8013, %v8107
      %v8124 = vadd.f32 %v8014, %v8108
      %v8125 = vadd.f32 %v8015, %v8109
      %v8126 = vadd.f32 %v8016, %v8110
      %v8127 = vadd.f32 %v8017, %v8111
      %v8128 = vadd.f32 %v8018, %v8112
      %8129 = vrot.lane.b32.xlu0 %v3647, 47
      %v8130 = vpop.permute.xlu0 %8129
      %8131 = vrot.lane.b32.xlu0 %v3648, 47
      %v8132 = vpop.permute.xlu0 %8131
      %vm8133 = vcmask 384000
      %v8134 = vsel %vm8133, %v8130, %v8132
      %v8138 = vmul.f32 %v7483, %v8130
      %v8139 = vmul.f32 %v7484, %v8134
      %v8140 = vmul.f32 %v7485, %v8132
      %v8141 = vmul.f32 %v7486, %v8130
      %v8142 = vmul.f32 %v7487, %v8134
      %v8143 = vmul.f32 %v7488, %v8132
      %v8144 = vmul.f32 %v7489, %v8130
      %v8145 = vmul.f32 %v7490, %v8134
      %v8146 = vmul.f32 %v7491, %v8132
      %v8147 = vmul.f32 %v7492, %v8130
      %v8148 = vmul.f32 %v7493, %v8134
      %v8149 = vmul.f32 %v7494, %v8132
      %8150 = vset.pattern.permute.xlu0 47
      %8151 = vperm.xlu0 %8150, %v3136
      %v8152 = vpop.permute.xlu0 %8151
      %8154 = vset.pattern.permute.xlu0 47
      %8155 = vperm.xlu0 %8154, %v3137
      %v8156 = vpop.permute.xlu0 %8155
      %8158 = vset.pattern.permute.xlu0 47
      %8159 = vperm.xlu0 %8158, %v3138
      %v8160 = vpop.permute.xlu0 %8159
      %8162 = vset.pattern.permute.xlu0 47
      %8163 = vperm.xlu0 %8162, %v3139
      %v8164 = vpop.permute.xlu0 %8163
      %v8166 = vmul.f32 %v8138, %v8152
      %v8167 = vmul.f32 %v8139, %v8152
      %v8168 = vmul.f32 %v8140, %v8152
      %v8169 = vmul.f32 %v8141, %v8156
      %v8170 = vmul.f32 %v8142, %v8156
      %v8171 = vmul.f32 %v8143, %v8156
      %v8172 = vmul.f32 %v8144, %v8160
      %v8173 = vmul.f32 %v8145, %v8160
      %v8174 = vmul.f32 %v8146, %v8160
      %v8175 = vmul.f32 %v8147, %v8164
      %v8176 = vmul.f32 %v8148, %v8164
      %v8177 = vmul.f32 %v8149, %v8164
      %8190 = vrot.lane.b32.xlu0 %v8166, 81
      %v8191 = vpop.permute.xlu0 %8190
      %8192 = vrot.lane.b32.xlu0 %v8167, 81
      %v8193 = vpop.permute.xlu0 %8192
      %8194 = vrot.lane.b32.xlu0 %v8168, 81
      %v8195 = vpop.permute.xlu0 %8194
      %8196 = vrot.lane.b32.xlu0 %v8169, 81
      %v8197 = vpop.permute.xlu0 %8196
      %8198 = vrot.lane.b32.xlu0 %v8170, 81
      %v8199 = vpop.permute.xlu0 %8198
      %8200 = vrot.lane.b32.xlu0 %v8171, 81
      %v8201 = vpop.permute.xlu0 %8200
      %8202 = vrot.lane.b32.xlu0 %v8172, 81
      %v8203 = vpop.permute.xlu0 %8202
      %8204 = vrot.lane.b32.xlu0 %v8173, 81
      %v8205 = vpop.permute.xlu0 %8204
      %8206 = vrot.lane.b32.xlu0 %v8174, 81
      %v8207 = vpop.permute.xlu0 %8206
      %8208 = vrot.lane.b32.xlu0 %v8175, 81
      %v8209 = vpop.permute.xlu0 %8208
      %8210 = vrot.lane.b32.xlu0 %v8176, 81
      %v8211 = vpop.permute.xlu0 %8210
      %8212 = vrot.lane.b32.xlu0 %v8177, 81
      %v8213 = vpop.permute.xlu0 %8212
      %vm8214 = vcmask 662528
      %v8215 = vsel %vm8214, %v8191, %v8193
      %v8216 = vsel %vm8214, %v8193, %v8195
      %v8217 = vsel %vm8214, %v8197, %v8199
      %v8218 = vsel %vm8214, %v8199, %v8201
      %v8219 = vsel %vm8214, %v8203, %v8205
      %v8220 = vsel %vm8214, %v8205, %v8207
      %v8221 = vsel %vm8214, %v8209, %v8211
      %v8222 = vsel %vm8214, %v8211, %v8213
      %v8231 = vadd.f32 %v8121, %v8215
      %v8232 = vadd.f32 %v8122, %v8216
      %v8233 = vadd.f32 %v8123, %v8217
      %v8234 = vadd.f32 %v8124, %v8218
      %v8235 = vadd.f32 %v8125, %v8219
      %v8236 = vadd.f32 %v8126, %v8220
      %v8237 = vadd.f32 %v8127, %v8221
      %v8238 = vadd.f32 %v8128, %v8222
      %8239 = vrot.lane.b32.xlu0 %v3760, 50
      %v8240 = vpop.permute.xlu0 %8239
      %8241 = vrot.lane.b32.xlu0 %v3761, 50
      %v8242 = vpop.permute.xlu0 %8241
      %vm8243 = vcmask 408576
      %v8244 = vsel %vm8243, %v8240, %v8242
      %v8248 = vmul.f32 %v7483, %v8240
      %v8249 = vmul.f32 %v7484, %v8244
      %v8250 = vmul.f32 %v7485, %v8242
      %v8251 = vmul.f32 %v7486, %v8240
      %v8252 = vmul.f32 %v7487, %v8244
      %v8253 = vmul.f32 %v7488, %v8242
      %v8254 = vmul.f32 %v7489, %v8240
      %v8255 = vmul.f32 %v7490, %v8244
      %v8256 = vmul.f32 %v7491, %v8242
      %v8257 = vmul.f32 %v7492, %v8240
      %v8258 = vmul.f32 %v7493, %v8244
      %v8259 = vmul.f32 %v7494, %v8242
      %8260 = vset.pattern.permute.xlu0 48
      %8261 = vperm.xlu0 %8260, %v3136
      %v8262 = vpop.permute.xlu0 %8261
      %8264 = vset.pattern.permute.xlu0 48
      %8265 = vperm.xlu0 %8264, %v3137
      %v8266 = vpop.permute.xlu0 %8265
      %8268 = vset.pattern.permute.xlu0 48
      %8269 = vperm.xlu0 %8268, %v3138
      %v8270 = vpop.permute.xlu0 %8269
      %8272 = vset.pattern.permute.xlu0 48
      %8273 = vperm.xlu0 %8272, %v3139
      %v8274 = vpop.permute.xlu0 %8273
      %v8276 = vmul.f32 %v8248, %v8262
      %v8277 = vmul.f32 %v8249, %v8262
      %v8278 = vmul.f32 %v8250, %v8262
      %v8279 = vmul.f32 %v8251, %v8266
      %v8280 = vmul.f32 %v8252, %v8266
      %v8281 = vmul.f32 %v8253, %v8266
      %v8282 = vmul.f32 %v8254, %v8270
      %v8283 = vmul.f32 %v8255, %v8270
      %v8284 = vmul.f32 %v8256, %v8270
      %v8285 = vmul.f32 %v8257, %v8274
      %v8286 = vmul.f32 %v8258, %v8274
      %v8287 = vmul.f32 %v8259, %v8274
      %8300 = vrot.lane.b32.xlu0 %v8276, 78
      %v8301 = vpop.permute.xlu0 %8300
      %8302 = vrot.lane.b32.xlu0 %v8277, 78
      %v8303 = vpop.permute.xlu0 %8302
      %8304 = vrot.lane.b32.xlu0 %v8278, 78
      %v8305 = vpop.permute.xlu0 %8304
      %8306 = vrot.lane.b32.xlu0 %v8279, 78
      %v8307 = vpop.permute.xlu0 %8306
      %8308 = vrot.lane.b32.xlu0 %v8280, 78
      %v8309 = vpop.permute.xlu0 %8308
      %8310 = vrot.lane.b32.xlu0 %v8281, 78
      %v8311 = vpop.permute.xlu0 %8310
      %8312 = vrot.lane.b32.xlu0 %v8282, 78
      %v8313 = vpop.permute.xlu0 %8312
      %8314 = vrot.lane.b32.xlu0 %v8283, 78
      %v8315 = vpop.permute.xlu0 %8314
      %8316 = vrot.lane.b32.xlu0 %v8284, 78
      %v8317 = vpop.permute.xlu0 %8316
      %8318 = vrot.lane.b32.xlu0 %v8285, 78
      %v8319 = vpop.permute.xlu0 %8318
      %8320 = vrot.lane.b32.xlu0 %v8286, 78
      %v8321 = vpop.permute.xlu0 %8320
      %8322 = vrot.lane.b32.xlu0 %v8287, 78
      %v8323 = vpop.permute.xlu0 %8322
      %v8324 = vsel %vm2257, %v8301, %v8303
      %v8325 = vsel %vm2257, %v8303, %v8305
      %v8326 = vsel %vm2257, %v8307, %v8309
      %v8327 = vsel %vm2257, %v8309, %v8311
      %v8328 = vsel %vm2257, %v8313, %v8315
      %v8329 = vsel %vm2257, %v8315, %v8317
      %v8330 = vsel %vm2257, %v8319, %v8321
      %v8331 = vsel %vm2257, %v8321, %v8323
      %v8340 = vadd.f32 %v8231, %v8324
      %v8341 = vadd.f32 %v8232, %v8325
      %v8342 = vadd.f32 %v8233, %v8326
      %v8343 = vadd.f32 %v8234, %v8327
      %v8344 = vadd.f32 %v8235, %v8328
      %v8345 = vadd.f32 %v8236, %v8329
      %v8346 = vadd.f32 %v8237, %v8330
      %v8347 = vadd.f32 %v8238, %v8331
      %v8348 = vld [vmem:[%s6] sm:$0xff]
      %v8349 = vld [vmem:[%s6 + $0x8] sm:$0xff]
      %v8350 = vld [vmem:[%s6 + $0x10] sm:$0xff]
      %v8351 = vld [vmem:[%s6 + $0x18] sm:$0xff]
      %8353 = vset.pattern.permute.xlu0 0
      %8354 = vperm.xlu0 %8353, %v8348
      %v8355 = vpop.permute.xlu0 %8354
      %8358 = vset.pattern.permute.xlu0 0
      %8359 = vperm.xlu0 %8358, %v8349
      %v8360 = vpop.permute.xlu0 %8359
      %8363 = vset.pattern.permute.xlu0 0
      %8364 = vperm.xlu0 %8363, %v8350
      %v8365 = vpop.permute.xlu0 %8364
      %8368 = vset.pattern.permute.xlu0 0
      %8369 = vperm.xlu0 %8368, %v8351
      %v8370 = vpop.permute.xlu0 %8369
      %v8372 = vadd.f32 %v8340, %v8355
      %v8373 = vadd.f32 %v8341, %v8355
      %v8374 = vadd.f32 %v8342, %v8360
      %v8375 = vadd.f32 %v8343, %v8360
      %v8376 = vadd.f32 %v8344, %v8365
      %v8377 = vadd.f32 %v8345, %v8365
      %v8378 = vadd.f32 %v8346, %v8370
      %v8379 = vadd.f32 %v8347, %v8370
      %v8380 = vld [vmem:[%s7] sm:$0xff]
      %v8381 = vld [vmem:[%s7 + $0x8] sm:$0xff]
      %v8382 = vld [vmem:[%s7 + $0x10] sm:$0xff]
      %v8383 = vld [vmem:[%s7 + $0x18] sm:$0xff]
      %v8384 = vld [vmem:[%s8] sm:$0xff]
      %v8385 = vld [vmem:[%s8 + $0x8] sm:$0xff]
      %v8386 = vld [vmem:[%s8 + $0x10] sm:$0xff]
      %v8387 = vld [vmem:[%s8 + $0x18] sm:$0xff]
      %8389 = vset.pattern.permute.xlu0 0
      %8390 = vperm.xlu0 %8389, %v8384
      %v8391 = vpop.permute.xlu0 %8390
      %8394 = vset.pattern.permute.xlu0 0
      %8395 = vperm.xlu0 %8394, %v8385
      %v8396 = vpop.permute.xlu0 %8395
      %8399 = vset.pattern.permute.xlu0 0
      %8400 = vperm.xlu0 %8399, %v8386
      %v8401 = vpop.permute.xlu0 %8400
      %8404 = vset.pattern.permute.xlu0 0
      %8405 = vperm.xlu0 %8404, %v8387
      %v8406 = vpop.permute.xlu0 %8405
      %v8409 = vsel %vm1448, %v8380, 0
      %v8412 = vsel %vm1448, %v8381, 0
      %v8415 = vsel %vm1448, %v8382, 0
      %v8418 = vsel %vm1448, %v8383, 0
      %8420 = vmatpush.msra.mxu0 0.0
      %8421 = vmatpush.msra.mxu0 0.0
      %8422 = vmatpush.msra.mxu0 0.0
      %8423 = vmatpush.msra.mxu0 0.0
      %8424 = vmatpush.msra.mxu0 0.0
      %8425 = vmatpush.msra.mxu0 0.0
      %8426 = vmatpush.msra.mxu0 0.0
      %8427 = vmatpush.msra.mxu0 0.0
      %8428 = vmatpush.msra.mxu0 0.0
      %8429 = vmatpush.msra.mxu0 0.0
      %8430 = vmatpush.msra.mxu0 0.0
      %8431 = vmatpush.msra.mxu0 0.0
      %8432 = vmatpush.msra.mxu0 %v8378
      %8433 = vmatpush.msra.mxu0 %v8376
      %8434 = vmatpush.msra.mxu0 %v8374
      %8435 = vmatpush.msra.mxu0 %v8372
      %8436 = vmatmul.f32.gmra.mxu0 %v8409
      %v8437 = vpop.f32.mrf.mxu0
      %v8438 = vadd.f32 %v8391, %v8437
      %8439 = vmatmul.f32.gmra.mxu0 %v8412
      %v8440 = vpop.f32.mrf.mxu0
      %v8441 = vadd.f32 %v8396, %v8440
      %8442 = vmatmul.f32.gmra.mxu0 %v8415
      %v8443 = vpop.f32.mrf.mxu0
      %v8444 = vadd.f32 %v8401, %v8443
      %8445 = vmatmul.f32.gmra.mxu0 %v8418
      %v8446 = vpop.f32.mrf.mxu0
      %v8447 = vadd.f32 %v8406, %v8446
      %8448 = vdwg.mxu0
      %8449 = vmatpush.msra.mxu0 0.0
      %8450 = vmatpush.msra.mxu0 0.0
      %8451 = vmatpush.msra.mxu0 0.0
      %8452 = vmatpush.msra.mxu0 0.0
      %8453 = vmatpush.msra.mxu0 0.0
      %8454 = vmatpush.msra.mxu0 0.0
      %8455 = vmatpush.msra.mxu0 0.0
      %8456 = vmatpush.msra.mxu0 0.0
      %8457 = vmatpush.msra.mxu0 0.0
      %8458 = vmatpush.msra.mxu0 0.0
      %8459 = vmatpush.msra.mxu0 0.0
      %8460 = vmatpush.msra.mxu0 0.0
      %8461 = vmatpush.msra.mxu0 %v8379
      %8462 = vmatpush.msra.mxu0 %v8377
      %8463 = vmatpush.msra.mxu0 %v8375
      %8464 = vmatpush.msra.mxu0 %v8373
      %8465 = vmatmul.f32.gmra.mxu0 %v8409
      %v8466 = vpop.f32.mrf.mxu0
      %v8467 = vadd.f32 %v8391, %v8466
      %8468 = vmatmul.f32.gmra.mxu0 %v8412
      %v8469 = vpop.f32.mrf.mxu0
      %v8470 = vadd.f32 %v8396, %v8469
      %8471 = vmatmul.f32.gmra.mxu0 %v8415
      %v8472 = vpop.f32.mrf.mxu0
      %v8473 = vadd.f32 %v8401, %v8472
      %8474 = vmatmul.f32.gmra.mxu0 %v8418
      %v8475 = vpop.f32.mrf.mxu0
      %v8476 = vadd.f32 %v8406, %v8475
      %8477 = vdwg.mxu0
      %v8478 = vmul.f32 %v333, %v8438
      %v8479 = vmul.f32 %v334, %v8467
      %v8480 = vmul.f32 %v335, %v8441
      %v8481 = vmul.f32 %v336, %v8470
      %v8482 = vmul.f32 %v337, %v8444
      %v8483 = vmul.f32 %v338, %v8473
      %v8484 = vmul.f32 %v339, %v8447
      %v8485 = vmul.f32 %v340, %v8476
      %8486 = vst [vmem:[%s332] sm:$0xff] %v8478
      %8487 = vst [vmem:[%s332 + $0x8] sm:$0xff] %v8479
      %8488 = vst [vmem:[%s332 + $0x10] sm:$0xff] %v8480
      %8489 = vst [vmem:[%s332 + $0x18] sm:$0xff] %v8481
      %8490 = vst [vmem:[%s332 + $0x20] sm:$0xff] %v8482
      %8491 = vst [vmem:[%s332 + $0x28] sm:$0xff] %v8483
      %8492 = vst [vmem:[%s332 + $0x30] sm:$0xff] %v8484
      %8493 = vst [vmem:[%s332 + $0x38] sm:$0xff] %v8485
      %p8494 = scmp.lt.s32.totalorder %s20, 1
      %s8495 = scalar_select %p8494, %s20, 1
      %s8496 = smul.addr %s8495, 8
      %s8497 = smul.addr %s8496, 8
      %s8498 = scalar_lea.vmem %s9, %s8497
      // Predicated region
      $region57: #{attention_module_forward.1} parent=55 // pred_check
        %p8499 = pneg %p232
      $region58: #{attention_module_forward.1} parent=55 // pred_check_branch
        %8501 = sbr.rel (%p8499) target = $region60
      $region59: #{attention_module_forward.1} parent=55 // pred_region
        _
      $region60: #{attention_module_forward.1} parent=55 // pred_fallthru
        _
    $region56: #{attention_module_forward.1} parent=5 // pred_fallthru
      _
    %p8502 = scmp.le.s32.totalorder 2, %s15
    // Predicated region
    $region61: #{attention_module_forward.1} parent=5 // pred_check
      %p8503 = pneg %p8502
    $region62: #{attention_module_forward.1} parent=5 // pred_check_branch
      %8505 = sbr.rel (%p8503) target = $region64
    $region63: #{attention_module_forward.1} parent=5 // pred_region
      %s8506 = ssub.s32 %s15, 2
      // Predicated region
      $region65: #{attention_module_forward.1} parent=63 // pred_check
        %p8507 = pneg %p238
      $region66: #{attention_module_forward.1} parent=63 // pred_check_branch
        %8509 = sbr.rel (%p8507) target = $region68
      $region67: #{attention_module_forward.1} parent=63 // pred_region
        %p8510 = scmp.lt.s32.totalorder %s21, 1
        %s8511 = scalar_select %p8510, %s21, 1
        %s8512 = smul.addr %s8511, 8
        %s8513 = smul.addr %s8512, 8
        %s8514 = scalar_lea.vmem %s9, %s8513
      $region68: #{attention_module_forward.1} parent=63 // pred_fallthru
        _
    $region64: #{attention_module_forward.1} parent=5 // pred_fallthru
      _
  $region6: #{attention_module_forward.1} parent=0 // loop_footer
    %s19 = sadd.s32 1, %s15
  $region7: #{attention_module_forward.1} parent=0 // loop_footer_branch
    %14 = sbr.rel target = $region3
  $region8: #{attention_module_forward.1} parent=0 // loop_exit
    _

</llo_original>
